<compile_context>
chip_gen: v7x
topology: tpu7x:2x2x1
jax: 0.10.0
libtpu: 0.0.40
codegen_flags: <defaults>
</compile_context>

<pallas_src>
import functools

import jax
import jax.numpy as jnp
from jax.experimental import pallas as pl
from jax.experimental.pallas import tpu as pltpu

EPS = 1e-5


def _fused_bn_relu_conv_bn_kernel(x_ref, w_ref, g1_ref, b1_ref, g2_ref, b2_ref,
                                  o_ref, xn_ref, *, m_true):
    # x_ref : (Cin, Mpad)      f32   channel-major input (zero-padded lanes), resident
    # w_ref : (tc, Cin)        bf16  Cout tile of the 1x1 conv weight
    # g1/b1 : (Cin, 1)         f32   BN1 affine params
    # g2/b2 : (tc, 1)          f32   BN2 affine params (per-tile slice)
    # o_ref : (tc, Mpad)       f32   output tile
    # xn_ref: (Cin, Mpad)      bf16  VMEM scratch holding normalized/ReLU'd input
    inv_m = jnp.float32(1.0 / m_true)

    # --- BN1 + ReLU + bf16 cast, computed ONCE (grid axis is "arbitrary", so the
    # scratch written on step 0 is valid for all later steps on the same core). ---
    @pl.when(pl.program_id(0) == 0)
    def _():
        x = x_ref[...]                                        # (Cin, Mpad)
        # Padded columns of x are zero -> they contribute nothing to the sums,
        # so dividing by the true M gives the exact batch statistics.
        s1 = jnp.sum(x, axis=1, keepdims=True)                # (Cin, 1)
        s2 = jnp.sum(x * x, axis=1, keepdims=True)            # (Cin, 1)
        mu1 = s1 * inv_m
        var1 = jnp.maximum(s2 * inv_m - mu1 * mu1, 0.0)       # clamp cancellation
        scale1 = g1_ref[...] * jax.lax.rsqrt(var1 + EPS)
        shift1 = b1_ref[...] - mu1 * scale1
        xn = jnp.maximum(x * scale1 + shift1, 0.0)
        # Zero the padded lanes so ReLU(shift1) cannot leak into BN2 statistics.
        col = jax.lax.broadcasted_iota(jnp.int32, xn.shape, 1)
        xn = jnp.where(col < m_true, xn, 0.0)
        xn_ref[...] = xn.astype(jnp.bfloat16)

    # --- 1x1 convolution == channel-major matmul on the MXU (bf16 in, f32 acc). ---
    y = jnp.dot(w_ref[...], xn_ref[...], preferred_element_type=jnp.float32)  # (tc, Mpad)

    # --- BN2 on this Cout tile. Padded columns of y are exactly zero, so sums
    # over the full Mpad lanes with inv_m = 1/M_true are correct. ---
    t1 = jnp.sum(y, axis=1, keepdims=True)                    # (tc, 1)
    t2 = jnp.sum(y * y, axis=1, keepdims=True)                # (tc, 1)
    mu2 = t1 * inv_m
    var2 = jnp.maximum(t2 * inv_m - mu2 * mu2, 0.0)
    scale2 = g2_ref[...] * jax.lax.rsqrt(var2 + EPS)
    shift2 = b2_ref[...] - mu2 * scale2
    o_ref[...] = y * scale2 + shift2


def fused_bn_relu_conv_bn(x_nchw, w_oihw, gamma1, beta1, gamma2, beta2, *, tile_cout=512):
    N, Cin, H, W = x_nchw.shape
    Cout = w_oihw.shape[0]
    M = N * H * W
    Mpad = pl.cdiv(M, 128) * 128        # lane-dense last dim (784 -> 896)
    assert Cout % tile_cout == 0

    # Channel-major slab (Cin, M): pure reshape for N == 1 (size-1 axis move is free).
    x2d = jnp.transpose(x_nchw.reshape(N, Cin, H * W), (1, 0, 2)).reshape(Cin, M)
    if Mpad != M:
        x2d = jnp.pad(x2d, ((0, 0), (0, Mpad - M)))
    # OIHW 1x1 weight -> (Cout, Cin), pre-cast to bf16 (halves the weight DMA).
    w2d = w_oihw.reshape(Cout, Cin).astype(jnp.bfloat16)

    kernel = functools.partial(_fused_bn_relu_conv_bn_kernel, m_true=M)

    out2d = pl.pallas_call(
        kernel,
        out_shape=jax.ShapeDtypeStruct((Cout, Mpad), jnp.float32),
        grid=(Cout // tile_cout,),
        in_specs=[
            pl.BlockSpec((Cin, Mpad), lambda i: (0, 0)),        # x (resident, constant block)
            pl.BlockSpec((tile_cout, Cin), lambda i: (i, 0)),   # weight tile
            pl.BlockSpec((Cin, 1), lambda i: (0, 0)),           # gamma1
            pl.BlockSpec((Cin, 1), lambda i: (0, 0)),           # beta1
            pl.BlockSpec((tile_cout, 1), lambda i: (i, 0)),     # gamma2 tile
            pl.BlockSpec((tile_cout, 1), lambda i: (i, 0)),     # beta2 tile
        ],
        out_specs=pl.BlockSpec((tile_cout, Mpad), lambda i: (i, 0)),
        scratch_shapes=[pltpu.VMEM((Cin, Mpad), jnp.bfloat16)],  # hoisted xn
        compiler_params=pltpu.CompilerParams(
            # Must stay "arbitrary": the BN1 hoist writes xn scratch only on the
            # first grid step, so the Cout-tile axis must run serially on one TC.
            dimension_semantics=("arbitrary",),
        ),
    )(
        x2d,
        w2d,
        gamma1.reshape(Cin, 1),
        beta1.reshape(Cin, 1),
        gamma2.reshape(Cout, 1),
        beta2.reshape(Cout, 1),
    )

    # Drop lane padding, then (Cout, M) -> NCHW (pure reshape for N == 1).
    out2d = out2d[:, :M]
    return jnp.transpose(out2d.reshape(Cout, N, H * W), (1, 0, 2)).reshape(N, Cout, H, W)


def _reference(x, w, gamma1, beta1, gamma2, beta2):
    # Pure-JAX reference mirroring the PyTorch training-mode forward.
    mu1 = jnp.mean(x, axis=(0, 2, 3), keepdims=True)
    var1 = jnp.var(x, axis=(0, 2, 3), keepdims=True)
    xn = (x - mu1) / jnp.sqrt(var1 + EPS) * gamma1.reshape(1, -1, 1, 1) + beta1.reshape(1, -1, 1, 1)
    xr = jnp.maximum(xn, 0.0)
    y = jax.lax.conv_general_dilated(
        xr, w, window_strides=(1, 1), padding="VALID",
        dimension_numbers=("NCHW", "OIHW", "NCHW"))
    mu2 = jnp.mean(y, axis=(0, 2, 3), keepdims=True)
    var2 = jnp.var(y, axis=(0, 2, 3), keepdims=True)
    return (y - mu2) / jnp.sqrt(var2 + EPS) * gamma2.reshape(1, -1, 1, 1) + beta2.reshape(1, -1, 1, 1)


if __name__ == "__main__":
    N, Cin, H, W = 1, 256, 28, 28
    Cout = 1024

    key = jax.random.PRNGKey(0)
    kx, kw, kg1, kb1, kg2, kb2 = jax.random.split(key, 6)

    x = jax.random.normal(kx, (N, Cin, H, W), dtype=jnp.float32)
    # Deterministic parameter init (synthetic; not loaded from a checkpoint).
    w = jax.random.normal(kw, (Cout, Cin, 1, 1), dtype=jnp.float32) * 0.05
    gamma1 = 1.0 + 0.1 * jax.random.normal(kg1, (Cin,), dtype=jnp.float32)
    beta1 = 0.1 * jax.random.normal(kb1, (Cin,), dtype=jnp.float32)
    gamma2 = 1.0 + 0.1 * jax.random.normal(kg2, (Cout,), dtype=jnp.float32)
    beta2 = 0.1 * jax.random.normal(kb2, (Cout,), dtype=jnp.float32)

    out = fused_bn_relu_conv_bn(x, w, gamma1, beta1, gamma2, beta2)
    out = jax.block_until_ready(out)

    ref = _reference(x, w, gamma1, beta1, gamma2, beta2)
    ref = jax.block_until_ready(ref)

    assert out.shape == (N, Cout, H, W), out.shape
    # bf16 MXU operands vs f32 reference conv -> ~1e-2 relative error budget.
    assert jnp.allclose(out, ref, rtol=2e-2, atol=2e-2), float(jnp.max(jnp.abs(out - ref)))

    print("KERNEL_OK")
</pallas_src>

<mosaic_0001>
module attributes {stable_mosaic.version = 11 : i64} {
  func.func @_fused_bn_relu_conv_bn_kernel(%arg0: i32, %arg1: memref<256x896xf32, #tpu.memory_space<vmem>>, %arg2: memref<512x256xbf16, #tpu.memory_space<vmem>>, %arg3: memref<256x1xf32, #tpu.memory_space<vmem>>, %arg4: memref<256x1xf32, #tpu.memory_space<vmem>>, %arg5: memref<512x1xf32, #tpu.memory_space<vmem>>, %arg6: memref<512x1xf32, #tpu.memory_space<vmem>>, %arg7: memref<512x896xf32, #tpu.memory_space<vmem>>, %arg8: memref<256x896xbf16, #tpu.memory_space<vmem>>) attributes {dimension_semantics = [#tpu.dimension_semantics<arbitrary>], iteration_bounds = array<i64: 2>, scalar_prefetch = 0 : i64, scratch_operands = 1 : i64, tpu.core_type = #tpu.core_type<tc>, window_params = [{pipeline_mode = #tpu.pipeline_mode<synchronous>, transform_indices = @transform_0, window_bounds = array<i64: 256, 896>}, {transform_indices = @transform_1, window_bounds = array<i64: 512, 256>}, {pipeline_mode = #tpu.pipeline_mode<synchronous>, transform_indices = @transform_2, window_bounds = array<i64: 256, 1>}, {pipeline_mode = #tpu.pipeline_mode<synchronous>, transform_indices = @transform_3, window_bounds = array<i64: 256, 1>}, {transform_indices = @transform_4, window_bounds = array<i64: 512, 1>}, {transform_indices = @transform_5, window_bounds = array<i64: 512, 1>}, {transform_indices = @transform_6, window_bounds = array<i64: 512, 896>}]} {
    %c0_i32 = arith.constant 0 : i32
    %0 = arith.cmpi eq, %arg0, %c0_i32 : i32
    %1 = arith.extui %0 : i1 to i32
    %cst = arith.constant 0.00127551018 : f32
    %c0_i32_0 = arith.constant 0 : i32
    %2 = arith.cmpi ne, %1, %c0_i32_0 : i32
    scf.if %2 {
      %c0_17 = arith.constant 0 : index
      %c0_18 = arith.constant 0 : index
      %32 = vector.load %arg1[%c0_17, %c0_18] : memref<256x896xf32, #tpu.memory_space<vmem>>, vector<256x896xf32>
      %cst_19 = arith.constant dense<0.000000e+00> : vector<256xf32>
      %33 = vector.multi_reduction <add>, %32, %cst_19 [1] : vector<256x896xf32> to vector<256xf32>
      %34 = vector.shape_cast %33 : vector<256xf32> to vector<256x1xf32>
      %35 = arith.mulf %32, %32 : vector<256x896xf32>
      %cst_20 = arith.constant dense<0.000000e+00> : vector<256xf32>
      %36 = vector.multi_reduction <add>, %35, %cst_20 [1] : vector<256x896xf32> to vector<256xf32>
      %37 = vector.shape_cast %36 : vector<256xf32> to vector<256x1xf32>
      %38 = vector.broadcast %cst : f32 to vector<256x1xf32>
      %39 = arith.mulf %34, %38 : vector<256x1xf32>
      %40 = vector.broadcast %cst : f32 to vector<256x1xf32>
      %41 = arith.mulf %37, %40 : vector<256x1xf32>
      %42 = arith.mulf %39, %39 : vector<256x1xf32>
      %43 = arith.subf %41, %42 : vector<256x1xf32>
      %cst_21 = arith.constant 0.000000e+00 : f32
      %44 = vector.broadcast %cst_21 : f32 to vector<256x1xf32>
      %45 = arith.maximumf %43, %44 : vector<256x1xf32>
      %c0_22 = arith.constant 0 : index
      %c0_23 = arith.constant 0 : index
      %46 = vector.load %arg3[%c0_22, %c0_23] : memref<256x1xf32, #tpu.memory_space<vmem>>, vector<256x1xf32>
      %cst_24 = arith.constant 9.99999974E-6 : f32
      %47 = vector.broadcast %cst_24 : f32 to vector<256x1xf32>
      %48 = arith.addf %45, %47 : vector<256x1xf32>
      %49 = math.rsqrt %48 : vector<256x1xf32>
      %50 = arith.mulf %46, %49 : vector<256x1xf32>
      %c0_25 = arith.constant 0 : index
      %c0_26 = arith.constant 0 : index
      %51 = vector.load %arg4[%c0_25, %c0_26] : memref<256x1xf32, #tpu.memory_space<vmem>>, vector<256x1xf32>
      %52 = arith.mulf %39, %50 : vector<256x1xf32>
      %53 = arith.subf %51, %52 : vector<256x1xf32>
      %54 = vector.broadcast %50 : vector<256x1xf32> to vector<256x896xf32>
      %55 = arith.mulf %32, %54 : vector<256x896xf32>
      %56 = vector.broadcast %53 : vector<256x1xf32> to vector<256x896xf32>
      %57 = arith.addf %55, %56 : vector<256x896xf32>
      %cst_27 = arith.constant 0.000000e+00 : f32
      %58 = vector.broadcast %cst_27 : f32 to vector<256x896xf32>
      %59 = arith.maximumf %57, %58 : vector<256x896xf32>
      %60 = tpu.iota {dimensions = array<i32: 1>} : vector<256x896xi32>
      %c784_i32 = arith.constant 784 : i32
      %61 = vector.broadcast %c784_i32 : i32 to vector<256x896xi32>
      %62 = arith.cmpi slt, %60, %61 : vector<256x896xi32>
      %cst_28 = arith.constant 0.000000e+00 : f32
      %63 = vector.broadcast %cst_28 : f32 to vector<256x896xf32>
      %64 = arith.select %62, %59, %63 : vector<256x896xi1>, vector<256x896xf32>
      %65 = arith.truncf %64 : vector<256x896xf32> to vector<256x896xbf16>
      %c0_29 = arith.constant 0 : index
      %c0_30 = arith.constant 0 : index
      %66 = vector.load %arg8[%c0_29, %c0_30] : memref<256x896xbf16, #tpu.memory_space<vmem>>, vector<256x896xbf16>
      tpu.vector_store %arg8[%c0_29, %c0_30], %65 {strides = array<i32>} : memref<256x896xbf16, #tpu.memory_space<vmem>>, vector<256x896xbf16>,
    } else {
    }
    %c0 = arith.constant 0 : index
    %c0_1 = arith.constant 0 : index
    %3 = vector.load %arg2[%c0, %c0_1] : memref<512x256xbf16, #tpu.memory_space<vmem>>, vector<512x256xbf16>
    %c0_2 = arith.constant 0 : index
    %c0_3 = arith.constant 0 : index
    %4 = vector.load %arg8[%c0_2, %c0_3] : memref<256x896xbf16, #tpu.memory_space<vmem>>, vector<256x896xbf16>
    %cst_4 = arith.constant dense<0.000000e+00> : vector<512x896xf32>
    %5 = tpu.matmul %3, %4, %cst_4 {dimension_numbers = #tpu.dot_dimension_numbers<[1], [0], [0], [1], [0, 0, 1, 1], [], []>} : vector<512x256xbf16>, vector<256x896xbf16>, vector<512x896xf32> -> vector<512x896xf32>
    %cst_5 = arith.constant dense<0.000000e+00> : vector<512xf32>
    %6 = vector.multi_reduction <add>, %5, %cst_5 [1] : vector<512x896xf32> to vector<512xf32>
    %7 = vector.shape_cast %6 : vector<512xf32> to vector<512x1xf32>
    %8 = arith.mulf %5, %5 : vector<512x896xf32>
    %cst_6 = arith.constant dense<0.000000e+00> : vector<512xf32>
    %9 = vector.multi_reduction <add>, %8, %cst_6 [1] : vector<512x896xf32> to vector<512xf32>
    %10 = vector.shape_cast %9 : vector<512xf32> to vector<512x1xf32>
    %cst_7 = arith.constant 0.00127551018 : f32
    %11 = vector.broadcast %cst_7 : f32 to vector<512x1xf32>
    %12 = arith.mulf %7, %11 : vector<512x1xf32>
    %cst_8 = arith.constant 0.00127551018 : f32
    %13 = vector.broadcast %cst_8 : f32 to vector<512x1xf32>
    %14 = arith.mulf %10, %13 : vector<512x1xf32>
    %15 = arith.mulf %12, %12 : vector<512x1xf32>
    %16 = arith.subf %14, %15 : vector<512x1xf32>
    %cst_9 = arith.constant 0.000000e+00 : f32
    %17 = vector.broadcast %cst_9 : f32 to vector<512x1xf32>
    %18 = arith.maximumf %16, %17 : vector<512x1xf32>
    %c0_10 = arith.constant 0 : index
    %c0_11 = arith.constant 0 : index
    %19 = vector.load %arg5[%c0_10, %c0_11] : memref<512x1xf32, #tpu.memory_space<vmem>>, vector<512x1xf32>
    %cst_12 = arith.constant 9.99999974E-6 : f32
    %20 = vector.broadcast %cst_12 : f32 to vector<512x1xf32>
    %21 = arith.addf %18, %20 : vector<512x1xf32>
    %22 = math.rsqrt %21 : vector<512x1xf32>
    %23 = arith.mulf %19, %22 : vector<512x1xf32>
    %c0_13 = arith.constant 0 : index
    %c0_14 = arith.constant 0 : index
    %24 = vector.load %arg6[%c0_13, %c0_14] : memref<512x1xf32, #tpu.memory_space<vmem>>, vector<512x1xf32>
    %25 = arith.mulf %12, %23 : vector<512x1xf32>
    %26 = arith.subf %24, %25 : vector<512x1xf32>
    %27 = vector.broadcast %23 : vector<512x1xf32> to vector<512x896xf32>
    %28 = arith.mulf %5, %27 : vector<512x896xf32>
    %29 = vector.broadcast %26 : vector<512x1xf32> to vector<512x896xf32>
    %30 = arith.addf %28, %29 : vector<512x896xf32>
    %c0_15 = arith.constant 0 : index
    %c0_16 = arith.constant 0 : index
    %31 = vector.load %arg7[%c0_15, %c0_16] : memref<512x896xf32, #tpu.memory_space<vmem>>, vector<512x896xf32>
    tpu.vector_store %arg7[%c0_15, %c0_16], %30 {strides = array<i32>} : memref<512x896xf32, #tpu.memory_space<vmem>>, vector<512x896xf32>,
    return
  }
  func.func @transform_0(%arg0: i32) -> (i32, i32) {
    %c0_i32 = arith.constant 0 : i32
    %c0_i32_0 = arith.constant 0 : i32
    %c0_i32_1 = arith.constant 0 : i32
    return %c0_i32, %c0_i32_0 : i32, i32
  }
  func.func @transform_1(%arg0: i32) -> (i32, i32) {
    %c0_i32 = arith.constant 0 : i32
    %c0_i32_0 = arith.constant 0 : i32
    return %arg0, %c0_i32 : i32, i32
  }
  func.func @transform_2(%arg0: i32) -> (i32, i32) {
    %c0_i32 = arith.constant 0 : i32
    %c0_i32_0 = arith.constant 0 : i32
    %c0_i32_1 = arith.constant 0 : i32
    return %c0_i32, %c0_i32_0 : i32, i32
  }
  func.func @transform_3(%arg0: i32) -> (i32, i32) {
    %c0_i32 = arith.constant 0 : i32
    %c0_i32_0 = arith.constant 0 : i32
    %c0_i32_1 = arith.constant 0 : i32
    return %c0_i32, %c0_i32_0 : i32, i32
  }
  func.func @transform_4(%arg0: i32) -> (i32, i32) {
    %c0_i32 = arith.constant 0 : i32
    %c0_i32_0 = arith.constant 0 : i32
    return %arg0, %c0_i32 : i32, i32
  }
  func.func @transform_5(%arg0: i32) -> (i32, i32) {
    %c0_i32 = arith.constant 0 : i32
    %c0_i32_0 = arith.constant 0 : i32
    return %arg0, %c0_i32 : i32, i32
  }
  func.func @transform_6(%arg0: i32) -> (i32, i32) {
    %c0_i32 = arith.constant 0 : i32
    %c0_i32_0 = arith.constant 0 : i32
    return %arg0, %c0_i32 : i32, i32
  }
}

</mosaic_0001>

<llo_original>
// kernel: tpu_custom_call.1
$region0: #{tpu_custom_call.1}
  #allocation0 [shape = 'u32[]', space=smem, size = 0x4, offset = 0x4, fixed_abs, tag = 'smem constant byte address 0x4 - core index']
  #allocation1 [shape = 'u32[144,128]{1,0:T(1,128)}', space=vmem, size = 0x12000, scoped, tag = 'internal scratch']
  #allocation2 [shape = 'bf16[256,896]{1,0:T(16,128)(2,1)}', space=vmem, size = 0x70000, scoped, tag = 'scratch operand']
  %s0 = inlined_call_operand.hbm [shape: f32[256,896], index: 0, kind: input, shape index: {}]
  %s1 = inlined_call_operand.hbm [shape: bf16[1024,256], index: 1, kind: input, shape index: {}]
  %s2 = inlined_call_operand.vmem [shape: f32[256,1], index: 2, kind: input, shape index: {}]
  %s3 = inlined_call_operand.vmem [shape: f32[256,1], index: 3, kind: input, shape index: {}]
  %s4 = inlined_call_operand.vmem [shape: f32[1024,1], index: 4, kind: input, shape index: {}]
  %s5 = inlined_call_operand.vmem [shape: f32[1024,1], index: 5, kind: input, shape index: {}]
  %s6 = inlined_call_operand.hbm [shape: f32[1024,896], index: 6, kind: output, shape index: {}]
  %s7 = sld [smem:[#allocation0]]
  $region69: #{tpu_custom_call.1} parent=0
    _
  %s9 = ssub.s32 1, %s7
  %s10 = scalar_select 0, %s9, %s7
  $region1: #{tpu_custom_call.1} parent=0
    #allocation3 [shape = 'u8[917504]{0}', space=vmem, size = 0xe0000, scoped, tag = 'input window, operand 0, single buffered']
    #allocation4 [shape = 's32[2]{0}', space=sflag, size = 0x8, scoped, tag = 'scoped memory for tpu_custom_call.1']
    #allocation5 [shape = 's32[2]{0}', space=sflag, size = 0x8, scoped, tag = 'scoped memory for tpu_custom_call.1']
    #allocation6 [shape = 'u8[524288]{0}', space=vmem, size = 0x80000, scoped, tag = 'input window, operand 1']
    #allocation7 [shape = 's32[2]{0}', space=sflag, size = 0x8, scoped, tag = 'scoped memory for tpu_custom_call.1']
    #allocation8 [shape = 'u8[3670016]{0}', space=vmem, size = 0x380000, scoped, tag = 'output window, operand 0']
    %11 = vsyncpa [#allocation4], 0
    %12 = vsyncpa [#allocation7], 0
    %s13 = scalar_lea.sflag [#allocation7], 1
    %14 = vsyncpa %s13, 0
    %15 = vsyncpa [#allocation5], 0
    %s16 = scalar_lea.sflag [#allocation5], 1
    %17 = vsyncpa %s16, 0
    loop: start=0, step=1, limit=4
    $region2: #{tpu_custom_call.1} parent=1 // loop_pre_header
      _
    $region3: #{tpu_custom_call.1} parent=1 // loop_header
      %s19 = sphi 0, %s23
      %p20 = scmp.ge.s32.totalorder %s19, 4
      %s27 = sphi 0, %s27
      %s29 = sphi 0, %s27
      %s30 = sphi 0, %s29
      %s44 = sphi 0, %s30
      %s50 = sphi 0, %s52
      %s53 = sphi 0, %s50
      %s54 = sphi 0, %s53
      %s70 = sphi 0, %s54
      %s74 = sphi 0, %s74
      %s76 = sphi 0, %s74
      %s77 = sphi 0, %s76
      %s91 = sphi 0, %s77
      %s95 = sphi 0, %s95
      %s97 = sphi 0, %s95
      %s98 = sphi 0, %s97
      %s112 = sphi 0, %s98
      %s118 = sphi 0, %s120
      %s121 = sphi 0, %s118
      %s122 = sphi 0, %s121
      %s138 = sphi 0, %s122
      %s144 = sphi 0, %s146
      %s147 = sphi 0, %s144
      %s148 = sphi 0, %s147
      %s164 = sphi 0, %s148
      %s170 = sphi 0, %s172
      %s173 = sphi 0, %s170
      %s174 = sphi 0, %s173
      %s190 = sphi 0, %s174
    $region4: #{tpu_custom_call.1} parent=1 // loop_header_branch
      %22 = sbr.rel (%p20) target = $region8
    $region5: #{tpu_custom_call.1} parent=1 // loop_body
      %s24 = ssub.s32 %s19, 1
      %s25 = ssub.s32 %s19, 2
      %s26 = sadd.s32 %s19, 1
      %s28 = sadd.s32 %s27, 1
      %p31 = scmp.eq.s32.totalorder %s19, 1
      %p32 = scmp.ne.s32.totalorder %s27, %s29
      %p33 = scmp.eq.s32.totalorder %s19, 0
      %p34 = por %p32, %p33
      %p35 = scmp.ne.s32.totalorder %s27, %s29
      %p36 = scmp.eq.s32.totalorder %s24, 1
      %p37 = por %p35, %p36
      %p38 = scmp.ne.s32.totalorder %s29, %s30
      %p39 = scmp.eq.s32.totalorder %s24, 0
      %p40 = por %p38, %p39
      %p41 = scmp.ne.s32.totalorder %s29, %s30
      %p42 = scmp.eq.s32.totalorder %s25, 1
      %p43 = por %p41, %p42
      %p45 = scmp.ne.s32.totalorder %s30, %s44
      %p46 = scmp.eq.s32.totalorder %s25, 0
      %p47 = por %p45, %p46
      %s48 = ssub.s32 %s19, %s26
      %p49 = scmp.eq.s32.totalorder %s48, 0
      %s51 = sadd.s32 %s50, 1
      %s52 = scalar_select %p49, %s50, %s51
      %p55 = pneg %p49
      %p56 = scmp.eq.s32.totalorder %s19, 1
      %p57 = por %p55, %p56
      %p58 = scmp.ne.s32.totalorder %s50, %s53
      %p59 = scmp.eq.s32.totalorder %s19, 0
      %p60 = por %p58, %p59
      %p61 = scmp.ne.s32.totalorder %s50, %s53
      %p62 = scmp.eq.s32.totalorder %s24, 1
      %p63 = por %p61, %p62
      %p64 = scmp.ne.s32.totalorder %s53, %s54
      %p65 = scmp.eq.s32.totalorder %s24, 0
      %p66 = por %p64, %p65
      %p67 = scmp.ne.s32.totalorder %s53, %s54
      %p68 = scmp.eq.s32.totalorder %s25, 1
      %p69 = por %p67, %p68
      %p71 = scmp.ne.s32.totalorder %s54, %s70
      %p72 = scmp.eq.s32.totalorder %s25, 0
      %p73 = por %p71, %p72
      %s75 = sadd.s32 %s74, 1
      %p78 = scmp.eq.s32.totalorder %s19, 1
      %p79 = scmp.ne.s32.totalorder %s74, %s76
      %p80 = scmp.eq.s32.totalorder %s19, 0
      %p81 = por %p79, %p80
      %p82 = scmp.ne.s32.totalorder %s74, %s76
      %p83 = scmp.eq.s32.totalorder %s24, 1
      %p84 = por %p82, %p83
      %p85 = scmp.ne.s32.totalorder %s76, %s77
      %p86 = scmp.eq.s32.totalorder %s24, 0
      %p87 = por %p85, %p86
      %p88 = scmp.ne.s32.totalorder %s76, %s77
      %p89 = scmp.eq.s32.totalorder %s25, 1
      %p90 = por %p88, %p89
      %p92 = scmp.ne.s32.totalorder %s77, %s91
      %p93 = scmp.eq.s32.totalorder %s25, 0
      %p94 = por %p92, %p93
      %s96 = sadd.s32 %s95, 1
      %p99 = scmp.eq.s32.totalorder %s19, 1
      %p100 = scmp.ne.s32.totalorder %s95, %s97
      %p101 = scmp.eq.s32.totalorder %s19, 0
      %p102 = por %p100, %p101
      %p103 = scmp.ne.s32.totalorder %s95, %s97
      %p104 = scmp.eq.s32.totalorder %s24, 1
      %p105 = por %p103, %p104
      %p106 = scmp.ne.s32.totalorder %s97, %s98
      %p107 = scmp.eq.s32.totalorder %s24, 0
      %p108 = por %p106, %p107
      %p109 = scmp.ne.s32.totalorder %s97, %s98
      %p110 = scmp.eq.s32.totalorder %s25, 1
      %p111 = por %p109, %p110
      %p113 = scmp.ne.s32.totalorder %s98, %s112
      %p114 = scmp.eq.s32.totalorder %s25, 0
      %p115 = por %p113, %p114
      %s116 = ssub.s32 %s19, %s26
      %p117 = scmp.eq.s32.totalorder %s116, 0
      %s119 = sadd.s32 %s118, 1
      %s120 = scalar_select %p117, %s118, %s119
      %p123 = pneg %p117
      %p124 = scmp.eq.s32.totalorder %s19, 1
      %p125 = por %p123, %p124
      %p126 = scmp.ne.s32.totalorder %s118, %s121
      %p127 = scmp.eq.s32.totalorder %s19, 0
      %p128 = por %p126, %p127
      %p129 = scmp.ne.s32.totalorder %s118, %s121
      %p130 = scmp.eq.s32.totalorder %s24, 1
      %p131 = por %p129, %p130
      %p132 = scmp.ne.s32.totalorder %s121, %s122
      %p133 = scmp.eq.s32.totalorder %s24, 0
      %p134 = por %p132, %p133
      %p135 = scmp.ne.s32.totalorder %s121, %s122
      %p136 = scmp.eq.s32.totalorder %s25, 1
      %p137 = por %p135, %p136
      %p139 = scmp.ne.s32.totalorder %s122, %s138
      %p140 = scmp.eq.s32.totalorder %s25, 0
      %p141 = por %p139, %p140
      %s142 = ssub.s32 %s19, %s26
      %p143 = scmp.eq.s32.totalorder %s142, 0
      %s145 = sadd.s32 %s144, 1
      %s146 = scalar_select %p143, %s144, %s145
      %p149 = pneg %p143
      %p150 = scmp.eq.s32.totalorder %s19, 1
      %p151 = por %p149, %p150
      %p152 = scmp.ne.s32.totalorder %s144, %s147
      %p153 = scmp.eq.s32.totalorder %s19, 0
      %p154 = por %p152, %p153
      %p155 = scmp.ne.s32.totalorder %s144, %s147
      %p156 = scmp.eq.s32.totalorder %s24, 1
      %p157 = por %p155, %p156
      %p158 = scmp.ne.s32.totalorder %s147, %s148
      %p159 = scmp.eq.s32.totalorder %s24, 0
      %p160 = por %p158, %p159
      %p161 = scmp.ne.s32.totalorder %s147, %s148
      %p162 = scmp.eq.s32.totalorder %s25, 1
      %p163 = por %p161, %p162
      %p165 = scmp.ne.s32.totalorder %s148, %s164
      %p166 = scmp.eq.s32.totalorder %s25, 0
      %p167 = por %p165, %p166
      %s168 = ssub.s32 %s19, %s26
      %p169 = scmp.eq.s32.totalorder %s168, 0
      %s171 = sadd.s32 %s170, 1
      %s172 = scalar_select %p169, %s170, %s171
      %p175 = pneg %p169
      %p176 = scmp.eq.s32.totalorder %s19, 1
      %p177 = por %p175, %p176
      %p178 = scmp.ne.s32.totalorder %s170, %s173
      %p179 = scmp.eq.s32.totalorder %s19, 0
      %p180 = por %p178, %p179
      %p181 = scmp.ne.s32.totalorder %s170, %s173
      %p182 = scmp.eq.s32.totalorder %s24, 1
      %p183 = por %p181, %p182
      %p184 = scmp.ne.s32.totalorder %s173, %s174
      %p185 = scmp.eq.s32.totalorder %s24, 0
      %p186 = por %p184, %p185
      %p187 = scmp.ne.s32.totalorder %s173, %s174
      %p188 = scmp.eq.s32.totalorder %s25, 1
      %p189 = por %p187, %p188
      %p191 = scmp.ne.s32.totalorder %s174, %s190
      %p192 = scmp.eq.s32.totalorder %s25, 0
      %p193 = por %p191, %p192
      %p194 = scmp.le.s32.totalorder 1, %s19
      %p195 = scmp.lt.s32.totalorder %s19, 3
      %p196 = pnand %p194, %p195
      %p197 = pneg %p196
      // Predicated region
      $region9: #{tpu_custom_call.1} parent=5 // pred_check
        _
      $region10: #{tpu_custom_call.1} parent=5 // pred_check_branch
        %199 = sbr.rel (%p196) target = $region12
      $region11: #{tpu_custom_call.1} parent=5 // pred_region
        %s200 = ssub.s32 %s19, 1
        // Predicated region
        $region13: #{tpu_custom_call.1} parent=11 // pred_check
          %p201 = pneg %p40
        $region14: #{tpu_custom_call.1} parent=11 // pred_check_branch
          %203 = sbr.rel (%p201) target = $region16
        $region15: #{tpu_custom_call.1} parent=11 // pred_region
          %s205 = ssub.s32 28672, 28672
          %206 = vsyncadd [#allocation4], %s205
          %s207 = sshll.u32 [#allocation3], 4
          %s208 = int_to_ptr.vmem [resolvable:$true] %s207
          %213 = dma.hbm_to_vmem [thread:$0]  %s0, 28672, %s208, [#allocation4], 896, 896, 56
        $region16: #{tpu_custom_call.1} parent=11 // pred_fallthru
          _
        // Predicated region
        $region17: #{tpu_custom_call.1} parent=11 // pred_check
          %p214 = pneg %p87
        $region18: #{tpu_custom_call.1} parent=11 // pred_check_branch
          %216 = sbr.rel (%p214) target = $region20
        $region19: #{tpu_custom_call.1} parent=11 // pred_region
          _
        $region20: #{tpu_custom_call.1} parent=11 // pred_fallthru
          _
        // Predicated region
        $region21: #{tpu_custom_call.1} parent=11 // pred_check
          %p217 = pneg %p108
        $region22: #{tpu_custom_call.1} parent=11 // pred_check_branch
          %219 = sbr.rel (%p217) target = $region24
        $region23: #{tpu_custom_call.1} parent=11 // pred_region
          _
        $region24: #{tpu_custom_call.1} parent=11 // pred_fallthru
          _
      $region12: #{tpu_custom_call.1} parent=5 // pred_fallthru
        _
      %p220 = scmp.lt.s32.totalorder %s19, 2
      // Predicated region
      $region25: #{tpu_custom_call.1} parent=5 // pred_check
        %p221 = pneg %p220
      $region26: #{tpu_custom_call.1} parent=5 // pred_check_branch
        %223 = sbr.rel (%p221) target = $region28
      $region27: #{tpu_custom_call.1} parent=5 // pred_region
        // Predicated region
        $region29: #{tpu_custom_call.1} parent=27 // pred_check
          %p224 = pneg %p60
        $region30: #{tpu_custom_call.1} parent=27 // pred_check_branch
          %226 = sbr.rel (%p224) target = $region32
        $region31: #{tpu_custom_call.1} parent=27 // pred_region
          %s227 = sand.u32 %s50, 1
          %s228 = scalar_lea.sflag [#allocation7], %s227
          %s229 = sand.u32 %s50, 1
          %s230 = smul.addr %s229, 512
          %s231 = scalar_lea.vmem [#allocation6], %s230
          %s232 = smul.u32 64, %s19
          %s234 = ssub.s32 8192, 8192
          %235 = vsyncadd %s228, %s234
          %s236 = smul.addr %s232, 2
          %s237 = smul.addr %s236, 64
          %s238 = scalar_lea.hbm %s1, %s237
          %s239 = sshll.u32 %s231, 4
          %s240 = int_to_ptr.vmem [resolvable:$true] %s239
          %245 = dma.hbm_to_vmem [thread:$0]  %s238, 8192, %s240, %s228, 128, 128, 8
        $region32: #{tpu_custom_call.1} parent=27 // pred_fallthru
          _
        // Predicated region
        $region33: #{tpu_custom_call.1} parent=27 // pred_check
          %p246 = pneg %p128
        $region34: #{tpu_custom_call.1} parent=27 // pred_check_branch
          %248 = sbr.rel (%p246) target = $region36
        $region35: #{tpu_custom_call.1} parent=27 // pred_region
          %s249 = smul.u32 64, %s19
          %p250 = scmp.lt.s32.totalorder %s249, 127
          %s251 = scalar_select %p250, %s249, 127
          %s252 = smul.addr %s251, 8
          %s253 = scalar_lea.vmem %s4, %s252
          %s254 = smul.u32 64, %s19
        $region36: #{tpu_custom_call.1} parent=27 // pred_fallthru
          _
        // Predicated region
        $region37: #{tpu_custom_call.1} parent=27 // pred_check
          %p255 = pneg %p154
        $region38: #{tpu_custom_call.1} parent=27 // pred_check_branch
          %257 = sbr.rel (%p255) target = $region40
        $region39: #{tpu_custom_call.1} parent=27 // pred_region
          %s258 = smul.u32 64, %s19
          %p259 = scmp.lt.s32.totalorder %s258, 127
          %s260 = scalar_select %p259, %s258, 127
          %s261 = smul.addr %s260, 8
          %s262 = scalar_lea.vmem %s5, %s261
          %s263 = smul.u32 64, %s19
        $region40: #{tpu_custom_call.1} parent=27 // pred_fallthru
          _
      $region28: #{tpu_custom_call.1} parent=5 // pred_fallthru
        _
      %p264 = scmp.le.s32.totalorder 1, %s19
      %p265 = scmp.lt.s32.totalorder %s19, 3
      %p266 = pnand %p264, %p265
      %p267 = pneg %p266
      // Predicated region
      $region41: #{tpu_custom_call.1} parent=5 // pred_check
        _
      $region42: #{tpu_custom_call.1} parent=5 // pred_check_branch
        %269 = sbr.rel (%p266) target = $region44
      $region43: #{tpu_custom_call.1} parent=5 // pred_region
        %s270 = ssub.s32 %s19, 1
        // Predicated region
        $region45: #{tpu_custom_call.1} parent=43 // pred_check
          %p271 = pneg %p40
        $region46: #{tpu_custom_call.1} parent=43 // pred_check_branch
          %273 = sbr.rel (%p271) target = $region48
        $region47: #{tpu_custom_call.1} parent=43 // pred_region
          %274 = dma.done [#allocation4], 28672
        $region48: #{tpu_custom_call.1} parent=43 // pred_fallthru
          _
        %s275 = sand.u32 %s53, 1
        %s276 = scalar_lea.sflag [#allocation7], %s275
        %s277 = sand.u32 %s53, 1
        %s278 = smul.addr %s277, 512
        %s279 = scalar_lea.vmem [#allocation6], %s278
        // Predicated region
        $region49: #{tpu_custom_call.1} parent=43 // pred_check
          %p280 = pneg %p66
        $region50: #{tpu_custom_call.1} parent=43 // pred_check_branch
          %282 = sbr.rel (%p280) target = $region52
        $region51: #{tpu_custom_call.1} parent=43 // pred_region
          %283 = dma.done %s276, 8192
        $region52: #{tpu_custom_call.1} parent=43 // pred_fallthru
          _
        %p284 = pneg %p40
        %p285 = pneg %p37
        %s286 = sand.u32 %s53, 1
        %s287 = scalar_lea.sflag [#allocation7], %s286
        %s288 = sand.u32 %s53, 1
        %s289 = smul.addr %s288, 512
        %s290 = scalar_lea.vmem [#allocation6], %s289
        %p291 = pneg %p66
        %p292 = pneg %p63
        %p293 = pneg %p87
        %p294 = pneg %p84
        %p295 = pneg %p108
        %p296 = pneg %p105
        %s297 = smul.u32 64, %s24
        %p298 = scmp.lt.s32.totalorder %s297, 127
        %s299 = scalar_select %p298, %s297, 127
        %s300 = smul.addr %s299, 8
        %s301 = scalar_lea.vmem %s4, %s300
        %p302 = pneg %p134
        %p303 = pneg %p131
        %s304 = smul.u32 64, %s24
        %p305 = scmp.lt.s32.totalorder %s304, 127
        %s306 = scalar_select %p305, %s304, 127
        %s307 = smul.addr %s306, 8
        %s308 = scalar_lea.vmem %s5, %s307
        %p309 = pneg %p160
        %p310 = pneg %p157
        %p311 = pneg %p186
        %p312 = pneg %p183
        %s313 = sand.u32 %s173, 1
        %s314 = scalar_lea.sflag [#allocation5], %s313
        %s315 = sand.u32 %s173, 1
        %s316 = smul.addr %s315, 3584
        %s317 = scalar_lea.vmem [#allocation8], %s316
        %s318 = smul.u32 64, %s24
        %s319 = smul.u32 64, %s24
        %p320 = scmp.lt.s32.totalorder %s319, 127
        %s321 = scalar_select %p320, %s319, 127
        %s322 = smul.addr %s321, 8
        %s323 = scalar_lea.vmem %s4, %s322
        %s324 = smul.u32 64, %s24
        %s325 = smul.u32 64, %s24
        %p326 = scmp.lt.s32.totalorder %s325, 127
        %s327 = scalar_select %p326, %s325, 127
        %s328 = smul.addr %s327, 8
        %s329 = scalar_lea.vmem %s5, %s328
        %s330 = smul.u32 64, %s24
        %s331 = smul.u32 64, %s24
        %p333 = scmp.eq.s32.totalorder %s24, 0
        // Predicated region
        $region53: #{tpu_custom_call.1} parent=43 // pred_check
          %p334 = pneg %p333
        $region54: #{tpu_custom_call.1} parent=43 // pred_check_branch
          %336 = sbr.rel (%p334) target = $region56
        $region55: #{tpu_custom_call.1} parent=43 // pred_region
          %v337 = vld [vmem:[#allocation3] sm:$0xff]
          %v338 = vld [vmem:[#allocation3 + $0x8] sm:$0xff]
          %v339 = vld [vmem:[#allocation3 + $0x10] sm:$0xff]
          %v340 = vld [vmem:[#allocation3 + $0x18] sm:$0xff]
          %v341 = vld [vmem:[#allocation3 + $0x20] sm:$0xff]
          %v342 = vld [vmem:[#allocation3 + $0x28] sm:$0xff]
          %v343 = vld [vmem:[#allocation3 + $0x30] sm:$0xff]
          %v344 = vld [vmem:[#allocation3 + $0x38] sm:$0xff]
          %v345 = vld [vmem:[#allocation3 + $0x40] sm:$0xff]
          %v346 = vld [vmem:[#allocation3 + $0x48] sm:$0xff]
          %v347 = vld [vmem:[#allocation3 + $0x50] sm:$0xff]
          %v348 = vld [vmem:[#allocation3 + $0x58] sm:$0xff]
          %v349 = vld [vmem:[#allocation3 + $0x60] sm:$0xff]
          %v350 = vld [vmem:[#allocation3 + $0x68] sm:$0xff]
          %v351 = vld [vmem:[#allocation3 + $0x70] sm:$0xff]
          %v352 = vld [vmem:[#allocation3 + $0x78] sm:$0xff]
          %v353 = vld [vmem:[#allocation3 + $0x80] sm:$0xff]
          %v354 = vld [vmem:[#allocation3 + $0x88] sm:$0xff]
          %v355 = vld [vmem:[#allocation3 + $0x90] sm:$0xff]
          %v356 = vld [vmem:[#allocation3 + $0x98] sm:$0xff]
          %v357 = vld [vmem:[#allocation3 + $0xa0] sm:$0xff]
          %v358 = vld [vmem:[#allocation3 + $0xa8] sm:$0xff]
          %v359 = vld [vmem:[#allocation3 + $0xb0] sm:$0xff]
          %v360 = vld [vmem:[#allocation3 + $0xb8] sm:$0xff]
          %v361 = vld [vmem:[#allocation3 + $0xc0] sm:$0xff]
          %v362 = vld [vmem:[#allocation3 + $0xc8] sm:$0xff]
          %v363 = vld [vmem:[#allocation3 + $0xd0] sm:$0xff]
          %v364 = vld [vmem:[#allocation3 + $0xd8] sm:$0xff]
          %v365 = vld [vmem:[#allocation3 + $0xe0] sm:$0xff]
          %v366 = vld [vmem:[#allocation3 + $0xe8] sm:$0xff]
          %v367 = vld [vmem:[#allocation3 + $0xf0] sm:$0xff]
          %v368 = vld [vmem:[#allocation3 + $0xf8] sm:$0xff]
          %v369 = vld [vmem:[#allocation3 + $0x100] sm:$0xff]
          %v370 = vld [vmem:[#allocation3 + $0x108] sm:$0xff]
          %v371 = vld [vmem:[#allocation3 + $0x110] sm:$0xff]
          %v372 = vld [vmem:[#allocation3 + $0x118] sm:$0xff]
          %v373 = vld [vmem:[#allocation3 + $0x120] sm:$0xff]
          %v374 = vld [vmem:[#allocation3 + $0x128] sm:$0xff]
          %v375 = vld [vmem:[#allocation3 + $0x130] sm:$0xff]
          %v376 = vld [vmem:[#allocation3 + $0x138] sm:$0xff]
          %v377 = vld [vmem:[#allocation3 + $0x140] sm:$0xff]
          %v378 = vld [vmem:[#allocation3 + $0x148] sm:$0xff]
          %v379 = vld [vmem:[#allocation3 + $0x150] sm:$0xff]
          %v380 = vld [vmem:[#allocation3 + $0x158] sm:$0xff]
          %v381 = vld [vmem:[#allocation3 + $0x160] sm:$0xff]
          %v382 = vld [vmem:[#allocation3 + $0x168] sm:$0xff]
          %v383 = vld [vmem:[#allocation3 + $0x170] sm:$0xff]
          %v384 = vld [vmem:[#allocation3 + $0x178] sm:$0xff]
          %v385 = vld [vmem:[#allocation3 + $0x180] sm:$0xff]
          %v386 = vld [vmem:[#allocation3 + $0x188] sm:$0xff]
          %v387 = vld [vmem:[#allocation3 + $0x190] sm:$0xff]
          %v388 = vld [vmem:[#allocation3 + $0x198] sm:$0xff]
          %v389 = vld [vmem:[#allocation3 + $0x1a0] sm:$0xff]
          %v390 = vld [vmem:[#allocation3 + $0x1a8] sm:$0xff]
          %v391 = vld [vmem:[#allocation3 + $0x1b0] sm:$0xff]
          %v392 = vld [vmem:[#allocation3 + $0x1b8] sm:$0xff]
          %v393 = vld [vmem:[#allocation3 + $0x1c0] sm:$0xff]
          %v394 = vld [vmem:[#allocation3 + $0x1c8] sm:$0xff]
          %v395 = vld [vmem:[#allocation3 + $0x1d0] sm:$0xff]
          %v396 = vld [vmem:[#allocation3 + $0x1d8] sm:$0xff]
          %v397 = vld [vmem:[#allocation3 + $0x1e0] sm:$0xff]
          %v398 = vld [vmem:[#allocation3 + $0x1e8] sm:$0xff]
          %v399 = vld [vmem:[#allocation3 + $0x1f0] sm:$0xff]
          %v400 = vld [vmem:[#allocation3 + $0x1f8] sm:$0xff]
          %v401 = vld [vmem:[#allocation3 + $0x200] sm:$0xff]
          %v402 = vld [vmem:[#allocation3 + $0x208] sm:$0xff]
          %v403 = vld [vmem:[#allocation3 + $0x210] sm:$0xff]
          %v404 = vld [vmem:[#allocation3 + $0x218] sm:$0xff]
          %v405 = vld [vmem:[#allocation3 + $0x220] sm:$0xff]
          %v406 = vld [vmem:[#allocation3 + $0x228] sm:$0xff]
          %v407 = vld [vmem:[#allocation3 + $0x230] sm:$0xff]
          %v408 = vld [vmem:[#allocation3 + $0x238] sm:$0xff]
          %v409 = vld [vmem:[#allocation3 + $0x240] sm:$0xff]
          %v410 = vld [vmem:[#allocation3 + $0x248] sm:$0xff]
          %v411 = vld [vmem:[#allocation3 + $0x250] sm:$0xff]
          %v412 = vld [vmem:[#allocation3 + $0x258] sm:$0xff]
          %v413 = vld [vmem:[#allocation3 + $0x260] sm:$0xff]
          %v414 = vld [vmem:[#allocation3 + $0x268] sm:$0xff]
          %v415 = vld [vmem:[#allocation3 + $0x270] sm:$0xff]
          %v416 = vld [vmem:[#allocation3 + $0x278] sm:$0xff]
          %v417 = vld [vmem:[#allocation3 + $0x280] sm:$0xff]
          %v418 = vld [vmem:[#allocation3 + $0x288] sm:$0xff]
          %v419 = vld [vmem:[#allocation3 + $0x290] sm:$0xff]
          %v420 = vld [vmem:[#allocation3 + $0x298] sm:$0xff]
          %v421 = vld [vmem:[#allocation3 + $0x2a0] sm:$0xff]
          %v422 = vld [vmem:[#allocation3 + $0x2a8] sm:$0xff]
          %v423 = vld [vmem:[#allocation3 + $0x2b0] sm:$0xff]
          %v424 = vld [vmem:[#allocation3 + $0x2b8] sm:$0xff]
          %v425 = vld [vmem:[#allocation3 + $0x2c0] sm:$0xff]
          %v426 = vld [vmem:[#allocation3 + $0x2c8] sm:$0xff]
          %v427 = vld [vmem:[#allocation3 + $0x2d0] sm:$0xff]
          %v428 = vld [vmem:[#allocation3 + $0x2d8] sm:$0xff]
          %v429 = vld [vmem:[#allocation3 + $0x2e0] sm:$0xff]
          %v430 = vld [vmem:[#allocation3 + $0x2e8] sm:$0xff]
          %v431 = vld [vmem:[#allocation3 + $0x2f0] sm:$0xff]
          %v432 = vld [vmem:[#allocation3 + $0x2f8] sm:$0xff]
          %v433 = vld [vmem:[#allocation3 + $0x300] sm:$0xff]
          %v434 = vld [vmem:[#allocation3 + $0x308] sm:$0xff]
          %v435 = vld [vmem:[#allocation3 + $0x310] sm:$0xff]
          %v436 = vld [vmem:[#allocation3 + $0x318] sm:$0xff]
          %v437 = vld [vmem:[#allocation3 + $0x320] sm:$0xff]
          %v438 = vld [vmem:[#allocation3 + $0x328] sm:$0xff]
          %v439 = vld [vmem:[#allocation3 + $0x330] sm:$0xff]
          %v440 = vld [vmem:[#allocation3 + $0x338] sm:$0xff]
          %v441 = vld [vmem:[#allocation3 + $0x340] sm:$0xff]
          %v442 = vld [vmem:[#allocation3 + $0x348] sm:$0xff]
          %v443 = vld [vmem:[#allocation3 + $0x350] sm:$0xff]
          %v444 = vld [vmem:[#allocation3 + $0x358] sm:$0xff]
          %v445 = vld [vmem:[#allocation3 + $0x360] sm:$0xff]
          %v446 = vld [vmem:[#allocation3 + $0x368] sm:$0xff]
          %v447 = vld [vmem:[#allocation3 + $0x370] sm:$0xff]
          %v448 = vld [vmem:[#allocation3 + $0x378] sm:$0xff]
          %v449 = vld [vmem:[#allocation3 + $0x380] sm:$0xff]
          %v450 = vld [vmem:[#allocation3 + $0x388] sm:$0xff]
          %v451 = vld [vmem:[#allocation3 + $0x390] sm:$0xff]
          %v452 = vld [vmem:[#allocation3 + $0x398] sm:$0xff]
          %v453 = vld [vmem:[#allocation3 + $0x3a0] sm:$0xff]
          %v454 = vld [vmem:[#allocation3 + $0x3a8] sm:$0xff]
          %v455 = vld [vmem:[#allocation3 + $0x3b0] sm:$0xff]
          %v456 = vld [vmem:[#allocation3 + $0x3b8] sm:$0xff]
          %v457 = vld [vmem:[#allocation3 + $0x3c0] sm:$0xff]
          %v458 = vld [vmem:[#allocation3 + $0x3c8] sm:$0xff]
          %v459 = vld [vmem:[#allocation3 + $0x3d0] sm:$0xff]
          %v460 = vld [vmem:[#allocation3 + $0x3d8] sm:$0xff]
          %v461 = vld [vmem:[#allocation3 + $0x3e0] sm:$0xff]
          %v462 = vld [vmem:[#allocation3 + $0x3e8] sm:$0xff]
          %v463 = vld [vmem:[#allocation3 + $0x3f0] sm:$0xff]
          %v464 = vld [vmem:[#allocation3 + $0x3f8] sm:$0xff]
          %v465 = vld [vmem:[#allocation3 + $0x400] sm:$0xff]
          %v466 = vld [vmem:[#allocation3 + $0x408] sm:$0xff]
          %v467 = vld [vmem:[#allocation3 + $0x410] sm:$0xff]
          %v468 = vld [vmem:[#allocation3 + $0x418] sm:$0xff]
          %v469 = vld [vmem:[#allocation3 + $0x420] sm:$0xff]
          %v470 = vld [vmem:[#allocation3 + $0x428] sm:$0xff]
          %v471 = vld [vmem:[#allocation3 + $0x430] sm:$0xff]
          %v472 = vld [vmem:[#allocation3 + $0x438] sm:$0xff]
          %v473 = vld [vmem:[#allocation3 + $0x440] sm:$0xff]
          %v474 = vld [vmem:[#allocation3 + $0x448] sm:$0xff]
          %v475 = vld [vmem:[#allocation3 + $0x450] sm:$0xff]
          %v476 = vld [vmem:[#allocation3 + $0x458] sm:$0xff]
          %v477 = vld [vmem:[#allocation3 + $0x460] sm:$0xff]
          %v478 = vld [vmem:[#allocation3 + $0x468] sm:$0xff]
          %v479 = vld [vmem:[#allocation3 + $0x470] sm:$0xff]
          %v480 = vld [vmem:[#allocation3 + $0x478] sm:$0xff]
          %v481 = vld [vmem:[#allocation3 + $0x480] sm:$0xff]
          %v482 = vld [vmem:[#allocation3 + $0x488] sm:$0xff]
          %v483 = vld [vmem:[#allocation3 + $0x490] sm:$0xff]
          %v484 = vld [vmem:[#allocation3 + $0x498] sm:$0xff]
          %v485 = vld [vmem:[#allocation3 + $0x4a0] sm:$0xff]
          %v486 = vld [vmem:[#allocation3 + $0x4a8] sm:$0xff]
          %v487 = vld [vmem:[#allocation3 + $0x4b0] sm:$0xff]
          %v488 = vld [vmem:[#allocation3 + $0x4b8] sm:$0xff]
          %v489 = vld [vmem:[#allocation3 + $0x4c0] sm:$0xff]
          %v490 = vld [vmem:[#allocation3 + $0x4c8] sm:$0xff]
          %v491 = vld [vmem:[#allocation3 + $0x4d0] sm:$0xff]
          %v492 = vld [vmem:[#allocation3 + $0x4d8] sm:$0xff]
          %v493 = vld [vmem:[#allocation3 + $0x4e0] sm:$0xff]
          %v494 = vld [vmem:[#allocation3 + $0x4e8] sm:$0xff]
          %v495 = vld [vmem:[#allocation3 + $0x4f0] sm:$0xff]
          %v496 = vld [vmem:[#allocation3 + $0x4f8] sm:$0xff]
          %v497 = vld [vmem:[#allocation3 + $0x500] sm:$0xff]
          %v498 = vld [vmem:[#allocation3 + $0x508] sm:$0xff]
          %v499 = vld [vmem:[#allocation3 + $0x510] sm:$0xff]
          %v500 = vld [vmem:[#allocation3 + $0x518] sm:$0xff]
          %v501 = vld [vmem:[#allocation3 + $0x520] sm:$0xff]
          %v502 = vld [vmem:[#allocation3 + $0x528] sm:$0xff]
          %v503 = vld [vmem:[#allocation3 + $0x530] sm:$0xff]
          %v504 = vld [vmem:[#allocation3 + $0x538] sm:$0xff]
          %v505 = vld [vmem:[#allocation3 + $0x540] sm:$0xff]
          %v506 = vld [vmem:[#allocation3 + $0x548] sm:$0xff]
          %v507 = vld [vmem:[#allocation3 + $0x550] sm:$0xff]
          %v508 = vld [vmem:[#allocation3 + $0x558] sm:$0xff]
          %v509 = vld [vmem:[#allocation3 + $0x560] sm:$0xff]
          %v510 = vld [vmem:[#allocation3 + $0x568] sm:$0xff]
          %v511 = vld [vmem:[#allocation3 + $0x570] sm:$0xff]
          %v512 = vld [vmem:[#allocation3 + $0x578] sm:$0xff]
          %v513 = vld [vmem:[#allocation3 + $0x580] sm:$0xff]
          %v514 = vld [vmem:[#allocation3 + $0x588] sm:$0xff]
          %v515 = vld [vmem:[#allocation3 + $0x590] sm:$0xff]
          %v516 = vld [vmem:[#allocation3 + $0x598] sm:$0xff]
          %v517 = vld [vmem:[#allocation3 + $0x5a0] sm:$0xff]
          %v518 = vld [vmem:[#allocation3 + $0x5a8] sm:$0xff]
          %v519 = vld [vmem:[#allocation3 + $0x5b0] sm:$0xff]
          %v520 = vld [vmem:[#allocation3 + $0x5b8] sm:$0xff]
          %v521 = vld [vmem:[#allocation3 + $0x5c0] sm:$0xff]
          %v522 = vld [vmem:[#allocation3 + $0x5c8] sm:$0xff]
          %v523 = vld [vmem:[#allocation3 + $0x5d0] sm:$0xff]
          %v524 = vld [vmem:[#allocation3 + $0x5d8] sm:$0xff]
          %v525 = vld [vmem:[#allocation3 + $0x5e0] sm:$0xff]
          %v526 = vld [vmem:[#allocation3 + $0x5e8] sm:$0xff]
          %v527 = vld [vmem:[#allocation3 + $0x5f0] sm:$0xff]
          %v528 = vld [vmem:[#allocation3 + $0x5f8] sm:$0xff]
          %v529 = vld [vmem:[#allocation3 + $0x600] sm:$0xff]
          %v530 = vld [vmem:[#allocation3 + $0x608] sm:$0xff]
          %v531 = vld [vmem:[#allocation3 + $0x610] sm:$0xff]
          %v532 = vld [vmem:[#allocation3 + $0x618] sm:$0xff]
          %v533 = vld [vmem:[#allocation3 + $0x620] sm:$0xff]
          %v534 = vld [vmem:[#allocation3 + $0x628] sm:$0xff]
          %v535 = vld [vmem:[#allocation3 + $0x630] sm:$0xff]
          %v536 = vld [vmem:[#allocation3 + $0x638] sm:$0xff]
          %v537 = vld [vmem:[#allocation3 + $0x640] sm:$0xff]
          %v538 = vld [vmem:[#allocation3 + $0x648] sm:$0xff]
          %v539 = vld [vmem:[#allocation3 + $0x650] sm:$0xff]
          %v540 = vld [vmem:[#allocation3 + $0x658] sm:$0xff]
          %v541 = vld [vmem:[#allocation3 + $0x660] sm:$0xff]
          %v542 = vld [vmem:[#allocation3 + $0x668] sm:$0xff]
          %v543 = vld [vmem:[#allocation3 + $0x670] sm:$0xff]
          %v544 = vld [vmem:[#allocation3 + $0x678] sm:$0xff]
          %v545 = vld [vmem:[#allocation3 + $0x680] sm:$0xff]
          %v546 = vld [vmem:[#allocation3 + $0x688] sm:$0xff]
          %v547 = vld [vmem:[#allocation3 + $0x690] sm:$0xff]
          %v548 = vld [vmem:[#allocation3 + $0x698] sm:$0xff]
          %v549 = vld [vmem:[#allocation3 + $0x6a0] sm:$0xff]
          %v550 = vld [vmem:[#allocation3 + $0x6a8] sm:$0xff]
          %v551 = vld [vmem:[#allocation3 + $0x6b0] sm:$0xff]
          %v552 = vld [vmem:[#allocation3 + $0x6b8] sm:$0xff]
          %v553 = vld [vmem:[#allocation3 + $0x6c0] sm:$0xff]
          %v554 = vld [vmem:[#allocation3 + $0x6c8] sm:$0xff]
          %v555 = vld [vmem:[#allocation3 + $0x6d0] sm:$0xff]
          %v556 = vld [vmem:[#allocation3 + $0x6d8] sm:$0xff]
          %v557 = vld [vmem:[#allocation3 + $0x6e0] sm:$0xff]
          %v558 = vld [vmem:[#allocation3 + $0x6e8] sm:$0xff]
          %v559 = vld [vmem:[#allocation3 + $0x6f0] sm:$0xff]
          %v560 = vld [vmem:[#allocation3 + $0x6f8] sm:$0xff]
          %v561 = vadd.f32 %v337, %v338
          %v562 = vadd.f32 %v561, %v339
          %v563 = vadd.f32 %v562, %v340
          %v564 = vadd.f32 %v563, %v341
          %v565 = vadd.f32 %v564, %v342
          %v566 = vadd.f32 %v565, %v343
          %567 = vadd.xlane.f32.xlu0 %v566
          %v568 = vpop.xlane.xlu0 %567
          %v569 = vadd.f32 %v344, %v345
          %v570 = vadd.f32 %v569, %v346
          %v571 = vadd.f32 %v570, %v347
          %v572 = vadd.f32 %v571, %v348
          %v573 = vadd.f32 %v572, %v349
          %v574 = vadd.f32 %v573, %v350
          %575 = vadd.xlane.f32.xlu0 %v574
          %v576 = vpop.xlane.xlu0 %575
          %v577 = vadd.f32 %v351, %v352
          %v578 = vadd.f32 %v577, %v353
          %v579 = vadd.f32 %v578, %v354
          %v580 = vadd.f32 %v579, %v355
          %v581 = vadd.f32 %v580, %v356
          %v582 = vadd.f32 %v581, %v357
          %583 = vadd.xlane.f32.xlu0 %v582
          %v584 = vpop.xlane.xlu0 %583
          %v585 = vadd.f32 %v358, %v359
          %v586 = vadd.f32 %v585, %v360
          %v587 = vadd.f32 %v586, %v361
          %v588 = vadd.f32 %v587, %v362
          %v589 = vadd.f32 %v588, %v363
          %v590 = vadd.f32 %v589, %v364
          %591 = vadd.xlane.f32.xlu0 %v590
          %v592 = vpop.xlane.xlu0 %591
          %v593 = vadd.f32 %v365, %v366
          %v594 = vadd.f32 %v593, %v367
          %v595 = vadd.f32 %v594, %v368
          %v596 = vadd.f32 %v595, %v369
          %v597 = vadd.f32 %v596, %v370
          %v598 = vadd.f32 %v597, %v371
          %599 = vadd.xlane.f32.xlu0 %v598
          %v600 = vpop.xlane.xlu0 %599
          %v601 = vadd.f32 %v372, %v373
          %v602 = vadd.f32 %v601, %v374
          %v603 = vadd.f32 %v602, %v375
          %v604 = vadd.f32 %v603, %v376
          %v605 = vadd.f32 %v604, %v377
          %v606 = vadd.f32 %v605, %v378
          %607 = vadd.xlane.f32.xlu0 %v606
          %v608 = vpop.xlane.xlu0 %607
          %v609 = vadd.f32 %v379, %v380
          %v610 = vadd.f32 %v609, %v381
          %v611 = vadd.f32 %v610, %v382
          %v612 = vadd.f32 %v611, %v383
          %v613 = vadd.f32 %v612, %v384
          %v614 = vadd.f32 %v613, %v385
          %615 = vadd.xlane.f32.xlu0 %v614
          %v616 = vpop.xlane.xlu0 %615
          %v617 = vadd.f32 %v386, %v387
          %v618 = vadd.f32 %v617, %v388
          %v619 = vadd.f32 %v618, %v389
          %v620 = vadd.f32 %v619, %v390
          %v621 = vadd.f32 %v620, %v391
          %v622 = vadd.f32 %v621, %v392
          %623 = vadd.xlane.f32.xlu0 %v622
          %v624 = vpop.xlane.xlu0 %623
          %v625 = vadd.f32 %v393, %v394
          %v626 = vadd.f32 %v625, %v395
          %v627 = vadd.f32 %v626, %v396
          %v628 = vadd.f32 %v627, %v397
          %v629 = vadd.f32 %v628, %v398
          %v630 = vadd.f32 %v629, %v399
          %631 = vadd.xlane.f32.xlu0 %v630
          %v632 = vpop.xlane.xlu0 %631
          %v633 = vadd.f32 %v400, %v401
          %v634 = vadd.f32 %v633, %v402
          %v635 = vadd.f32 %v634, %v403
          %v636 = vadd.f32 %v635, %v404
          %v637 = vadd.f32 %v636, %v405
          %v638 = vadd.f32 %v637, %v406
          %639 = vadd.xlane.f32.xlu0 %v638
          %v640 = vpop.xlane.xlu0 %639
          %v641 = vadd.f32 %v407, %v408
          %v642 = vadd.f32 %v641, %v409
          %v643 = vadd.f32 %v642, %v410
          %v644 = vadd.f32 %v643, %v411
          %v645 = vadd.f32 %v644, %v412
          %v646 = vadd.f32 %v645, %v413
          %647 = vadd.xlane.f32.xlu0 %v646
          %v648 = vpop.xlane.xlu0 %647
          %v649 = vadd.f32 %v414, %v415
          %v650 = vadd.f32 %v649, %v416
          %v651 = vadd.f32 %v650, %v417
          %v652 = vadd.f32 %v651, %v418
          %v653 = vadd.f32 %v652, %v419
          %v654 = vadd.f32 %v653, %v420
          %655 = vadd.xlane.f32.xlu0 %v654
          %v656 = vpop.xlane.xlu0 %655
          %v657 = vadd.f32 %v421, %v422
          %v658 = vadd.f32 %v657, %v423
          %v659 = vadd.f32 %v658, %v424
          %v660 = vadd.f32 %v659, %v425
          %v661 = vadd.f32 %v660, %v426
          %v662 = vadd.f32 %v661, %v427
          %663 = vadd.xlane.f32.xlu0 %v662
          %v664 = vpop.xlane.xlu0 %663
          %v665 = vadd.f32 %v428, %v429
          %v666 = vadd.f32 %v665, %v430
          %v667 = vadd.f32 %v666, %v431
          %v668 = vadd.f32 %v667, %v432
          %v669 = vadd.f32 %v668, %v433
          %v670 = vadd.f32 %v669, %v434
          %671 = vadd.xlane.f32.xlu0 %v670
          %v672 = vpop.xlane.xlu0 %671
          %v673 = vadd.f32 %v435, %v436
          %v674 = vadd.f32 %v673, %v437
          %v675 = vadd.f32 %v674, %v438
          %v676 = vadd.f32 %v675, %v439
          %v677 = vadd.f32 %v676, %v440
          %v678 = vadd.f32 %v677, %v441
          %679 = vadd.xlane.f32.xlu0 %v678
          %v680 = vpop.xlane.xlu0 %679
          %v681 = vadd.f32 %v442, %v443
          %v682 = vadd.f32 %v681, %v444
          %v683 = vadd.f32 %v682, %v445
          %v684 = vadd.f32 %v683, %v446
          %v685 = vadd.f32 %v684, %v447
          %v686 = vadd.f32 %v685, %v448
          %687 = vadd.xlane.f32.xlu0 %v686
          %v688 = vpop.xlane.xlu0 %687
          %v689 = vadd.f32 %v449, %v450
          %v690 = vadd.f32 %v689, %v451
          %v691 = vadd.f32 %v690, %v452
          %v692 = vadd.f32 %v691, %v453
          %v693 = vadd.f32 %v692, %v454
          %v694 = vadd.f32 %v693, %v455
          %695 = vadd.xlane.f32.xlu0 %v694
          %v696 = vpop.xlane.xlu0 %695
          %v697 = vadd.f32 %v456, %v457
          %v698 = vadd.f32 %v697, %v458
          %v699 = vadd.f32 %v698, %v459
          %v700 = vadd.f32 %v699, %v460
          %v701 = vadd.f32 %v700, %v461
          %v702 = vadd.f32 %v701, %v462
          %703 = vadd.xlane.f32.xlu0 %v702
          %v704 = vpop.xlane.xlu0 %703
          %v705 = vadd.f32 %v463, %v464
          %v706 = vadd.f32 %v705, %v465
          %v707 = vadd.f32 %v706, %v466
          %v708 = vadd.f32 %v707, %v467
          %v709 = vadd.f32 %v708, %v468
          %v710 = vadd.f32 %v709, %v469
          %711 = vadd.xlane.f32.xlu0 %v710
          %v712 = vpop.xlane.xlu0 %711
          %v713 = vadd.f32 %v470, %v471
          %v714 = vadd.f32 %v713, %v472
          %v715 = vadd.f32 %v714, %v473
          %v716 = vadd.f32 %v715, %v474
          %v717 = vadd.f32 %v716, %v475
          %v718 = vadd.f32 %v717, %v476
          %719 = vadd.xlane.f32.xlu0 %v718
          %v720 = vpop.xlane.xlu0 %719
          %v721 = vadd.f32 %v477, %v478
          %v722 = vadd.f32 %v721, %v479
          %v723 = vadd.f32 %v722, %v480
          %v724 = vadd.f32 %v723, %v481
          %v725 = vadd.f32 %v724, %v482
          %v726 = vadd.f32 %v725, %v483
          %727 = vadd.xlane.f32.xlu0 %v726
          %v728 = vpop.xlane.xlu0 %727
          %v729 = vadd.f32 %v484, %v485
          %v730 = vadd.f32 %v729, %v486
          %v731 = vadd.f32 %v730, %v487
          %v732 = vadd.f32 %v731, %v488
          %v733 = vadd.f32 %v732, %v489
          %v734 = vadd.f32 %v733, %v490
          %735 = vadd.xlane.f32.xlu0 %v734
          %v736 = vpop.xlane.xlu0 %735
          %v737 = vadd.f32 %v491, %v492
          %v738 = vadd.f32 %v737, %v493
          %v739 = vadd.f32 %v738, %v494
          %v740 = vadd.f32 %v739, %v495
          %v741 = vadd.f32 %v740, %v496
          %v742 = vadd.f32 %v741, %v497
          %743 = vadd.xlane.f32.xlu0 %v742
          %v744 = vpop.xlane.xlu0 %743
          %v745 = vadd.f32 %v498, %v499
          %v746 = vadd.f32 %v745, %v500
          %v747 = vadd.f32 %v746, %v501
          %v748 = vadd.f32 %v747, %v502
          %v749 = vadd.f32 %v748, %v503
          %v750 = vadd.f32 %v749, %v504
          %751 = vadd.xlane.f32.xlu0 %v750
          %v752 = vpop.xlane.xlu0 %751
          %v753 = vadd.f32 %v505, %v506
          %v754 = vadd.f32 %v753, %v507
          %v755 = vadd.f32 %v754, %v508
          %v756 = vadd.f32 %v755, %v509
          %v757 = vadd.f32 %v756, %v510
          %v758 = vadd.f32 %v757, %v511
          %759 = vadd.xlane.f32.xlu0 %v758
          %v760 = vpop.xlane.xlu0 %759
          %v761 = vadd.f32 %v512, %v513
          %v762 = vadd.f32 %v761, %v514
          %v763 = vadd.f32 %v762, %v515
          %v764 = vadd.f32 %v763, %v516
          %v765 = vadd.f32 %v764, %v517
          %v766 = vadd.f32 %v765, %v518
          %767 = vadd.xlane.f32.xlu0 %v766
          %v768 = vpop.xlane.xlu0 %767
          %v769 = vadd.f32 %v519, %v520
          %v770 = vadd.f32 %v769, %v521
          %v771 = vadd.f32 %v770, %v522
          %v772 = vadd.f32 %v771, %v523
          %v773 = vadd.f32 %v772, %v524
          %v774 = vadd.f32 %v773, %v525
          %775 = vadd.xlane.f32.xlu0 %v774
          %v776 = vpop.xlane.xlu0 %775
          %v777 = vadd.f32 %v526, %v527
          %v778 = vadd.f32 %v777, %v528
          %v779 = vadd.f32 %v778, %v529
          %v780 = vadd.f32 %v779, %v530
          %v781 = vadd.f32 %v780, %v531
          %v782 = vadd.f32 %v781, %v532
          %783 = vadd.xlane.f32.xlu0 %v782
          %v784 = vpop.xlane.xlu0 %783
          %v785 = vadd.f32 %v533, %v534
          %v786 = vadd.f32 %v785, %v535
          %v787 = vadd.f32 %v786, %v536
          %v788 = vadd.f32 %v787, %v537
          %v789 = vadd.f32 %v788, %v538
          %v790 = vadd.f32 %v789, %v539
          %791 = vadd.xlane.f32.xlu0 %v790
          %v792 = vpop.xlane.xlu0 %791
          %v793 = vadd.f32 %v540, %v541
          %v794 = vadd.f32 %v793, %v542
          %v795 = vadd.f32 %v794, %v543
          %v796 = vadd.f32 %v795, %v544
          %v797 = vadd.f32 %v796, %v545
          %v798 = vadd.f32 %v797, %v546
          %799 = vadd.xlane.f32.xlu0 %v798
          %v800 = vpop.xlane.xlu0 %799
          %v801 = vadd.f32 %v547, %v548
          %v802 = vadd.f32 %v801, %v549
          %v803 = vadd.f32 %v802, %v550
          %v804 = vadd.f32 %v803, %v551
          %v805 = vadd.f32 %v804, %v552
          %v806 = vadd.f32 %v805, %v553
          %807 = vadd.xlane.f32.xlu0 %v806
          %v808 = vpop.xlane.xlu0 %807
          %v809 = vadd.f32 %v554, %v555
          %v810 = vadd.f32 %v809, %v556
          %v811 = vadd.f32 %v810, %v557
          %v812 = vadd.f32 %v811, %v558
          %v813 = vadd.f32 %v812, %v559
          %v814 = vadd.f32 %v813, %v560
          %815 = vadd.xlane.f32.xlu0 %v814
          %v816 = vpop.xlane.xlu0 %815
          %v817 = vmul.f32 %v337, %v337
          %v818 = vmul.f32 %v338, %v338
          %v819 = vmul.f32 %v339, %v339
          %v820 = vmul.f32 %v340, %v340
          %v821 = vmul.f32 %v341, %v341
          %v822 = vmul.f32 %v342, %v342
          %v823 = vmul.f32 %v343, %v343
          %v824 = vmul.f32 %v344, %v344
          %v825 = vmul.f32 %v345, %v345
          %v826 = vmul.f32 %v346, %v346
          %v827 = vmul.f32 %v347, %v347
          %v828 = vmul.f32 %v348, %v348
          %v829 = vmul.f32 %v349, %v349
          %v830 = vmul.f32 %v350, %v350
          %v831 = vmul.f32 %v351, %v351
          %v832 = vmul.f32 %v352, %v352
          %v833 = vmul.f32 %v353, %v353
          %v834 = vmul.f32 %v354, %v354
          %v835 = vmul.f32 %v355, %v355
          %v836 = vmul.f32 %v356, %v356
          %v837 = vmul.f32 %v357, %v357
          %v838 = vmul.f32 %v358, %v358
          %v839 = vmul.f32 %v359, %v359
          %v840 = vmul.f32 %v360, %v360
          %v841 = vmul.f32 %v361, %v361
          %v842 = vmul.f32 %v362, %v362
          %v843 = vmul.f32 %v363, %v363
          %v844 = vmul.f32 %v364, %v364
          %v845 = vmul.f32 %v365, %v365
          %v846 = vmul.f32 %v366, %v366
          %v847 = vmul.f32 %v367, %v367
          %v848 = vmul.f32 %v368, %v368
          %v849 = vmul.f32 %v369, %v369
          %v850 = vmul.f32 %v370, %v370
          %v851 = vmul.f32 %v371, %v371
          %v852 = vmul.f32 %v372, %v372
          %v853 = vmul.f32 %v373, %v373
          %v854 = vmul.f32 %v374, %v374
          %v855 = vmul.f32 %v375, %v375
          %v856 = vmul.f32 %v376, %v376
          %v857 = vmul.f32 %v377, %v377
          %v858 = vmul.f32 %v378, %v378
          %v859 = vmul.f32 %v379, %v379
          %v860 = vmul.f32 %v380, %v380
          %v861 = vmul.f32 %v381, %v381
          %v862 = vmul.f32 %v382, %v382
          %v863 = vmul.f32 %v383, %v383
          %v864 = vmul.f32 %v384, %v384
          %v865 = vmul.f32 %v385, %v385
          %v866 = vmul.f32 %v386, %v386
          %v867 = vmul.f32 %v387, %v387
          %v868 = vmul.f32 %v388, %v388
          %v869 = vmul.f32 %v389, %v389
          %v870 = vmul.f32 %v390, %v390
          %v871 = vmul.f32 %v391, %v391
          %v872 = vmul.f32 %v392, %v392
          %v873 = vmul.f32 %v393, %v393
          %v874 = vmul.f32 %v394, %v394
          %v875 = vmul.f32 %v395, %v395
          %v876 = vmul.f32 %v396, %v396
          %v877 = vmul.f32 %v397, %v397
          %v878 = vmul.f32 %v398, %v398
          %v879 = vmul.f32 %v399, %v399
          %v880 = vmul.f32 %v400, %v400
          %v881 = vmul.f32 %v401, %v401
          %v882 = vmul.f32 %v402, %v402
          %v883 = vmul.f32 %v403, %v403
          %v884 = vmul.f32 %v404, %v404
          %v885 = vmul.f32 %v405, %v405
          %v886 = vmul.f32 %v406, %v406
          %v887 = vmul.f32 %v407, %v407
          %v888 = vmul.f32 %v408, %v408
          %v889 = vmul.f32 %v409, %v409
          %v890 = vmul.f32 %v410, %v410
          %v891 = vmul.f32 %v411, %v411
          %v892 = vmul.f32 %v412, %v412
          %v893 = vmul.f32 %v413, %v413
          %v894 = vmul.f32 %v414, %v414
          %v895 = vmul.f32 %v415, %v415
          %v896 = vmul.f32 %v416, %v416
          %v897 = vmul.f32 %v417, %v417
          %v898 = vmul.f32 %v418, %v418
          %v899 = vmul.f32 %v419, %v419
          %v900 = vmul.f32 %v420, %v420
          %v901 = vmul.f32 %v421, %v421
          %v902 = vmul.f32 %v422, %v422
          %v903 = vmul.f32 %v423, %v423
          %v904 = vmul.f32 %v424, %v424
          %v905 = vmul.f32 %v425, %v425
          %v906 = vmul.f32 %v426, %v426
          %v907 = vmul.f32 %v427, %v427
          %v908 = vmul.f32 %v428, %v428
          %v909 = vmul.f32 %v429, %v429
          %v910 = vmul.f32 %v430, %v430
          %v911 = vmul.f32 %v431, %v431
          %v912 = vmul.f32 %v432, %v432
          %v913 = vmul.f32 %v433, %v433
          %v914 = vmul.f32 %v434, %v434
          %v915 = vmul.f32 %v435, %v435
          %v916 = vmul.f32 %v436, %v436
          %v917 = vmul.f32 %v437, %v437
          %v918 = vmul.f32 %v438, %v438
          %v919 = vmul.f32 %v439, %v439
          %v920 = vmul.f32 %v440, %v440
          %v921 = vmul.f32 %v441, %v441
          %v922 = vmul.f32 %v442, %v442
          %v923 = vmul.f32 %v443, %v443
          %v924 = vmul.f32 %v444, %v444
          %v925 = vmul.f32 %v445, %v445
          %v926 = vmul.f32 %v446, %v446
          %v927 = vmul.f32 %v447, %v447
          %v928 = vmul.f32 %v448, %v448
          %v929 = vmul.f32 %v449, %v449
          %v930 = vmul.f32 %v450, %v450
          %v931 = vmul.f32 %v451, %v451
          %v932 = vmul.f32 %v452, %v452
          %v933 = vmul.f32 %v453, %v453
          %v934 = vmul.f32 %v454, %v454
          %v935 = vmul.f32 %v455, %v455
          %v936 = vmul.f32 %v456, %v456
          %v937 = vmul.f32 %v457, %v457
          %v938 = vmul.f32 %v458, %v458
          %v939 = vmul.f32 %v459, %v459
          %v940 = vmul.f32 %v460, %v460
          %v941 = vmul.f32 %v461, %v461
          %v942 = vmul.f32 %v462, %v462
          %v943 = vmul.f32 %v463, %v463
          %v944 = vmul.f32 %v464, %v464
          %v945 = vmul.f32 %v465, %v465
          %v946 = vmul.f32 %v466, %v466
          %v947 = vmul.f32 %v467, %v467
          %v948 = vmul.f32 %v468, %v468
          %v949 = vmul.f32 %v469, %v469
          %v950 = vmul.f32 %v470, %v470
          %v951 = vmul.f32 %v471, %v471
          %v952 = vmul.f32 %v472, %v472
          %v953 = vmul.f32 %v473, %v473
          %v954 = vmul.f32 %v474, %v474
          %v955 = vmul.f32 %v475, %v475
          %v956 = vmul.f32 %v476, %v476
          %v957 = vmul.f32 %v477, %v477
          %v958 = vmul.f32 %v478, %v478
          %v959 = vmul.f32 %v479, %v479
          %v960 = vmul.f32 %v480, %v480
          %v961 = vmul.f32 %v481, %v481
          %v962 = vmul.f32 %v482, %v482
          %v963 = vmul.f32 %v483, %v483
          %v964 = vmul.f32 %v484, %v484
          %v965 = vmul.f32 %v485, %v485
          %v966 = vmul.f32 %v486, %v486
          %v967 = vmul.f32 %v487, %v487
          %v968 = vmul.f32 %v488, %v488
          %v969 = vmul.f32 %v489, %v489
          %v970 = vmul.f32 %v490, %v490
          %v971 = vmul.f32 %v491, %v491
          %v972 = vmul.f32 %v492, %v492
          %v973 = vmul.f32 %v493, %v493
          %v974 = vmul.f32 %v494, %v494
          %v975 = vmul.f32 %v495, %v495
          %v976 = vmul.f32 %v496, %v496
          %v977 = vmul.f32 %v497, %v497
          %v978 = vmul.f32 %v498, %v498
          %v979 = vmul.f32 %v499, %v499
          %v980 = vmul.f32 %v500, %v500
          %v981 = vmul.f32 %v501, %v501
          %v982 = vmul.f32 %v502, %v502
          %v983 = vmul.f32 %v503, %v503
          %v984 = vmul.f32 %v504, %v504
          %v985 = vmul.f32 %v505, %v505
          %v986 = vmul.f32 %v506, %v506
          %v987 = vmul.f32 %v507, %v507
          %v988 = vmul.f32 %v508, %v508
          %v989 = vmul.f32 %v509, %v509
          %v990 = vmul.f32 %v510, %v510
          %v991 = vmul.f32 %v511, %v511
          %v992 = vmul.f32 %v512, %v512
          %v993 = vmul.f32 %v513, %v513
          %v994 = vmul.f32 %v514, %v514
          %v995 = vmul.f32 %v515, %v515
          %v996 = vmul.f32 %v516, %v516
          %v997 = vmul.f32 %v517, %v517
          %v998 = vmul.f32 %v518, %v518
          %v999 = vmul.f32 %v519, %v519
          %v1000 = vmul.f32 %v520, %v520
          %v1001 = vmul.f32 %v521, %v521
          %v1002 = vmul.f32 %v522, %v522
          %v1003 = vmul.f32 %v523, %v523
          %v1004 = vmul.f32 %v524, %v524
          %v1005 = vmul.f32 %v525, %v525
          %v1006 = vmul.f32 %v526, %v526
          %v1007 = vmul.f32 %v527, %v527
          %v1008 = vmul.f32 %v528, %v528
          %v1009 = vmul.f32 %v529, %v529
          %v1010 = vmul.f32 %v530, %v530
          %v1011 = vmul.f32 %v531, %v531
          %v1012 = vmul.f32 %v532, %v532
          %v1013 = vmul.f32 %v533, %v533
          %v1014 = vmul.f32 %v534, %v534
          %v1015 = vmul.f32 %v535, %v535
          %v1016 = vmul.f32 %v536, %v536
          %v1017 = vmul.f32 %v537, %v537
          %v1018 = vmul.f32 %v538, %v538
          %v1019 = vmul.f32 %v539, %v539
          %v1020 = vmul.f32 %v540, %v540
          %v1021 = vmul.f32 %v541, %v541
          %v1022 = vmul.f32 %v542, %v542
          %v1023 = vmul.f32 %v543, %v543
          %v1024 = vmul.f32 %v544, %v544
          %v1025 = vmul.f32 %v545, %v545
          %v1026 = vmul.f32 %v546, %v546
          %v1027 = vmul.f32 %v547, %v547
          %v1028 = vmul.f32 %v548, %v548
          %v1029 = vmul.f32 %v549, %v549
          %v1030 = vmul.f32 %v550, %v550
          %v1031 = vmul.f32 %v551, %v551
          %v1032 = vmul.f32 %v552, %v552
          %v1033 = vmul.f32 %v553, %v553
          %v1034 = vmul.f32 %v554, %v554
          %v1035 = vmul.f32 %v555, %v555
          %v1036 = vmul.f32 %v556, %v556
          %v1037 = vmul.f32 %v557, %v557
          %v1038 = vmul.f32 %v558, %v558
          %v1039 = vmul.f32 %v559, %v559
          %v1040 = vmul.f32 %v560, %v560
          %v1041 = vadd.f32 %v817, %v818
          %v1042 = vadd.f32 %v1041, %v819
          %v1043 = vadd.f32 %v1042, %v820
          %v1044 = vadd.f32 %v1043, %v821
          %v1045 = vadd.f32 %v1044, %v822
          %v1046 = vadd.f32 %v1045, %v823
          %1047 = vadd.xlane.f32.xlu0 %v1046
          %v1048 = vpop.xlane.xlu0 %1047
          %v1049 = vadd.f32 %v824, %v825
          %v1050 = vadd.f32 %v1049, %v826
          %v1051 = vadd.f32 %v1050, %v827
          %v1052 = vadd.f32 %v1051, %v828
          %v1053 = vadd.f32 %v1052, %v829
          %v1054 = vadd.f32 %v1053, %v830
          %1055 = vadd.xlane.f32.xlu0 %v1054
          %v1056 = vpop.xlane.xlu0 %1055
          %v1057 = vadd.f32 %v831, %v832
          %v1058 = vadd.f32 %v1057, %v833
          %v1059 = vadd.f32 %v1058, %v834
          %v1060 = vadd.f32 %v1059, %v835
          %v1061 = vadd.f32 %v1060, %v836
          %v1062 = vadd.f32 %v1061, %v837
          %1063 = vadd.xlane.f32.xlu0 %v1062
          %v1064 = vpop.xlane.xlu0 %1063
          %v1065 = vadd.f32 %v838, %v839
          %v1066 = vadd.f32 %v1065, %v840
          %v1067 = vadd.f32 %v1066, %v841
          %v1068 = vadd.f32 %v1067, %v842
          %v1069 = vadd.f32 %v1068, %v843
          %v1070 = vadd.f32 %v1069, %v844
          %1071 = vadd.xlane.f32.xlu0 %v1070
          %v1072 = vpop.xlane.xlu0 %1071
          %v1073 = vadd.f32 %v845, %v846
          %v1074 = vadd.f32 %v1073, %v847
          %v1075 = vadd.f32 %v1074, %v848
          %v1076 = vadd.f32 %v1075, %v849
          %v1077 = vadd.f32 %v1076, %v850
          %v1078 = vadd.f32 %v1077, %v851
          %1079 = vadd.xlane.f32.xlu0 %v1078
          %v1080 = vpop.xlane.xlu0 %1079
          %v1081 = vadd.f32 %v852, %v853
          %v1082 = vadd.f32 %v1081, %v854
          %v1083 = vadd.f32 %v1082, %v855
          %v1084 = vadd.f32 %v1083, %v856
          %v1085 = vadd.f32 %v1084, %v857
          %v1086 = vadd.f32 %v1085, %v858
          %1087 = vadd.xlane.f32.xlu0 %v1086
          %v1088 = vpop.xlane.xlu0 %1087
          %v1089 = vadd.f32 %v859, %v860
          %v1090 = vadd.f32 %v1089, %v861
          %v1091 = vadd.f32 %v1090, %v862
          %v1092 = vadd.f32 %v1091, %v863
          %v1093 = vadd.f32 %v1092, %v864
          %v1094 = vadd.f32 %v1093, %v865
          %1095 = vadd.xlane.f32.xlu0 %v1094
          %v1096 = vpop.xlane.xlu0 %1095
          %v1097 = vadd.f32 %v866, %v867
          %v1098 = vadd.f32 %v1097, %v868
          %v1099 = vadd.f32 %v1098, %v869
          %v1100 = vadd.f32 %v1099, %v870
          %v1101 = vadd.f32 %v1100, %v871
          %v1102 = vadd.f32 %v1101, %v872
          %1103 = vadd.xlane.f32.xlu0 %v1102
          %v1104 = vpop.xlane.xlu0 %1103
          %v1105 = vadd.f32 %v873, %v874
          %v1106 = vadd.f32 %v1105, %v875
          %v1107 = vadd.f32 %v1106, %v876
          %v1108 = vadd.f32 %v1107, %v877
          %v1109 = vadd.f32 %v1108, %v878
          %v1110 = vadd.f32 %v1109, %v879
          %1111 = vadd.xlane.f32.xlu0 %v1110
          %v1112 = vpop.xlane.xlu0 %1111
          %v1113 = vadd.f32 %v880, %v881
          %v1114 = vadd.f32 %v1113, %v882
          %v1115 = vadd.f32 %v1114, %v883
          %v1116 = vadd.f32 %v1115, %v884
          %v1117 = vadd.f32 %v1116, %v885
          %v1118 = vadd.f32 %v1117, %v886
          %1119 = vadd.xlane.f32.xlu0 %v1118
          %v1120 = vpop.xlane.xlu0 %1119
          %v1121 = vadd.f32 %v887, %v888
          %v1122 = vadd.f32 %v1121, %v889
          %v1123 = vadd.f32 %v1122, %v890
          %v1124 = vadd.f32 %v1123, %v891
          %v1125 = vadd.f32 %v1124, %v892
          %v1126 = vadd.f32 %v1125, %v893
          %1127 = vadd.xlane.f32.xlu0 %v1126
          %v1128 = vpop.xlane.xlu0 %1127
          %v1129 = vadd.f32 %v894, %v895
          %v1130 = vadd.f32 %v1129, %v896
          %v1131 = vadd.f32 %v1130, %v897
          %v1132 = vadd.f32 %v1131, %v898
          %v1133 = vadd.f32 %v1132, %v899
          %v1134 = vadd.f32 %v1133, %v900
          %1135 = vadd.xlane.f32.xlu0 %v1134
          %v1136 = vpop.xlane.xlu0 %1135
          %v1137 = vadd.f32 %v901, %v902
          %v1138 = vadd.f32 %v1137, %v903
          %v1139 = vadd.f32 %v1138, %v904
          %v1140 = vadd.f32 %v1139, %v905
          %v1141 = vadd.f32 %v1140, %v906
          %v1142 = vadd.f32 %v1141, %v907
          %1143 = vadd.xlane.f32.xlu0 %v1142
          %v1144 = vpop.xlane.xlu0 %1143
          %v1145 = vadd.f32 %v908, %v909
          %v1146 = vadd.f32 %v1145, %v910
          %v1147 = vadd.f32 %v1146, %v911
          %v1148 = vadd.f32 %v1147, %v912
          %v1149 = vadd.f32 %v1148, %v913
          %v1150 = vadd.f32 %v1149, %v914
          %1151 = vadd.xlane.f32.xlu0 %v1150
          %v1152 = vpop.xlane.xlu0 %1151
          %v1153 = vadd.f32 %v915, %v916
          %v1154 = vadd.f32 %v1153, %v917
          %v1155 = vadd.f32 %v1154, %v918
          %v1156 = vadd.f32 %v1155, %v919
          %v1157 = vadd.f32 %v1156, %v920
          %v1158 = vadd.f32 %v1157, %v921
          %1159 = vadd.xlane.f32.xlu0 %v1158
          %v1160 = vpop.xlane.xlu0 %1159
          %v1161 = vadd.f32 %v922, %v923
          %v1162 = vadd.f32 %v1161, %v924
          %v1163 = vadd.f32 %v1162, %v925
          %v1164 = vadd.f32 %v1163, %v926
          %v1165 = vadd.f32 %v1164, %v927
          %v1166 = vadd.f32 %v1165, %v928
          %1167 = vadd.xlane.f32.xlu0 %v1166
          %v1168 = vpop.xlane.xlu0 %1167
          %v1169 = vadd.f32 %v929, %v930
          %v1170 = vadd.f32 %v1169, %v931
          %v1171 = vadd.f32 %v1170, %v932
          %v1172 = vadd.f32 %v1171, %v933
          %v1173 = vadd.f32 %v1172, %v934
          %v1174 = vadd.f32 %v1173, %v935
          %1175 = vadd.xlane.f32.xlu0 %v1174
          %v1176 = vpop.xlane.xlu0 %1175
          %v1177 = vadd.f32 %v936, %v937
          %v1178 = vadd.f32 %v1177, %v938
          %v1179 = vadd.f32 %v1178, %v939
          %v1180 = vadd.f32 %v1179, %v940
          %v1181 = vadd.f32 %v1180, %v941
          %v1182 = vadd.f32 %v1181, %v942
          %1183 = vadd.xlane.f32.xlu0 %v1182
          %v1184 = vpop.xlane.xlu0 %1183
          %v1185 = vadd.f32 %v943, %v944
          %v1186 = vadd.f32 %v1185, %v945
          %v1187 = vadd.f32 %v1186, %v946
          %v1188 = vadd.f32 %v1187, %v947
          %v1189 = vadd.f32 %v1188, %v948
          %v1190 = vadd.f32 %v1189, %v949
          %1191 = vadd.xlane.f32.xlu0 %v1190
          %v1192 = vpop.xlane.xlu0 %1191
          %v1193 = vadd.f32 %v950, %v951
          %v1194 = vadd.f32 %v1193, %v952
          %v1195 = vadd.f32 %v1194, %v953
          %v1196 = vadd.f32 %v1195, %v954
          %v1197 = vadd.f32 %v1196, %v955
          %v1198 = vadd.f32 %v1197, %v956
          %1199 = vadd.xlane.f32.xlu0 %v1198
          %v1200 = vpop.xlane.xlu0 %1199
          %v1201 = vadd.f32 %v957, %v958
          %v1202 = vadd.f32 %v1201, %v959
          %v1203 = vadd.f32 %v1202, %v960
          %v1204 = vadd.f32 %v1203, %v961
          %v1205 = vadd.f32 %v1204, %v962
          %v1206 = vadd.f32 %v1205, %v963
          %1207 = vadd.xlane.f32.xlu0 %v1206
          %v1208 = vpop.xlane.xlu0 %1207
          %v1209 = vadd.f32 %v964, %v965
          %v1210 = vadd.f32 %v1209, %v966
          %v1211 = vadd.f32 %v1210, %v967
          %v1212 = vadd.f32 %v1211, %v968
          %v1213 = vadd.f32 %v1212, %v969
          %v1214 = vadd.f32 %v1213, %v970
          %1215 = vadd.xlane.f32.xlu0 %v1214
          %v1216 = vpop.xlane.xlu0 %1215
          %v1217 = vadd.f32 %v971, %v972
          %v1218 = vadd.f32 %v1217, %v973
          %v1219 = vadd.f32 %v1218, %v974
          %v1220 = vadd.f32 %v1219, %v975
          %v1221 = vadd.f32 %v1220, %v976
          %v1222 = vadd.f32 %v1221, %v977
          %1223 = vadd.xlane.f32.xlu0 %v1222
          %v1224 = vpop.xlane.xlu0 %1223
          %v1225 = vadd.f32 %v978, %v979
          %v1226 = vadd.f32 %v1225, %v980
          %v1227 = vadd.f32 %v1226, %v981
          %v1228 = vadd.f32 %v1227, %v982
          %v1229 = vadd.f32 %v1228, %v983
          %v1230 = vadd.f32 %v1229, %v984
          %1231 = vadd.xlane.f32.xlu0 %v1230
          %v1232 = vpop.xlane.xlu0 %1231
          %v1233 = vadd.f32 %v985, %v986
          %v1234 = vadd.f32 %v1233, %v987
          %v1235 = vadd.f32 %v1234, %v988
          %v1236 = vadd.f32 %v1235, %v989
          %v1237 = vadd.f32 %v1236, %v990
          %v1238 = vadd.f32 %v1237, %v991
          %1239 = vadd.xlane.f32.xlu0 %v1238
          %v1240 = vpop.xlane.xlu0 %1239
          %v1241 = vadd.f32 %v992, %v993
          %v1242 = vadd.f32 %v1241, %v994
          %v1243 = vadd.f32 %v1242, %v995
          %v1244 = vadd.f32 %v1243, %v996
          %v1245 = vadd.f32 %v1244, %v997
          %v1246 = vadd.f32 %v1245, %v998
          %1247 = vadd.xlane.f32.xlu0 %v1246
          %v1248 = vpop.xlane.xlu0 %1247
          %v1249 = vadd.f32 %v999, %v1000
          %v1250 = vadd.f32 %v1249, %v1001
          %v1251 = vadd.f32 %v1250, %v1002
          %v1252 = vadd.f32 %v1251, %v1003
          %v1253 = vadd.f32 %v1252, %v1004
          %v1254 = vadd.f32 %v1253, %v1005
          %1255 = vadd.xlane.f32.xlu0 %v1254
          %v1256 = vpop.xlane.xlu0 %1255
          %v1257 = vadd.f32 %v1006, %v1007
          %v1258 = vadd.f32 %v1257, %v1008
          %v1259 = vadd.f32 %v1258, %v1009
          %v1260 = vadd.f32 %v1259, %v1010
          %v1261 = vadd.f32 %v1260, %v1011
          %v1262 = vadd.f32 %v1261, %v1012
          %1263 = vadd.xlane.f32.xlu0 %v1262
          %v1264 = vpop.xlane.xlu0 %1263
          %v1265 = vadd.f32 %v1013, %v1014
          %v1266 = vadd.f32 %v1265, %v1015
          %v1267 = vadd.f32 %v1266, %v1016
          %v1268 = vadd.f32 %v1267, %v1017
          %v1269 = vadd.f32 %v1268, %v1018
          %v1270 = vadd.f32 %v1269, %v1019
          %1271 = vadd.xlane.f32.xlu0 %v1270
          %v1272 = vpop.xlane.xlu0 %1271
          %v1273 = vadd.f32 %v1020, %v1021
          %v1274 = vadd.f32 %v1273, %v1022
          %v1275 = vadd.f32 %v1274, %v1023
          %v1276 = vadd.f32 %v1275, %v1024
          %v1277 = vadd.f32 %v1276, %v1025
          %v1278 = vadd.f32 %v1277, %v1026
          %1279 = vadd.xlane.f32.xlu0 %v1278
          %v1280 = vpop.xlane.xlu0 %1279
          %v1281 = vadd.f32 %v1027, %v1028
          %v1282 = vadd.f32 %v1281, %v1029
          %v1283 = vadd.f32 %v1282, %v1030
          %v1284 = vadd.f32 %v1283, %v1031
          %v1285 = vadd.f32 %v1284, %v1032
          %v1286 = vadd.f32 %v1285, %v1033
          %1287 = vadd.xlane.f32.xlu0 %v1286
          %v1288 = vpop.xlane.xlu0 %1287
          %v1289 = vadd.f32 %v1034, %v1035
          %v1290 = vadd.f32 %v1289, %v1036
          %v1291 = vadd.f32 %v1290, %v1037
          %v1292 = vadd.f32 %v1291, %v1038
          %v1293 = vadd.f32 %v1292, %v1039
          %v1294 = vadd.f32 %v1293, %v1040
          %1295 = vadd.xlane.f32.xlu0 %v1294
          %v1296 = vpop.xlane.xlu0 %1295
          %v1297 = vmul.f32 %v568, 0.0012755102
          %v1298 = vmul.f32 %v576, 0.0012755102
          %v1299 = vmul.f32 %v584, 0.0012755102
          %v1300 = vmul.f32 %v592, 0.0012755102
          %v1301 = vmul.f32 %v600, 0.0012755102
          %v1302 = vmul.f32 %v608, 0.0012755102
          %v1303 = vmul.f32 %v616, 0.0012755102
          %v1304 = vmul.f32 %v624, 0.0012755102
          %v1305 = vmul.f32 %v632, 0.0012755102
          %v1306 = vmul.f32 %v640, 0.0012755102
          %v1307 = vmul.f32 %v648, 0.0012755102
          %v1308 = vmul.f32 %v656, 0.0012755102
          %v1309 = vmul.f32 %v664, 0.0012755102
          %v1310 = vmul.f32 %v672, 0.0012755102
          %v1311 = vmul.f32 %v680, 0.0012755102
          %v1312 = vmul.f32 %v688, 0.0012755102
          %v1313 = vmul.f32 %v696, 0.0012755102
          %v1314 = vmul.f32 %v704, 0.0012755102
          %v1315 = vmul.f32 %v712, 0.0012755102
          %v1316 = vmul.f32 %v720, 0.0012755102
          %v1317 = vmul.f32 %v728, 0.0012755102
          %v1318 = vmul.f32 %v736, 0.0012755102
          %v1319 = vmul.f32 %v744, 0.0012755102
          %v1320 = vmul.f32 %v752, 0.0012755102
          %v1321 = vmul.f32 %v760, 0.0012755102
          %v1322 = vmul.f32 %v768, 0.0012755102
          %v1323 = vmul.f32 %v776, 0.0012755102
          %v1324 = vmul.f32 %v784, 0.0012755102
          %v1325 = vmul.f32 %v792, 0.0012755102
          %v1326 = vmul.f32 %v800, 0.0012755102
          %v1327 = vmul.f32 %v808, 0.0012755102
          %v1328 = vmul.f32 %v816, 0.0012755102
          %v1329 = vmul.f32 %v1048, 0.0012755102
          %v1330 = vmul.f32 %v1056, 0.0012755102
          %v1331 = vmul.f32 %v1064, 0.0012755102
          %v1332 = vmul.f32 %v1072, 0.0012755102
          %v1333 = vmul.f32 %v1080, 0.0012755102
          %v1334 = vmul.f32 %v1088, 0.0012755102
          %v1335 = vmul.f32 %v1096, 0.0012755102
          %v1336 = vmul.f32 %v1104, 0.0012755102
          %v1337 = vmul.f32 %v1112, 0.0012755102
          %v1338 = vmul.f32 %v1120, 0.0012755102
          %v1339 = vmul.f32 %v1128, 0.0012755102
          %v1340 = vmul.f32 %v1136, 0.0012755102
          %v1341 = vmul.f32 %v1144, 0.0012755102
          %v1342 = vmul.f32 %v1152, 0.0012755102
          %v1343 = vmul.f32 %v1160, 0.0012755102
          %v1344 = vmul.f32 %v1168, 0.0012755102
          %v1345 = vmul.f32 %v1176, 0.0012755102
          %v1346 = vmul.f32 %v1184, 0.0012755102
          %v1347 = vmul.f32 %v1192, 0.0012755102
          %v1348 = vmul.f32 %v1200, 0.0012755102
          %v1349 = vmul.f32 %v1208, 0.0012755102
          %v1350 = vmul.f32 %v1216, 0.0012755102
          %v1351 = vmul.f32 %v1224, 0.0012755102
          %v1352 = vmul.f32 %v1232, 0.0012755102
          %v1353 = vmul.f32 %v1240, 0.0012755102
          %v1354 = vmul.f32 %v1248, 0.0012755102
          %v1355 = vmul.f32 %v1256, 0.0012755102
          %v1356 = vmul.f32 %v1264, 0.0012755102
          %v1357 = vmul.f32 %v1272, 0.0012755102
          %v1358 = vmul.f32 %v1280, 0.0012755102
          %v1359 = vmul.f32 %v1288, 0.0012755102
          %v1360 = vmul.f32 %v1296, 0.0012755102
          %v1361 = vmul.f32 %v1297, %v1297
          %v1362 = vmul.f32 %v1298, %v1298
          %v1363 = vmul.f32 %v1299, %v1299
          %v1364 = vmul.f32 %v1300, %v1300
          %v1365 = vmul.f32 %v1301, %v1301
          %v1366 = vmul.f32 %v1302, %v1302
          %v1367 = vmul.f32 %v1303, %v1303
          %v1368 = vmul.f32 %v1304, %v1304
          %v1369 = vmul.f32 %v1305, %v1305
          %v1370 = vmul.f32 %v1306, %v1306
          %v1371 = vmul.f32 %v1307, %v1307
          %v1372 = vmul.f32 %v1308, %v1308
          %v1373 = vmul.f32 %v1309, %v1309
          %v1374 = vmul.f32 %v1310, %v1310
          %v1375 = vmul.f32 %v1311, %v1311
          %v1376 = vmul.f32 %v1312, %v1312
          %v1377 = vmul.f32 %v1313, %v1313
          %v1378 = vmul.f32 %v1314, %v1314
          %v1379 = vmul.f32 %v1315, %v1315
          %v1380 = vmul.f32 %v1316, %v1316
          %v1381 = vmul.f32 %v1317, %v1317
          %v1382 = vmul.f32 %v1318, %v1318
          %v1383 = vmul.f32 %v1319, %v1319
          %v1384 = vmul.f32 %v1320, %v1320
          %v1385 = vmul.f32 %v1321, %v1321
          %v1386 = vmul.f32 %v1322, %v1322
          %v1387 = vmul.f32 %v1323, %v1323
          %v1388 = vmul.f32 %v1324, %v1324
          %v1389 = vmul.f32 %v1325, %v1325
          %v1390 = vmul.f32 %v1326, %v1326
          %v1391 = vmul.f32 %v1327, %v1327
          %v1392 = vmul.f32 %v1328, %v1328
          %v1393 = vsub.f32 %v1329, %v1361
          %v1394 = vsub.f32 %v1330, %v1362
          %v1395 = vsub.f32 %v1331, %v1363
          %v1396 = vsub.f32 %v1332, %v1364
          %v1397 = vsub.f32 %v1333, %v1365
          %v1398 = vsub.f32 %v1334, %v1366
          %v1399 = vsub.f32 %v1335, %v1367
          %v1400 = vsub.f32 %v1336, %v1368
          %v1401 = vsub.f32 %v1337, %v1369
          %v1402 = vsub.f32 %v1338, %v1370
          %v1403 = vsub.f32 %v1339, %v1371
          %v1404 = vsub.f32 %v1340, %v1372
          %v1405 = vsub.f32 %v1341, %v1373
          %v1406 = vsub.f32 %v1342, %v1374
          %v1407 = vsub.f32 %v1343, %v1375
          %v1408 = vsub.f32 %v1344, %v1376
          %v1409 = vsub.f32 %v1345, %v1377
          %v1410 = vsub.f32 %v1346, %v1378
          %v1411 = vsub.f32 %v1347, %v1379
          %v1412 = vsub.f32 %v1348, %v1380
          %v1413 = vsub.f32 %v1349, %v1381
          %v1414 = vsub.f32 %v1350, %v1382
          %v1415 = vsub.f32 %v1351, %v1383
          %v1416 = vsub.f32 %v1352, %v1384
          %v1417 = vsub.f32 %v1353, %v1385
          %v1418 = vsub.f32 %v1354, %v1386
          %v1419 = vsub.f32 %v1355, %v1387
          %v1420 = vsub.f32 %v1356, %v1388
          %v1421 = vsub.f32 %v1357, %v1389
          %v1422 = vsub.f32 %v1358, %v1390
          %v1423 = vsub.f32 %v1359, %v1391
          %v1424 = vsub.f32 %v1360, %v1392
          %v1425 = vmax.f32 %v1393, 0.0
          %v1426 = vmax.f32 %v1394, 0.0
          %v1427 = vmax.f32 %v1395, 0.0
          %v1428 = vmax.f32 %v1396, 0.0
          %v1429 = vmax.f32 %v1397, 0.0
          %v1430 = vmax.f32 %v1398, 0.0
          %v1431 = vmax.f32 %v1399, 0.0
          %v1432 = vmax.f32 %v1400, 0.0
          %v1433 = vmax.f32 %v1401, 0.0
          %v1434 = vmax.f32 %v1402, 0.0
          %v1435 = vmax.f32 %v1403, 0.0
          %v1436 = vmax.f32 %v1404, 0.0
          %v1437 = vmax.f32 %v1405, 0.0
          %v1438 = vmax.f32 %v1406, 0.0
          %v1439 = vmax.f32 %v1407, 0.0
          %v1440 = vmax.f32 %v1408, 0.0
          %v1441 = vmax.f32 %v1409, 0.0
          %v1442 = vmax.f32 %v1410, 0.0
          %v1443 = vmax.f32 %v1411, 0.0
          %v1444 = vmax.f32 %v1412, 0.0
          %v1445 = vmax.f32 %v1413, 0.0
          %v1446 = vmax.f32 %v1414, 0.0
          %v1447 = vmax.f32 %v1415, 0.0
          %v1448 = vmax.f32 %v1416, 0.0
          %v1449 = vmax.f32 %v1417, 0.0
          %v1450 = vmax.f32 %v1418, 0.0
          %v1451 = vmax.f32 %v1419, 0.0
          %v1452 = vmax.f32 %v1420, 0.0
          %v1453 = vmax.f32 %v1421, 0.0
          %v1454 = vmax.f32 %v1422, 0.0
          %v1455 = vmax.f32 %v1423, 0.0
          %v1456 = vmax.f32 %v1424, 0.0
          %v1457 = vld [vmem:[%s2] sm:$0xff]
          %v1458 = vld [vmem:[%s2 + $0x8] sm:$0xff]
          %v1459 = vld [vmem:[%s2 + $0x10] sm:$0xff]
          %v1460 = vld [vmem:[%s2 + $0x18] sm:$0xff]
          %v1461 = vld [vmem:[%s2 + $0x20] sm:$0xff]
          %v1462 = vld [vmem:[%s2 + $0x28] sm:$0xff]
          %v1463 = vld [vmem:[%s2 + $0x30] sm:$0xff]
          %v1464 = vld [vmem:[%s2 + $0x38] sm:$0xff]
          %v1465 = vld [vmem:[%s2 + $0x40] sm:$0xff]
          %v1466 = vld [vmem:[%s2 + $0x48] sm:$0xff]
          %v1467 = vld [vmem:[%s2 + $0x50] sm:$0xff]
          %v1468 = vld [vmem:[%s2 + $0x58] sm:$0xff]
          %v1469 = vld [vmem:[%s2 + $0x60] sm:$0xff]
          %v1470 = vld [vmem:[%s2 + $0x68] sm:$0xff]
          %v1471 = vld [vmem:[%s2 + $0x70] sm:$0xff]
          %v1472 = vld [vmem:[%s2 + $0x78] sm:$0xff]
          %v1473 = vld [vmem:[%s2 + $0x80] sm:$0xff]
          %v1474 = vld [vmem:[%s2 + $0x88] sm:$0xff]
          %v1475 = vld [vmem:[%s2 + $0x90] sm:$0xff]
          %v1476 = vld [vmem:[%s2 + $0x98] sm:$0xff]
          %v1477 = vld [vmem:[%s2 + $0xa0] sm:$0xff]
          %v1478 = vld [vmem:[%s2 + $0xa8] sm:$0xff]
          %v1479 = vld [vmem:[%s2 + $0xb0] sm:$0xff]
          %v1480 = vld [vmem:[%s2 + $0xb8] sm:$0xff]
          %v1481 = vld [vmem:[%s2 + $0xc0] sm:$0xff]
          %v1482 = vld [vmem:[%s2 + $0xc8] sm:$0xff]
          %v1483 = vld [vmem:[%s2 + $0xd0] sm:$0xff]
          %v1484 = vld [vmem:[%s2 + $0xd8] sm:$0xff]
          %v1485 = vld [vmem:[%s2 + $0xe0] sm:$0xff]
          %v1486 = vld [vmem:[%s2 + $0xe8] sm:$0xff]
          %v1487 = vld [vmem:[%s2 + $0xf0] sm:$0xff]
          %v1488 = vld [vmem:[%s2 + $0xf8] sm:$0xff]
          %v1489 = vadd.f32 %v1425, 1e-05
          %v1490 = vadd.f32 %v1426, 1e-05
          %v1491 = vadd.f32 %v1427, 1e-05
          %v1492 = vadd.f32 %v1428, 1e-05
          %v1493 = vadd.f32 %v1429, 1e-05
          %v1494 = vadd.f32 %v1430, 1e-05
          %v1495 = vadd.f32 %v1431, 1e-05
          %v1496 = vadd.f32 %v1432, 1e-05
          %v1497 = vadd.f32 %v1433, 1e-05
          %v1498 = vadd.f32 %v1434, 1e-05
          %v1499 = vadd.f32 %v1435, 1e-05
          %v1500 = vadd.f32 %v1436, 1e-05
          %v1501 = vadd.f32 %v1437, 1e-05
          %v1502 = vadd.f32 %v1438, 1e-05
          %v1503 = vadd.f32 %v1439, 1e-05
          %v1504 = vadd.f32 %v1440, 1e-05
          %v1505 = vadd.f32 %v1441, 1e-05
          %v1506 = vadd.f32 %v1442, 1e-05
          %v1507 = vadd.f32 %v1443, 1e-05
          %v1508 = vadd.f32 %v1444, 1e-05
          %v1509 = vadd.f32 %v1445, 1e-05
          %v1510 = vadd.f32 %v1446, 1e-05
          %v1511 = vadd.f32 %v1447, 1e-05
          %v1512 = vadd.f32 %v1448, 1e-05
          %v1513 = vadd.f32 %v1449, 1e-05
          %v1514 = vadd.f32 %v1450, 1e-05
          %v1515 = vadd.f32 %v1451, 1e-05
          %v1516 = vadd.f32 %v1452, 1e-05
          %v1517 = vadd.f32 %v1453, 1e-05
          %v1518 = vadd.f32 %v1454, 1e-05
          %v1519 = vadd.f32 %v1455, 1e-05
          %v1520 = vadd.f32 %v1456, 1e-05
          %v1521 = vrsqrt.pop %v1489
          %v1522 = vrsqrt.pop %v1490
          %v1523 = vrsqrt.pop %v1491
          %v1524 = vrsqrt.pop %v1492
          %v1525 = vrsqrt.pop %v1493
          %v1526 = vrsqrt.pop %v1494
          %v1527 = vrsqrt.pop %v1495
          %v1528 = vrsqrt.pop %v1496
          %v1529 = vrsqrt.pop %v1497
          %v1530 = vrsqrt.pop %v1498
          %v1531 = vrsqrt.pop %v1499
          %v1532 = vrsqrt.pop %v1500
          %v1533 = vrsqrt.pop %v1501
          %v1534 = vrsqrt.pop %v1502
          %v1535 = vrsqrt.pop %v1503
          %v1536 = vrsqrt.pop %v1504
          %v1537 = vrsqrt.pop %v1505
          %v1538 = vrsqrt.pop %v1506
          %v1539 = vrsqrt.pop %v1507
          %v1540 = vrsqrt.pop %v1508
          %v1541 = vrsqrt.pop %v1509
          %v1542 = vrsqrt.pop %v1510
          %v1543 = vrsqrt.pop %v1511
          %v1544 = vrsqrt.pop %v1512
          %v1545 = vrsqrt.pop %v1513
          %v1546 = vrsqrt.pop %v1514
          %v1547 = vrsqrt.pop %v1515
          %v1548 = vrsqrt.pop %v1516
          %v1549 = vrsqrt.pop %v1517
          %v1550 = vrsqrt.pop %v1518
          %v1551 = vrsqrt.pop %v1519
          %v1552 = vrsqrt.pop %v1520
          %v1553 = vmul.f32 %v1457, %v1521
          %v1554 = vmul.f32 %v1458, %v1522
          %v1555 = vmul.f32 %v1459, %v1523
          %v1556 = vmul.f32 %v1460, %v1524
          %v1557 = vmul.f32 %v1461, %v1525
          %v1558 = vmul.f32 %v1462, %v1526
          %v1559 = vmul.f32 %v1463, %v1527
          %v1560 = vmul.f32 %v1464, %v1528
          %v1561 = vmul.f32 %v1465, %v1529
          %v1562 = vmul.f32 %v1466, %v1530
          %v1563 = vmul.f32 %v1467, %v1531
          %v1564 = vmul.f32 %v1468, %v1532
          %v1565 = vmul.f32 %v1469, %v1533
          %v1566 = vmul.f32 %v1470, %v1534
          %v1567 = vmul.f32 %v1471, %v1535
          %v1568 = vmul.f32 %v1472, %v1536
          %v1569 = vmul.f32 %v1473, %v1537
          %v1570 = vmul.f32 %v1474, %v1538
          %v1571 = vmul.f32 %v1475, %v1539
          %v1572 = vmul.f32 %v1476, %v1540
          %v1573 = vmul.f32 %v1477, %v1541
          %v1574 = vmul.f32 %v1478, %v1542
          %v1575 = vmul.f32 %v1479, %v1543
          %v1576 = vmul.f32 %v1480, %v1544
          %v1577 = vmul.f32 %v1481, %v1545
          %v1578 = vmul.f32 %v1482, %v1546
          %v1579 = vmul.f32 %v1483, %v1547
          %v1580 = vmul.f32 %v1484, %v1548
          %v1581 = vmul.f32 %v1485, %v1549
          %v1582 = vmul.f32 %v1486, %v1550
          %v1583 = vmul.f32 %v1487, %v1551
          %v1584 = vmul.f32 %v1488, %v1552
          %v1585 = vld [vmem:[%s3] sm:$0xff]
          %v1586 = vld [vmem:[%s3 + $0x8] sm:$0xff]
          %v1587 = vld [vmem:[%s3 + $0x10] sm:$0xff]
          %v1588 = vld [vmem:[%s3 + $0x18] sm:$0xff]
          %v1589 = vld [vmem:[%s3 + $0x20] sm:$0xff]
          %v1590 = vld [vmem:[%s3 + $0x28] sm:$0xff]
          %v1591 = vld [vmem:[%s3 + $0x30] sm:$0xff]
          %v1592 = vld [vmem:[%s3 + $0x38] sm:$0xff]
          %v1593 = vld [vmem:[%s3 + $0x40] sm:$0xff]
          %v1594 = vld [vmem:[%s3 + $0x48] sm:$0xff]
          %v1595 = vld [vmem:[%s3 + $0x50] sm:$0xff]
          %v1596 = vld [vmem:[%s3 + $0x58] sm:$0xff]
          %v1597 = vld [vmem:[%s3 + $0x60] sm:$0xff]
          %v1598 = vld [vmem:[%s3 + $0x68] sm:$0xff]
          %v1599 = vld [vmem:[%s3 + $0x70] sm:$0xff]
          %v1600 = vld [vmem:[%s3 + $0x78] sm:$0xff]
          %v1601 = vld [vmem:[%s3 + $0x80] sm:$0xff]
          %v1602 = vld [vmem:[%s3 + $0x88] sm:$0xff]
          %v1603 = vld [vmem:[%s3 + $0x90] sm:$0xff]
          %v1604 = vld [vmem:[%s3 + $0x98] sm:$0xff]
          %v1605 = vld [vmem:[%s3 + $0xa0] sm:$0xff]
          %v1606 = vld [vmem:[%s3 + $0xa8] sm:$0xff]
          %v1607 = vld [vmem:[%s3 + $0xb0] sm:$0xff]
          %v1608 = vld [vmem:[%s3 + $0xb8] sm:$0xff]
          %v1609 = vld [vmem:[%s3 + $0xc0] sm:$0xff]
          %v1610 = vld [vmem:[%s3 + $0xc8] sm:$0xff]
          %v1611 = vld [vmem:[%s3 + $0xd0] sm:$0xff]
          %v1612 = vld [vmem:[%s3 + $0xd8] sm:$0xff]
          %v1613 = vld [vmem:[%s3 + $0xe0] sm:$0xff]
          %v1614 = vld [vmem:[%s3 + $0xe8] sm:$0xff]
          %v1615 = vld [vmem:[%s3 + $0xf0] sm:$0xff]
          %v1616 = vld [vmem:[%s3 + $0xf8] sm:$0xff]
          %v1617 = vmul.f32 %v1297, %v1553
          %v1618 = vmul.f32 %v1298, %v1554
          %v1619 = vmul.f32 %v1299, %v1555
          %v1620 = vmul.f32 %v1300, %v1556
          %v1621 = vmul.f32 %v1301, %v1557
          %v1622 = vmul.f32 %v1302, %v1558
          %v1623 = vmul.f32 %v1303, %v1559
          %v1624 = vmul.f32 %v1304, %v1560
          %v1625 = vmul.f32 %v1305, %v1561
          %v1626 = vmul.f32 %v1306, %v1562
          %v1627 = vmul.f32 %v1307, %v1563
          %v1628 = vmul.f32 %v1308, %v1564
          %v1629 = vmul.f32 %v1309, %v1565
          %v1630 = vmul.f32 %v1310, %v1566
          %v1631 = vmul.f32 %v1311, %v1567
          %v1632 = vmul.f32 %v1312, %v1568
          %v1633 = vmul.f32 %v1313, %v1569
          %v1634 = vmul.f32 %v1314, %v1570
          %v1635 = vmul.f32 %v1315, %v1571
          %v1636 = vmul.f32 %v1316, %v1572
          %v1637 = vmul.f32 %v1317, %v1573
          %v1638 = vmul.f32 %v1318, %v1574
          %v1639 = vmul.f32 %v1319, %v1575
          %v1640 = vmul.f32 %v1320, %v1576
          %v1641 = vmul.f32 %v1321, %v1577
          %v1642 = vmul.f32 %v1322, %v1578
          %v1643 = vmul.f32 %v1323, %v1579
          %v1644 = vmul.f32 %v1324, %v1580
          %v1645 = vmul.f32 %v1325, %v1581
          %v1646 = vmul.f32 %v1326, %v1582
          %v1647 = vmul.f32 %v1327, %v1583
          %v1648 = vmul.f32 %v1328, %v1584
          %v1649 = vsub.f32 %v1585, %v1617
          %v1650 = vsub.f32 %v1586, %v1618
          %v1651 = vsub.f32 %v1587, %v1619
          %v1652 = vsub.f32 %v1588, %v1620
          %v1653 = vsub.f32 %v1589, %v1621
          %v1654 = vsub.f32 %v1590, %v1622
          %v1655 = vsub.f32 %v1591, %v1623
          %v1656 = vsub.f32 %v1592, %v1624
          %v1657 = vsub.f32 %v1593, %v1625
          %v1658 = vsub.f32 %v1594, %v1626
          %v1659 = vsub.f32 %v1595, %v1627
          %v1660 = vsub.f32 %v1596, %v1628
          %v1661 = vsub.f32 %v1597, %v1629
          %v1662 = vsub.f32 %v1598, %v1630
          %v1663 = vsub.f32 %v1599, %v1631
          %v1664 = vsub.f32 %v1600, %v1632
          %v1665 = vsub.f32 %v1601, %v1633
          %v1666 = vsub.f32 %v1602, %v1634
          %v1667 = vsub.f32 %v1603, %v1635
          %v1668 = vsub.f32 %v1604, %v1636
          %v1669 = vsub.f32 %v1605, %v1637
          %v1670 = vsub.f32 %v1606, %v1638
          %v1671 = vsub.f32 %v1607, %v1639
          %v1672 = vsub.f32 %v1608, %v1640
          %v1673 = vsub.f32 %v1609, %v1641
          %v1674 = vsub.f32 %v1610, %v1642
          %v1675 = vsub.f32 %v1611, %v1643
          %v1676 = vsub.f32 %v1612, %v1644
          %v1677 = vsub.f32 %v1613, %v1645
          %v1678 = vsub.f32 %v1614, %v1646
          %v1679 = vsub.f32 %v1615, %v1647
          %v1680 = vsub.f32 %v1616, %v1648
          %1682 = vset.pattern.permute.xlu0 0
          %1683 = vperm.xlu0 %1682, %v1553
          %v1684 = vpop.permute.xlu0 %1683
          %1687 = vset.pattern.permute.xlu0 0
          %1688 = vperm.xlu0 %1687, %v1554
          %v1689 = vpop.permute.xlu0 %1688
          %1692 = vset.pattern.permute.xlu0 0
          %1693 = vperm.xlu0 %1692, %v1555
          %v1694 = vpop.permute.xlu0 %1693
          %1697 = vset.pattern.permute.xlu0 0
          %1698 = vperm.xlu0 %1697, %v1556
          %v1699 = vpop.permute.xlu0 %1698
          %1702 = vset.pattern.permute.xlu0 0
          %1703 = vperm.xlu0 %1702, %v1557
          %v1704 = vpop.permute.xlu0 %1703
          %1707 = vset.pattern.permute.xlu0 0
          %1708 = vperm.xlu0 %1707, %v1558
          %v1709 = vpop.permute.xlu0 %1708
          %1712 = vset.pattern.permute.xlu0 0
          %1713 = vperm.xlu0 %1712, %v1559
          %v1714 = vpop.permute.xlu0 %1713
          %1717 = vset.pattern.permute.xlu0 0
          %1718 = vperm.xlu0 %1717, %v1560
          %v1719 = vpop.permute.xlu0 %1718
          %1722 = vset.pattern.permute.xlu0 0
          %1723 = vperm.xlu0 %1722, %v1561
          %v1724 = vpop.permute.xlu0 %1723
          %1727 = vset.pattern.permute.xlu0 0
          %1728 = vperm.xlu0 %1727, %v1562
          %v1729 = vpop.permute.xlu0 %1728
          %1732 = vset.pattern.permute.xlu0 0
          %1733 = vperm.xlu0 %1732, %v1563
          %v1734 = vpop.permute.xlu0 %1733
          %1737 = vset.pattern.permute.xlu0 0
          %1738 = vperm.xlu0 %1737, %v1564
          %v1739 = vpop.permute.xlu0 %1738
          %1742 = vset.pattern.permute.xlu0 0
          %1743 = vperm.xlu0 %1742, %v1565
          %v1744 = vpop.permute.xlu0 %1743
          %1747 = vset.pattern.permute.xlu0 0
          %1748 = vperm.xlu0 %1747, %v1566
          %v1749 = vpop.permute.xlu0 %1748
          %1752 = vset.pattern.permute.xlu0 0
          %1753 = vperm.xlu0 %1752, %v1567
          %v1754 = vpop.permute.xlu0 %1753
          %1757 = vset.pattern.permute.xlu0 0
          %1758 = vperm.xlu0 %1757, %v1568
          %v1759 = vpop.permute.xlu0 %1758
          %1762 = vset.pattern.permute.xlu0 0
          %1763 = vperm.xlu0 %1762, %v1569
          %v1764 = vpop.permute.xlu0 %1763
          %1767 = vset.pattern.permute.xlu0 0
          %1768 = vperm.xlu0 %1767, %v1570
          %v1769 = vpop.permute.xlu0 %1768
          %1772 = vset.pattern.permute.xlu0 0
          %1773 = vperm.xlu0 %1772, %v1571
          %v1774 = vpop.permute.xlu0 %1773
          %1777 = vset.pattern.permute.xlu0 0
          %1778 = vperm.xlu0 %1777, %v1572
          %v1779 = vpop.permute.xlu0 %1778
          %1782 = vset.pattern.permute.xlu0 0
          %1783 = vperm.xlu0 %1782, %v1573
          %v1784 = vpop.permute.xlu0 %1783
          %1787 = vset.pattern.permute.xlu0 0
          %1788 = vperm.xlu0 %1787, %v1574
          %v1789 = vpop.permute.xlu0 %1788
          %1792 = vset.pattern.permute.xlu0 0
          %1793 = vperm.xlu0 %1792, %v1575
          %v1794 = vpop.permute.xlu0 %1793
          %1797 = vset.pattern.permute.xlu0 0
          %1798 = vperm.xlu0 %1797, %v1576
          %v1799 = vpop.permute.xlu0 %1798
          %1802 = vset.pattern.permute.xlu0 0
          %1803 = vperm.xlu0 %1802, %v1577
          %v1804 = vpop.permute.xlu0 %1803
          %1807 = vset.pattern.permute.xlu0 0
          %1808 = vperm.xlu0 %1807, %v1578
          %v1809 = vpop.permute.xlu0 %1808
          %1812 = vset.pattern.permute.xlu0 0
          %1813 = vperm.xlu0 %1812, %v1579
          %v1814 = vpop.permute.xlu0 %1813
          %1817 = vset.pattern.permute.xlu0 0
          %1818 = vperm.xlu0 %1817, %v1580
          %v1819 = vpop.permute.xlu0 %1818
          %1822 = vset.pattern.permute.xlu0 0
          %1823 = vperm.xlu0 %1822, %v1581
          %v1824 = vpop.permute.xlu0 %1823
          %1827 = vset.pattern.permute.xlu0 0
          %1828 = vperm.xlu0 %1827, %v1582
          %v1829 = vpop.permute.xlu0 %1828
          %1832 = vset.pattern.permute.xlu0 0
          %1833 = vperm.xlu0 %1832, %v1583
          %v1834 = vpop.permute.xlu0 %1833
          %1837 = vset.pattern.permute.xlu0 0
          %1838 = vperm.xlu0 %1837, %v1584
          %v1839 = vpop.permute.xlu0 %1838
          %v1841 = vmul.f32 %v337, %v1684
          %v1842 = vmul.f32 %v338, %v1684
          %v1843 = vmul.f32 %v339, %v1684
          %v1844 = vmul.f32 %v340, %v1684
          %v1845 = vmul.f32 %v341, %v1684
          %v1846 = vmul.f32 %v342, %v1684
          %v1847 = vmul.f32 %v343, %v1684
          %v1848 = vmul.f32 %v344, %v1689
          %v1849 = vmul.f32 %v345, %v1689
          %v1850 = vmul.f32 %v346, %v1689
          %v1851 = vmul.f32 %v347, %v1689
          %v1852 = vmul.f32 %v348, %v1689
          %v1853 = vmul.f32 %v349, %v1689
          %v1854 = vmul.f32 %v350, %v1689
          %v1855 = vmul.f32 %v351, %v1694
          %v1856 = vmul.f32 %v352, %v1694
          %v1857 = vmul.f32 %v353, %v1694
          %v1858 = vmul.f32 %v354, %v1694
          %v1859 = vmul.f32 %v355, %v1694
          %v1860 = vmul.f32 %v356, %v1694
          %v1861 = vmul.f32 %v357, %v1694
          %v1862 = vmul.f32 %v358, %v1699
          %v1863 = vmul.f32 %v359, %v1699
          %v1864 = vmul.f32 %v360, %v1699
          %v1865 = vmul.f32 %v361, %v1699
          %v1866 = vmul.f32 %v362, %v1699
          %v1867 = vmul.f32 %v363, %v1699
          %v1868 = vmul.f32 %v364, %v1699
          %v1869 = vmul.f32 %v365, %v1704
          %v1870 = vmul.f32 %v366, %v1704
          %v1871 = vmul.f32 %v367, %v1704
          %v1872 = vmul.f32 %v368, %v1704
          %v1873 = vmul.f32 %v369, %v1704
          %v1874 = vmul.f32 %v370, %v1704
          %v1875 = vmul.f32 %v371, %v1704
          %v1876 = vmul.f32 %v372, %v1709
          %v1877 = vmul.f32 %v373, %v1709
          %v1878 = vmul.f32 %v374, %v1709
          %v1879 = vmul.f32 %v375, %v1709
          %v1880 = vmul.f32 %v376, %v1709
          %v1881 = vmul.f32 %v377, %v1709
          %v1882 = vmul.f32 %v378, %v1709
          %v1883 = vmul.f32 %v379, %v1714
          %v1884 = vmul.f32 %v380, %v1714
          %v1885 = vmul.f32 %v381, %v1714
          %v1886 = vmul.f32 %v382, %v1714
          %v1887 = vmul.f32 %v383, %v1714
          %v1888 = vmul.f32 %v384, %v1714
          %v1889 = vmul.f32 %v385, %v1714
          %v1890 = vmul.f32 %v386, %v1719
          %v1891 = vmul.f32 %v387, %v1719
          %v1892 = vmul.f32 %v388, %v1719
          %v1893 = vmul.f32 %v389, %v1719
          %v1894 = vmul.f32 %v390, %v1719
          %v1895 = vmul.f32 %v391, %v1719
          %v1896 = vmul.f32 %v392, %v1719
          %v1897 = vmul.f32 %v393, %v1724
          %v1898 = vmul.f32 %v394, %v1724
          %v1899 = vmul.f32 %v395, %v1724
          %v1900 = vmul.f32 %v396, %v1724
          %v1901 = vmul.f32 %v397, %v1724
          %v1902 = vmul.f32 %v398, %v1724
          %v1903 = vmul.f32 %v399, %v1724
          %v1904 = vmul.f32 %v400, %v1729
          %v1905 = vmul.f32 %v401, %v1729
          %v1906 = vmul.f32 %v402, %v1729
          %v1907 = vmul.f32 %v403, %v1729
          %v1908 = vmul.f32 %v404, %v1729
          %v1909 = vmul.f32 %v405, %v1729
          %v1910 = vmul.f32 %v406, %v1729
          %v1911 = vmul.f32 %v407, %v1734
          %v1912 = vmul.f32 %v408, %v1734
          %v1913 = vmul.f32 %v409, %v1734
          %v1914 = vmul.f32 %v410, %v1734
          %v1915 = vmul.f32 %v411, %v1734
          %v1916 = vmul.f32 %v412, %v1734
          %v1917 = vmul.f32 %v413, %v1734
          %v1918 = vmul.f32 %v414, %v1739
          %v1919 = vmul.f32 %v415, %v1739
          %v1920 = vmul.f32 %v416, %v1739
          %v1921 = vmul.f32 %v417, %v1739
          %v1922 = vmul.f32 %v418, %v1739
          %v1923 = vmul.f32 %v419, %v1739
          %v1924 = vmul.f32 %v420, %v1739
          %v1925 = vmul.f32 %v421, %v1744
          %v1926 = vmul.f32 %v422, %v1744
          %v1927 = vmul.f32 %v423, %v1744
          %v1928 = vmul.f32 %v424, %v1744
          %v1929 = vmul.f32 %v425, %v1744
          %v1930 = vmul.f32 %v426, %v1744
          %v1931 = vmul.f32 %v427, %v1744
          %v1932 = vmul.f32 %v428, %v1749
          %v1933 = vmul.f32 %v429, %v1749
          %v1934 = vmul.f32 %v430, %v1749
          %v1935 = vmul.f32 %v431, %v1749
          %v1936 = vmul.f32 %v432, %v1749
          %v1937 = vmul.f32 %v433, %v1749
          %v1938 = vmul.f32 %v434, %v1749
          %v1939 = vmul.f32 %v435, %v1754
          %v1940 = vmul.f32 %v436, %v1754
          %v1941 = vmul.f32 %v437, %v1754
          %v1942 = vmul.f32 %v438, %v1754
          %v1943 = vmul.f32 %v439, %v1754
          %v1944 = vmul.f32 %v440, %v1754
          %v1945 = vmul.f32 %v441, %v1754
          %v1946 = vmul.f32 %v442, %v1759
          %v1947 = vmul.f32 %v443, %v1759
          %v1948 = vmul.f32 %v444, %v1759
          %v1949 = vmul.f32 %v445, %v1759
          %v1950 = vmul.f32 %v446, %v1759
          %v1951 = vmul.f32 %v447, %v1759
          %v1952 = vmul.f32 %v448, %v1759
          %v1953 = vmul.f32 %v449, %v1764
          %v1954 = vmul.f32 %v450, %v1764
          %v1955 = vmul.f32 %v451, %v1764
          %v1956 = vmul.f32 %v452, %v1764
          %v1957 = vmul.f32 %v453, %v1764
          %v1958 = vmul.f32 %v454, %v1764
          %v1959 = vmul.f32 %v455, %v1764
          %v1960 = vmul.f32 %v456, %v1769
          %v1961 = vmul.f32 %v457, %v1769
          %v1962 = vmul.f32 %v458, %v1769
          %v1963 = vmul.f32 %v459, %v1769
          %v1964 = vmul.f32 %v460, %v1769
          %v1965 = vmul.f32 %v461, %v1769
          %v1966 = vmul.f32 %v462, %v1769
          %v1967 = vmul.f32 %v463, %v1774
          %v1968 = vmul.f32 %v464, %v1774
          %v1969 = vmul.f32 %v465, %v1774
          %v1970 = vmul.f32 %v466, %v1774
          %v1971 = vmul.f32 %v467, %v1774
          %v1972 = vmul.f32 %v468, %v1774
          %v1973 = vmul.f32 %v469, %v1774
          %v1974 = vmul.f32 %v470, %v1779
          %v1975 = vmul.f32 %v471, %v1779
          %v1976 = vmul.f32 %v472, %v1779
          %v1977 = vmul.f32 %v473, %v1779
          %v1978 = vmul.f32 %v474, %v1779
          %v1979 = vmul.f32 %v475, %v1779
          %v1980 = vmul.f32 %v476, %v1779
          %v1981 = vmul.f32 %v477, %v1784
          %v1982 = vmul.f32 %v478, %v1784
          %v1983 = vmul.f32 %v479, %v1784
          %v1984 = vmul.f32 %v480, %v1784
          %v1985 = vmul.f32 %v481, %v1784
          %v1986 = vmul.f32 %v482, %v1784
          %v1987 = vmul.f32 %v483, %v1784
          %v1988 = vmul.f32 %v484, %v1789
          %v1989 = vmul.f32 %v485, %v1789
          %v1990 = vmul.f32 %v486, %v1789
          %v1991 = vmul.f32 %v487, %v1789
          %v1992 = vmul.f32 %v488, %v1789
          %v1993 = vmul.f32 %v489, %v1789
          %v1994 = vmul.f32 %v490, %v1789
          %v1995 = vmul.f32 %v491, %v1794
          %v1996 = vmul.f32 %v492, %v1794
          %v1997 = vmul.f32 %v493, %v1794
          %v1998 = vmul.f32 %v494, %v1794
          %v1999 = vmul.f32 %v495, %v1794
          %v2000 = vmul.f32 %v496, %v1794
          %v2001 = vmul.f32 %v497, %v1794
          %v2002 = vmul.f32 %v498, %v1799
          %v2003 = vmul.f32 %v499, %v1799
          %v2004 = vmul.f32 %v500, %v1799
          %v2005 = vmul.f32 %v501, %v1799
          %v2006 = vmul.f32 %v502, %v1799
          %v2007 = vmul.f32 %v503, %v1799
          %v2008 = vmul.f32 %v504, %v1799
          %v2009 = vmul.f32 %v505, %v1804
          %v2010 = vmul.f32 %v506, %v1804
          %v2011 = vmul.f32 %v507, %v1804
          %v2012 = vmul.f32 %v508, %v1804
          %v2013 = vmul.f32 %v509, %v1804
          %v2014 = vmul.f32 %v510, %v1804
          %v2015 = vmul.f32 %v511, %v1804
          %v2016 = vmul.f32 %v512, %v1809
          %v2017 = vmul.f32 %v513, %v1809
          %v2018 = vmul.f32 %v514, %v1809
          %v2019 = vmul.f32 %v515, %v1809
          %v2020 = vmul.f32 %v516, %v1809
          %v2021 = vmul.f32 %v517, %v1809
          %v2022 = vmul.f32 %v518, %v1809
          %v2023 = vmul.f32 %v519, %v1814
          %v2024 = vmul.f32 %v520, %v1814
          %v2025 = vmul.f32 %v521, %v1814
          %v2026 = vmul.f32 %v522, %v1814
          %v2027 = vmul.f32 %v523, %v1814
          %v2028 = vmul.f32 %v524, %v1814
          %v2029 = vmul.f32 %v525, %v1814
          %v2030 = vmul.f32 %v526, %v1819
          %v2031 = vmul.f32 %v527, %v1819
          %v2032 = vmul.f32 %v528, %v1819
          %v2033 = vmul.f32 %v529, %v1819
          %v2034 = vmul.f32 %v530, %v1819
          %v2035 = vmul.f32 %v531, %v1819
          %v2036 = vmul.f32 %v532, %v1819
          %v2037 = vmul.f32 %v533, %v1824
          %v2038 = vmul.f32 %v534, %v1824
          %v2039 = vmul.f32 %v535, %v1824
          %v2040 = vmul.f32 %v536, %v1824
          %v2041 = vmul.f32 %v537, %v1824
          %v2042 = vmul.f32 %v538, %v1824
          %v2043 = vmul.f32 %v539, %v1824
          %v2044 = vmul.f32 %v540, %v1829
          %v2045 = vmul.f32 %v541, %v1829
          %v2046 = vmul.f32 %v542, %v1829
          %v2047 = vmul.f32 %v543, %v1829
          %v2048 = vmul.f32 %v544, %v1829
          %v2049 = vmul.f32 %v545, %v1829
          %v2050 = vmul.f32 %v546, %v1829
          %v2051 = vmul.f32 %v547, %v1834
          %v2052 = vmul.f32 %v548, %v1834
          %v2053 = vmul.f32 %v549, %v1834
          %v2054 = vmul.f32 %v550, %v1834
          %v2055 = vmul.f32 %v551, %v1834
          %v2056 = vmul.f32 %v552, %v1834
          %v2057 = vmul.f32 %v553, %v1834
          %v2058 = vmul.f32 %v554, %v1839
          %v2059 = vmul.f32 %v555, %v1839
          %v2060 = vmul.f32 %v556, %v1839
          %v2061 = vmul.f32 %v557, %v1839
          %v2062 = vmul.f32 %v558, %v1839
          %v2063 = vmul.f32 %v559, %v1839
          %v2064 = vmul.f32 %v560, %v1839
          %2066 = vset.pattern.permute.xlu0 0
          %2067 = vperm.xlu0 %2066, %v1649
          %v2068 = vpop.permute.xlu0 %2067
          %2071 = vset.pattern.permute.xlu0 0
          %2072 = vperm.xlu0 %2071, %v1650
          %v2073 = vpop.permute.xlu0 %2072
          %2076 = vset.pattern.permute.xlu0 0
          %2077 = vperm.xlu0 %2076, %v1651
          %v2078 = vpop.permute.xlu0 %2077
          %2081 = vset.pattern.permute.xlu0 0
          %2082 = vperm.xlu0 %2081, %v1652
          %v2083 = vpop.permute.xlu0 %2082
          %2086 = vset.pattern.permute.xlu0 0
          %2087 = vperm.xlu0 %2086, %v1653
          %v2088 = vpop.permute.xlu0 %2087
          %2091 = vset.pattern.permute.xlu0 0
          %2092 = vperm.xlu0 %2091, %v1654
          %v2093 = vpop.permute.xlu0 %2092
          %2096 = vset.pattern.permute.xlu0 0
          %2097 = vperm.xlu0 %2096, %v1655
          %v2098 = vpop.permute.xlu0 %2097
          %2101 = vset.pattern.permute.xlu0 0
          %2102 = vperm.xlu0 %2101, %v1656
          %v2103 = vpop.permute.xlu0 %2102
          %2106 = vset.pattern.permute.xlu0 0
          %2107 = vperm.xlu0 %2106, %v1657
          %v2108 = vpop.permute.xlu0 %2107
          %2111 = vset.pattern.permute.xlu0 0
          %2112 = vperm.xlu0 %2111, %v1658
          %v2113 = vpop.permute.xlu0 %2112
          %2116 = vset.pattern.permute.xlu0 0
          %2117 = vperm.xlu0 %2116, %v1659
          %v2118 = vpop.permute.xlu0 %2117
          %2121 = vset.pattern.permute.xlu0 0
          %2122 = vperm.xlu0 %2121, %v1660
          %v2123 = vpop.permute.xlu0 %2122
          %2126 = vset.pattern.permute.xlu0 0
          %2127 = vperm.xlu0 %2126, %v1661
          %v2128 = vpop.permute.xlu0 %2127
          %2131 = vset.pattern.permute.xlu0 0
          %2132 = vperm.xlu0 %2131, %v1662
          %v2133 = vpop.permute.xlu0 %2132
          %2136 = vset.pattern.permute.xlu0 0
          %2137 = vperm.xlu0 %2136, %v1663
          %v2138 = vpop.permute.xlu0 %2137
          %2141 = vset.pattern.permute.xlu0 0
          %2142 = vperm.xlu0 %2141, %v1664
          %v2143 = vpop.permute.xlu0 %2142
          %2146 = vset.pattern.permute.xlu0 0
          %2147 = vperm.xlu0 %2146, %v1665
          %v2148 = vpop.permute.xlu0 %2147
          %2151 = vset.pattern.permute.xlu0 0
          %2152 = vperm.xlu0 %2151, %v1666
          %v2153 = vpop.permute.xlu0 %2152
          %2156 = vset.pattern.permute.xlu0 0
          %2157 = vperm.xlu0 %2156, %v1667
          %v2158 = vpop.permute.xlu0 %2157
          %2161 = vset.pattern.permute.xlu0 0
          %2162 = vperm.xlu0 %2161, %v1668
          %v2163 = vpop.permute.xlu0 %2162
          %2166 = vset.pattern.permute.xlu0 0
          %2167 = vperm.xlu0 %2166, %v1669
          %v2168 = vpop.permute.xlu0 %2167
          %2171 = vset.pattern.permute.xlu0 0
          %2172 = vperm.xlu0 %2171, %v1670
          %v2173 = vpop.permute.xlu0 %2172
          %2176 = vset.pattern.permute.xlu0 0
          %2177 = vperm.xlu0 %2176, %v1671
          %v2178 = vpop.permute.xlu0 %2177
          %2181 = vset.pattern.permute.xlu0 0
          %2182 = vperm.xlu0 %2181, %v1672
          %v2183 = vpop.permute.xlu0 %2182
          %2186 = vset.pattern.permute.xlu0 0
          %2187 = vperm.xlu0 %2186, %v1673
          %v2188 = vpop.permute.xlu0 %2187
          %2191 = vset.pattern.permute.xlu0 0
          %2192 = vperm.xlu0 %2191, %v1674
          %v2193 = vpop.permute.xlu0 %2192
          %2196 = vset.pattern.permute.xlu0 0
          %2197 = vperm.xlu0 %2196, %v1675
          %v2198 = vpop.permute.xlu0 %2197
          %2201 = vset.pattern.permute.xlu0 0
          %2202 = vperm.xlu0 %2201, %v1676
          %v2203 = vpop.permute.xlu0 %2202
          %2206 = vset.pattern.permute.xlu0 0
          %2207 = vperm.xlu0 %2206, %v1677
          %v2208 = vpop.permute.xlu0 %2207
          %2211 = vset.pattern.permute.xlu0 0
          %2212 = vperm.xlu0 %2211, %v1678
          %v2213 = vpop.permute.xlu0 %2212
          %2216 = vset.pattern.permute.xlu0 0
          %2217 = vperm.xlu0 %2216, %v1679
          %v2218 = vpop.permute.xlu0 %2217
          %2221 = vset.pattern.permute.xlu0 0
          %2222 = vperm.xlu0 %2221, %v1680
          %v2223 = vpop.permute.xlu0 %2222
          %v2225 = vadd.f32 %v1841, %v2068
          %v2226 = vadd.f32 %v1842, %v2068
          %v2227 = vadd.f32 %v1843, %v2068
          %v2228 = vadd.f32 %v1844, %v2068
          %v2229 = vadd.f32 %v1845, %v2068
          %v2230 = vadd.f32 %v1846, %v2068
          %v2231 = vadd.f32 %v1847, %v2068
          %v2232 = vadd.f32 %v1848, %v2073
          %v2233 = vadd.f32 %v1849, %v2073
          %v2234 = vadd.f32 %v1850, %v2073
          %v2235 = vadd.f32 %v1851, %v2073
          %v2236 = vadd.f32 %v1852, %v2073
          %v2237 = vadd.f32 %v1853, %v2073
          %v2238 = vadd.f32 %v1854, %v2073
          %v2239 = vadd.f32 %v1855, %v2078
          %v2240 = vadd.f32 %v1856, %v2078
          %v2241 = vadd.f32 %v1857, %v2078
          %v2242 = vadd.f32 %v1858, %v2078
          %v2243 = vadd.f32 %v1859, %v2078
          %v2244 = vadd.f32 %v1860, %v2078
          %v2245 = vadd.f32 %v1861, %v2078
          %v2246 = vadd.f32 %v1862, %v2083
          %v2247 = vadd.f32 %v1863, %v2083
          %v2248 = vadd.f32 %v1864, %v2083
          %v2249 = vadd.f32 %v1865, %v2083
          %v2250 = vadd.f32 %v1866, %v2083
          %v2251 = vadd.f32 %v1867, %v2083
          %v2252 = vadd.f32 %v1868, %v2083
          %v2253 = vadd.f32 %v1869, %v2088
          %v2254 = vadd.f32 %v1870, %v2088
          %v2255 = vadd.f32 %v1871, %v2088
          %v2256 = vadd.f32 %v1872, %v2088
          %v2257 = vadd.f32 %v1873, %v2088
          %v2258 = vadd.f32 %v1874, %v2088
          %v2259 = vadd.f32 %v1875, %v2088
          %v2260 = vadd.f32 %v1876, %v2093
          %v2261 = vadd.f32 %v1877, %v2093
          %v2262 = vadd.f32 %v1878, %v2093
          %v2263 = vadd.f32 %v1879, %v2093
          %v2264 = vadd.f32 %v1880, %v2093
          %v2265 = vadd.f32 %v1881, %v2093
          %v2266 = vadd.f32 %v1882, %v2093
          %v2267 = vadd.f32 %v1883, %v2098
          %v2268 = vadd.f32 %v1884, %v2098
          %v2269 = vadd.f32 %v1885, %v2098
          %v2270 = vadd.f32 %v1886, %v2098
          %v2271 = vadd.f32 %v1887, %v2098
          %v2272 = vadd.f32 %v1888, %v2098
          %v2273 = vadd.f32 %v1889, %v2098
          %v2274 = vadd.f32 %v1890, %v2103
          %v2275 = vadd.f32 %v1891, %v2103
          %v2276 = vadd.f32 %v1892, %v2103
          %v2277 = vadd.f32 %v1893, %v2103
          %v2278 = vadd.f32 %v1894, %v2103
          %v2279 = vadd.f32 %v1895, %v2103
          %v2280 = vadd.f32 %v1896, %v2103
          %v2281 = vadd.f32 %v1897, %v2108
          %v2282 = vadd.f32 %v1898, %v2108
          %v2283 = vadd.f32 %v1899, %v2108
          %v2284 = vadd.f32 %v1900, %v2108
          %v2285 = vadd.f32 %v1901, %v2108
          %v2286 = vadd.f32 %v1902, %v2108
          %v2287 = vadd.f32 %v1903, %v2108
          %v2288 = vadd.f32 %v1904, %v2113
          %v2289 = vadd.f32 %v1905, %v2113
          %v2290 = vadd.f32 %v1906, %v2113
          %v2291 = vadd.f32 %v1907, %v2113
          %v2292 = vadd.f32 %v1908, %v2113
          %v2293 = vadd.f32 %v1909, %v2113
          %v2294 = vadd.f32 %v1910, %v2113
          %v2295 = vadd.f32 %v1911, %v2118
          %v2296 = vadd.f32 %v1912, %v2118
          %v2297 = vadd.f32 %v1913, %v2118
          %v2298 = vadd.f32 %v1914, %v2118
          %v2299 = vadd.f32 %v1915, %v2118
          %v2300 = vadd.f32 %v1916, %v2118
          %v2301 = vadd.f32 %v1917, %v2118
          %v2302 = vadd.f32 %v1918, %v2123
          %v2303 = vadd.f32 %v1919, %v2123
          %v2304 = vadd.f32 %v1920, %v2123
          %v2305 = vadd.f32 %v1921, %v2123
          %v2306 = vadd.f32 %v1922, %v2123
          %v2307 = vadd.f32 %v1923, %v2123
          %v2308 = vadd.f32 %v1924, %v2123
          %v2309 = vadd.f32 %v1925, %v2128
          %v2310 = vadd.f32 %v1926, %v2128
          %v2311 = vadd.f32 %v1927, %v2128
          %v2312 = vadd.f32 %v1928, %v2128
          %v2313 = vadd.f32 %v1929, %v2128
          %v2314 = vadd.f32 %v1930, %v2128
          %v2315 = vadd.f32 %v1931, %v2128
          %v2316 = vadd.f32 %v1932, %v2133
          %v2317 = vadd.f32 %v1933, %v2133
          %v2318 = vadd.f32 %v1934, %v2133
          %v2319 = vadd.f32 %v1935, %v2133
          %v2320 = vadd.f32 %v1936, %v2133
          %v2321 = vadd.f32 %v1937, %v2133
          %v2322 = vadd.f32 %v1938, %v2133
          %v2323 = vadd.f32 %v1939, %v2138
          %v2324 = vadd.f32 %v1940, %v2138
          %v2325 = vadd.f32 %v1941, %v2138
          %v2326 = vadd.f32 %v1942, %v2138
          %v2327 = vadd.f32 %v1943, %v2138
          %v2328 = vadd.f32 %v1944, %v2138
          %v2329 = vadd.f32 %v1945, %v2138
          %v2330 = vadd.f32 %v1946, %v2143
          %v2331 = vadd.f32 %v1947, %v2143
          %v2332 = vadd.f32 %v1948, %v2143
          %v2333 = vadd.f32 %v1949, %v2143
          %v2334 = vadd.f32 %v1950, %v2143
          %v2335 = vadd.f32 %v1951, %v2143
          %v2336 = vadd.f32 %v1952, %v2143
          %v2337 = vadd.f32 %v1953, %v2148
          %v2338 = vadd.f32 %v1954, %v2148
          %v2339 = vadd.f32 %v1955, %v2148
          %v2340 = vadd.f32 %v1956, %v2148
          %v2341 = vadd.f32 %v1957, %v2148
          %v2342 = vadd.f32 %v1958, %v2148
          %v2343 = vadd.f32 %v1959, %v2148
          %v2344 = vadd.f32 %v1960, %v2153
          %v2345 = vadd.f32 %v1961, %v2153
          %v2346 = vadd.f32 %v1962, %v2153
          %v2347 = vadd.f32 %v1963, %v2153
          %v2348 = vadd.f32 %v1964, %v2153
          %v2349 = vadd.f32 %v1965, %v2153
          %v2350 = vadd.f32 %v1966, %v2153
          %v2351 = vadd.f32 %v1967, %v2158
          %v2352 = vadd.f32 %v1968, %v2158
          %v2353 = vadd.f32 %v1969, %v2158
          %v2354 = vadd.f32 %v1970, %v2158
          %v2355 = vadd.f32 %v1971, %v2158
          %v2356 = vadd.f32 %v1972, %v2158
          %v2357 = vadd.f32 %v1973, %v2158
          %v2358 = vadd.f32 %v1974, %v2163
          %v2359 = vadd.f32 %v1975, %v2163
          %v2360 = vadd.f32 %v1976, %v2163
          %v2361 = vadd.f32 %v1977, %v2163
          %v2362 = vadd.f32 %v1978, %v2163
          %v2363 = vadd.f32 %v1979, %v2163
          %v2364 = vadd.f32 %v1980, %v2163
          %v2365 = vadd.f32 %v1981, %v2168
          %v2366 = vadd.f32 %v1982, %v2168
          %v2367 = vadd.f32 %v1983, %v2168
          %v2368 = vadd.f32 %v1984, %v2168
          %v2369 = vadd.f32 %v1985, %v2168
          %v2370 = vadd.f32 %v1986, %v2168
          %v2371 = vadd.f32 %v1987, %v2168
          %v2372 = vadd.f32 %v1988, %v2173
          %v2373 = vadd.f32 %v1989, %v2173
          %v2374 = vadd.f32 %v1990, %v2173
          %v2375 = vadd.f32 %v1991, %v2173
          %v2376 = vadd.f32 %v1992, %v2173
          %v2377 = vadd.f32 %v1993, %v2173
          %v2378 = vadd.f32 %v1994, %v2173
          %v2379 = vadd.f32 %v1995, %v2178
          %v2380 = vadd.f32 %v1996, %v2178
          %v2381 = vadd.f32 %v1997, %v2178
          %v2382 = vadd.f32 %v1998, %v2178
          %v2383 = vadd.f32 %v1999, %v2178
          %v2384 = vadd.f32 %v2000, %v2178
          %v2385 = vadd.f32 %v2001, %v2178
          %v2386 = vadd.f32 %v2002, %v2183
          %v2387 = vadd.f32 %v2003, %v2183
          %v2388 = vadd.f32 %v2004, %v2183
          %v2389 = vadd.f32 %v2005, %v2183
          %v2390 = vadd.f32 %v2006, %v2183
          %v2391 = vadd.f32 %v2007, %v2183
          %v2392 = vadd.f32 %v2008, %v2183
          %v2393 = vadd.f32 %v2009, %v2188
          %v2394 = vadd.f32 %v2010, %v2188
          %v2395 = vadd.f32 %v2011, %v2188
          %v2396 = vadd.f32 %v2012, %v2188
          %v2397 = vadd.f32 %v2013, %v2188
          %v2398 = vadd.f32 %v2014, %v2188
          %v2399 = vadd.f32 %v2015, %v2188
          %v2400 = vadd.f32 %v2016, %v2193
          %v2401 = vadd.f32 %v2017, %v2193
          %v2402 = vadd.f32 %v2018, %v2193
          %v2403 = vadd.f32 %v2019, %v2193
          %v2404 = vadd.f32 %v2020, %v2193
          %v2405 = vadd.f32 %v2021, %v2193
          %v2406 = vadd.f32 %v2022, %v2193
          %v2407 = vadd.f32 %v2023, %v2198
          %v2408 = vadd.f32 %v2024, %v2198
          %v2409 = vadd.f32 %v2025, %v2198
          %v2410 = vadd.f32 %v2026, %v2198
          %v2411 = vadd.f32 %v2027, %v2198
          %v2412 = vadd.f32 %v2028, %v2198
          %v2413 = vadd.f32 %v2029, %v2198
          %v2414 = vadd.f32 %v2030, %v2203
          %v2415 = vadd.f32 %v2031, %v2203
          %v2416 = vadd.f32 %v2032, %v2203
          %v2417 = vadd.f32 %v2033, %v2203
          %v2418 = vadd.f32 %v2034, %v2203
          %v2419 = vadd.f32 %v2035, %v2203
          %v2420 = vadd.f32 %v2036, %v2203
          %v2421 = vadd.f32 %v2037, %v2208
          %v2422 = vadd.f32 %v2038, %v2208
          %v2423 = vadd.f32 %v2039, %v2208
          %v2424 = vadd.f32 %v2040, %v2208
          %v2425 = vadd.f32 %v2041, %v2208
          %v2426 = vadd.f32 %v2042, %v2208
          %v2427 = vadd.f32 %v2043, %v2208
          %v2428 = vadd.f32 %v2044, %v2213
          %v2429 = vadd.f32 %v2045, %v2213
          %v2430 = vadd.f32 %v2046, %v2213
          %v2431 = vadd.f32 %v2047, %v2213
          %v2432 = vadd.f32 %v2048, %v2213
          %v2433 = vadd.f32 %v2049, %v2213
          %v2434 = vadd.f32 %v2050, %v2213
          %v2435 = vadd.f32 %v2051, %v2218
          %v2436 = vadd.f32 %v2052, %v2218
          %v2437 = vadd.f32 %v2053, %v2218
          %v2438 = vadd.f32 %v2054, %v2218
          %v2439 = vadd.f32 %v2055, %v2218
          %v2440 = vadd.f32 %v2056, %v2218
          %v2441 = vadd.f32 %v2057, %v2218
          %v2442 = vadd.f32 %v2058, %v2223
          %v2443 = vadd.f32 %v2059, %v2223
          %v2444 = vadd.f32 %v2060, %v2223
          %v2445 = vadd.f32 %v2061, %v2223
          %v2446 = vadd.f32 %v2062, %v2223
          %v2447 = vadd.f32 %v2063, %v2223
          %v2448 = vadd.f32 %v2064, %v2223
          %v2449 = vmax.f32 %v2225, 0.0
          %v2450 = vmax.f32 %v2226, 0.0
          %v2451 = vmax.f32 %v2227, 0.0
          %v2452 = vmax.f32 %v2228, 0.0
          %v2453 = vmax.f32 %v2229, 0.0
          %v2454 = vmax.f32 %v2230, 0.0
          %v2455 = vmax.f32 %v2231, 0.0
          %v2456 = vmax.f32 %v2232, 0.0
          %v2457 = vmax.f32 %v2233, 0.0
          %v2458 = vmax.f32 %v2234, 0.0
          %v2459 = vmax.f32 %v2235, 0.0
          %v2460 = vmax.f32 %v2236, 0.0
          %v2461 = vmax.f32 %v2237, 0.0
          %v2462 = vmax.f32 %v2238, 0.0
          %v2463 = vmax.f32 %v2239, 0.0
          %v2464 = vmax.f32 %v2240, 0.0
          %v2465 = vmax.f32 %v2241, 0.0
          %v2466 = vmax.f32 %v2242, 0.0
          %v2467 = vmax.f32 %v2243, 0.0
          %v2468 = vmax.f32 %v2244, 0.0
          %v2469 = vmax.f32 %v2245, 0.0
          %v2470 = vmax.f32 %v2246, 0.0
          %v2471 = vmax.f32 %v2247, 0.0
          %v2472 = vmax.f32 %v2248, 0.0
          %v2473 = vmax.f32 %v2249, 0.0
          %v2474 = vmax.f32 %v2250, 0.0
          %v2475 = vmax.f32 %v2251, 0.0
          %v2476 = vmax.f32 %v2252, 0.0
          %v2477 = vmax.f32 %v2253, 0.0
          %v2478 = vmax.f32 %v2254, 0.0
          %v2479 = vmax.f32 %v2255, 0.0
          %v2480 = vmax.f32 %v2256, 0.0
          %v2481 = vmax.f32 %v2257, 0.0
          %v2482 = vmax.f32 %v2258, 0.0
          %v2483 = vmax.f32 %v2259, 0.0
          %v2484 = vmax.f32 %v2260, 0.0
          %v2485 = vmax.f32 %v2261, 0.0
          %v2486 = vmax.f32 %v2262, 0.0
          %v2487 = vmax.f32 %v2263, 0.0
          %v2488 = vmax.f32 %v2264, 0.0
          %v2489 = vmax.f32 %v2265, 0.0
          %v2490 = vmax.f32 %v2266, 0.0
          %v2491 = vmax.f32 %v2267, 0.0
          %v2492 = vmax.f32 %v2268, 0.0
          %v2493 = vmax.f32 %v2269, 0.0
          %v2494 = vmax.f32 %v2270, 0.0
          %v2495 = vmax.f32 %v2271, 0.0
          %v2496 = vmax.f32 %v2272, 0.0
          %v2497 = vmax.f32 %v2273, 0.0
          %v2498 = vmax.f32 %v2274, 0.0
          %v2499 = vmax.f32 %v2275, 0.0
          %v2500 = vmax.f32 %v2276, 0.0
          %v2501 = vmax.f32 %v2277, 0.0
          %v2502 = vmax.f32 %v2278, 0.0
          %v2503 = vmax.f32 %v2279, 0.0
          %v2504 = vmax.f32 %v2280, 0.0
          %v2505 = vmax.f32 %v2281, 0.0
          %v2506 = vmax.f32 %v2282, 0.0
          %v2507 = vmax.f32 %v2283, 0.0
          %v2508 = vmax.f32 %v2284, 0.0
          %v2509 = vmax.f32 %v2285, 0.0
          %v2510 = vmax.f32 %v2286, 0.0
          %v2511 = vmax.f32 %v2287, 0.0
          %v2512 = vmax.f32 %v2288, 0.0
          %v2513 = vmax.f32 %v2289, 0.0
          %v2514 = vmax.f32 %v2290, 0.0
          %v2515 = vmax.f32 %v2291, 0.0
          %v2516 = vmax.f32 %v2292, 0.0
          %v2517 = vmax.f32 %v2293, 0.0
          %v2518 = vmax.f32 %v2294, 0.0
          %v2519 = vmax.f32 %v2295, 0.0
          %v2520 = vmax.f32 %v2296, 0.0
          %v2521 = vmax.f32 %v2297, 0.0
          %v2522 = vmax.f32 %v2298, 0.0
          %v2523 = vmax.f32 %v2299, 0.0
          %v2524 = vmax.f32 %v2300, 0.0
          %v2525 = vmax.f32 %v2301, 0.0
          %v2526 = vmax.f32 %v2302, 0.0
          %v2527 = vmax.f32 %v2303, 0.0
          %v2528 = vmax.f32 %v2304, 0.0
          %v2529 = vmax.f32 %v2305, 0.0
          %v2530 = vmax.f32 %v2306, 0.0
          %v2531 = vmax.f32 %v2307, 0.0
          %v2532 = vmax.f32 %v2308, 0.0
          %v2533 = vmax.f32 %v2309, 0.0
          %v2534 = vmax.f32 %v2310, 0.0
          %v2535 = vmax.f32 %v2311, 0.0
          %v2536 = vmax.f32 %v2312, 0.0
          %v2537 = vmax.f32 %v2313, 0.0
          %v2538 = vmax.f32 %v2314, 0.0
          %v2539 = vmax.f32 %v2315, 0.0
          %v2540 = vmax.f32 %v2316, 0.0
          %v2541 = vmax.f32 %v2317, 0.0
          %v2542 = vmax.f32 %v2318, 0.0
          %v2543 = vmax.f32 %v2319, 0.0
          %v2544 = vmax.f32 %v2320, 0.0
          %v2545 = vmax.f32 %v2321, 0.0
          %v2546 = vmax.f32 %v2322, 0.0
          %v2547 = vmax.f32 %v2323, 0.0
          %v2548 = vmax.f32 %v2324, 0.0
          %v2549 = vmax.f32 %v2325, 0.0
          %v2550 = vmax.f32 %v2326, 0.0
          %v2551 = vmax.f32 %v2327, 0.0
          %v2552 = vmax.f32 %v2328, 0.0
          %v2553 = vmax.f32 %v2329, 0.0
          %v2554 = vmax.f32 %v2330, 0.0
          %v2555 = vmax.f32 %v2331, 0.0
          %v2556 = vmax.f32 %v2332, 0.0
          %v2557 = vmax.f32 %v2333, 0.0
          %v2558 = vmax.f32 %v2334, 0.0
          %v2559 = vmax.f32 %v2335, 0.0
          %v2560 = vmax.f32 %v2336, 0.0
          %v2561 = vmax.f32 %v2337, 0.0
          %v2562 = vmax.f32 %v2338, 0.0
          %v2563 = vmax.f32 %v2339, 0.0
          %v2564 = vmax.f32 %v2340, 0.0
          %v2565 = vmax.f32 %v2341, 0.0
          %v2566 = vmax.f32 %v2342, 0.0
          %v2567 = vmax.f32 %v2343, 0.0
          %v2568 = vmax.f32 %v2344, 0.0
          %v2569 = vmax.f32 %v2345, 0.0
          %v2570 = vmax.f32 %v2346, 0.0
          %v2571 = vmax.f32 %v2347, 0.0
          %v2572 = vmax.f32 %v2348, 0.0
          %v2573 = vmax.f32 %v2349, 0.0
          %v2574 = vmax.f32 %v2350, 0.0
          %v2575 = vmax.f32 %v2351, 0.0
          %v2576 = vmax.f32 %v2352, 0.0
          %v2577 = vmax.f32 %v2353, 0.0
          %v2578 = vmax.f32 %v2354, 0.0
          %v2579 = vmax.f32 %v2355, 0.0
          %v2580 = vmax.f32 %v2356, 0.0
          %v2581 = vmax.f32 %v2357, 0.0
          %v2582 = vmax.f32 %v2358, 0.0
          %v2583 = vmax.f32 %v2359, 0.0
          %v2584 = vmax.f32 %v2360, 0.0
          %v2585 = vmax.f32 %v2361, 0.0
          %v2586 = vmax.f32 %v2362, 0.0
          %v2587 = vmax.f32 %v2363, 0.0
          %v2588 = vmax.f32 %v2364, 0.0
          %v2589 = vmax.f32 %v2365, 0.0
          %v2590 = vmax.f32 %v2366, 0.0
          %v2591 = vmax.f32 %v2367, 0.0
          %v2592 = vmax.f32 %v2368, 0.0
          %v2593 = vmax.f32 %v2369, 0.0
          %v2594 = vmax.f32 %v2370, 0.0
          %v2595 = vmax.f32 %v2371, 0.0
          %v2596 = vmax.f32 %v2372, 0.0
          %v2597 = vmax.f32 %v2373, 0.0
          %v2598 = vmax.f32 %v2374, 0.0
          %v2599 = vmax.f32 %v2375, 0.0
          %v2600 = vmax.f32 %v2376, 0.0
          %v2601 = vmax.f32 %v2377, 0.0
          %v2602 = vmax.f32 %v2378, 0.0
          %v2603 = vmax.f32 %v2379, 0.0
          %v2604 = vmax.f32 %v2380, 0.0
          %v2605 = vmax.f32 %v2381, 0.0
          %v2606 = vmax.f32 %v2382, 0.0
          %v2607 = vmax.f32 %v2383, 0.0
          %v2608 = vmax.f32 %v2384, 0.0
          %v2609 = vmax.f32 %v2385, 0.0
          %v2610 = vmax.f32 %v2386, 0.0
          %v2611 = vmax.f32 %v2387, 0.0
          %v2612 = vmax.f32 %v2388, 0.0
          %v2613 = vmax.f32 %v2389, 0.0
          %v2614 = vmax.f32 %v2390, 0.0
          %v2615 = vmax.f32 %v2391, 0.0
          %v2616 = vmax.f32 %v2392, 0.0
          %v2617 = vmax.f32 %v2393, 0.0
          %v2618 = vmax.f32 %v2394, 0.0
          %v2619 = vmax.f32 %v2395, 0.0
          %v2620 = vmax.f32 %v2396, 0.0
          %v2621 = vmax.f32 %v2397, 0.0
          %v2622 = vmax.f32 %v2398, 0.0
          %v2623 = vmax.f32 %v2399, 0.0
          %v2624 = vmax.f32 %v2400, 0.0
          %v2625 = vmax.f32 %v2401, 0.0
          %v2626 = vmax.f32 %v2402, 0.0
          %v2627 = vmax.f32 %v2403, 0.0
          %v2628 = vmax.f32 %v2404, 0.0
          %v2629 = vmax.f32 %v2405, 0.0
          %v2630 = vmax.f32 %v2406, 0.0
          %v2631 = vmax.f32 %v2407, 0.0
          %v2632 = vmax.f32 %v2408, 0.0
          %v2633 = vmax.f32 %v2409, 0.0
          %v2634 = vmax.f32 %v2410, 0.0
          %v2635 = vmax.f32 %v2411, 0.0
          %v2636 = vmax.f32 %v2412, 0.0
          %v2637 = vmax.f32 %v2413, 0.0
          %v2638 = vmax.f32 %v2414, 0.0
          %v2639 = vmax.f32 %v2415, 0.0
          %v2640 = vmax.f32 %v2416, 0.0
          %v2641 = vmax.f32 %v2417, 0.0
          %v2642 = vmax.f32 %v2418, 0.0
          %v2643 = vmax.f32 %v2419, 0.0
          %v2644 = vmax.f32 %v2420, 0.0
          %v2645 = vmax.f32 %v2421, 0.0
          %v2646 = vmax.f32 %v2422, 0.0
          %v2647 = vmax.f32 %v2423, 0.0
          %v2648 = vmax.f32 %v2424, 0.0
          %v2649 = vmax.f32 %v2425, 0.0
          %v2650 = vmax.f32 %v2426, 0.0
          %v2651 = vmax.f32 %v2427, 0.0
          %v2652 = vmax.f32 %v2428, 0.0
          %v2653 = vmax.f32 %v2429, 0.0
          %v2654 = vmax.f32 %v2430, 0.0
          %v2655 = vmax.f32 %v2431, 0.0
          %v2656 = vmax.f32 %v2432, 0.0
          %v2657 = vmax.f32 %v2433, 0.0
          %v2658 = vmax.f32 %v2434, 0.0
          %v2659 = vmax.f32 %v2435, 0.0
          %v2660 = vmax.f32 %v2436, 0.0
          %v2661 = vmax.f32 %v2437, 0.0
          %v2662 = vmax.f32 %v2438, 0.0
          %v2663 = vmax.f32 %v2439, 0.0
          %v2664 = vmax.f32 %v2440, 0.0
          %v2665 = vmax.f32 %v2441, 0.0
          %v2666 = vmax.f32 %v2442, 0.0
          %v2667 = vmax.f32 %v2443, 0.0
          %v2668 = vmax.f32 %v2444, 0.0
          %v2669 = vmax.f32 %v2445, 0.0
          %v2670 = vmax.f32 %v2446, 0.0
          %v2671 = vmax.f32 %v2447, 0.0
          %v2672 = vmax.f32 %v2448, 0.0
          %v2673 = vlaneseq
          %v2674 = vand.u32 %v2673, 127
          %v2675 = vadd.s32 %v2674, 128
          %v2676 = vadd.s32 %v2674, 256
          %v2677 = vadd.s32 %v2674, 384
          %v2678 = vadd.s32 %v2674, 512
          %v2679 = vadd.s32 %v2674, 640
          %v2680 = vadd.s32 %v2674, 768
          %vm2681 = vcmp.lt.s32.totalorder %v2674, 784
          %vm2682 = vcmp.lt.s32.totalorder %v2675, 784
          %vm2683 = vcmp.lt.s32.totalorder %v2676, 784
          %vm2684 = vcmp.lt.s32.totalorder %v2677, 784
          %vm2685 = vcmp.lt.s32.totalorder %v2678, 784
          %vm2686 = vcmp.lt.s32.totalorder %v2679, 784
          %vm2687 = vcmp.lt.s32.totalorder %v2680, 784
          %v2688 = vsel %vm2681, %v2449, 0.0
          %v2689 = vsel %vm2682, %v2450, 0.0
          %v2690 = vsel %vm2683, %v2451, 0.0
          %v2691 = vsel %vm2684, %v2452, 0.0
          %v2692 = vsel %vm2685, %v2453, 0.0
          %v2693 = vsel %vm2686, %v2454, 0.0
          %v2694 = vsel %vm2687, %v2455, 0.0
          %v2695 = vsel %vm2681, %v2456, 0.0
          %v2696 = vsel %vm2682, %v2457, 0.0
          %v2697 = vsel %vm2683, %v2458, 0.0
          %v2698 = vsel %vm2684, %v2459, 0.0
          %v2699 = vsel %vm2685, %v2460, 0.0
          %v2700 = vsel %vm2686, %v2461, 0.0
          %v2701 = vsel %vm2687, %v2462, 0.0
          %v2702 = vsel %vm2681, %v2463, 0.0
          %v2703 = vsel %vm2682, %v2464, 0.0
          %v2704 = vsel %vm2683, %v2465, 0.0
          %v2705 = vsel %vm2684, %v2466, 0.0
          %v2706 = vsel %vm2685, %v2467, 0.0
          %v2707 = vsel %vm2686, %v2468, 0.0
          %v2708 = vsel %vm2687, %v2469, 0.0
          %v2709 = vsel %vm2681, %v2470, 0.0
          %v2710 = vsel %vm2682, %v2471, 0.0
          %v2711 = vsel %vm2683, %v2472, 0.0
          %v2712 = vsel %vm2684, %v2473, 0.0
          %v2713 = vsel %vm2685, %v2474, 0.0
          %v2714 = vsel %vm2686, %v2475, 0.0
          %v2715 = vsel %vm2687, %v2476, 0.0
          %v2716 = vsel %vm2681, %v2477, 0.0
          %v2717 = vsel %vm2682, %v2478, 0.0
          %v2718 = vsel %vm2683, %v2479, 0.0
          %v2719 = vsel %vm2684, %v2480, 0.0
          %v2720 = vsel %vm2685, %v2481, 0.0
          %v2721 = vsel %vm2686, %v2482, 0.0
          %v2722 = vsel %vm2687, %v2483, 0.0
          %v2723 = vsel %vm2681, %v2484, 0.0
          %v2724 = vsel %vm2682, %v2485, 0.0
          %v2725 = vsel %vm2683, %v2486, 0.0
          %v2726 = vsel %vm2684, %v2487, 0.0
          %v2727 = vsel %vm2685, %v2488, 0.0
          %v2728 = vsel %vm2686, %v2489, 0.0
          %v2729 = vsel %vm2687, %v2490, 0.0
          %v2730 = vsel %vm2681, %v2491, 0.0
          %v2731 = vsel %vm2682, %v2492, 0.0
          %v2732 = vsel %vm2683, %v2493, 0.0
          %v2733 = vsel %vm2684, %v2494, 0.0
          %v2734 = vsel %vm2685, %v2495, 0.0
          %v2735 = vsel %vm2686, %v2496, 0.0
          %v2736 = vsel %vm2687, %v2497, 0.0
          %v2737 = vsel %vm2681, %v2498, 0.0
          %v2738 = vsel %vm2682, %v2499, 0.0
          %v2739 = vsel %vm2683, %v2500, 0.0
          %v2740 = vsel %vm2684, %v2501, 0.0
          %v2741 = vsel %vm2685, %v2502, 0.0
          %v2742 = vsel %vm2686, %v2503, 0.0
          %v2743 = vsel %vm2687, %v2504, 0.0
          %v2744 = vsel %vm2681, %v2505, 0.0
          %v2745 = vsel %vm2682, %v2506, 0.0
          %v2746 = vsel %vm2683, %v2507, 0.0
          %v2747 = vsel %vm2684, %v2508, 0.0
          %v2748 = vsel %vm2685, %v2509, 0.0
          %v2749 = vsel %vm2686, %v2510, 0.0
          %v2750 = vsel %vm2687, %v2511, 0.0
          %v2751 = vsel %vm2681, %v2512, 0.0
          %v2752 = vsel %vm2682, %v2513, 0.0
          %v2753 = vsel %vm2683, %v2514, 0.0
          %v2754 = vsel %vm2684, %v2515, 0.0
          %v2755 = vsel %vm2685, %v2516, 0.0
          %v2756 = vsel %vm2686, %v2517, 0.0
          %v2757 = vsel %vm2687, %v2518, 0.0
          %v2758 = vsel %vm2681, %v2519, 0.0
          %v2759 = vsel %vm2682, %v2520, 0.0
          %v2760 = vsel %vm2683, %v2521, 0.0
          %v2761 = vsel %vm2684, %v2522, 0.0
          %v2762 = vsel %vm2685, %v2523, 0.0
          %v2763 = vsel %vm2686, %v2524, 0.0
          %v2764 = vsel %vm2687, %v2525, 0.0
          %v2765 = vsel %vm2681, %v2526, 0.0
          %v2766 = vsel %vm2682, %v2527, 0.0
          %v2767 = vsel %vm2683, %v2528, 0.0
          %v2768 = vsel %vm2684, %v2529, 0.0
          %v2769 = vsel %vm2685, %v2530, 0.0
          %v2770 = vsel %vm2686, %v2531, 0.0
          %v2771 = vsel %vm2687, %v2532, 0.0
          %v2772 = vsel %vm2681, %v2533, 0.0
          %v2773 = vsel %vm2682, %v2534, 0.0
          %v2774 = vsel %vm2683, %v2535, 0.0
          %v2775 = vsel %vm2684, %v2536, 0.0
          %v2776 = vsel %vm2685, %v2537, 0.0
          %v2777 = vsel %vm2686, %v2538, 0.0
          %v2778 = vsel %vm2687, %v2539, 0.0
          %v2779 = vsel %vm2681, %v2540, 0.0
          %v2780 = vsel %vm2682, %v2541, 0.0
          %v2781 = vsel %vm2683, %v2542, 0.0
          %v2782 = vsel %vm2684, %v2543, 0.0
          %v2783 = vsel %vm2685, %v2544, 0.0
          %v2784 = vsel %vm2686, %v2545, 0.0
          %v2785 = vsel %vm2687, %v2546, 0.0
          %v2786 = vsel %vm2681, %v2547, 0.0
          %v2787 = vsel %vm2682, %v2548, 0.0
          %v2788 = vsel %vm2683, %v2549, 0.0
          %v2789 = vsel %vm2684, %v2550, 0.0
          %v2790 = vsel %vm2685, %v2551, 0.0
          %v2791 = vsel %vm2686, %v2552, 0.0
          %v2792 = vsel %vm2687, %v2553, 0.0
          %v2793 = vsel %vm2681, %v2554, 0.0
          %v2794 = vsel %vm2682, %v2555, 0.0
          %v2795 = vsel %vm2683, %v2556, 0.0
          %v2796 = vsel %vm2684, %v2557, 0.0
          %v2797 = vsel %vm2685, %v2558, 0.0
          %v2798 = vsel %vm2686, %v2559, 0.0
          %v2799 = vsel %vm2687, %v2560, 0.0
          %v2800 = vsel %vm2681, %v2561, 0.0
          %v2801 = vsel %vm2682, %v2562, 0.0
          %v2802 = vsel %vm2683, %v2563, 0.0
          %v2803 = vsel %vm2684, %v2564, 0.0
          %v2804 = vsel %vm2685, %v2565, 0.0
          %v2805 = vsel %vm2686, %v2566, 0.0
          %v2806 = vsel %vm2687, %v2567, 0.0
          %v2807 = vsel %vm2681, %v2568, 0.0
          %v2808 = vsel %vm2682, %v2569, 0.0
          %v2809 = vsel %vm2683, %v2570, 0.0
          %v2810 = vsel %vm2684, %v2571, 0.0
          %v2811 = vsel %vm2685, %v2572, 0.0
          %v2812 = vsel %vm2686, %v2573, 0.0
          %v2813 = vsel %vm2687, %v2574, 0.0
          %v2814 = vsel %vm2681, %v2575, 0.0
          %v2815 = vsel %vm2682, %v2576, 0.0
          %v2816 = vsel %vm2683, %v2577, 0.0
          %v2817 = vsel %vm2684, %v2578, 0.0
          %v2818 = vsel %vm2685, %v2579, 0.0
          %v2819 = vsel %vm2686, %v2580, 0.0
          %v2820 = vsel %vm2687, %v2581, 0.0
          %v2821 = vsel %vm2681, %v2582, 0.0
          %v2822 = vsel %vm2682, %v2583, 0.0
          %v2823 = vsel %vm2683, %v2584, 0.0
          %v2824 = vsel %vm2684, %v2585, 0.0
          %v2825 = vsel %vm2685, %v2586, 0.0
          %v2826 = vsel %vm2686, %v2587, 0.0
          %v2827 = vsel %vm2687, %v2588, 0.0
          %v2828 = vsel %vm2681, %v2589, 0.0
          %v2829 = vsel %vm2682, %v2590, 0.0
          %v2830 = vsel %vm2683, %v2591, 0.0
          %v2831 = vsel %vm2684, %v2592, 0.0
          %v2832 = vsel %vm2685, %v2593, 0.0
          %v2833 = vsel %vm2686, %v2594, 0.0
          %v2834 = vsel %vm2687, %v2595, 0.0
          %v2835 = vsel %vm2681, %v2596, 0.0
          %v2836 = vsel %vm2682, %v2597, 0.0
          %v2837 = vsel %vm2683, %v2598, 0.0
          %v2838 = vsel %vm2684, %v2599, 0.0
          %v2839 = vsel %vm2685, %v2600, 0.0
          %v2840 = vsel %vm2686, %v2601, 0.0
          %v2841 = vsel %vm2687, %v2602, 0.0
          %v2842 = vsel %vm2681, %v2603, 0.0
          %v2843 = vsel %vm2682, %v2604, 0.0
          %v2844 = vsel %vm2683, %v2605, 0.0
          %v2845 = vsel %vm2684, %v2606, 0.0
          %v2846 = vsel %vm2685, %v2607, 0.0
          %v2847 = vsel %vm2686, %v2608, 0.0
          %v2848 = vsel %vm2687, %v2609, 0.0
          %v2849 = vsel %vm2681, %v2610, 0.0
          %v2850 = vsel %vm2682, %v2611, 0.0
          %v2851 = vsel %vm2683, %v2612, 0.0
          %v2852 = vsel %vm2684, %v2613, 0.0
          %v2853 = vsel %vm2685, %v2614, 0.0
          %v2854 = vsel %vm2686, %v2615, 0.0
          %v2855 = vsel %vm2687, %v2616, 0.0
          %v2856 = vsel %vm2681, %v2617, 0.0
          %v2857 = vsel %vm2682, %v2618, 0.0
          %v2858 = vsel %vm2683, %v2619, 0.0
          %v2859 = vsel %vm2684, %v2620, 0.0
          %v2860 = vsel %vm2685, %v2621, 0.0
          %v2861 = vsel %vm2686, %v2622, 0.0
          %v2862 = vsel %vm2687, %v2623, 0.0
          %v2863 = vsel %vm2681, %v2624, 0.0
          %v2864 = vsel %vm2682, %v2625, 0.0
          %v2865 = vsel %vm2683, %v2626, 0.0
          %v2866 = vsel %vm2684, %v2627, 0.0
          %v2867 = vsel %vm2685, %v2628, 0.0
          %v2868 = vsel %vm2686, %v2629, 0.0
          %v2869 = vsel %vm2687, %v2630, 0.0
          %v2870 = vsel %vm2681, %v2631, 0.0
          %v2871 = vsel %vm2682, %v2632, 0.0
          %v2872 = vsel %vm2683, %v2633, 0.0
          %v2873 = vsel %vm2684, %v2634, 0.0
          %v2874 = vsel %vm2685, %v2635, 0.0
          %v2875 = vsel %vm2686, %v2636, 0.0
          %v2876 = vsel %vm2687, %v2637, 0.0
          %v2877 = vsel %vm2681, %v2638, 0.0
          %v2878 = vsel %vm2682, %v2639, 0.0
          %v2879 = vsel %vm2683, %v2640, 0.0
          %v2880 = vsel %vm2684, %v2641, 0.0
          %v2881 = vsel %vm2685, %v2642, 0.0
          %v2882 = vsel %vm2686, %v2643, 0.0
          %v2883 = vsel %vm2687, %v2644, 0.0
          %v2884 = vsel %vm2681, %v2645, 0.0
          %v2885 = vsel %vm2682, %v2646, 0.0
          %v2886 = vsel %vm2683, %v2647, 0.0
          %v2887 = vsel %vm2684, %v2648, 0.0
          %v2888 = vsel %vm2685, %v2649, 0.0
          %v2889 = vsel %vm2686, %v2650, 0.0
          %v2890 = vsel %vm2687, %v2651, 0.0
          %v2891 = vsel %vm2681, %v2652, 0.0
          %v2892 = vsel %vm2682, %v2653, 0.0
          %v2893 = vsel %vm2683, %v2654, 0.0
          %v2894 = vsel %vm2684, %v2655, 0.0
          %v2895 = vsel %vm2685, %v2656, 0.0
          %v2896 = vsel %vm2686, %v2657, 0.0
          %v2897 = vsel %vm2687, %v2658, 0.0
          %v2898 = vsel %vm2681, %v2659, 0.0
          %v2899 = vsel %vm2682, %v2660, 0.0
          %v2900 = vsel %vm2683, %v2661, 0.0
          %v2901 = vsel %vm2684, %v2662, 0.0
          %v2902 = vsel %vm2685, %v2663, 0.0
          %v2903 = vsel %vm2686, %v2664, 0.0
          %v2904 = vsel %vm2687, %v2665, 0.0
          %v2905 = vsel %vm2681, %v2666, 0.0
          %v2906 = vsel %vm2682, %v2667, 0.0
          %v2907 = vsel %vm2683, %v2668, 0.0
          %v2908 = vsel %vm2684, %v2669, 0.0
          %v2909 = vsel %vm2685, %v2670, 0.0
          %v2910 = vsel %vm2686, %v2671, 0.0
          %v2911 = vsel %vm2687, %v2672, 0.0
          %v2912 = vpack.c.bf16 %v2695, %v2688
          %v2913 = vpack.c.bf16 %v2696, %v2689
          %v2914 = vpack.c.bf16 %v2697, %v2690
          %v2915 = vpack.c.bf16 %v2698, %v2691
          %v2916 = vpack.c.bf16 %v2699, %v2692
          %v2917 = vpack.c.bf16 %v2700, %v2693
          %v2918 = vpack.c.bf16 %v2701, %v2694
          %v2919 = vpack.c.bf16 %v2709, %v2702
          %v2920 = vpack.c.bf16 %v2710, %v2703
          %v2921 = vpack.c.bf16 %v2711, %v2704
          %v2922 = vpack.c.bf16 %v2712, %v2705
          %v2923 = vpack.c.bf16 %v2713, %v2706
          %v2924 = vpack.c.bf16 %v2714, %v2707
          %v2925 = vpack.c.bf16 %v2715, %v2708
          %v2926 = vpack.c.bf16 %v2723, %v2716
          %v2927 = vpack.c.bf16 %v2724, %v2717
          %v2928 = vpack.c.bf16 %v2725, %v2718
          %v2929 = vpack.c.bf16 %v2726, %v2719
          %v2930 = vpack.c.bf16 %v2727, %v2720
          %v2931 = vpack.c.bf16 %v2728, %v2721
          %v2932 = vpack.c.bf16 %v2729, %v2722
          %v2933 = vpack.c.bf16 %v2737, %v2730
          %v2934 = vpack.c.bf16 %v2738, %v2731
          %v2935 = vpack.c.bf16 %v2739, %v2732
          %v2936 = vpack.c.bf16 %v2740, %v2733
          %v2937 = vpack.c.bf16 %v2741, %v2734
          %v2938 = vpack.c.bf16 %v2742, %v2735
          %v2939 = vpack.c.bf16 %v2743, %v2736
          %v2940 = vpack.c.bf16 %v2751, %v2744
          %v2941 = vpack.c.bf16 %v2752, %v2745
          %v2942 = vpack.c.bf16 %v2753, %v2746
          %v2943 = vpack.c.bf16 %v2754, %v2747
          %v2944 = vpack.c.bf16 %v2755, %v2748
          %v2945 = vpack.c.bf16 %v2756, %v2749
          %v2946 = vpack.c.bf16 %v2757, %v2750
          %v2947 = vpack.c.bf16 %v2765, %v2758
          %v2948 = vpack.c.bf16 %v2766, %v2759
          %v2949 = vpack.c.bf16 %v2767, %v2760
          %v2950 = vpack.c.bf16 %v2768, %v2761
          %v2951 = vpack.c.bf16 %v2769, %v2762
          %v2952 = vpack.c.bf16 %v2770, %v2763
          %v2953 = vpack.c.bf16 %v2771, %v2764
          %v2954 = vpack.c.bf16 %v2779, %v2772
          %v2955 = vpack.c.bf16 %v2780, %v2773
          %v2956 = vpack.c.bf16 %v2781, %v2774
          %v2957 = vpack.c.bf16 %v2782, %v2775
          %v2958 = vpack.c.bf16 %v2783, %v2776
          %v2959 = vpack.c.bf16 %v2784, %v2777
          %v2960 = vpack.c.bf16 %v2785, %v2778
          %v2961 = vpack.c.bf16 %v2793, %v2786
          %v2962 = vpack.c.bf16 %v2794, %v2787
          %v2963 = vpack.c.bf16 %v2795, %v2788
          %v2964 = vpack.c.bf16 %v2796, %v2789
          %v2965 = vpack.c.bf16 %v2797, %v2790
          %v2966 = vpack.c.bf16 %v2798, %v2791
          %v2967 = vpack.c.bf16 %v2799, %v2792
          %v2968 = vpack.c.bf16 %v2807, %v2800
          %v2969 = vpack.c.bf16 %v2808, %v2801
          %v2970 = vpack.c.bf16 %v2809, %v2802
          %v2971 = vpack.c.bf16 %v2810, %v2803
          %v2972 = vpack.c.bf16 %v2811, %v2804
          %v2973 = vpack.c.bf16 %v2812, %v2805
          %v2974 = vpack.c.bf16 %v2813, %v2806
          %v2975 = vpack.c.bf16 %v2821, %v2814
          %v2976 = vpack.c.bf16 %v2822, %v2815
          %v2977 = vpack.c.bf16 %v2823, %v2816
          %v2978 = vpack.c.bf16 %v2824, %v2817
          %v2979 = vpack.c.bf16 %v2825, %v2818
          %v2980 = vpack.c.bf16 %v2826, %v2819
          %v2981 = vpack.c.bf16 %v2827, %v2820
          %v2982 = vpack.c.bf16 %v2835, %v2828
          %v2983 = vpack.c.bf16 %v2836, %v2829
          %v2984 = vpack.c.bf16 %v2837, %v2830
          %v2985 = vpack.c.bf16 %v2838, %v2831
          %v2986 = vpack.c.bf16 %v2839, %v2832
          %v2987 = vpack.c.bf16 %v2840, %v2833
          %v2988 = vpack.c.bf16 %v2841, %v2834
          %v2989 = vpack.c.bf16 %v2849, %v2842
          %v2990 = vpack.c.bf16 %v2850, %v2843
          %v2991 = vpack.c.bf16 %v2851, %v2844
          %v2992 = vpack.c.bf16 %v2852, %v2845
          %v2993 = vpack.c.bf16 %v2853, %v2846
          %v2994 = vpack.c.bf16 %v2854, %v2847
          %v2995 = vpack.c.bf16 %v2855, %v2848
          %v2996 = vpack.c.bf16 %v2863, %v2856
          %v2997 = vpack.c.bf16 %v2864, %v2857
          %v2998 = vpack.c.bf16 %v2865, %v2858
          %v2999 = vpack.c.bf16 %v2866, %v2859
          %v3000 = vpack.c.bf16 %v2867, %v2860
          %v3001 = vpack.c.bf16 %v2868, %v2861
          %v3002 = vpack.c.bf16 %v2869, %v2862
          %v3003 = vpack.c.bf16 %v2877, %v2870
          %v3004 = vpack.c.bf16 %v2878, %v2871
          %v3005 = vpack.c.bf16 %v2879, %v2872
          %v3006 = vpack.c.bf16 %v2880, %v2873
          %v3007 = vpack.c.bf16 %v2881, %v2874
          %v3008 = vpack.c.bf16 %v2882, %v2875
          %v3009 = vpack.c.bf16 %v2883, %v2876
          %v3010 = vpack.c.bf16 %v2891, %v2884
          %v3011 = vpack.c.bf16 %v2892, %v2885
          %v3012 = vpack.c.bf16 %v2893, %v2886
          %v3013 = vpack.c.bf16 %v2894, %v2887
          %v3014 = vpack.c.bf16 %v2895, %v2888
          %v3015 = vpack.c.bf16 %v2896, %v2889
          %v3016 = vpack.c.bf16 %v2897, %v2890
          %v3017 = vpack.c.bf16 %v2905, %v2898
          %v3018 = vpack.c.bf16 %v2906, %v2899
          %v3019 = vpack.c.bf16 %v2907, %v2900
          %v3020 = vpack.c.bf16 %v2908, %v2901
          %v3021 = vpack.c.bf16 %v2909, %v2902
          %v3022 = vpack.c.bf16 %v2910, %v2903
          %v3023 = vpack.c.bf16 %v2911, %v2904
          %3024 = vst [vmem:[#allocation2] sm:$0xff] %v2912
          %3025 = vst [vmem:[#allocation2 + $0x8] sm:$0xff] %v2913
          %3026 = vst [vmem:[#allocation2 + $0x10] sm:$0xff] %v2914
          %3027 = vst [vmem:[#allocation2 + $0x18] sm:$0xff] %v2915
          %3028 = vst [vmem:[#allocation2 + $0x20] sm:$0xff] %v2916
          %3029 = vst [vmem:[#allocation2 + $0x28] sm:$0xff] %v2917
          %3030 = vst [vmem:[#allocation2 + $0x30] sm:$0xff] %v2918
          %3031 = vst [vmem:[#allocation2 + $0x38] sm:$0xff] %v2919
          %3032 = vst [vmem:[#allocation2 + $0x40] sm:$0xff] %v2920
          %3033 = vst [vmem:[#allocation2 + $0x48] sm:$0xff] %v2921
          %3034 = vst [vmem:[#allocation2 + $0x50] sm:$0xff] %v2922
          %3035 = vst [vmem:[#allocation2 + $0x58] sm:$0xff] %v2923
          %3036 = vst [vmem:[#allocation2 + $0x60] sm:$0xff] %v2924
          %3037 = vst [vmem:[#allocation2 + $0x68] sm:$0xff] %v2925
          %3038 = vst [vmem:[#allocation2 + $0x70] sm:$0xff] %v2926
          %3039 = vst [vmem:[#allocation2 + $0x78] sm:$0xff] %v2927
          %3040 = vst [vmem:[#allocation2 + $0x80] sm:$0xff] %v2928
          %3041 = vst [vmem:[#allocation2 + $0x88] sm:$0xff] %v2929
          %3042 = vst [vmem:[#allocation2 + $0x90] sm:$0xff] %v2930
          %3043 = vst [vmem:[#allocation2 + $0x98] sm:$0xff] %v2931
          %3044 = vst [vmem:[#allocation2 + $0xa0] sm:$0xff] %v2932
          %3045 = vst [vmem:[#allocation2 + $0xa8] sm:$0xff] %v2933
          %3046 = vst [vmem:[#allocation2 + $0xb0] sm:$0xff] %v2934
          %3047 = vst [vmem:[#allocation2 + $0xb8] sm:$0xff] %v2935
          %3048 = vst [vmem:[#allocation2 + $0xc0] sm:$0xff] %v2936
          %3049 = vst [vmem:[#allocation2 + $0xc8] sm:$0xff] %v2937
          %3050 = vst [vmem:[#allocation2 + $0xd0] sm:$0xff] %v2938
          %3051 = vst [vmem:[#allocation2 + $0xd8] sm:$0xff] %v2939
          %3052 = vst [vmem:[#allocation2 + $0xe0] sm:$0xff] %v2940
          %3053 = vst [vmem:[#allocation2 + $0xe8] sm:$0xff] %v2941
          %3054 = vst [vmem:[#allocation2 + $0xf0] sm:$0xff] %v2942
          %3055 = vst [vmem:[#allocation2 + $0xf8] sm:$0xff] %v2943
          %3056 = vst [vmem:[#allocation2 + $0x100] sm:$0xff] %v2944
          %3057 = vst [vmem:[#allocation2 + $0x108] sm:$0xff] %v2945
          %3058 = vst [vmem:[#allocation2 + $0x110] sm:$0xff] %v2946
          %3059 = vst [vmem:[#allocation2 + $0x118] sm:$0xff] %v2947
          %3060 = vst [vmem:[#allocation2 + $0x120] sm:$0xff] %v2948
          %3061 = vst [vmem:[#allocation2 + $0x128] sm:$0xff] %v2949
          %3062 = vst [vmem:[#allocation2 + $0x130] sm:$0xff] %v2950
          %3063 = vst [vmem:[#allocation2 + $0x138] sm:$0xff] %v2951
          %3064 = vst [vmem:[#allocation2 + $0x140] sm:$0xff] %v2952
          %3065 = vst [vmem:[#allocation2 + $0x148] sm:$0xff] %v2953
          %3066 = vst [vmem:[#allocation2 + $0x150] sm:$0xff] %v2954
          %3067 = vst [vmem:[#allocation2 + $0x158] sm:$0xff] %v2955
          %3068 = vst [vmem:[#allocation2 + $0x160] sm:$0xff] %v2956
          %3069 = vst [vmem:[#allocation2 + $0x168] sm:$0xff] %v2957
          %3070 = vst [vmem:[#allocation2 + $0x170] sm:$0xff] %v2958
          %3071 = vst [vmem:[#allocation2 + $0x178] sm:$0xff] %v2959
          %3072 = vst [vmem:[#allocation2 + $0x180] sm:$0xff] %v2960
          %3073 = vst [vmem:[#allocation2 + $0x188] sm:$0xff] %v2961
          %3074 = vst [vmem:[#allocation2 + $0x190] sm:$0xff] %v2962
          %3075 = vst [vmem:[#allocation2 + $0x198] sm:$0xff] %v2963
          %3076 = vst [vmem:[#allocation2 + $0x1a0] sm:$0xff] %v2964
          %3077 = vst [vmem:[#allocation2 + $0x1a8] sm:$0xff] %v2965
          %3078 = vst [vmem:[#allocation2 + $0x1b0] sm:$0xff] %v2966
          %3079 = vst [vmem:[#allocation2 + $0x1b8] sm:$0xff] %v2967
          %3080 = vst [vmem:[#allocation2 + $0x1c0] sm:$0xff] %v2968
          %3081 = vst [vmem:[#allocation2 + $0x1c8] sm:$0xff] %v2969
          %3082 = vst [vmem:[#allocation2 + $0x1d0] sm:$0xff] %v2970
          %3083 = vst [vmem:[#allocation2 + $0x1d8] sm:$0xff] %v2971
          %3084 = vst [vmem:[#allocation2 + $0x1e0] sm:$0xff] %v2972
          %3085 = vst [vmem:[#allocation2 + $0x1e8] sm:$0xff] %v2973
          %3086 = vst [vmem:[#allocation2 + $0x1f0] sm:$0xff] %v2974
          %3087 = vst [vmem:[#allocation2 + $0x1f8] sm:$0xff] %v2975
          %3088 = vst [vmem:[#allocation2 + $0x200] sm:$0xff] %v2976
          %3089 = vst [vmem:[#allocation2 + $0x208] sm:$0xff] %v2977
          %3090 = vst [vmem:[#allocation2 + $0x210] sm:$0xff] %v2978
          %3091 = vst [vmem:[#allocation2 + $0x218] sm:$0xff] %v2979
          %3092 = vst [vmem:[#allocation2 + $0x220] sm:$0xff] %v2980
          %3093 = vst [vmem:[#allocation2 + $0x228] sm:$0xff] %v2981
          %3094 = vst [vmem:[#allocation2 + $0x230] sm:$0xff] %v2982
          %3095 = vst [vmem:[#allocation2 + $0x238] sm:$0xff] %v2983
          %3096 = vst [vmem:[#allocation2 + $0x240] sm:$0xff] %v2984
          %3097 = vst [vmem:[#allocation2 + $0x248] sm:$0xff] %v2985
          %3098 = vst [vmem:[#allocation2 + $0x250] sm:$0xff] %v2986
          %3099 = vst [vmem:[#allocation2 + $0x258] sm:$0xff] %v2987
          %3100 = vst [vmem:[#allocation2 + $0x260] sm:$0xff] %v2988
          %3101 = vst [vmem:[#allocation2 + $0x268] sm:$0xff] %v2989
          %3102 = vst [vmem:[#allocation2 + $0x270] sm:$0xff] %v2990
          %3103 = vst [vmem:[#allocation2 + $0x278] sm:$0xff] %v2991
          %3104 = vst [vmem:[#allocation2 + $0x280] sm:$0xff] %v2992
          %3105 = vst [vmem:[#allocation2 + $0x288] sm:$0xff] %v2993
          %3106 = vst [vmem:[#allocation2 + $0x290] sm:$0xff] %v2994
          %3107 = vst [vmem:[#allocation2 + $0x298] sm:$0xff] %v2995
          %3108 = vst [vmem:[#allocation2 + $0x2a0] sm:$0xff] %v2996
          %3109 = vst [vmem:[#allocation2 + $0x2a8] sm:$0xff] %v2997
          %3110 = vst [vmem:[#allocation2 + $0x2b0] sm:$0xff] %v2998
          %3111 = vst [vmem:[#allocation2 + $0x2b8] sm:$0xff] %v2999
          %3112 = vst [vmem:[#allocation2 + $0x2c0] sm:$0xff] %v3000
          %3113 = vst [vmem:[#allocation2 + $0x2c8] sm:$0xff] %v3001
          %3114 = vst [vmem:[#allocation2 + $0x2d0] sm:$0xff] %v3002
          %3115 = vst [vmem:[#allocation2 + $0x2d8] sm:$0xff] %v3003
          %3116 = vst [vmem:[#allocation2 + $0x2e0] sm:$0xff] %v3004
          %3117 = vst [vmem:[#allocation2 + $0x2e8] sm:$0xff] %v3005
          %3118 = vst [vmem:[#allocation2 + $0x2f0] sm:$0xff] %v3006
          %3119 = vst [vmem:[#allocation2 + $0x2f8] sm:$0xff] %v3007
          %3120 = vst [vmem:[#allocation2 + $0x300] sm:$0xff] %v3008
          %3121 = vst [vmem:[#allocation2 + $0x308] sm:$0xff] %v3009
          %3122 = vst [vmem:[#allocation2 + $0x310] sm:$0xff] %v3010
          %3123 = vst [vmem:[#allocation2 + $0x318] sm:$0xff] %v3011
          %3124 = vst [vmem:[#allocation2 + $0x320] sm:$0xff] %v3012
          %3125 = vst [vmem:[#allocation2 + $0x328] sm:$0xff] %v3013
          %3126 = vst [vmem:[#allocation2 + $0x330] sm:$0xff] %v3014
          %3127 = vst [vmem:[#allocation2 + $0x338] sm:$0xff] %v3015
          %3128 = vst [vmem:[#allocation2 + $0x340] sm:$0xff] %v3016
          %3129 = vst [vmem:[#allocation2 + $0x348] sm:$0xff] %v3017
          %3130 = vst [vmem:[#allocation2 + $0x350] sm:$0xff] %v3018
          %3131 = vst [vmem:[#allocation2 + $0x358] sm:$0xff] %v3019
          %3132 = vst [vmem:[#allocation2 + $0x360] sm:$0xff] %v3020
          %3133 = vst [vmem:[#allocation2 + $0x368] sm:$0xff] %v3021
          %3134 = vst [vmem:[#allocation2 + $0x370] sm:$0xff] %v3022
          %3135 = vst [vmem:[#allocation2 + $0x378] sm:$0xff] %v3023
        $region56: #{tpu_custom_call.1} parent=43 // pred_fallthru
          _
        %v3136 = vld [vmem:[%s279] sm:$0xff]
        %v3137 = vld [vmem:[%s279 + $0x8] sm:$0xff]
        %v3138 = vld [vmem:[%s279 + $0x10] sm:$0xff]
        %v3139 = vld [vmem:[%s279 + $0x18] sm:$0xff]
        %v3140 = vld [vmem:[%s279 + $0x20] sm:$0xff]
        %v3141 = vld [vmem:[%s279 + $0x28] sm:$0xff]
        %v3142 = vld [vmem:[%s279 + $0x30] sm:$0xff]
        %v3143 = vld [vmem:[%s279 + $0x38] sm:$0xff]
        %v3144 = vld [vmem:[%s279 + $0x40] sm:$0xff]
        %v3145 = vld [vmem:[%s279 + $0x48] sm:$0xff]
        %v3146 = vld [vmem:[%s279 + $0x50] sm:$0xff]
        %v3147 = vld [vmem:[%s279 + $0x58] sm:$0xff]
        %v3148 = vld [vmem:[%s279 + $0x60] sm:$0xff]
        %v3149 = vld [vmem:[%s279 + $0x68] sm:$0xff]
        %v3150 = vld [vmem:[%s279 + $0x70] sm:$0xff]
        %v3151 = vld [vmem:[%s279 + $0x78] sm:$0xff]
        %v3152 = vld [vmem:[%s279 + $0x80] sm:$0xff]
        %v3153 = vld [vmem:[%s279 + $0x88] sm:$0xff]
        %v3154 = vld [vmem:[%s279 + $0x90] sm:$0xff]
        %v3155 = vld [vmem:[%s279 + $0x98] sm:$0xff]
        %v3156 = vld [vmem:[%s279 + $0xa0] sm:$0xff]
        %v3157 = vld [vmem:[%s279 + $0xa8] sm:$0xff]
        %v3158 = vld [vmem:[%s279 + $0xb0] sm:$0xff]
        %v3159 = vld [vmem:[%s279 + $0xb8] sm:$0xff]
        %v3160 = vld [vmem:[%s279 + $0xc0] sm:$0xff]
        %v3161 = vld [vmem:[%s279 + $0xc8] sm:$0xff]
        %v3162 = vld [vmem:[%s279 + $0xd0] sm:$0xff]
        %v3163 = vld [vmem:[%s279 + $0xd8] sm:$0xff]
        %v3164 = vld [vmem:[%s279 + $0xe0] sm:$0xff]
        %v3165 = vld [vmem:[%s279 + $0xe8] sm:$0xff]
        %v3166 = vld [vmem:[%s279 + $0xf0] sm:$0xff]
        %v3167 = vld [vmem:[%s279 + $0xf8] sm:$0xff]
        %v3168 = vld [vmem:[%s279 + $0x100] sm:$0xff]
        %v3169 = vld [vmem:[%s279 + $0x108] sm:$0xff]
        %v3170 = vld [vmem:[%s279 + $0x110] sm:$0xff]
        %v3171 = vld [vmem:[%s279 + $0x118] sm:$0xff]
        %v3172 = vld [vmem:[%s279 + $0x120] sm:$0xff]
        %v3173 = vld [vmem:[%s279 + $0x128] sm:$0xff]
        %v3174 = vld [vmem:[%s279 + $0x130] sm:$0xff]
        %v3175 = vld [vmem:[%s279 + $0x138] sm:$0xff]
        %v3176 = vld [vmem:[%s279 + $0x140] sm:$0xff]
        %v3177 = vld [vmem:[%s279 + $0x148] sm:$0xff]
        %v3178 = vld [vmem:[%s279 + $0x150] sm:$0xff]
        %v3179 = vld [vmem:[%s279 + $0x158] sm:$0xff]
        %v3180 = vld [vmem:[%s279 + $0x160] sm:$0xff]
        %v3181 = vld [vmem:[%s279 + $0x168] sm:$0xff]
        %v3182 = vld [vmem:[%s279 + $0x170] sm:$0xff]
        %v3183 = vld [vmem:[%s279 + $0x178] sm:$0xff]
        %v3184 = vld [vmem:[%s279 + $0x180] sm:$0xff]
        %v3185 = vld [vmem:[%s279 + $0x188] sm:$0xff]
        %v3186 = vld [vmem:[%s279 + $0x190] sm:$0xff]
        %v3187 = vld [vmem:[%s279 + $0x198] sm:$0xff]
        %v3188 = vld [vmem:[%s279 + $0x1a0] sm:$0xff]
        %v3189 = vld [vmem:[%s279 + $0x1a8] sm:$0xff]
        %v3190 = vld [vmem:[%s279 + $0x1b0] sm:$0xff]
        %v3191 = vld [vmem:[%s279 + $0x1b8] sm:$0xff]
        %v3192 = vld [vmem:[%s279 + $0x1c0] sm:$0xff]
        %v3193 = vld [vmem:[%s279 + $0x1c8] sm:$0xff]
        %v3194 = vld [vmem:[%s279 + $0x1d0] sm:$0xff]
        %v3195 = vld [vmem:[%s279 + $0x1d8] sm:$0xff]
        %v3196 = vld [vmem:[%s279 + $0x1e0] sm:$0xff]
        %v3197 = vld [vmem:[%s279 + $0x1e8] sm:$0xff]
        %v3198 = vld [vmem:[%s279 + $0x1f0] sm:$0xff]
        %v3199 = vld [vmem:[%s279 + $0x1f8] sm:$0xff]
        %v3200 = vld [vmem:[#allocation2] sm:$0xff]
        %v3201 = vld [vmem:[#allocation2 + $0x8] sm:$0xff]
        %v3202 = vld [vmem:[#allocation2 + $0x10] sm:$0xff]
        %v3203 = vld [vmem:[#allocation2 + $0x18] sm:$0xff]
        %v3204 = vld [vmem:[#allocation2 + $0x20] sm:$0xff]
        %v3205 = vld [vmem:[#allocation2 + $0x28] sm:$0xff]
        %v3206 = vld [vmem:[#allocation2 + $0x30] sm:$0xff]
        %v3207 = vld [vmem:[#allocation2 + $0x38] sm:$0xff]
        %v3208 = vld [vmem:[#allocation2 + $0x40] sm:$0xff]
        %v3209 = vld [vmem:[#allocation2 + $0x48] sm:$0xff]
        %v3210 = vld [vmem:[#allocation2 + $0x50] sm:$0xff]
        %v3211 = vld [vmem:[#allocation2 + $0x58] sm:$0xff]
        %v3212 = vld [vmem:[#allocation2 + $0x60] sm:$0xff]
        %v3213 = vld [vmem:[#allocation2 + $0x68] sm:$0xff]
        %v3214 = vld [vmem:[#allocation2 + $0x70] sm:$0xff]
        %v3215 = vld [vmem:[#allocation2 + $0x78] sm:$0xff]
        %v3216 = vld [vmem:[#allocation2 + $0x80] sm:$0xff]
        %v3217 = vld [vmem:[#allocation2 + $0x88] sm:$0xff]
        %v3218 = vld [vmem:[#allocation2 + $0x90] sm:$0xff]
        %v3219 = vld [vmem:[#allocation2 + $0x98] sm:$0xff]
        %v3220 = vld [vmem:[#allocation2 + $0xa0] sm:$0xff]
        %v3221 = vld [vmem:[#allocation2 + $0xa8] sm:$0xff]
        %v3222 = vld [vmem:[#allocation2 + $0xb0] sm:$0xff]
        %v3223 = vld [vmem:[#allocation2 + $0xb8] sm:$0xff]
        %v3224 = vld [vmem:[#allocation2 + $0xc0] sm:$0xff]
        %v3225 = vld [vmem:[#allocation2 + $0xc8] sm:$0xff]
        %v3226 = vld [vmem:[#allocation2 + $0xd0] sm:$0xff]
        %v3227 = vld [vmem:[#allocation2 + $0xd8] sm:$0xff]
        %v3228 = vld [vmem:[#allocation2 + $0xe0] sm:$0xff]
        %v3229 = vld [vmem:[#allocation2 + $0xe8] sm:$0xff]
        %v3230 = vld [vmem:[#allocation2 + $0xf0] sm:$0xff]
        %v3231 = vld [vmem:[#allocation2 + $0xf8] sm:$0xff]
        %v3232 = vld [vmem:[#allocation2 + $0x100] sm:$0xff]
        %v3233 = vld [vmem:[#allocation2 + $0x108] sm:$0xff]
        %v3234 = vld [vmem:[#allocation2 + $0x110] sm:$0xff]
        %v3235 = vld [vmem:[#allocation2 + $0x118] sm:$0xff]
        %v3236 = vld [vmem:[#allocation2 + $0x120] sm:$0xff]
        %v3237 = vld [vmem:[#allocation2 + $0x128] sm:$0xff]
        %v3238 = vld [vmem:[#allocation2 + $0x130] sm:$0xff]
        %v3239 = vld [vmem:[#allocation2 + $0x138] sm:$0xff]
        %v3240 = vld [vmem:[#allocation2 + $0x140] sm:$0xff]
        %v3241 = vld [vmem:[#allocation2 + $0x148] sm:$0xff]
        %v3242 = vld [vmem:[#allocation2 + $0x150] sm:$0xff]
        %v3243 = vld [vmem:[#allocation2 + $0x158] sm:$0xff]
        %v3244 = vld [vmem:[#allocation2 + $0x160] sm:$0xff]
        %v3245 = vld [vmem:[#allocation2 + $0x168] sm:$0xff]
        %v3246 = vld [vmem:[#allocation2 + $0x170] sm:$0xff]
        %v3247 = vld [vmem:[#allocation2 + $0x178] sm:$0xff]
        %v3248 = vld [vmem:[#allocation2 + $0x180] sm:$0xff]
        %v3249 = vld [vmem:[#allocation2 + $0x188] sm:$0xff]
        %v3250 = vld [vmem:[#allocation2 + $0x190] sm:$0xff]
        %v3251 = vld [vmem:[#allocation2 + $0x198] sm:$0xff]
        %v3252 = vld [vmem:[#allocation2 + $0x1a0] sm:$0xff]
        %v3253 = vld [vmem:[#allocation2 + $0x1a8] sm:$0xff]
        %v3254 = vld [vmem:[#allocation2 + $0x1b0] sm:$0xff]
        %v3255 = vld [vmem:[#allocation2 + $0x1b8] sm:$0xff]
        %v3256 = vld [vmem:[#allocation2 + $0x1c0] sm:$0xff]
        %v3257 = vld [vmem:[#allocation2 + $0x1c8] sm:$0xff]
        %v3258 = vld [vmem:[#allocation2 + $0x1d0] sm:$0xff]
        %v3259 = vld [vmem:[#allocation2 + $0x1d8] sm:$0xff]
        %v3260 = vld [vmem:[#allocation2 + $0x1e0] sm:$0xff]
        %v3261 = vld [vmem:[#allocation2 + $0x1e8] sm:$0xff]
        %v3262 = vld [vmem:[#allocation2 + $0x1f0] sm:$0xff]
        %v3263 = vld [vmem:[#allocation2 + $0x1f8] sm:$0xff]
        %v3264 = vld [vmem:[#allocation2 + $0x200] sm:$0xff]
        %v3265 = vld [vmem:[#allocation2 + $0x208] sm:$0xff]
        %v3266 = vld [vmem:[#allocation2 + $0x210] sm:$0xff]
        %v3267 = vld [vmem:[#allocation2 + $0x218] sm:$0xff]
        %v3268 = vld [vmem:[#allocation2 + $0x220] sm:$0xff]
        %v3269 = vld [vmem:[#allocation2 + $0x228] sm:$0xff]
        %v3270 = vld [vmem:[#allocation2 + $0x230] sm:$0xff]
        %v3271 = vld [vmem:[#allocation2 + $0x238] sm:$0xff]
        %v3272 = vld [vmem:[#allocation2 + $0x240] sm:$0xff]
        %v3273 = vld [vmem:[#allocation2 + $0x248] sm:$0xff]
        %v3274 = vld [vmem:[#allocation2 + $0x250] sm:$0xff]
        %v3275 = vld [vmem:[#allocation2 + $0x258] sm:$0xff]
        %v3276 = vld [vmem:[#allocation2 + $0x260] sm:$0xff]
        %v3277 = vld [vmem:[#allocation2 + $0x268] sm:$0xff]
        %v3278 = vld [vmem:[#allocation2 + $0x270] sm:$0xff]
        %v3279 = vld [vmem:[#allocation2 + $0x278] sm:$0xff]
        %v3280 = vld [vmem:[#allocation2 + $0x280] sm:$0xff]
        %v3281 = vld [vmem:[#allocation2 + $0x288] sm:$0xff]
        %v3282 = vld [vmem:[#allocation2 + $0x290] sm:$0xff]
        %v3283 = vld [vmem:[#allocation2 + $0x298] sm:$0xff]
        %v3284 = vld [vmem:[#allocation2 + $0x2a0] sm:$0xff]
        %v3285 = vld [vmem:[#allocation2 + $0x2a8] sm:$0xff]
        %v3286 = vld [vmem:[#allocation2 + $0x2b0] sm:$0xff]
        %v3287 = vld [vmem:[#allocation2 + $0x2b8] sm:$0xff]
        %v3288 = vld [vmem:[#allocation2 + $0x2c0] sm:$0xff]
        %v3289 = vld [vmem:[#allocation2 + $0x2c8] sm:$0xff]
        %v3290 = vld [vmem:[#allocation2 + $0x2d0] sm:$0xff]
        %v3291 = vld [vmem:[#allocation2 + $0x2d8] sm:$0xff]
        %v3292 = vld [vmem:[#allocation2 + $0x2e0] sm:$0xff]
        %v3293 = vld [vmem:[#allocation2 + $0x2e8] sm:$0xff]
        %v3294 = vld [vmem:[#allocation2 + $0x2f0] sm:$0xff]
        %v3295 = vld [vmem:[#allocation2 + $0x2f8] sm:$0xff]
        %v3296 = vld [vmem:[#allocation2 + $0x300] sm:$0xff]
        %v3297 = vld [vmem:[#allocation2 + $0x308] sm:$0xff]
        %v3298 = vld [vmem:[#allocation2 + $0x310] sm:$0xff]
        %v3299 = vld [vmem:[#allocation2 + $0x318] sm:$0xff]
        %v3300 = vld [vmem:[#allocation2 + $0x320] sm:$0xff]
        %v3301 = vld [vmem:[#allocation2 + $0x328] sm:$0xff]
        %v3302 = vld [vmem:[#allocation2 + $0x330] sm:$0xff]
        %v3303 = vld [vmem:[#allocation2 + $0x338] sm:$0xff]
        %v3304 = vld [vmem:[#allocation2 + $0x340] sm:$0xff]
        %v3305 = vld [vmem:[#allocation2 + $0x348] sm:$0xff]
        %v3306 = vld [vmem:[#allocation2 + $0x350] sm:$0xff]
        %v3307 = vld [vmem:[#allocation2 + $0x358] sm:$0xff]
        %v3308 = vld [vmem:[#allocation2 + $0x360] sm:$0xff]
        %v3309 = vld [vmem:[#allocation2 + $0x368] sm:$0xff]
        %v3310 = vld [vmem:[#allocation2 + $0x370] sm:$0xff]
        %v3311 = vld [vmem:[#allocation2 + $0x378] sm:$0xff]
        %v3376 = vunpack.c.l.b16 %v3136
        %v3377 = vunpack.c.h.b16 %v3136
        %v3378 = vunpack.c.l.b16 %v3137
        %v3379 = vunpack.c.h.b16 %v3137
        %v3380 = vunpack.c.l.b16 %v3138
        %v3381 = vunpack.c.h.b16 %v3138
        %v3382 = vunpack.c.l.b16 %v3139
        %v3383 = vunpack.c.h.b16 %v3139
        %v3384 = vunpack.c.l.b16 %v3140
        %v3385 = vunpack.c.h.b16 %v3140
        %v3386 = vunpack.c.l.b16 %v3141
        %v3387 = vunpack.c.h.b16 %v3141
        %v3388 = vunpack.c.l.b16 %v3142
        %v3389 = vunpack.c.h.b16 %v3142
        %v3390 = vunpack.c.l.b16 %v3143
        %v3391 = vunpack.c.h.b16 %v3143
        %v3392 = vunpack.c.l.b16 %v3144
        %v3393 = vunpack.c.h.b16 %v3144
        %v3394 = vunpack.c.l.b16 %v3145
        %v3395 = vunpack.c.h.b16 %v3145
        %v3396 = vunpack.c.l.b16 %v3146
        %v3397 = vunpack.c.h.b16 %v3146
        %v3398 = vunpack.c.l.b16 %v3147
        %v3399 = vunpack.c.h.b16 %v3147
        %v3400 = vunpack.c.l.b16 %v3148
        %v3401 = vunpack.c.h.b16 %v3148
        %v3402 = vunpack.c.l.b16 %v3149
        %v3403 = vunpack.c.h.b16 %v3149
        %v3404 = vunpack.c.l.b16 %v3150
        %v3405 = vunpack.c.h.b16 %v3150
        %v3406 = vunpack.c.l.b16 %v3151
        %v3407 = vunpack.c.h.b16 %v3151
        %v3408 = vunpack.c.l.b16 %v3152
        %v3409 = vunpack.c.h.b16 %v3152
        %v3410 = vunpack.c.l.b16 %v3153
        %v3411 = vunpack.c.h.b16 %v3153
        %v3412 = vunpack.c.l.b16 %v3154
        %v3413 = vunpack.c.h.b16 %v3154
        %v3414 = vunpack.c.l.b16 %v3155
        %v3415 = vunpack.c.h.b16 %v3155
        %v3416 = vunpack.c.l.b16 %v3156
        %v3417 = vunpack.c.h.b16 %v3156
        %v3418 = vunpack.c.l.b16 %v3157
        %v3419 = vunpack.c.h.b16 %v3157
        %v3420 = vunpack.c.l.b16 %v3158
        %v3421 = vunpack.c.h.b16 %v3158
        %v3422 = vunpack.c.l.b16 %v3159
        %v3423 = vunpack.c.h.b16 %v3159
        %v3424 = vunpack.c.l.b16 %v3160
        %v3425 = vunpack.c.h.b16 %v3160
        %v3426 = vunpack.c.l.b16 %v3161
        %v3427 = vunpack.c.h.b16 %v3161
        %v3428 = vunpack.c.l.b16 %v3162
        %v3429 = vunpack.c.h.b16 %v3162
        %v3430 = vunpack.c.l.b16 %v3163
        %v3431 = vunpack.c.h.b16 %v3163
        %v3432 = vunpack.c.l.b16 %v3164
        %v3433 = vunpack.c.h.b16 %v3164
        %v3434 = vunpack.c.l.b16 %v3165
        %v3435 = vunpack.c.h.b16 %v3165
        %v3436 = vunpack.c.l.b16 %v3166
        %v3437 = vunpack.c.h.b16 %v3166
        %v3438 = vunpack.c.l.b16 %v3167
        %v3439 = vunpack.c.h.b16 %v3167
        %v3440 = vunpack.c.l.b16 %v3168
        %v3441 = vunpack.c.h.b16 %v3168
        %v3442 = vunpack.c.l.b16 %v3169
        %v3443 = vunpack.c.h.b16 %v3169
        %v3444 = vunpack.c.l.b16 %v3170
        %v3445 = vunpack.c.h.b16 %v3170
        %v3446 = vunpack.c.l.b16 %v3171
        %v3447 = vunpack.c.h.b16 %v3171
        %v3448 = vunpack.c.l.b16 %v3172
        %v3449 = vunpack.c.h.b16 %v3172
        %v3450 = vunpack.c.l.b16 %v3173
        %v3451 = vunpack.c.h.b16 %v3173
        %v3452 = vunpack.c.l.b16 %v3174
        %v3453 = vunpack.c.h.b16 %v3174
        %v3454 = vunpack.c.l.b16 %v3175
        %v3455 = vunpack.c.h.b16 %v3175
        %v3456 = vunpack.c.l.b16 %v3176
        %v3457 = vunpack.c.h.b16 %v3176
        %v3458 = vunpack.c.l.b16 %v3177
        %v3459 = vunpack.c.h.b16 %v3177
        %v3460 = vunpack.c.l.b16 %v3178
        %v3461 = vunpack.c.h.b16 %v3178
        %v3462 = vunpack.c.l.b16 %v3179
        %v3463 = vunpack.c.h.b16 %v3179
        %v3464 = vunpack.c.l.b16 %v3180
        %v3465 = vunpack.c.h.b16 %v3180
        %v3466 = vunpack.c.l.b16 %v3181
        %v3467 = vunpack.c.h.b16 %v3181
        %v3468 = vunpack.c.l.b16 %v3182
        %v3469 = vunpack.c.h.b16 %v3182
        %v3470 = vunpack.c.l.b16 %v3183
        %v3471 = vunpack.c.h.b16 %v3183
        %v3472 = vunpack.c.l.b16 %v3184
        %v3473 = vunpack.c.h.b16 %v3184
        %v3474 = vunpack.c.l.b16 %v3185
        %v3475 = vunpack.c.h.b16 %v3185
        %v3476 = vunpack.c.l.b16 %v3186
        %v3477 = vunpack.c.h.b16 %v3186
        %v3478 = vunpack.c.l.b16 %v3187
        %v3479 = vunpack.c.h.b16 %v3187
        %v3480 = vunpack.c.l.b16 %v3188
        %v3481 = vunpack.c.h.b16 %v3188
        %v3482 = vunpack.c.l.b16 %v3189
        %v3483 = vunpack.c.h.b16 %v3189
        %v3484 = vunpack.c.l.b16 %v3190
        %v3485 = vunpack.c.h.b16 %v3190
        %v3486 = vunpack.c.l.b16 %v3191
        %v3487 = vunpack.c.h.b16 %v3191
        %v3488 = vunpack.c.l.b16 %v3192
        %v3489 = vunpack.c.h.b16 %v3192
        %v3490 = vunpack.c.l.b16 %v3193
        %v3491 = vunpack.c.h.b16 %v3193
        %v3492 = vunpack.c.l.b16 %v3194
        %v3493 = vunpack.c.h.b16 %v3194
        %v3494 = vunpack.c.l.b16 %v3195
        %v3495 = vunpack.c.h.b16 %v3195
        %v3496 = vunpack.c.l.b16 %v3196
        %v3497 = vunpack.c.h.b16 %v3196
        %v3498 = vunpack.c.l.b16 %v3197
        %v3499 = vunpack.c.h.b16 %v3197
        %v3500 = vunpack.c.l.b16 %v3198
        %v3501 = vunpack.c.h.b16 %v3198
        %v3502 = vunpack.c.l.b16 %v3199
        %v3503 = vunpack.c.h.b16 %v3199
        %v3504 = vpack.c.b16 %v3378, %v3376
        %v3505 = vpack.c.b16 %v3379, %v3377
        %v3506 = vpack.c.b16 %v3382, %v3380
        %v3507 = vpack.c.b16 %v3383, %v3381
        %v3508 = vpack.c.b16 %v3386, %v3384
        %v3509 = vpack.c.b16 %v3387, %v3385
        %v3510 = vpack.c.b16 %v3390, %v3388
        %v3511 = vpack.c.b16 %v3391, %v3389
        %v3512 = vpack.c.b16 %v3394, %v3392
        %v3513 = vpack.c.b16 %v3395, %v3393
        %v3514 = vpack.c.b16 %v3398, %v3396
        %v3515 = vpack.c.b16 %v3399, %v3397
        %v3516 = vpack.c.b16 %v3402, %v3400
        %v3517 = vpack.c.b16 %v3403, %v3401
        %v3518 = vpack.c.b16 %v3406, %v3404
        %v3519 = vpack.c.b16 %v3407, %v3405
        %v3520 = vpack.c.b16 %v3410, %v3408
        %v3521 = vpack.c.b16 %v3411, %v3409
        %v3522 = vpack.c.b16 %v3414, %v3412
        %v3523 = vpack.c.b16 %v3415, %v3413
        %v3524 = vpack.c.b16 %v3418, %v3416
        %v3525 = vpack.c.b16 %v3419, %v3417
        %v3526 = vpack.c.b16 %v3422, %v3420
        %v3527 = vpack.c.b16 %v3423, %v3421
        %v3528 = vpack.c.b16 %v3426, %v3424
        %v3529 = vpack.c.b16 %v3427, %v3425
        %v3530 = vpack.c.b16 %v3430, %v3428
        %v3531 = vpack.c.b16 %v3431, %v3429
        %v3532 = vpack.c.b16 %v3434, %v3432
        %v3533 = vpack.c.b16 %v3435, %v3433
        %v3534 = vpack.c.b16 %v3438, %v3436
        %v3535 = vpack.c.b16 %v3439, %v3437
        %v3536 = vpack.c.b16 %v3442, %v3440
        %v3537 = vpack.c.b16 %v3443, %v3441
        %v3538 = vpack.c.b16 %v3446, %v3444
        %v3539 = vpack.c.b16 %v3447, %v3445
        %v3540 = vpack.c.b16 %v3450, %v3448
        %v3541 = vpack.c.b16 %v3451, %v3449
        %v3542 = vpack.c.b16 %v3454, %v3452
        %v3543 = vpack.c.b16 %v3455, %v3453
        %v3544 = vpack.c.b16 %v3458, %v3456
        %v3545 = vpack.c.b16 %v3459, %v3457
        %v3546 = vpack.c.b16 %v3462, %v3460
        %v3547 = vpack.c.b16 %v3463, %v3461
        %v3548 = vpack.c.b16 %v3466, %v3464
        %v3549 = vpack.c.b16 %v3467, %v3465
        %v3550 = vpack.c.b16 %v3470, %v3468
        %v3551 = vpack.c.b16 %v3471, %v3469
        %v3552 = vpack.c.b16 %v3474, %v3472
        %v3553 = vpack.c.b16 %v3475, %v3473
        %v3554 = vpack.c.b16 %v3478, %v3476
        %v3555 = vpack.c.b16 %v3479, %v3477
        %v3556 = vpack.c.b16 %v3482, %v3480
        %v3557 = vpack.c.b16 %v3483, %v3481
        %v3558 = vpack.c.b16 %v3486, %v3484
        %v3559 = vpack.c.b16 %v3487, %v3485
        %v3560 = vpack.c.b16 %v3490, %v3488
        %v3561 = vpack.c.b16 %v3491, %v3489
        %v3562 = vpack.c.b16 %v3494, %v3492
        %v3563 = vpack.c.b16 %v3495, %v3493
        %v3564 = vpack.c.b16 %v3498, %v3496
        %v3565 = vpack.c.b16 %v3499, %v3497
        %v3566 = vpack.c.b16 %v3502, %v3500
        %v3567 = vpack.c.b16 %v3503, %v3501
        %3632 = vmatprep.subr.bf16.mxu0 %v3201
        %3633 = vmatpush1.bf16.msra.mxu0 %v3200
        %3634 = vmatprep.subr.bf16.mxu0 %v3208
        %3635 = vmatpush1.bf16.msra.mxu0 %v3207
        %3636 = vmatprep.subr.bf16.mxu0 %v3215
        %3637 = vmatpush1.bf16.msra.mxu0 %v3214
        %3638 = vmatprep.subr.bf16.mxu0 %v3222
        %3639 = vmatpush1.bf16.msra.mxu0 %v3221
        %3640 = vmatprep.subr.bf16.mxu0 %v3229
        %3641 = vmatpush1.bf16.msra.mxu0 %v3228
        %3642 = vmatprep.subr.bf16.mxu0 %v3236
        %3643 = vmatpush1.bf16.msra.mxu0 %v3235
        %3644 = vmatprep.subr.bf16.mxu0 %v3243
        %3645 = vmatpush1.bf16.msra.mxu0 %v3242
        %3646 = vmatprep.subr.bf16.mxu0 %v3250
        %3647 = vmatpush1.bf16.msra.mxu0 %v3249
        %3648 = vmatprep.subr.bf16.mxu0 %v3257
        %3649 = vmatpush1.bf16.msra.mxu0 %v3256
        %3650 = vmatprep.subr.bf16.mxu0 %v3264
        %3651 = vmatpush1.bf16.msra.mxu0 %v3263
        %3652 = vmatprep.subr.bf16.mxu0 %v3271
        %3653 = vmatpush1.bf16.msra.mxu0 %v3270
        %3654 = vmatprep.subr.bf16.mxu0 %v3278
        %3655 = vmatpush1.bf16.msra.mxu0 %v3277
        %3656 = vmatprep.subr.bf16.mxu0 %v3285
        %3657 = vmatpush1.bf16.msra.mxu0 %v3284
        %3658 = vmatprep.subr.bf16.mxu0 %v3292
        %3659 = vmatpush1.bf16.msra.mxu0 %v3291
        %3660 = vmatprep.subr.bf16.mxu0 %v3299
        %3661 = vmatpush1.bf16.msra.mxu0 %v3298
        %3662 = vmatprep.subr.bf16.mxu0 %v3306
        %3663 = vmatpush1.bf16.msra.mxu0 %v3305
        %3664 = vmatprep.mubr.bf16.mxu0 %v3505
        %3665 = vmatmul.mubr.bf16.gmra.mrb[0].mxu0 %v3504
        %v3666 = vpop.f32.mrb[0].mxu0
        %v3667 = vadd.f32 0.0, %v3666
        %v3668 = vpop.f32.mrb[0].mxu0
        %v3669 = vadd.f32 0.0, %v3668
        %v3670 = vpop.f32.mrb[0].mxu0
        %v3671 = vadd.f32 0.0, %v3670
        %v3672 = vpop.f32.mrb[0].mxu0
        %v3673 = vadd.f32 0.0, %v3672
        %3674 = vmatprep.mubr.bf16.mxu0 %v3507
        %3675 = vmatmul.mubr.bf16.gmra.mrb[0].mxu0 %v3506
        %v3676 = vpop.f32.mrb[0].mxu0
        %v3677 = vadd.f32 0.0, %v3676
        %v3678 = vpop.f32.mrb[0].mxu0
        %v3679 = vadd.f32 0.0, %v3678
        %v3680 = vpop.f32.mrb[0].mxu0
        %v3681 = vadd.f32 0.0, %v3680
        %v3682 = vpop.f32.mrb[0].mxu0
        %v3683 = vadd.f32 0.0, %v3682
        %3684 = vmatprep.mubr.bf16.mxu0 %v3509
        %3685 = vmatmul.mubr.bf16.gmra.mrb[0].mxu0 %v3508
        %v3686 = vpop.f32.mrb[0].mxu0
        %v3687 = vadd.f32 0.0, %v3686
        %v3688 = vpop.f32.mrb[0].mxu0
        %v3689 = vadd.f32 0.0, %v3688
        %v3690 = vpop.f32.mrb[0].mxu0
        %v3691 = vadd.f32 0.0, %v3690
        %v3692 = vpop.f32.mrb[0].mxu0
        %v3693 = vadd.f32 0.0, %v3692
        %3694 = vmatprep.mubr.bf16.mxu0 %v3511
        %3695 = vmatmul.mubr.bf16.gmra.mrb[0].mxu0 %v3510
        %v3696 = vpop.f32.mrb[0].mxu0
        %v3697 = vadd.f32 0.0, %v3696
        %v3698 = vpop.f32.mrb[0].mxu0
        %v3699 = vadd.f32 0.0, %v3698
        %v3700 = vpop.f32.mrb[0].mxu0
        %v3701 = vadd.f32 0.0, %v3700
        %v3702 = vpop.f32.mrb[0].mxu0
        %v3703 = vadd.f32 0.0, %v3702
        %3704 = vmatprep.mubr.bf16.mxu0 %v3513
        %3705 = vmatmul.mubr.bf16.gmra.mrb[0].mxu0 %v3512
        %v3706 = vpop.f32.mrb[0].mxu0
        %v3707 = vadd.f32 0.0, %v3706
        %v3708 = vpop.f32.mrb[0].mxu0
        %v3709 = vadd.f32 0.0, %v3708
        %v3710 = vpop.f32.mrb[0].mxu0
        %v3711 = vadd.f32 0.0, %v3710
        %v3712 = vpop.f32.mrb[0].mxu0
        %v3713 = vadd.f32 0.0, %v3712
        %3714 = vmatprep.mubr.bf16.mxu0 %v3515
        %3715 = vmatmul.mubr.bf16.gmra.mrb[0].mxu0 %v3514
        %v3716 = vpop.f32.mrb[0].mxu0
        %v3717 = vadd.f32 0.0, %v3716
        %v3718 = vpop.f32.mrb[0].mxu0
        %v3719 = vadd.f32 0.0, %v3718
        %v3720 = vpop.f32.mrb[0].mxu0
        %v3721 = vadd.f32 0.0, %v3720
        %v3722 = vpop.f32.mrb[0].mxu0
        %v3723 = vadd.f32 0.0, %v3722
        %3724 = vmatprep.mubr.bf16.mxu0 %v3517
        %3725 = vmatmul.mubr.bf16.gmra.mrb[0].mxu0 %v3516
        %v3726 = vpop.f32.mrb[0].mxu0
        %v3727 = vadd.f32 0.0, %v3726
        %v3728 = vpop.f32.mrb[0].mxu0
        %v3729 = vadd.f32 0.0, %v3728
        %v3730 = vpop.f32.mrb[0].mxu0
        %v3731 = vadd.f32 0.0, %v3730
        %v3732 = vpop.f32.mrb[0].mxu0
        %v3733 = vadd.f32 0.0, %v3732
        %3734 = vmatprep.mubr.bf16.mxu0 %v3519
        %3735 = vmatmul.mubr.bf16.gmra.mrb[0].mxu0 %v3518
        %v3736 = vpop.f32.mrb[0].mxu0
        %v3737 = vadd.f32 0.0, %v3736
        %v3738 = vpop.f32.mrb[0].mxu0
        %v3739 = vadd.f32 0.0, %v3738
        %v3740 = vpop.f32.mrb[0].mxu0
        %v3741 = vadd.f32 0.0, %v3740
        %v3742 = vpop.f32.mrb[0].mxu0
        %v3743 = vadd.f32 0.0, %v3742
        %3744 = vmatprep.mubr.bf16.mxu0 %v3521
        %3745 = vmatmul.mubr.bf16.gmra.mrb[0].mxu0 %v3520
        %v3746 = vpop.f32.mrb[0].mxu0
        %v3747 = vadd.f32 0.0, %v3746
        %v3748 = vpop.f32.mrb[0].mxu0
        %v3749 = vadd.f32 0.0, %v3748
        %v3750 = vpop.f32.mrb[0].mxu0
        %v3751 = vadd.f32 0.0, %v3750
        %v3752 = vpop.f32.mrb[0].mxu0
        %v3753 = vadd.f32 0.0, %v3752
        %3754 = vmatprep.mubr.bf16.mxu0 %v3523
        %3755 = vmatmul.mubr.bf16.gmra.mrb[0].mxu0 %v3522
        %v3756 = vpop.f32.mrb[0].mxu0
        %v3757 = vadd.f32 0.0, %v3756
        %v3758 = vpop.f32.mrb[0].mxu0
        %v3759 = vadd.f32 0.0, %v3758
        %v3760 = vpop.f32.mrb[0].mxu0
        %v3761 = vadd.f32 0.0, %v3760
        %v3762 = vpop.f32.mrb[0].mxu0
        %v3763 = vadd.f32 0.0, %v3762
        %3764 = vmatprep.mubr.bf16.mxu0 %v3525
        %3765 = vmatmul.mubr.bf16.gmra.mrb[0].mxu0 %v3524
        %v3766 = vpop.f32.mrb[0].mxu0
        %v3767 = vadd.f32 0.0, %v3766
        %v3768 = vpop.f32.mrb[0].mxu0
        %v3769 = vadd.f32 0.0, %v3768
        %v3770 = vpop.f32.mrb[0].mxu0
        %v3771 = vadd.f32 0.0, %v3770
        %v3772 = vpop.f32.mrb[0].mxu0
        %v3773 = vadd.f32 0.0, %v3772
        %3774 = vmatprep.mubr.bf16.mxu0 %v3527
        %3775 = vmatmul.mubr.bf16.gmra.mrb[0].mxu0 %v3526
        %v3776 = vpop.f32.mrb[0].mxu0
        %v3777 = vadd.f32 0.0, %v3776
        %v3778 = vpop.f32.mrb[0].mxu0
        %v3779 = vadd.f32 0.0, %v3778
        %v3780 = vpop.f32.mrb[0].mxu0
        %v3781 = vadd.f32 0.0, %v3780
        %v3782 = vpop.f32.mrb[0].mxu0
        %v3783 = vadd.f32 0.0, %v3782
        %3784 = vmatprep.mubr.bf16.mxu0 %v3529
        %3785 = vmatmul.mubr.bf16.gmra.mrb[0].mxu0 %v3528
        %v3786 = vpop.f32.mrb[0].mxu0
        %v3787 = vadd.f32 0.0, %v3786
        %v3788 = vpop.f32.mrb[0].mxu0
        %v3789 = vadd.f32 0.0, %v3788
        %v3790 = vpop.f32.mrb[0].mxu0
        %v3791 = vadd.f32 0.0, %v3790
        %v3792 = vpop.f32.mrb[0].mxu0
        %v3793 = vadd.f32 0.0, %v3792
        %3794 = vmatprep.mubr.bf16.mxu0 %v3531
        %3795 = vmatmul.mubr.bf16.gmra.mrb[0].mxu0 %v3530
        %v3796 = vpop.f32.mrb[0].mxu0
        %v3797 = vadd.f32 0.0, %v3796
        %v3798 = vpop.f32.mrb[0].mxu0
        %v3799 = vadd.f32 0.0, %v3798
        %v3800 = vpop.f32.mrb[0].mxu0
        %v3801 = vadd.f32 0.0, %v3800
        %v3802 = vpop.f32.mrb[0].mxu0
        %v3803 = vadd.f32 0.0, %v3802
        %3804 = vmatprep.mubr.bf16.mxu0 %v3533
        %3805 = vmatmul.mubr.bf16.gmra.mrb[0].mxu0 %v3532
        %v3806 = vpop.f32.mrb[0].mxu0
        %v3807 = vadd.f32 0.0, %v3806
        %v3808 = vpop.f32.mrb[0].mxu0
        %v3809 = vadd.f32 0.0, %v3808
        %v3810 = vpop.f32.mrb[0].mxu0
        %v3811 = vadd.f32 0.0, %v3810
        %v3812 = vpop.f32.mrb[0].mxu0
        %v3813 = vadd.f32 0.0, %v3812
        %3814 = vmatprep.mubr.bf16.mxu0 %v3535
        %3815 = vmatmul.mubr.bf16.gmra.mrb[0].mxu0 %v3534
        %v3816 = vpop.f32.mrb[0].mxu0
        %v3817 = vadd.f32 0.0, %v3816
        %v3818 = vpop.f32.mrb[0].mxu0
        %v3819 = vadd.f32 0.0, %v3818
        %v3820 = vpop.f32.mrb[0].mxu0
        %v3821 = vadd.f32 0.0, %v3820
        %v3822 = vpop.f32.mrb[0].mxu0
        %v3823 = vadd.f32 0.0, %v3822
        %3824 = vmatprep.mubr.bf16.mxu0 %v3537
        %3825 = vmatmul.mubr.bf16.gmra.mrb[0].mxu0 %v3536
        %v3826 = vpop.f32.mrb[0].mxu0
        %v3827 = vadd.f32 0.0, %v3826
        %v3828 = vpop.f32.mrb[0].mxu0
        %v3829 = vadd.f32 0.0, %v3828
        %v3830 = vpop.f32.mrb[0].mxu0
        %v3831 = vadd.f32 0.0, %v3830
        %v3832 = vpop.f32.mrb[0].mxu0
        %v3833 = vadd.f32 0.0, %v3832
        %3834 = vmatprep.mubr.bf16.mxu0 %v3539
        %3835 = vmatmul.mubr.bf16.gmra.mrb[0].mxu0 %v3538
        %v3836 = vpop.f32.mrb[0].mxu0
        %v3837 = vadd.f32 0.0, %v3836
        %v3838 = vpop.f32.mrb[0].mxu0
        %v3839 = vadd.f32 0.0, %v3838
        %v3840 = vpop.f32.mrb[0].mxu0
        %v3841 = vadd.f32 0.0, %v3840
        %v3842 = vpop.f32.mrb[0].mxu0
        %v3843 = vadd.f32 0.0, %v3842
        %3844 = vmatprep.mubr.bf16.mxu0 %v3541
        %3845 = vmatmul.mubr.bf16.gmra.mrb[0].mxu0 %v3540
        %v3846 = vpop.f32.mrb[0].mxu0
        %v3847 = vadd.f32 0.0, %v3846
        %v3848 = vpop.f32.mrb[0].mxu0
        %v3849 = vadd.f32 0.0, %v3848
        %v3850 = vpop.f32.mrb[0].mxu0
        %v3851 = vadd.f32 0.0, %v3850
        %v3852 = vpop.f32.mrb[0].mxu0
        %v3853 = vadd.f32 0.0, %v3852
        %3854 = vmatprep.mubr.bf16.mxu0 %v3543
        %3855 = vmatmul.mubr.bf16.gmra.mrb[0].mxu0 %v3542
        %v3856 = vpop.f32.mrb[0].mxu0
        %v3857 = vadd.f32 0.0, %v3856
        %v3858 = vpop.f32.mrb[0].mxu0
        %v3859 = vadd.f32 0.0, %v3858
        %v3860 = vpop.f32.mrb[0].mxu0
        %v3861 = vadd.f32 0.0, %v3860
        %v3862 = vpop.f32.mrb[0].mxu0
        %v3863 = vadd.f32 0.0, %v3862
        %3864 = vmatprep.mubr.bf16.mxu0 %v3545
        %3865 = vmatmul.mubr.bf16.gmra.mrb[0].mxu0 %v3544
        %v3866 = vpop.f32.mrb[0].mxu0
        %v3867 = vadd.f32 0.0, %v3866
        %v3868 = vpop.f32.mrb[0].mxu0
        %v3869 = vadd.f32 0.0, %v3868
        %v3870 = vpop.f32.mrb[0].mxu0
        %v3871 = vadd.f32 0.0, %v3870
        %v3872 = vpop.f32.mrb[0].mxu0
        %v3873 = vadd.f32 0.0, %v3872
        %3874 = vmatprep.mubr.bf16.mxu0 %v3547
        %3875 = vmatmul.mubr.bf16.gmra.mrb[0].mxu0 %v3546
        %v3876 = vpop.f32.mrb[0].mxu0
        %v3877 = vadd.f32 0.0, %v3876
        %v3878 = vpop.f32.mrb[0].mxu0
        %v3879 = vadd.f32 0.0, %v3878
        %v3880 = vpop.f32.mrb[0].mxu0
        %v3881 = vadd.f32 0.0, %v3880
        %v3882 = vpop.f32.mrb[0].mxu0
        %v3883 = vadd.f32 0.0, %v3882
        %3884 = vmatprep.mubr.bf16.mxu0 %v3549
        %3885 = vmatmul.mubr.bf16.gmra.mrb[0].mxu0 %v3548
        %v3886 = vpop.f32.mrb[0].mxu0
        %v3887 = vadd.f32 0.0, %v3886
        %v3888 = vpop.f32.mrb[0].mxu0
        %v3889 = vadd.f32 0.0, %v3888
        %v3890 = vpop.f32.mrb[0].mxu0
        %v3891 = vadd.f32 0.0, %v3890
        %v3892 = vpop.f32.mrb[0].mxu0
        %v3893 = vadd.f32 0.0, %v3892
        %3894 = vmatprep.mubr.bf16.mxu0 %v3551
        %3895 = vmatmul.mubr.bf16.gmra.mrb[0].mxu0 %v3550
        %v3896 = vpop.f32.mrb[0].mxu0
        %v3897 = vadd.f32 0.0, %v3896
        %v3898 = vpop.f32.mrb[0].mxu0
        %v3899 = vadd.f32 0.0, %v3898
        %v3900 = vpop.f32.mrb[0].mxu0
        %v3901 = vadd.f32 0.0, %v3900
        %v3902 = vpop.f32.mrb[0].mxu0
        %v3903 = vadd.f32 0.0, %v3902
        %3904 = vmatprep.mubr.bf16.mxu0 %v3553
        %3905 = vmatmul.mubr.bf16.gmra.mrb[0].mxu0 %v3552
        %v3906 = vpop.f32.mrb[0].mxu0
        %v3907 = vadd.f32 0.0, %v3906
        %v3908 = vpop.f32.mrb[0].mxu0
        %v3909 = vadd.f32 0.0, %v3908
        %v3910 = vpop.f32.mrb[0].mxu0
        %v3911 = vadd.f32 0.0, %v3910
        %v3912 = vpop.f32.mrb[0].mxu0
        %v3913 = vadd.f32 0.0, %v3912
        %3914 = vmatprep.mubr.bf16.mxu0 %v3555
        %3915 = vmatmul.mubr.bf16.gmra.mrb[0].mxu0 %v3554
        %v3916 = vpop.f32.mrb[0].mxu0
        %v3917 = vadd.f32 0.0, %v3916
        %v3918 = vpop.f32.mrb[0].mxu0
        %v3919 = vadd.f32 0.0, %v3918
        %v3920 = vpop.f32.mrb[0].mxu0
        %v3921 = vadd.f32 0.0, %v3920
        %v3922 = vpop.f32.mrb[0].mxu0
        %v3923 = vadd.f32 0.0, %v3922
        %3924 = vmatprep.mubr.bf16.mxu0 %v3557
        %3925 = vmatmul.mubr.bf16.gmra.mrb[0].mxu0 %v3556
        %v3926 = vpop.f32.mrb[0].mxu0
        %v3927 = vadd.f32 0.0, %v3926
        %v3928 = vpop.f32.mrb[0].mxu0
        %v3929 = vadd.f32 0.0, %v3928
        %v3930 = vpop.f32.mrb[0].mxu0
        %v3931 = vadd.f32 0.0, %v3930
        %v3932 = vpop.f32.mrb[0].mxu0
        %v3933 = vadd.f32 0.0, %v3932
        %3934 = vmatprep.mubr.bf16.mxu0 %v3559
        %3935 = vmatmul.mubr.bf16.gmra.mrb[0].mxu0 %v3558
        %v3936 = vpop.f32.mrb[0].mxu0
        %v3937 = vadd.f32 0.0, %v3936
        %v3938 = vpop.f32.mrb[0].mxu0
        %v3939 = vadd.f32 0.0, %v3938
        %v3940 = vpop.f32.mrb[0].mxu0
        %v3941 = vadd.f32 0.0, %v3940
        %v3942 = vpop.f32.mrb[0].mxu0
        %v3943 = vadd.f32 0.0, %v3942
        %3944 = vmatprep.mubr.bf16.mxu0 %v3561
        %3945 = vmatmul.mubr.bf16.gmra.mrb[0].mxu0 %v3560
        %v3946 = vpop.f32.mrb[0].mxu0
        %v3947 = vadd.f32 0.0, %v3946
        %v3948 = vpop.f32.mrb[0].mxu0
        %v3949 = vadd.f32 0.0, %v3948
        %v3950 = vpop.f32.mrb[0].mxu0
        %v3951 = vadd.f32 0.0, %v3950
        %v3952 = vpop.f32.mrb[0].mxu0
        %v3953 = vadd.f32 0.0, %v3952
        %3954 = vmatprep.mubr.bf16.mxu0 %v3563
        %3955 = vmatmul.mubr.bf16.gmra.mrb[0].mxu0 %v3562
        %v3956 = vpop.f32.mrb[0].mxu0
        %v3957 = vadd.f32 0.0, %v3956
        %v3958 = vpop.f32.mrb[0].mxu0
        %v3959 = vadd.f32 0.0, %v3958
        %v3960 = vpop.f32.mrb[0].mxu0
        %v3961 = vadd.f32 0.0, %v3960
        %v3962 = vpop.f32.mrb[0].mxu0
        %v3963 = vadd.f32 0.0, %v3962
        %3964 = vmatprep.mubr.bf16.mxu0 %v3565
        %3965 = vmatmul.mubr.bf16.gmra.mrb[0].mxu0 %v3564
        %v3966 = vpop.f32.mrb[0].mxu0
        %v3967 = vadd.f32 0.0, %v3966
        %v3968 = vpop.f32.mrb[0].mxu0
        %v3969 = vadd.f32 0.0, %v3968
        %v3970 = vpop.f32.mrb[0].mxu0
        %v3971 = vadd.f32 0.0, %v3970
        %v3972 = vpop.f32.mrb[0].mxu0
        %v3973 = vadd.f32 0.0, %v3972
        %3974 = vmatprep.mubr.bf16.mxu0 %v3567
        %3975 = vmatmul.mubr.bf16.gmra.mrb[0].mxu0 %v3566
        %v3976 = vpop.f32.mrb[0].mxu0
        %v3977 = vadd.f32 0.0, %v3976
        %v3978 = vpop.f32.mrb[0].mxu0
        %v3979 = vadd.f32 0.0, %v3978
        %v3980 = vpop.f32.mrb[0].mxu0
        %v3981 = vadd.f32 0.0, %v3980
        %v3982 = vpop.f32.mrb[0].mxu0
        %v3983 = vadd.f32 0.0, %v3982
        %3984 = vdwg.mxu0
        %3985 = vmatprep.subr.bf16.mxu0 %v3203
        %3986 = vmatpush1.bf16.msra.mxu0 %v3202
        %3987 = vmatprep.subr.bf16.mxu0 %v3210
        %3988 = vmatpush1.bf16.msra.mxu0 %v3209
        %3989 = vmatprep.subr.bf16.mxu0 %v3217
        %3990 = vmatpush1.bf16.msra.mxu0 %v3216
        %3991 = vmatprep.subr.bf16.mxu0 %v3224
        %3992 = vmatpush1.bf16.msra.mxu0 %v3223
        %3993 = vmatprep.subr.bf16.mxu0 %v3231
        %3994 = vmatpush1.bf16.msra.mxu0 %v3230
        %3995 = vmatprep.subr.bf16.mxu0 %v3238
        %3996 = vmatpush1.bf16.msra.mxu0 %v3237
        %3997 = vmatprep.subr.bf16.mxu0 %v3245
        %3998 = vmatpush1.bf16.msra.mxu0 %v3244
        %3999 = vmatprep.subr.bf16.mxu0 %v3252
        %4000 = vmatpush1.bf16.msra.mxu0 %v3251
        %4001 = vmatprep.subr.bf16.mxu0 %v3259
        %4002 = vmatpush1.bf16.msra.mxu0 %v3258
        %4003 = vmatprep.subr.bf16.mxu0 %v3266
        %4004 = vmatpush1.bf16.msra.mxu0 %v3265
        %4005 = vmatprep.subr.bf16.mxu0 %v3273
        %4006 = vmatpush1.bf16.msra.mxu0 %v3272
        %4007 = vmatprep.subr.bf16.mxu0 %v3280
        %4008 = vmatpush1.bf16.msra.mxu0 %v3279
        %4009 = vmatprep.subr.bf16.mxu0 %v3287
        %4010 = vmatpush1.bf16.msra.mxu0 %v3286
        %4011 = vmatprep.subr.bf16.mxu0 %v3294
        %4012 = vmatpush1.bf16.msra.mxu0 %v3293
        %4013 = vmatprep.subr.bf16.mxu0 %v3301
        %4014 = vmatpush1.bf16.msra.mxu0 %v3300
        %4015 = vmatprep.subr.bf16.mxu0 %v3308
        %4016 = vmatpush1.bf16.msra.mxu0 %v3307
        %4017 = vmatprep.mubr.bf16.mxu0 %v3505
        %4018 = vmatmul.mubr.bf16.gmra.mrb[0].mxu0 %v3504
        %v4019 = vpop.f32.mrb[0].mxu0
        %v4020 = vadd.f32 0.0, %v4019
        %v4021 = vpop.f32.mrb[0].mxu0
        %v4022 = vadd.f32 0.0, %v4021
        %v4023 = vpop.f32.mrb[0].mxu0
        %v4024 = vadd.f32 0.0, %v4023
        %v4025 = vpop.f32.mrb[0].mxu0
        %v4026 = vadd.f32 0.0, %v4025
        %4027 = vmatprep.mubr.bf16.mxu0 %v3507
        %4028 = vmatmul.mubr.bf16.gmra.mrb[0].mxu0 %v3506
        %v4029 = vpop.f32.mrb[0].mxu0
        %v4030 = vadd.f32 0.0, %v4029
        %v4031 = vpop.f32.mrb[0].mxu0
        %v4032 = vadd.f32 0.0, %v4031
        %v4033 = vpop.f32.mrb[0].mxu0
        %v4034 = vadd.f32 0.0, %v4033
        %v4035 = vpop.f32.mrb[0].mxu0
        %v4036 = vadd.f32 0.0, %v4035
        %4037 = vmatprep.mubr.bf16.mxu0 %v3509
        %4038 = vmatmul.mubr.bf16.gmra.mrb[0].mxu0 %v3508
        %v4039 = vpop.f32.mrb[0].mxu0
        %v4040 = vadd.f32 0.0, %v4039
        %v4041 = vpop.f32.mrb[0].mxu0
        %v4042 = vadd.f32 0.0, %v4041
        %v4043 = vpop.f32.mrb[0].mxu0
        %v4044 = vadd.f32 0.0, %v4043
        %v4045 = vpop.f32.mrb[0].mxu0
        %v4046 = vadd.f32 0.0, %v4045
        %4047 = vmatprep.mubr.bf16.mxu0 %v3511
        %4048 = vmatmul.mubr.bf16.gmra.mrb[0].mxu0 %v3510
        %v4049 = vpop.f32.mrb[0].mxu0
        %v4050 = vadd.f32 0.0, %v4049
        %v4051 = vpop.f32.mrb[0].mxu0
        %v4052 = vadd.f32 0.0, %v4051
        %v4053 = vpop.f32.mrb[0].mxu0
        %v4054 = vadd.f32 0.0, %v4053
        %v4055 = vpop.f32.mrb[0].mxu0
        %v4056 = vadd.f32 0.0, %v4055
        %4057 = vmatprep.mubr.bf16.mxu0 %v3513
        %4058 = vmatmul.mubr.bf16.gmra.mrb[0].mxu0 %v3512
        %v4059 = vpop.f32.mrb[0].mxu0
        %v4060 = vadd.f32 0.0, %v4059
        %v4061 = vpop.f32.mrb[0].mxu0
        %v4062 = vadd.f32 0.0, %v4061
        %v4063 = vpop.f32.mrb[0].mxu0
        %v4064 = vadd.f32 0.0, %v4063
        %v4065 = vpop.f32.mrb[0].mxu0
        %v4066 = vadd.f32 0.0, %v4065
        %4067 = vmatprep.mubr.bf16.mxu0 %v3515
        %4068 = vmatmul.mubr.bf16.gmra.mrb[0].mxu0 %v3514
        %v4069 = vpop.f32.mrb[0].mxu0
        %v4070 = vadd.f32 0.0, %v4069
        %v4071 = vpop.f32.mrb[0].mxu0
        %v4072 = vadd.f32 0.0, %v4071
        %v4073 = vpop.f32.mrb[0].mxu0
        %v4074 = vadd.f32 0.0, %v4073
        %v4075 = vpop.f32.mrb[0].mxu0
        %v4076 = vadd.f32 0.0, %v4075
        %4077 = vmatprep.mubr.bf16.mxu0 %v3517
        %4078 = vmatmul.mubr.bf16.gmra.mrb[0].mxu0 %v3516
        %v4079 = vpop.f32.mrb[0].mxu0
        %v4080 = vadd.f32 0.0, %v4079
        %v4081 = vpop.f32.mrb[0].mxu0
        %v4082 = vadd.f32 0.0, %v4081
        %v4083 = vpop.f32.mrb[0].mxu0
        %v4084 = vadd.f32 0.0, %v4083
        %v4085 = vpop.f32.mrb[0].mxu0
        %v4086 = vadd.f32 0.0, %v4085
        %4087 = vmatprep.mubr.bf16.mxu0 %v3519
        %4088 = vmatmul.mubr.bf16.gmra.mrb[0].mxu0 %v3518
        %v4089 = vpop.f32.mrb[0].mxu0
        %v4090 = vadd.f32 0.0, %v4089
        %v4091 = vpop.f32.mrb[0].mxu0
        %v4092 = vadd.f32 0.0, %v4091
        %v4093 = vpop.f32.mrb[0].mxu0
        %v4094 = vadd.f32 0.0, %v4093
        %v4095 = vpop.f32.mrb[0].mxu0
        %v4096 = vadd.f32 0.0, %v4095
        %4097 = vmatprep.mubr.bf16.mxu0 %v3521
        %4098 = vmatmul.mubr.bf16.gmra.mrb[0].mxu0 %v3520
        %v4099 = vpop.f32.mrb[0].mxu0
        %v4100 = vadd.f32 0.0, %v4099
        %v4101 = vpop.f32.mrb[0].mxu0
        %v4102 = vadd.f32 0.0, %v4101
        %v4103 = vpop.f32.mrb[0].mxu0
        %v4104 = vadd.f32 0.0, %v4103
        %v4105 = vpop.f32.mrb[0].mxu0
        %v4106 = vadd.f32 0.0, %v4105
        %4107 = vmatprep.mubr.bf16.mxu0 %v3523
        %4108 = vmatmul.mubr.bf16.gmra.mrb[0].mxu0 %v3522
        %v4109 = vpop.f32.mrb[0].mxu0
        %v4110 = vadd.f32 0.0, %v4109
        %v4111 = vpop.f32.mrb[0].mxu0
        %v4112 = vadd.f32 0.0, %v4111
        %v4113 = vpop.f32.mrb[0].mxu0
        %v4114 = vadd.f32 0.0, %v4113
        %v4115 = vpop.f32.mrb[0].mxu0
        %v4116 = vadd.f32 0.0, %v4115
        %4117 = vmatprep.mubr.bf16.mxu0 %v3525
        %4118 = vmatmul.mubr.bf16.gmra.mrb[0].mxu0 %v3524
        %v4119 = vpop.f32.mrb[0].mxu0
        %v4120 = vadd.f32 0.0, %v4119
        %v4121 = vpop.f32.mrb[0].mxu0
        %v4122 = vadd.f32 0.0, %v4121
        %v4123 = vpop.f32.mrb[0].mxu0
        %v4124 = vadd.f32 0.0, %v4123
        %v4125 = vpop.f32.mrb[0].mxu0
        %v4126 = vadd.f32 0.0, %v4125
        %4127 = vmatprep.mubr.bf16.mxu0 %v3527
        %4128 = vmatmul.mubr.bf16.gmra.mrb[0].mxu0 %v3526
        %v4129 = vpop.f32.mrb[0].mxu0
        %v4130 = vadd.f32 0.0, %v4129
        %v4131 = vpop.f32.mrb[0].mxu0
        %v4132 = vadd.f32 0.0, %v4131
        %v4133 = vpop.f32.mrb[0].mxu0
        %v4134 = vadd.f32 0.0, %v4133
        %v4135 = vpop.f32.mrb[0].mxu0
        %v4136 = vadd.f32 0.0, %v4135
        %4137 = vmatprep.mubr.bf16.mxu0 %v3529
        %4138 = vmatmul.mubr.bf16.gmra.mrb[0].mxu0 %v3528
        %v4139 = vpop.f32.mrb[0].mxu0
        %v4140 = vadd.f32 0.0, %v4139
        %v4141 = vpop.f32.mrb[0].mxu0
        %v4142 = vadd.f32 0.0, %v4141
        %v4143 = vpop.f32.mrb[0].mxu0
        %v4144 = vadd.f32 0.0, %v4143
        %v4145 = vpop.f32.mrb[0].mxu0
        %v4146 = vadd.f32 0.0, %v4145
        %4147 = vmatprep.mubr.bf16.mxu0 %v3531
        %4148 = vmatmul.mubr.bf16.gmra.mrb[0].mxu0 %v3530
        %v4149 = vpop.f32.mrb[0].mxu0
        %v4150 = vadd.f32 0.0, %v4149
        %v4151 = vpop.f32.mrb[0].mxu0
        %v4152 = vadd.f32 0.0, %v4151
        %v4153 = vpop.f32.mrb[0].mxu0
        %v4154 = vadd.f32 0.0, %v4153
        %v4155 = vpop.f32.mrb[0].mxu0
        %v4156 = vadd.f32 0.0, %v4155
        %4157 = vmatprep.mubr.bf16.mxu0 %v3533
        %4158 = vmatmul.mubr.bf16.gmra.mrb[0].mxu0 %v3532
        %v4159 = vpop.f32.mrb[0].mxu0
        %v4160 = vadd.f32 0.0, %v4159
        %v4161 = vpop.f32.mrb[0].mxu0
        %v4162 = vadd.f32 0.0, %v4161
        %v4163 = vpop.f32.mrb[0].mxu0
        %v4164 = vadd.f32 0.0, %v4163
        %v4165 = vpop.f32.mrb[0].mxu0
        %v4166 = vadd.f32 0.0, %v4165
        %4167 = vmatprep.mubr.bf16.mxu0 %v3535
        %4168 = vmatmul.mubr.bf16.gmra.mrb[0].mxu0 %v3534
        %v4169 = vpop.f32.mrb[0].mxu0
        %v4170 = vadd.f32 0.0, %v4169
        %v4171 = vpop.f32.mrb[0].mxu0
        %v4172 = vadd.f32 0.0, %v4171
        %v4173 = vpop.f32.mrb[0].mxu0
        %v4174 = vadd.f32 0.0, %v4173
        %v4175 = vpop.f32.mrb[0].mxu0
        %v4176 = vadd.f32 0.0, %v4175
        %4177 = vmatprep.mubr.bf16.mxu0 %v3537
        %4178 = vmatmul.mubr.bf16.gmra.mrb[0].mxu0 %v3536
        %v4179 = vpop.f32.mrb[0].mxu0
        %v4180 = vadd.f32 0.0, %v4179
        %v4181 = vpop.f32.mrb[0].mxu0
        %v4182 = vadd.f32 0.0, %v4181
        %v4183 = vpop.f32.mrb[0].mxu0
        %v4184 = vadd.f32 0.0, %v4183
        %v4185 = vpop.f32.mrb[0].mxu0
        %v4186 = vadd.f32 0.0, %v4185
        %4187 = vmatprep.mubr.bf16.mxu0 %v3539
        %4188 = vmatmul.mubr.bf16.gmra.mrb[0].mxu0 %v3538
        %v4189 = vpop.f32.mrb[0].mxu0
        %v4190 = vadd.f32 0.0, %v4189
        %v4191 = vpop.f32.mrb[0].mxu0
        %v4192 = vadd.f32 0.0, %v4191
        %v4193 = vpop.f32.mrb[0].mxu0
        %v4194 = vadd.f32 0.0, %v4193
        %v4195 = vpop.f32.mrb[0].mxu0
        %v4196 = vadd.f32 0.0, %v4195
        %4197 = vmatprep.mubr.bf16.mxu0 %v3541
        %4198 = vmatmul.mubr.bf16.gmra.mrb[0].mxu0 %v3540
        %v4199 = vpop.f32.mrb[0].mxu0
        %v4200 = vadd.f32 0.0, %v4199
        %v4201 = vpop.f32.mrb[0].mxu0
        %v4202 = vadd.f32 0.0, %v4201
        %v4203 = vpop.f32.mrb[0].mxu0
        %v4204 = vadd.f32 0.0, %v4203
        %v4205 = vpop.f32.mrb[0].mxu0
        %v4206 = vadd.f32 0.0, %v4205
        %4207 = vmatprep.mubr.bf16.mxu0 %v3543
        %4208 = vmatmul.mubr.bf16.gmra.mrb[0].mxu0 %v3542
        %v4209 = vpop.f32.mrb[0].mxu0
        %v4210 = vadd.f32 0.0, %v4209
        %v4211 = vpop.f32.mrb[0].mxu0
        %v4212 = vadd.f32 0.0, %v4211
        %v4213 = vpop.f32.mrb[0].mxu0
        %v4214 = vadd.f32 0.0, %v4213
        %v4215 = vpop.f32.mrb[0].mxu0
        %v4216 = vadd.f32 0.0, %v4215
        %4217 = vmatprep.mubr.bf16.mxu0 %v3545
        %4218 = vmatmul.mubr.bf16.gmra.mrb[0].mxu0 %v3544
        %v4219 = vpop.f32.mrb[0].mxu0
        %v4220 = vadd.f32 0.0, %v4219
        %v4221 = vpop.f32.mrb[0].mxu0
        %v4222 = vadd.f32 0.0, %v4221
        %v4223 = vpop.f32.mrb[0].mxu0
        %v4224 = vadd.f32 0.0, %v4223
        %v4225 = vpop.f32.mrb[0].mxu0
        %v4226 = vadd.f32 0.0, %v4225
        %4227 = vmatprep.mubr.bf16.mxu0 %v3547
        %4228 = vmatmul.mubr.bf16.gmra.mrb[0].mxu0 %v3546
        %v4229 = vpop.f32.mrb[0].mxu0
        %v4230 = vadd.f32 0.0, %v4229
        %v4231 = vpop.f32.mrb[0].mxu0
        %v4232 = vadd.f32 0.0, %v4231
        %v4233 = vpop.f32.mrb[0].mxu0
        %v4234 = vadd.f32 0.0, %v4233
        %v4235 = vpop.f32.mrb[0].mxu0
        %v4236 = vadd.f32 0.0, %v4235
        %4237 = vmatprep.mubr.bf16.mxu0 %v3549
        %4238 = vmatmul.mubr.bf16.gmra.mrb[0].mxu0 %v3548
        %v4239 = vpop.f32.mrb[0].mxu0
        %v4240 = vadd.f32 0.0, %v4239
        %v4241 = vpop.f32.mrb[0].mxu0
        %v4242 = vadd.f32 0.0, %v4241
        %v4243 = vpop.f32.mrb[0].mxu0
        %v4244 = vadd.f32 0.0, %v4243
        %v4245 = vpop.f32.mrb[0].mxu0
        %v4246 = vadd.f32 0.0, %v4245
        %4247 = vmatprep.mubr.bf16.mxu0 %v3551
        %4248 = vmatmul.mubr.bf16.gmra.mrb[0].mxu0 %v3550
        %v4249 = vpop.f32.mrb[0].mxu0
        %v4250 = vadd.f32 0.0, %v4249
        %v4251 = vpop.f32.mrb[0].mxu0
        %v4252 = vadd.f32 0.0, %v4251
        %v4253 = vpop.f32.mrb[0].mxu0
        %v4254 = vadd.f32 0.0, %v4253
        %v4255 = vpop.f32.mrb[0].mxu0
        %v4256 = vadd.f32 0.0, %v4255
        %4257 = vmatprep.mubr.bf16.mxu0 %v3553
        %4258 = vmatmul.mubr.bf16.gmra.mrb[0].mxu0 %v3552
        %v4259 = vpop.f32.mrb[0].mxu0
        %v4260 = vadd.f32 0.0, %v4259
        %v4261 = vpop.f32.mrb[0].mxu0
        %v4262 = vadd.f32 0.0, %v4261
        %v4263 = vpop.f32.mrb[0].mxu0
        %v4264 = vadd.f32 0.0, %v4263
        %v4265 = vpop.f32.mrb[0].mxu0
        %v4266 = vadd.f32 0.0, %v4265
        %4267 = vmatprep.mubr.bf16.mxu0 %v3555
        %4268 = vmatmul.mubr.bf16.gmra.mrb[0].mxu0 %v3554
        %v4269 = vpop.f32.mrb[0].mxu0
        %v4270 = vadd.f32 0.0, %v4269
        %v4271 = vpop.f32.mrb[0].mxu0
        %v4272 = vadd.f32 0.0, %v4271
        %v4273 = vpop.f32.mrb[0].mxu0
        %v4274 = vadd.f32 0.0, %v4273
        %v4275 = vpop.f32.mrb[0].mxu0
        %v4276 = vadd.f32 0.0, %v4275
        %4277 = vmatprep.mubr.bf16.mxu0 %v3557
        %4278 = vmatmul.mubr.bf16.gmra.mrb[0].mxu0 %v3556
        %v4279 = vpop.f32.mrb[0].mxu0
        %v4280 = vadd.f32 0.0, %v4279
        %v4281 = vpop.f32.mrb[0].mxu0
        %v4282 = vadd.f32 0.0, %v4281
        %v4283 = vpop.f32.mrb[0].mxu0
        %v4284 = vadd.f32 0.0, %v4283
        %v4285 = vpop.f32.mrb[0].mxu0
        %v4286 = vadd.f32 0.0, %v4285
        %4287 = vmatprep.mubr.bf16.mxu0 %v3559
        %4288 = vmatmul.mubr.bf16.gmra.mrb[0].mxu0 %v3558
        %v4289 = vpop.f32.mrb[0].mxu0
        %v4290 = vadd.f32 0.0, %v4289
        %v4291 = vpop.f32.mrb[0].mxu0
        %v4292 = vadd.f32 0.0, %v4291
        %v4293 = vpop.f32.mrb[0].mxu0
        %v4294 = vadd.f32 0.0, %v4293
        %v4295 = vpop.f32.mrb[0].mxu0
        %v4296 = vadd.f32 0.0, %v4295
        %4297 = vmatprep.mubr.bf16.mxu0 %v3561
        %4298 = vmatmul.mubr.bf16.gmra.mrb[0].mxu0 %v3560
        %v4299 = vpop.f32.mrb[0].mxu0
        %v4300 = vadd.f32 0.0, %v4299
        %v4301 = vpop.f32.mrb[0].mxu0
        %v4302 = vadd.f32 0.0, %v4301
        %v4303 = vpop.f32.mrb[0].mxu0
        %v4304 = vadd.f32 0.0, %v4303
        %v4305 = vpop.f32.mrb[0].mxu0
        %v4306 = vadd.f32 0.0, %v4305
        %4307 = vmatprep.mubr.bf16.mxu0 %v3563
        %4308 = vmatmul.mubr.bf16.gmra.mrb[0].mxu0 %v3562
        %v4309 = vpop.f32.mrb[0].mxu0
        %v4310 = vadd.f32 0.0, %v4309
        %v4311 = vpop.f32.mrb[0].mxu0
        %v4312 = vadd.f32 0.0, %v4311
        %v4313 = vpop.f32.mrb[0].mxu0
        %v4314 = vadd.f32 0.0, %v4313
        %v4315 = vpop.f32.mrb[0].mxu0
        %v4316 = vadd.f32 0.0, %v4315
        %4317 = vmatprep.mubr.bf16.mxu0 %v3565
        %4318 = vmatmul.mubr.bf16.gmra.mrb[0].mxu0 %v3564
        %v4319 = vpop.f32.mrb[0].mxu0
        %v4320 = vadd.f32 0.0, %v4319
        %v4321 = vpop.f32.mrb[0].mxu0
        %v4322 = vadd.f32 0.0, %v4321
        %v4323 = vpop.f32.mrb[0].mxu0
        %v4324 = vadd.f32 0.0, %v4323
        %v4325 = vpop.f32.mrb[0].mxu0
        %v4326 = vadd.f32 0.0, %v4325
        %4327 = vmatprep.mubr.bf16.mxu0 %v3567
        %4328 = vmatmul.mubr.bf16.gmra.mrb[0].mxu0 %v3566
        %v4329 = vpop.f32.mrb[0].mxu0
        %v4330 = vadd.f32 0.0, %v4329
        %v4331 = vpop.f32.mrb[0].mxu0
        %v4332 = vadd.f32 0.0, %v4331
        %v4333 = vpop.f32.mrb[0].mxu0
        %v4334 = vadd.f32 0.0, %v4333
        %v4335 = vpop.f32.mrb[0].mxu0
        %v4336 = vadd.f32 0.0, %v4335
        %4337 = vdwg.mxu0
        %4338 = vmatprep.subr.bf16.mxu0 %v3205
        %4339 = vmatpush1.bf16.msra.mxu0 %v3204
        %4340 = vmatprep.subr.bf16.mxu0 %v3212
        %4341 = vmatpush1.bf16.msra.mxu0 %v3211
        %4342 = vmatprep.subr.bf16.mxu0 %v3219
        %4343 = vmatpush1.bf16.msra.mxu0 %v3218
        %4344 = vmatprep.subr.bf16.mxu0 %v3226
        %4345 = vmatpush1.bf16.msra.mxu0 %v3225
        %4346 = vmatprep.subr.bf16.mxu0 %v3233
        %4347 = vmatpush1.bf16.msra.mxu0 %v3232
        %4348 = vmatprep.subr.bf16.mxu0 %v3240
        %4349 = vmatpush1.bf16.msra.mxu0 %v3239
        %4350 = vmatprep.subr.bf16.mxu0 %v3247
        %4351 = vmatpush1.bf16.msra.mxu0 %v3246
        %4352 = vmatprep.subr.bf16.mxu0 %v3254
        %4353 = vmatpush1.bf16.msra.mxu0 %v3253
        %4354 = vmatprep.subr.bf16.mxu0 %v3261
        %4355 = vmatpush1.bf16.msra.mxu0 %v3260
        %4356 = vmatprep.subr.bf16.mxu0 %v3268
        %4357 = vmatpush1.bf16.msra.mxu0 %v3267
        %4358 = vmatprep.subr.bf16.mxu0 %v3275
        %4359 = vmatpush1.bf16.msra.mxu0 %v3274
        %4360 = vmatprep.subr.bf16.mxu0 %v3282
        %4361 = vmatpush1.bf16.msra.mxu0 %v3281
        %4362 = vmatprep.subr.bf16.mxu0 %v3289
        %4363 = vmatpush1.bf16.msra.mxu0 %v3288
        %4364 = vmatprep.subr.bf16.mxu0 %v3296
        %4365 = vmatpush1.bf16.msra.mxu0 %v3295
        %4366 = vmatprep.subr.bf16.mxu0 %v3303
        %4367 = vmatpush1.bf16.msra.mxu0 %v3302
        %4368 = vmatprep.subr.bf16.mxu0 %v3310
        %4369 = vmatpush1.bf16.msra.mxu0 %v3309
        %4370 = vmatprep.mubr.bf16.mxu0 %v3505
        %4371 = vmatmul.mubr.bf16.gmra.mrb[0].mxu0 %v3504
        %v4372 = vpop.f32.mrb[0].mxu0
        %v4373 = vadd.f32 0.0, %v4372
        %v4374 = vpop.f32.mrb[0].mxu0
        %v4375 = vadd.f32 0.0, %v4374
        %v4376 = vpop.f32.mrb[0].mxu0
        %v4377 = vadd.f32 0.0, %v4376
        %v4378 = vpop.f32.mrb[0].mxu0
        %v4379 = vadd.f32 0.0, %v4378
        %4380 = vmatprep.mubr.bf16.mxu0 %v3507
        %4381 = vmatmul.mubr.bf16.gmra.mrb[0].mxu0 %v3506
        %v4382 = vpop.f32.mrb[0].mxu0
        %v4383 = vadd.f32 0.0, %v4382
        %v4384 = vpop.f32.mrb[0].mxu0
        %v4385 = vadd.f32 0.0, %v4384
        %v4386 = vpop.f32.mrb[0].mxu0
        %v4387 = vadd.f32 0.0, %v4386
        %v4388 = vpop.f32.mrb[0].mxu0
        %v4389 = vadd.f32 0.0, %v4388
        %4390 = vmatprep.mubr.bf16.mxu0 %v3509
        %4391 = vmatmul.mubr.bf16.gmra.mrb[0].mxu0 %v3508
        %v4392 = vpop.f32.mrb[0].mxu0
        %v4393 = vadd.f32 0.0, %v4392
        %v4394 = vpop.f32.mrb[0].mxu0
        %v4395 = vadd.f32 0.0, %v4394
        %v4396 = vpop.f32.mrb[0].mxu0
        %v4397 = vadd.f32 0.0, %v4396
        %v4398 = vpop.f32.mrb[0].mxu0
        %v4399 = vadd.f32 0.0, %v4398
        %4400 = vmatprep.mubr.bf16.mxu0 %v3511
        %4401 = vmatmul.mubr.bf16.gmra.mrb[0].mxu0 %v3510
        %v4402 = vpop.f32.mrb[0].mxu0
        %v4403 = vadd.f32 0.0, %v4402
        %v4404 = vpop.f32.mrb[0].mxu0
        %v4405 = vadd.f32 0.0, %v4404
        %v4406 = vpop.f32.mrb[0].mxu0
        %v4407 = vadd.f32 0.0, %v4406
        %v4408 = vpop.f32.mrb[0].mxu0
        %v4409 = vadd.f32 0.0, %v4408
        %4410 = vmatprep.mubr.bf16.mxu0 %v3513
        %4411 = vmatmul.mubr.bf16.gmra.mrb[0].mxu0 %v3512
        %v4412 = vpop.f32.mrb[0].mxu0
        %v4413 = vadd.f32 0.0, %v4412
        %v4414 = vpop.f32.mrb[0].mxu0
        %v4415 = vadd.f32 0.0, %v4414
        %v4416 = vpop.f32.mrb[0].mxu0
        %v4417 = vadd.f32 0.0, %v4416
        %v4418 = vpop.f32.mrb[0].mxu0
        %v4419 = vadd.f32 0.0, %v4418
        %4420 = vmatprep.mubr.bf16.mxu0 %v3515
        %4421 = vmatmul.mubr.bf16.gmra.mrb[0].mxu0 %v3514
        %v4422 = vpop.f32.mrb[0].mxu0
        %v4423 = vadd.f32 0.0, %v4422
        %v4424 = vpop.f32.mrb[0].mxu0
        %v4425 = vadd.f32 0.0, %v4424
        %v4426 = vpop.f32.mrb[0].mxu0
        %v4427 = vadd.f32 0.0, %v4426
        %v4428 = vpop.f32.mrb[0].mxu0
        %v4429 = vadd.f32 0.0, %v4428
        %4430 = vmatprep.mubr.bf16.mxu0 %v3517
        %4431 = vmatmul.mubr.bf16.gmra.mrb[0].mxu0 %v3516
        %v4432 = vpop.f32.mrb[0].mxu0
        %v4433 = vadd.f32 0.0, %v4432
        %v4434 = vpop.f32.mrb[0].mxu0
        %v4435 = vadd.f32 0.0, %v4434
        %v4436 = vpop.f32.mrb[0].mxu0
        %v4437 = vadd.f32 0.0, %v4436
        %v4438 = vpop.f32.mrb[0].mxu0
        %v4439 = vadd.f32 0.0, %v4438
        %4440 = vmatprep.mubr.bf16.mxu0 %v3519
        %4441 = vmatmul.mubr.bf16.gmra.mrb[0].mxu0 %v3518
        %v4442 = vpop.f32.mrb[0].mxu0
        %v4443 = vadd.f32 0.0, %v4442
        %v4444 = vpop.f32.mrb[0].mxu0
        %v4445 = vadd.f32 0.0, %v4444
        %v4446 = vpop.f32.mrb[0].mxu0
        %v4447 = vadd.f32 0.0, %v4446
        %v4448 = vpop.f32.mrb[0].mxu0
        %v4449 = vadd.f32 0.0, %v4448
        %4450 = vmatprep.mubr.bf16.mxu0 %v3521
        %4451 = vmatmul.mubr.bf16.gmra.mrb[0].mxu0 %v3520
        %v4452 = vpop.f32.mrb[0].mxu0
        %v4453 = vadd.f32 0.0, %v4452
        %v4454 = vpop.f32.mrb[0].mxu0
        %v4455 = vadd.f32 0.0, %v4454
        %v4456 = vpop.f32.mrb[0].mxu0
        %v4457 = vadd.f32 0.0, %v4456
        %v4458 = vpop.f32.mrb[0].mxu0
        %v4459 = vadd.f32 0.0, %v4458
        %4460 = vmatprep.mubr.bf16.mxu0 %v3523
        %4461 = vmatmul.mubr.bf16.gmra.mrb[0].mxu0 %v3522
        %v4462 = vpop.f32.mrb[0].mxu0
        %v4463 = vadd.f32 0.0, %v4462
        %v4464 = vpop.f32.mrb[0].mxu0
        %v4465 = vadd.f32 0.0, %v4464
        %v4466 = vpop.f32.mrb[0].mxu0
        %v4467 = vadd.f32 0.0, %v4466
        %v4468 = vpop.f32.mrb[0].mxu0
        %v4469 = vadd.f32 0.0, %v4468
        %4470 = vmatprep.mubr.bf16.mxu0 %v3525
        %4471 = vmatmul.mubr.bf16.gmra.mrb[0].mxu0 %v3524
        %v4472 = vpop.f32.mrb[0].mxu0
        %v4473 = vadd.f32 0.0, %v4472
        %v4474 = vpop.f32.mrb[0].mxu0
        %v4475 = vadd.f32 0.0, %v4474
        %v4476 = vpop.f32.mrb[0].mxu0
        %v4477 = vadd.f32 0.0, %v4476
        %v4478 = vpop.f32.mrb[0].mxu0
        %v4479 = vadd.f32 0.0, %v4478
        %4480 = vmatprep.mubr.bf16.mxu0 %v3527
        %4481 = vmatmul.mubr.bf16.gmra.mrb[0].mxu0 %v3526
        %v4482 = vpop.f32.mrb[0].mxu0
        %v4483 = vadd.f32 0.0, %v4482
        %v4484 = vpop.f32.mrb[0].mxu0
        %v4485 = vadd.f32 0.0, %v4484
        %v4486 = vpop.f32.mrb[0].mxu0
        %v4487 = vadd.f32 0.0, %v4486
        %v4488 = vpop.f32.mrb[0].mxu0
        %v4489 = vadd.f32 0.0, %v4488
        %4490 = vmatprep.mubr.bf16.mxu0 %v3529
        %4491 = vmatmul.mubr.bf16.gmra.mrb[0].mxu0 %v3528
        %v4492 = vpop.f32.mrb[0].mxu0
        %v4493 = vadd.f32 0.0, %v4492
        %v4494 = vpop.f32.mrb[0].mxu0
        %v4495 = vadd.f32 0.0, %v4494
        %v4496 = vpop.f32.mrb[0].mxu0
        %v4497 = vadd.f32 0.0, %v4496
        %v4498 = vpop.f32.mrb[0].mxu0
        %v4499 = vadd.f32 0.0, %v4498
        %4500 = vmatprep.mubr.bf16.mxu0 %v3531
        %4501 = vmatmul.mubr.bf16.gmra.mrb[0].mxu0 %v3530
        %v4502 = vpop.f32.mrb[0].mxu0
        %v4503 = vadd.f32 0.0, %v4502
        %v4504 = vpop.f32.mrb[0].mxu0
        %v4505 = vadd.f32 0.0, %v4504
        %v4506 = vpop.f32.mrb[0].mxu0
        %v4507 = vadd.f32 0.0, %v4506
        %v4508 = vpop.f32.mrb[0].mxu0
        %v4509 = vadd.f32 0.0, %v4508
        %4510 = vmatprep.mubr.bf16.mxu0 %v3533
        %4511 = vmatmul.mubr.bf16.gmra.mrb[0].mxu0 %v3532
        %v4512 = vpop.f32.mrb[0].mxu0
        %v4513 = vadd.f32 0.0, %v4512
        %v4514 = vpop.f32.mrb[0].mxu0
        %v4515 = vadd.f32 0.0, %v4514
        %v4516 = vpop.f32.mrb[0].mxu0
        %v4517 = vadd.f32 0.0, %v4516
        %v4518 = vpop.f32.mrb[0].mxu0
        %v4519 = vadd.f32 0.0, %v4518
        %4520 = vmatprep.mubr.bf16.mxu0 %v3535
        %4521 = vmatmul.mubr.bf16.gmra.mrb[0].mxu0 %v3534
        %v4522 = vpop.f32.mrb[0].mxu0
        %v4523 = vadd.f32 0.0, %v4522
        %v4524 = vpop.f32.mrb[0].mxu0
        %v4525 = vadd.f32 0.0, %v4524
        %v4526 = vpop.f32.mrb[0].mxu0
        %v4527 = vadd.f32 0.0, %v4526
        %v4528 = vpop.f32.mrb[0].mxu0
        %v4529 = vadd.f32 0.0, %v4528
        %4530 = vmatprep.mubr.bf16.mxu0 %v3537
        %4531 = vmatmul.mubr.bf16.gmra.mrb[0].mxu0 %v3536
        %v4532 = vpop.f32.mrb[0].mxu0
        %v4533 = vadd.f32 0.0, %v4532
        %v4534 = vpop.f32.mrb[0].mxu0
        %v4535 = vadd.f32 0.0, %v4534
        %v4536 = vpop.f32.mrb[0].mxu0
        %v4537 = vadd.f32 0.0, %v4536
        %v4538 = vpop.f32.mrb[0].mxu0
        %v4539 = vadd.f32 0.0, %v4538
        %4540 = vmatprep.mubr.bf16.mxu0 %v3539
        %4541 = vmatmul.mubr.bf16.gmra.mrb[0].mxu0 %v3538
        %v4542 = vpop.f32.mrb[0].mxu0
        %v4543 = vadd.f32 0.0, %v4542
        %v4544 = vpop.f32.mrb[0].mxu0
        %v4545 = vadd.f32 0.0, %v4544
        %v4546 = vpop.f32.mrb[0].mxu0
        %v4547 = vadd.f32 0.0, %v4546
        %v4548 = vpop.f32.mrb[0].mxu0
        %v4549 = vadd.f32 0.0, %v4548
        %4550 = vmatprep.mubr.bf16.mxu0 %v3541
        %4551 = vmatmul.mubr.bf16.gmra.mrb[0].mxu0 %v3540
        %v4552 = vpop.f32.mrb[0].mxu0
        %v4553 = vadd.f32 0.0, %v4552
        %v4554 = vpop.f32.mrb[0].mxu0
        %v4555 = vadd.f32 0.0, %v4554
        %v4556 = vpop.f32.mrb[0].mxu0
        %v4557 = vadd.f32 0.0, %v4556
        %v4558 = vpop.f32.mrb[0].mxu0
        %v4559 = vadd.f32 0.0, %v4558
        %4560 = vmatprep.mubr.bf16.mxu0 %v3543
        %4561 = vmatmul.mubr.bf16.gmra.mrb[0].mxu0 %v3542
        %v4562 = vpop.f32.mrb[0].mxu0
        %v4563 = vadd.f32 0.0, %v4562
        %v4564 = vpop.f32.mrb[0].mxu0
        %v4565 = vadd.f32 0.0, %v4564
        %v4566 = vpop.f32.mrb[0].mxu0
        %v4567 = vadd.f32 0.0, %v4566
        %v4568 = vpop.f32.mrb[0].mxu0
        %v4569 = vadd.f32 0.0, %v4568
        %4570 = vmatprep.mubr.bf16.mxu0 %v3545
        %4571 = vmatmul.mubr.bf16.gmra.mrb[0].mxu0 %v3544
        %v4572 = vpop.f32.mrb[0].mxu0
        %v4573 = vadd.f32 0.0, %v4572
        %v4574 = vpop.f32.mrb[0].mxu0
        %v4575 = vadd.f32 0.0, %v4574
        %v4576 = vpop.f32.mrb[0].mxu0
        %v4577 = vadd.f32 0.0, %v4576
        %v4578 = vpop.f32.mrb[0].mxu0
        %v4579 = vadd.f32 0.0, %v4578
        %4580 = vmatprep.mubr.bf16.mxu0 %v3547
        %4581 = vmatmul.mubr.bf16.gmra.mrb[0].mxu0 %v3546
        %v4582 = vpop.f32.mrb[0].mxu0
        %v4583 = vadd.f32 0.0, %v4582
        %v4584 = vpop.f32.mrb[0].mxu0
        %v4585 = vadd.f32 0.0, %v4584
        %v4586 = vpop.f32.mrb[0].mxu0
        %v4587 = vadd.f32 0.0, %v4586
        %v4588 = vpop.f32.mrb[0].mxu0
        %v4589 = vadd.f32 0.0, %v4588
        %4590 = vmatprep.mubr.bf16.mxu0 %v3549
        %4591 = vmatmul.mubr.bf16.gmra.mrb[0].mxu0 %v3548
        %v4592 = vpop.f32.mrb[0].mxu0
        %v4593 = vadd.f32 0.0, %v4592
        %v4594 = vpop.f32.mrb[0].mxu0
        %v4595 = vadd.f32 0.0, %v4594
        %v4596 = vpop.f32.mrb[0].mxu0
        %v4597 = vadd.f32 0.0, %v4596
        %v4598 = vpop.f32.mrb[0].mxu0
        %v4599 = vadd.f32 0.0, %v4598
        %4600 = vmatprep.mubr.bf16.mxu0 %v3551
        %4601 = vmatmul.mubr.bf16.gmra.mrb[0].mxu0 %v3550
        %v4602 = vpop.f32.mrb[0].mxu0
        %v4603 = vadd.f32 0.0, %v4602
        %v4604 = vpop.f32.mrb[0].mxu0
        %v4605 = vadd.f32 0.0, %v4604
        %v4606 = vpop.f32.mrb[0].mxu0
        %v4607 = vadd.f32 0.0, %v4606
        %v4608 = vpop.f32.mrb[0].mxu0
        %v4609 = vadd.f32 0.0, %v4608
        %4610 = vmatprep.mubr.bf16.mxu0 %v3553
        %4611 = vmatmul.mubr.bf16.gmra.mrb[0].mxu0 %v3552
        %v4612 = vpop.f32.mrb[0].mxu0
        %v4613 = vadd.f32 0.0, %v4612
        %v4614 = vpop.f32.mrb[0].mxu0
        %v4615 = vadd.f32 0.0, %v4614
        %v4616 = vpop.f32.mrb[0].mxu0
        %v4617 = vadd.f32 0.0, %v4616
        %v4618 = vpop.f32.mrb[0].mxu0
        %v4619 = vadd.f32 0.0, %v4618
        %4620 = vmatprep.mubr.bf16.mxu0 %v3555
        %4621 = vmatmul.mubr.bf16.gmra.mrb[0].mxu0 %v3554
        %v4622 = vpop.f32.mrb[0].mxu0
        %v4623 = vadd.f32 0.0, %v4622
        %v4624 = vpop.f32.mrb[0].mxu0
        %v4625 = vadd.f32 0.0, %v4624
        %v4626 = vpop.f32.mrb[0].mxu0
        %v4627 = vadd.f32 0.0, %v4626
        %v4628 = vpop.f32.mrb[0].mxu0
        %v4629 = vadd.f32 0.0, %v4628
        %4630 = vmatprep.mubr.bf16.mxu0 %v3557
        %4631 = vmatmul.mubr.bf16.gmra.mrb[0].mxu0 %v3556
        %v4632 = vpop.f32.mrb[0].mxu0
        %v4633 = vadd.f32 0.0, %v4632
        %v4634 = vpop.f32.mrb[0].mxu0
        %v4635 = vadd.f32 0.0, %v4634
        %v4636 = vpop.f32.mrb[0].mxu0
        %v4637 = vadd.f32 0.0, %v4636
        %v4638 = vpop.f32.mrb[0].mxu0
        %v4639 = vadd.f32 0.0, %v4638
        %4640 = vmatprep.mubr.bf16.mxu0 %v3559
        %4641 = vmatmul.mubr.bf16.gmra.mrb[0].mxu0 %v3558
        %v4642 = vpop.f32.mrb[0].mxu0
        %v4643 = vadd.f32 0.0, %v4642
        %v4644 = vpop.f32.mrb[0].mxu0
        %v4645 = vadd.f32 0.0, %v4644
        %v4646 = vpop.f32.mrb[0].mxu0
        %v4647 = vadd.f32 0.0, %v4646
        %v4648 = vpop.f32.mrb[0].mxu0
        %v4649 = vadd.f32 0.0, %v4648
        %4650 = vmatprep.mubr.bf16.mxu0 %v3561
        %4651 = vmatmul.mubr.bf16.gmra.mrb[0].mxu0 %v3560
        %v4652 = vpop.f32.mrb[0].mxu0
        %v4653 = vadd.f32 0.0, %v4652
        %v4654 = vpop.f32.mrb[0].mxu0
        %v4655 = vadd.f32 0.0, %v4654
        %v4656 = vpop.f32.mrb[0].mxu0
        %v4657 = vadd.f32 0.0, %v4656
        %v4658 = vpop.f32.mrb[0].mxu0
        %v4659 = vadd.f32 0.0, %v4658
        %4660 = vmatprep.mubr.bf16.mxu0 %v3563
        %4661 = vmatmul.mubr.bf16.gmra.mrb[0].mxu0 %v3562
        %v4662 = vpop.f32.mrb[0].mxu0
        %v4663 = vadd.f32 0.0, %v4662
        %v4664 = vpop.f32.mrb[0].mxu0
        %v4665 = vadd.f32 0.0, %v4664
        %v4666 = vpop.f32.mrb[0].mxu0
        %v4667 = vadd.f32 0.0, %v4666
        %v4668 = vpop.f32.mrb[0].mxu0
        %v4669 = vadd.f32 0.0, %v4668
        %4670 = vmatprep.mubr.bf16.mxu0 %v3565
        %4671 = vmatmul.mubr.bf16.gmra.mrb[0].mxu0 %v3564
        %v4672 = vpop.f32.mrb[0].mxu0
        %v4673 = vadd.f32 0.0, %v4672
        %v4674 = vpop.f32.mrb[0].mxu0
        %v4675 = vadd.f32 0.0, %v4674
        %v4676 = vpop.f32.mrb[0].mxu0
        %v4677 = vadd.f32 0.0, %v4676
        %v4678 = vpop.f32.mrb[0].mxu0
        %v4679 = vadd.f32 0.0, %v4678
        %4680 = vmatprep.mubr.bf16.mxu0 %v3567
        %4681 = vmatmul.mubr.bf16.gmra.mrb[0].mxu0 %v3566
        %v4682 = vpop.f32.mrb[0].mxu0
        %v4683 = vadd.f32 0.0, %v4682
        %v4684 = vpop.f32.mrb[0].mxu0
        %v4685 = vadd.f32 0.0, %v4684
        %v4686 = vpop.f32.mrb[0].mxu0
        %v4687 = vadd.f32 0.0, %v4686
        %v4688 = vpop.f32.mrb[0].mxu0
        %v4689 = vadd.f32 0.0, %v4688
        %4690 = vdwg.mxu0
        %4691 = vmatprep.subr.bf16.mxu0 0
        %4692 = vmatpush1.bf16.msra.mxu0 %v3206
        %4693 = vmatprep.subr.bf16.mxu0 0
        %4694 = vmatpush1.bf16.msra.mxu0 %v3213
        %4695 = vmatprep.subr.bf16.mxu0 0
        %4696 = vmatpush1.bf16.msra.mxu0 %v3220
        %4697 = vmatprep.subr.bf16.mxu0 0
        %4698 = vmatpush1.bf16.msra.mxu0 %v3227
        %4699 = vmatprep.subr.bf16.mxu0 0
        %4700 = vmatpush1.bf16.msra.mxu0 %v3234
        %4701 = vmatprep.subr.bf16.mxu0 0
        %4702 = vmatpush1.bf16.msra.mxu0 %v3241
        %4703 = vmatprep.subr.bf16.mxu0 0
        %4704 = vmatpush1.bf16.msra.mxu0 %v3248
        %4705 = vmatprep.subr.bf16.mxu0 0
        %4706 = vmatpush1.bf16.msra.mxu0 %v3255
        %4707 = vmatprep.subr.bf16.mxu0 0
        %4708 = vmatpush1.bf16.msra.mxu0 %v3262
        %4709 = vmatprep.subr.bf16.mxu0 0
        %4710 = vmatpush1.bf16.msra.mxu0 %v3269
        %4711 = vmatprep.subr.bf16.mxu0 0
        %4712 = vmatpush1.bf16.msra.mxu0 %v3276
        %4713 = vmatprep.subr.bf16.mxu0 0
        %4714 = vmatpush1.bf16.msra.mxu0 %v3283
        %4715 = vmatprep.subr.bf16.mxu0 0
        %4716 = vmatpush1.bf16.msra.mxu0 %v3290
        %4717 = vmatprep.subr.bf16.mxu0 0
        %4718 = vmatpush1.bf16.msra.mxu0 %v3297
        %4719 = vmatprep.subr.bf16.mxu0 0
        %4720 = vmatpush1.bf16.msra.mxu0 %v3304
        %4721 = vmatprep.subr.bf16.mxu0 0
        %4722 = vmatpush1.bf16.msra.mxu0 %v3311
        %4723 = vmatprep.mubr.bf16.mxu0 %v3505
        %4724 = vmatmul.mubr.bf16.gmra.mrb[0].mxu0 %v3504
        %v4725 = vpop.f32.mrb[0].mxu0
        %v4726 = vadd.f32 0.0, %v4725
        %v4727 = vpop.f32.mrb[0].mxu0
        %v4728 = vpop.f32.mrb[0].mxu0
        %v4729 = vadd.f32 0.0, %v4728
        %v4730 = vpop.f32.mrb[0].mxu0
        %4731 = vmatprep.mubr.bf16.mxu0 %v3507
        %4732 = vmatmul.mubr.bf16.gmra.mrb[0].mxu0 %v3506
        %v4733 = vpop.f32.mrb[0].mxu0
        %v4734 = vadd.f32 0.0, %v4733
        %v4735 = vpop.f32.mrb[0].mxu0
        %v4736 = vpop.f32.mrb[0].mxu0
        %v4737 = vadd.f32 0.0, %v4736
        %v4738 = vpop.f32.mrb[0].mxu0
        %4739 = vmatprep.mubr.bf16.mxu0 %v3509
        %4740 = vmatmul.mubr.bf16.gmra.mrb[0].mxu0 %v3508
        %v4741 = vpop.f32.mrb[0].mxu0
        %v4742 = vadd.f32 0.0, %v4741
        %v4743 = vpop.f32.mrb[0].mxu0
        %v4744 = vpop.f32.mrb[0].mxu0
        %v4745 = vadd.f32 0.0, %v4744
        %v4746 = vpop.f32.mrb[0].mxu0
        %4747 = vmatprep.mubr.bf16.mxu0 %v3511
        %4748 = vmatmul.mubr.bf16.gmra.mrb[0].mxu0 %v3510
        %v4749 = vpop.f32.mrb[0].mxu0
        %v4750 = vadd.f32 0.0, %v4749
        %v4751 = vpop.f32.mrb[0].mxu0
        %v4752 = vpop.f32.mrb[0].mxu0
        %v4753 = vadd.f32 0.0, %v4752
        %v4754 = vpop.f32.mrb[0].mxu0
        %4755 = vmatprep.mubr.bf16.mxu0 %v3513
        %4756 = vmatmul.mubr.bf16.gmra.mrb[0].mxu0 %v3512
        %v4757 = vpop.f32.mrb[0].mxu0
        %v4758 = vadd.f32 0.0, %v4757
        %v4759 = vpop.f32.mrb[0].mxu0
        %v4760 = vpop.f32.mrb[0].mxu0
        %v4761 = vadd.f32 0.0, %v4760
        %v4762 = vpop.f32.mrb[0].mxu0
        %4763 = vmatprep.mubr.bf16.mxu0 %v3515
        %4764 = vmatmul.mubr.bf16.gmra.mrb[0].mxu0 %v3514
        %v4765 = vpop.f32.mrb[0].mxu0
        %v4766 = vadd.f32 0.0, %v4765
        %v4767 = vpop.f32.mrb[0].mxu0
        %v4768 = vpop.f32.mrb[0].mxu0
        %v4769 = vadd.f32 0.0, %v4768
        %v4770 = vpop.f32.mrb[0].mxu0
        %4771 = vmatprep.mubr.bf16.mxu0 %v3517
        %4772 = vmatmul.mubr.bf16.gmra.mrb[0].mxu0 %v3516
        %v4773 = vpop.f32.mrb[0].mxu0
        %v4774 = vadd.f32 0.0, %v4773
        %v4775 = vpop.f32.mrb[0].mxu0
        %v4776 = vpop.f32.mrb[0].mxu0
        %v4777 = vadd.f32 0.0, %v4776
        %v4778 = vpop.f32.mrb[0].mxu0
        %4779 = vmatprep.mubr.bf16.mxu0 %v3519
        %4780 = vmatmul.mubr.bf16.gmra.mrb[0].mxu0 %v3518
        %v4781 = vpop.f32.mrb[0].mxu0
        %v4782 = vadd.f32 0.0, %v4781
        %v4783 = vpop.f32.mrb[0].mxu0
        %v4784 = vpop.f32.mrb[0].mxu0
        %v4785 = vadd.f32 0.0, %v4784
        %v4786 = vpop.f32.mrb[0].mxu0
        %4787 = vmatprep.mubr.bf16.mxu0 %v3521
        %4788 = vmatmul.mubr.bf16.gmra.mrb[0].mxu0 %v3520
        %v4789 = vpop.f32.mrb[0].mxu0
        %v4790 = vadd.f32 0.0, %v4789
        %v4791 = vpop.f32.mrb[0].mxu0
        %v4792 = vpop.f32.mrb[0].mxu0
        %v4793 = vadd.f32 0.0, %v4792
        %v4794 = vpop.f32.mrb[0].mxu0
        %4795 = vmatprep.mubr.bf16.mxu0 %v3523
        %4796 = vmatmul.mubr.bf16.gmra.mrb[0].mxu0 %v3522
        %v4797 = vpop.f32.mrb[0].mxu0
        %v4798 = vadd.f32 0.0, %v4797
        %v4799 = vpop.f32.mrb[0].mxu0
        %v4800 = vpop.f32.mrb[0].mxu0
        %v4801 = vadd.f32 0.0, %v4800
        %v4802 = vpop.f32.mrb[0].mxu0
        %4803 = vmatprep.mubr.bf16.mxu0 %v3525
        %4804 = vmatmul.mubr.bf16.gmra.mrb[0].mxu0 %v3524
        %v4805 = vpop.f32.mrb[0].mxu0
        %v4806 = vadd.f32 0.0, %v4805
        %v4807 = vpop.f32.mrb[0].mxu0
        %v4808 = vpop.f32.mrb[0].mxu0
        %v4809 = vadd.f32 0.0, %v4808
        %v4810 = vpop.f32.mrb[0].mxu0
        %4811 = vmatprep.mubr.bf16.mxu0 %v3527
        %4812 = vmatmul.mubr.bf16.gmra.mrb[0].mxu0 %v3526
        %v4813 = vpop.f32.mrb[0].mxu0
        %v4814 = vadd.f32 0.0, %v4813
        %v4815 = vpop.f32.mrb[0].mxu0
        %v4816 = vpop.f32.mrb[0].mxu0
        %v4817 = vadd.f32 0.0, %v4816
        %v4818 = vpop.f32.mrb[0].mxu0
        %4819 = vmatprep.mubr.bf16.mxu0 %v3529
        %4820 = vmatmul.mubr.bf16.gmra.mrb[0].mxu0 %v3528
        %v4821 = vpop.f32.mrb[0].mxu0
        %v4822 = vadd.f32 0.0, %v4821
        %v4823 = vpop.f32.mrb[0].mxu0
        %v4824 = vpop.f32.mrb[0].mxu0
        %v4825 = vadd.f32 0.0, %v4824
        %v4826 = vpop.f32.mrb[0].mxu0
        %4827 = vmatprep.mubr.bf16.mxu0 %v3531
        %4828 = vmatmul.mubr.bf16.gmra.mrb[0].mxu0 %v3530
        %v4829 = vpop.f32.mrb[0].mxu0
        %v4830 = vadd.f32 0.0, %v4829
        %v4831 = vpop.f32.mrb[0].mxu0
        %v4832 = vpop.f32.mrb[0].mxu0
        %v4833 = vadd.f32 0.0, %v4832
        %v4834 = vpop.f32.mrb[0].mxu0
        %4835 = vmatprep.mubr.bf16.mxu0 %v3533
        %4836 = vmatmul.mubr.bf16.gmra.mrb[0].mxu0 %v3532
        %v4837 = vpop.f32.mrb[0].mxu0
        %v4838 = vadd.f32 0.0, %v4837
        %v4839 = vpop.f32.mrb[0].mxu0
        %v4840 = vpop.f32.mrb[0].mxu0
        %v4841 = vadd.f32 0.0, %v4840
        %v4842 = vpop.f32.mrb[0].mxu0
        %4843 = vmatprep.mubr.bf16.mxu0 %v3535
        %4844 = vmatmul.mubr.bf16.gmra.mrb[0].mxu0 %v3534
        %v4845 = vpop.f32.mrb[0].mxu0
        %v4846 = vadd.f32 0.0, %v4845
        %v4847 = vpop.f32.mrb[0].mxu0
        %v4848 = vpop.f32.mrb[0].mxu0
        %v4849 = vadd.f32 0.0, %v4848
        %v4850 = vpop.f32.mrb[0].mxu0
        %4851 = vmatprep.mubr.bf16.mxu0 %v3537
        %4852 = vmatmul.mubr.bf16.gmra.mrb[0].mxu0 %v3536
        %v4853 = vpop.f32.mrb[0].mxu0
        %v4854 = vadd.f32 0.0, %v4853
        %v4855 = vpop.f32.mrb[0].mxu0
        %v4856 = vpop.f32.mrb[0].mxu0
        %v4857 = vadd.f32 0.0, %v4856
        %v4858 = vpop.f32.mrb[0].mxu0
        %4859 = vmatprep.mubr.bf16.mxu0 %v3539
        %4860 = vmatmul.mubr.bf16.gmra.mrb[0].mxu0 %v3538
        %v4861 = vpop.f32.mrb[0].mxu0
        %v4862 = vadd.f32 0.0, %v4861
        %v4863 = vpop.f32.mrb[0].mxu0
        %v4864 = vpop.f32.mrb[0].mxu0
        %v4865 = vadd.f32 0.0, %v4864
        %v4866 = vpop.f32.mrb[0].mxu0
        %4867 = vmatprep.mubr.bf16.mxu0 %v3541
        %4868 = vmatmul.mubr.bf16.gmra.mrb[0].mxu0 %v3540
        %v4869 = vpop.f32.mrb[0].mxu0
        %v4870 = vadd.f32 0.0, %v4869
        %v4871 = vpop.f32.mrb[0].mxu0
        %v4872 = vpop.f32.mrb[0].mxu0
        %v4873 = vadd.f32 0.0, %v4872
        %v4874 = vpop.f32.mrb[0].mxu0
        %4875 = vmatprep.mubr.bf16.mxu0 %v3543
        %4876 = vmatmul.mubr.bf16.gmra.mrb[0].mxu0 %v3542
        %v4877 = vpop.f32.mrb[0].mxu0
        %v4878 = vadd.f32 0.0, %v4877
        %v4879 = vpop.f32.mrb[0].mxu0
        %v4880 = vpop.f32.mrb[0].mxu0
        %v4881 = vadd.f32 0.0, %v4880
        %v4882 = vpop.f32.mrb[0].mxu0
        %4883 = vmatprep.mubr.bf16.mxu0 %v3545
        %4884 = vmatmul.mubr.bf16.gmra.mrb[0].mxu0 %v3544
        %v4885 = vpop.f32.mrb[0].mxu0
        %v4886 = vadd.f32 0.0, %v4885
        %v4887 = vpop.f32.mrb[0].mxu0
        %v4888 = vpop.f32.mrb[0].mxu0
        %v4889 = vadd.f32 0.0, %v4888
        %v4890 = vpop.f32.mrb[0].mxu0
        %4891 = vmatprep.mubr.bf16.mxu0 %v3547
        %4892 = vmatmul.mubr.bf16.gmra.mrb[0].mxu0 %v3546
        %v4893 = vpop.f32.mrb[0].mxu0
        %v4894 = vadd.f32 0.0, %v4893
        %v4895 = vpop.f32.mrb[0].mxu0
        %v4896 = vpop.f32.mrb[0].mxu0
        %v4897 = vadd.f32 0.0, %v4896
        %v4898 = vpop.f32.mrb[0].mxu0
        %4899 = vmatprep.mubr.bf16.mxu0 %v3549
        %4900 = vmatmul.mubr.bf16.gmra.mrb[0].mxu0 %v3548
        %v4901 = vpop.f32.mrb[0].mxu0
        %v4902 = vadd.f32 0.0, %v4901
        %v4903 = vpop.f32.mrb[0].mxu0
        %v4904 = vpop.f32.mrb[0].mxu0
        %v4905 = vadd.f32 0.0, %v4904
        %v4906 = vpop.f32.mrb[0].mxu0
        %4907 = vmatprep.mubr.bf16.mxu0 %v3551
        %4908 = vmatmul.mubr.bf16.gmra.mrb[0].mxu0 %v3550
        %v4909 = vpop.f32.mrb[0].mxu0
        %v4910 = vadd.f32 0.0, %v4909
        %v4911 = vpop.f32.mrb[0].mxu0
        %v4912 = vpop.f32.mrb[0].mxu0
        %v4913 = vadd.f32 0.0, %v4912
        %v4914 = vpop.f32.mrb[0].mxu0
        %4915 = vmatprep.mubr.bf16.mxu0 %v3553
        %4916 = vmatmul.mubr.bf16.gmra.mrb[0].mxu0 %v3552
        %v4917 = vpop.f32.mrb[0].mxu0
        %v4918 = vadd.f32 0.0, %v4917
        %v4919 = vpop.f32.mrb[0].mxu0
        %v4920 = vpop.f32.mrb[0].mxu0
        %v4921 = vadd.f32 0.0, %v4920
        %v4922 = vpop.f32.mrb[0].mxu0
        %4923 = vmatprep.mubr.bf16.mxu0 %v3555
        %4924 = vmatmul.mubr.bf16.gmra.mrb[0].mxu0 %v3554
        %v4925 = vpop.f32.mrb[0].mxu0
        %v4926 = vadd.f32 0.0, %v4925
        %v4927 = vpop.f32.mrb[0].mxu0
        %v4928 = vpop.f32.mrb[0].mxu0
        %v4929 = vadd.f32 0.0, %v4928
        %v4930 = vpop.f32.mrb[0].mxu0
        %4931 = vmatprep.mubr.bf16.mxu0 %v3557
        %4932 = vmatmul.mubr.bf16.gmra.mrb[0].mxu0 %v3556
        %v4933 = vpop.f32.mrb[0].mxu0
        %v4934 = vadd.f32 0.0, %v4933
        %v4935 = vpop.f32.mrb[0].mxu0
        %v4936 = vpop.f32.mrb[0].mxu0
        %v4937 = vadd.f32 0.0, %v4936
        %v4938 = vpop.f32.mrb[0].mxu0
        %4939 = vmatprep.mubr.bf16.mxu0 %v3559
        %4940 = vmatmul.mubr.bf16.gmra.mrb[0].mxu0 %v3558
        %v4941 = vpop.f32.mrb[0].mxu0
        %v4942 = vadd.f32 0.0, %v4941
        %v4943 = vpop.f32.mrb[0].mxu0
        %v4944 = vpop.f32.mrb[0].mxu0
        %v4945 = vadd.f32 0.0, %v4944
        %v4946 = vpop.f32.mrb[0].mxu0
        %4947 = vmatprep.mubr.bf16.mxu0 %v3561
        %4948 = vmatmul.mubr.bf16.gmra.mrb[0].mxu0 %v3560
        %v4949 = vpop.f32.mrb[0].mxu0
        %v4950 = vadd.f32 0.0, %v4949
        %v4951 = vpop.f32.mrb[0].mxu0
        %v4952 = vpop.f32.mrb[0].mxu0
        %v4953 = vadd.f32 0.0, %v4952
        %v4954 = vpop.f32.mrb[0].mxu0
        %4955 = vmatprep.mubr.bf16.mxu0 %v3563
        %4956 = vmatmul.mubr.bf16.gmra.mrb[0].mxu0 %v3562
        %v4957 = vpop.f32.mrb[0].mxu0
        %v4958 = vadd.f32 0.0, %v4957
        %v4959 = vpop.f32.mrb[0].mxu0
        %v4960 = vpop.f32.mrb[0].mxu0
        %v4961 = vadd.f32 0.0, %v4960
        %v4962 = vpop.f32.mrb[0].mxu0
        %4963 = vmatprep.mubr.bf16.mxu0 %v3565
        %4964 = vmatmul.mubr.bf16.gmra.mrb[0].mxu0 %v3564
        %v4965 = vpop.f32.mrb[0].mxu0
        %v4966 = vadd.f32 0.0, %v4965
        %v4967 = vpop.f32.mrb[0].mxu0
        %v4968 = vpop.f32.mrb[0].mxu0
        %v4969 = vadd.f32 0.0, %v4968
        %v4970 = vpop.f32.mrb[0].mxu0
        %4971 = vmatprep.mubr.bf16.mxu0 %v3567
        %4972 = vmatmul.mubr.bf16.gmra.mrb[0].mxu0 %v3566
        %v4973 = vpop.f32.mrb[0].mxu0
        %v4974 = vadd.f32 0.0, %v4973
        %v4975 = vpop.f32.mrb[0].mxu0
        %v4976 = vpop.f32.mrb[0].mxu0
        %v4977 = vadd.f32 0.0, %v4976
        %v4978 = vpop.f32.mrb[0].mxu0
        %4979 = vdwg.mxu0
        %v4980 = vadd.f32 %v3667, %v3669
        %v4981 = vadd.f32 %v4980, %v4020
        %v4982 = vadd.f32 %v4981, %v4022
        %v4983 = vadd.f32 %v4982, %v4373
        %v4984 = vadd.f32 %v4983, %v4375
        %v4985 = vadd.f32 %v4984, %v4726
        %4986 = vadd.xlane.f32.xlu0 %v4985
        %v4987 = vpop.xlane.xlu0 %4986
        %v4988 = vadd.f32 %v3671, %v3673
        %v4989 = vadd.f32 %v4988, %v4024
        %v4990 = vadd.f32 %v4989, %v4026
        %v4991 = vadd.f32 %v4990, %v4377
        %v4992 = vadd.f32 %v4991, %v4379
        %v4993 = vadd.f32 %v4992, %v4729
        %4994 = vadd.xlane.f32.xlu0 %v4993
        %v4995 = vpop.xlane.xlu0 %4994
        %v4996 = vadd.f32 %v3677, %v3679
        %v4997 = vadd.f32 %v4996, %v4030
        %v4998 = vadd.f32 %v4997, %v4032
        %v4999 = vadd.f32 %v4998, %v4383
        %v5000 = vadd.f32 %v4999, %v4385
        %v5001 = vadd.f32 %v5000, %v4734
        %5002 = vadd.xlane.f32.xlu0 %v5001
        %v5003 = vpop.xlane.xlu0 %5002
        %v5004 = vadd.f32 %v3681, %v3683
        %v5005 = vadd.f32 %v5004, %v4034
        %v5006 = vadd.f32 %v5005, %v4036
        %v5007 = vadd.f32 %v5006, %v4387
        %v5008 = vadd.f32 %v5007, %v4389
        %v5009 = vadd.f32 %v5008, %v4737
        %5010 = vadd.xlane.f32.xlu0 %v5009
        %v5011 = vpop.xlane.xlu0 %5010
        %v5012 = vadd.f32 %v3687, %v3689
        %v5013 = vadd.f32 %v5012, %v4040
        %v5014 = vadd.f32 %v5013, %v4042
        %v5015 = vadd.f32 %v5014, %v4393
        %v5016 = vadd.f32 %v5015, %v4395
        %v5017 = vadd.f32 %v5016, %v4742
        %5018 = vadd.xlane.f32.xlu0 %v5017
        %v5019 = vpop.xlane.xlu0 %5018
        %v5020 = vadd.f32 %v3691, %v3693
        %v5021 = vadd.f32 %v5020, %v4044
        %v5022 = vadd.f32 %v5021, %v4046
        %v5023 = vadd.f32 %v5022, %v4397
        %v5024 = vadd.f32 %v5023, %v4399
        %v5025 = vadd.f32 %v5024, %v4745
        %5026 = vadd.xlane.f32.xlu0 %v5025
        %v5027 = vpop.xlane.xlu0 %5026
        %v5028 = vadd.f32 %v3697, %v3699
        %v5029 = vadd.f32 %v5028, %v4050
        %v5030 = vadd.f32 %v5029, %v4052
        %v5031 = vadd.f32 %v5030, %v4403
        %v5032 = vadd.f32 %v5031, %v4405
        %v5033 = vadd.f32 %v5032, %v4750
        %5034 = vadd.xlane.f32.xlu0 %v5033
        %v5035 = vpop.xlane.xlu0 %5034
        %v5036 = vadd.f32 %v3701, %v3703
        %v5037 = vadd.f32 %v5036, %v4054
        %v5038 = vadd.f32 %v5037, %v4056
        %v5039 = vadd.f32 %v5038, %v4407
        %v5040 = vadd.f32 %v5039, %v4409
        %v5041 = vadd.f32 %v5040, %v4753
        %5042 = vadd.xlane.f32.xlu0 %v5041
        %v5043 = vpop.xlane.xlu0 %5042
        %v5044 = vadd.f32 %v3707, %v3709
        %v5045 = vadd.f32 %v5044, %v4060
        %v5046 = vadd.f32 %v5045, %v4062
        %v5047 = vadd.f32 %v5046, %v4413
        %v5048 = vadd.f32 %v5047, %v4415
        %v5049 = vadd.f32 %v5048, %v4758
        %5050 = vadd.xlane.f32.xlu0 %v5049
        %v5051 = vpop.xlane.xlu0 %5050
        %v5052 = vadd.f32 %v3711, %v3713
        %v5053 = vadd.f32 %v5052, %v4064
        %v5054 = vadd.f32 %v5053, %v4066
        %v5055 = vadd.f32 %v5054, %v4417
        %v5056 = vadd.f32 %v5055, %v4419
        %v5057 = vadd.f32 %v5056, %v4761
        %5058 = vadd.xlane.f32.xlu0 %v5057
        %v5059 = vpop.xlane.xlu0 %5058
        %v5060 = vadd.f32 %v3717, %v3719
        %v5061 = vadd.f32 %v5060, %v4070
        %v5062 = vadd.f32 %v5061, %v4072
        %v5063 = vadd.f32 %v5062, %v4423
        %v5064 = vadd.f32 %v5063, %v4425
        %v5065 = vadd.f32 %v5064, %v4766
        %5066 = vadd.xlane.f32.xlu0 %v5065
        %v5067 = vpop.xlane.xlu0 %5066
        %v5068 = vadd.f32 %v3721, %v3723
        %v5069 = vadd.f32 %v5068, %v4074
        %v5070 = vadd.f32 %v5069, %v4076
        %v5071 = vadd.f32 %v5070, %v4427
        %v5072 = vadd.f32 %v5071, %v4429
        %v5073 = vadd.f32 %v5072, %v4769
        %5074 = vadd.xlane.f32.xlu0 %v5073
        %v5075 = vpop.xlane.xlu0 %5074
        %v5076 = vadd.f32 %v3727, %v3729
        %v5077 = vadd.f32 %v5076, %v4080
        %v5078 = vadd.f32 %v5077, %v4082
        %v5079 = vadd.f32 %v5078, %v4433
        %v5080 = vadd.f32 %v5079, %v4435
        %v5081 = vadd.f32 %v5080, %v4774
        %5082 = vadd.xlane.f32.xlu0 %v5081
        %v5083 = vpop.xlane.xlu0 %5082
        %v5084 = vadd.f32 %v3731, %v3733
        %v5085 = vadd.f32 %v5084, %v4084
        %v5086 = vadd.f32 %v5085, %v4086
        %v5087 = vadd.f32 %v5086, %v4437
        %v5088 = vadd.f32 %v5087, %v4439
        %v5089 = vadd.f32 %v5088, %v4777
        %5090 = vadd.xlane.f32.xlu0 %v5089
        %v5091 = vpop.xlane.xlu0 %5090
        %v5092 = vadd.f32 %v3737, %v3739
        %v5093 = vadd.f32 %v5092, %v4090
        %v5094 = vadd.f32 %v5093, %v4092
        %v5095 = vadd.f32 %v5094, %v4443
        %v5096 = vadd.f32 %v5095, %v4445
        %v5097 = vadd.f32 %v5096, %v4782
        %5098 = vadd.xlane.f32.xlu0 %v5097
        %v5099 = vpop.xlane.xlu0 %5098
        %v5100 = vadd.f32 %v3741, %v3743
        %v5101 = vadd.f32 %v5100, %v4094
        %v5102 = vadd.f32 %v5101, %v4096
        %v5103 = vadd.f32 %v5102, %v4447
        %v5104 = vadd.f32 %v5103, %v4449
        %v5105 = vadd.f32 %v5104, %v4785
        %5106 = vadd.xlane.f32.xlu0 %v5105
        %v5107 = vpop.xlane.xlu0 %5106
        %v5108 = vadd.f32 %v3747, %v3749
        %v5109 = vadd.f32 %v5108, %v4100
        %v5110 = vadd.f32 %v5109, %v4102
        %v5111 = vadd.f32 %v5110, %v4453
        %v5112 = vadd.f32 %v5111, %v4455
        %v5113 = vadd.f32 %v5112, %v4790
        %5114 = vadd.xlane.f32.xlu0 %v5113
        %v5115 = vpop.xlane.xlu0 %5114
        %v5116 = vadd.f32 %v3751, %v3753
        %v5117 = vadd.f32 %v5116, %v4104
        %v5118 = vadd.f32 %v5117, %v4106
        %v5119 = vadd.f32 %v5118, %v4457
        %v5120 = vadd.f32 %v5119, %v4459
        %v5121 = vadd.f32 %v5120, %v4793
        %5122 = vadd.xlane.f32.xlu0 %v5121
        %v5123 = vpop.xlane.xlu0 %5122
        %v5124 = vadd.f32 %v3757, %v3759
        %v5125 = vadd.f32 %v5124, %v4110
        %v5126 = vadd.f32 %v5125, %v4112
        %v5127 = vadd.f32 %v5126, %v4463
        %v5128 = vadd.f32 %v5127, %v4465
        %v5129 = vadd.f32 %v5128, %v4798
        %5130 = vadd.xlane.f32.xlu0 %v5129
        %v5131 = vpop.xlane.xlu0 %5130
        %v5132 = vadd.f32 %v3761, %v3763
        %v5133 = vadd.f32 %v5132, %v4114
        %v5134 = vadd.f32 %v5133, %v4116
        %v5135 = vadd.f32 %v5134, %v4467
        %v5136 = vadd.f32 %v5135, %v4469
        %v5137 = vadd.f32 %v5136, %v4801
        %5138 = vadd.xlane.f32.xlu0 %v5137
        %v5139 = vpop.xlane.xlu0 %5138
        %v5140 = vadd.f32 %v3767, %v3769
        %v5141 = vadd.f32 %v5140, %v4120
        %v5142 = vadd.f32 %v5141, %v4122
        %v5143 = vadd.f32 %v5142, %v4473
        %v5144 = vadd.f32 %v5143, %v4475
        %v5145 = vadd.f32 %v5144, %v4806
        %5146 = vadd.xlane.f32.xlu0 %v5145
        %v5147 = vpop.xlane.xlu0 %5146
        %v5148 = vadd.f32 %v3771, %v3773
        %v5149 = vadd.f32 %v5148, %v4124
        %v5150 = vadd.f32 %v5149, %v4126
        %v5151 = vadd.f32 %v5150, %v4477
        %v5152 = vadd.f32 %v5151, %v4479
        %v5153 = vadd.f32 %v5152, %v4809
        %5154 = vadd.xlane.f32.xlu0 %v5153
        %v5155 = vpop.xlane.xlu0 %5154
        %v5156 = vadd.f32 %v3777, %v3779
        %v5157 = vadd.f32 %v5156, %v4130
        %v5158 = vadd.f32 %v5157, %v4132
        %v5159 = vadd.f32 %v5158, %v4483
        %v5160 = vadd.f32 %v5159, %v4485
        %v5161 = vadd.f32 %v5160, %v4814
        %5162 = vadd.xlane.f32.xlu0 %v5161
        %v5163 = vpop.xlane.xlu0 %5162
        %v5164 = vadd.f32 %v3781, %v3783
        %v5165 = vadd.f32 %v5164, %v4134
        %v5166 = vadd.f32 %v5165, %v4136
        %v5167 = vadd.f32 %v5166, %v4487
        %v5168 = vadd.f32 %v5167, %v4489
        %v5169 = vadd.f32 %v5168, %v4817
        %5170 = vadd.xlane.f32.xlu0 %v5169
        %v5171 = vpop.xlane.xlu0 %5170
        %v5172 = vadd.f32 %v3787, %v3789
        %v5173 = vadd.f32 %v5172, %v4140
        %v5174 = vadd.f32 %v5173, %v4142
        %v5175 = vadd.f32 %v5174, %v4493
        %v5176 = vadd.f32 %v5175, %v4495
        %v5177 = vadd.f32 %v5176, %v4822
        %5178 = vadd.xlane.f32.xlu0 %v5177
        %v5179 = vpop.xlane.xlu0 %5178
        %v5180 = vadd.f32 %v3791, %v3793
        %v5181 = vadd.f32 %v5180, %v4144
        %v5182 = vadd.f32 %v5181, %v4146
        %v5183 = vadd.f32 %v5182, %v4497
        %v5184 = vadd.f32 %v5183, %v4499
        %v5185 = vadd.f32 %v5184, %v4825
        %5186 = vadd.xlane.f32.xlu0 %v5185
        %v5187 = vpop.xlane.xlu0 %5186
        %v5188 = vadd.f32 %v3797, %v3799
        %v5189 = vadd.f32 %v5188, %v4150
        %v5190 = vadd.f32 %v5189, %v4152
        %v5191 = vadd.f32 %v5190, %v4503
        %v5192 = vadd.f32 %v5191, %v4505
        %v5193 = vadd.f32 %v5192, %v4830
        %5194 = vadd.xlane.f32.xlu0 %v5193
        %v5195 = vpop.xlane.xlu0 %5194
        %v5196 = vadd.f32 %v3801, %v3803
        %v5197 = vadd.f32 %v5196, %v4154
        %v5198 = vadd.f32 %v5197, %v4156
        %v5199 = vadd.f32 %v5198, %v4507
        %v5200 = vadd.f32 %v5199, %v4509
        %v5201 = vadd.f32 %v5200, %v4833
        %5202 = vadd.xlane.f32.xlu0 %v5201
        %v5203 = vpop.xlane.xlu0 %5202
        %v5204 = vadd.f32 %v3807, %v3809
        %v5205 = vadd.f32 %v5204, %v4160
        %v5206 = vadd.f32 %v5205, %v4162
        %v5207 = vadd.f32 %v5206, %v4513
        %v5208 = vadd.f32 %v5207, %v4515
        %v5209 = vadd.f32 %v5208, %v4838
        %5210 = vadd.xlane.f32.xlu0 %v5209
        %v5211 = vpop.xlane.xlu0 %5210
        %v5212 = vadd.f32 %v3811, %v3813
        %v5213 = vadd.f32 %v5212, %v4164
        %v5214 = vadd.f32 %v5213, %v4166
        %v5215 = vadd.f32 %v5214, %v4517
        %v5216 = vadd.f32 %v5215, %v4519
        %v5217 = vadd.f32 %v5216, %v4841
        %5218 = vadd.xlane.f32.xlu0 %v5217
        %v5219 = vpop.xlane.xlu0 %5218
        %v5220 = vadd.f32 %v3817, %v3819
        %v5221 = vadd.f32 %v5220, %v4170
        %v5222 = vadd.f32 %v5221, %v4172
        %v5223 = vadd.f32 %v5222, %v4523
        %v5224 = vadd.f32 %v5223, %v4525
        %v5225 = vadd.f32 %v5224, %v4846
        %5226 = vadd.xlane.f32.xlu0 %v5225
        %v5227 = vpop.xlane.xlu0 %5226
        %v5228 = vadd.f32 %v3821, %v3823
        %v5229 = vadd.f32 %v5228, %v4174
        %v5230 = vadd.f32 %v5229, %v4176
        %v5231 = vadd.f32 %v5230, %v4527
        %v5232 = vadd.f32 %v5231, %v4529
        %v5233 = vadd.f32 %v5232, %v4849
        %5234 = vadd.xlane.f32.xlu0 %v5233
        %v5235 = vpop.xlane.xlu0 %5234
        %v5236 = vadd.f32 %v3827, %v3829
        %v5237 = vadd.f32 %v5236, %v4180
        %v5238 = vadd.f32 %v5237, %v4182
        %v5239 = vadd.f32 %v5238, %v4533
        %v5240 = vadd.f32 %v5239, %v4535
        %v5241 = vadd.f32 %v5240, %v4854
        %5242 = vadd.xlane.f32.xlu0 %v5241
        %v5243 = vpop.xlane.xlu0 %5242
        %v5244 = vadd.f32 %v3831, %v3833
        %v5245 = vadd.f32 %v5244, %v4184
        %v5246 = vadd.f32 %v5245, %v4186
        %v5247 = vadd.f32 %v5246, %v4537
        %v5248 = vadd.f32 %v5247, %v4539
        %v5249 = vadd.f32 %v5248, %v4857
        %5250 = vadd.xlane.f32.xlu0 %v5249
        %v5251 = vpop.xlane.xlu0 %5250
        %v5252 = vadd.f32 %v3837, %v3839
        %v5253 = vadd.f32 %v5252, %v4190
        %v5254 = vadd.f32 %v5253, %v4192
        %v5255 = vadd.f32 %v5254, %v4543
        %v5256 = vadd.f32 %v5255, %v4545
        %v5257 = vadd.f32 %v5256, %v4862
        %5258 = vadd.xlane.f32.xlu0 %v5257
        %v5259 = vpop.xlane.xlu0 %5258
        %v5260 = vadd.f32 %v3841, %v3843
        %v5261 = vadd.f32 %v5260, %v4194
        %v5262 = vadd.f32 %v5261, %v4196
        %v5263 = vadd.f32 %v5262, %v4547
        %v5264 = vadd.f32 %v5263, %v4549
        %v5265 = vadd.f32 %v5264, %v4865
        %5266 = vadd.xlane.f32.xlu0 %v5265
        %v5267 = vpop.xlane.xlu0 %5266
        %v5268 = vadd.f32 %v3847, %v3849
        %v5269 = vadd.f32 %v5268, %v4200
        %v5270 = vadd.f32 %v5269, %v4202
        %v5271 = vadd.f32 %v5270, %v4553
        %v5272 = vadd.f32 %v5271, %v4555
        %v5273 = vadd.f32 %v5272, %v4870
        %5274 = vadd.xlane.f32.xlu0 %v5273
        %v5275 = vpop.xlane.xlu0 %5274
        %v5276 = vadd.f32 %v3851, %v3853
        %v5277 = vadd.f32 %v5276, %v4204
        %v5278 = vadd.f32 %v5277, %v4206
        %v5279 = vadd.f32 %v5278, %v4557
        %v5280 = vadd.f32 %v5279, %v4559
        %v5281 = vadd.f32 %v5280, %v4873
        %5282 = vadd.xlane.f32.xlu0 %v5281
        %v5283 = vpop.xlane.xlu0 %5282
        %v5284 = vadd.f32 %v3857, %v3859
        %v5285 = vadd.f32 %v5284, %v4210
        %v5286 = vadd.f32 %v5285, %v4212
        %v5287 = vadd.f32 %v5286, %v4563
        %v5288 = vadd.f32 %v5287, %v4565
        %v5289 = vadd.f32 %v5288, %v4878
        %5290 = vadd.xlane.f32.xlu0 %v5289
        %v5291 = vpop.xlane.xlu0 %5290
        %v5292 = vadd.f32 %v3861, %v3863
        %v5293 = vadd.f32 %v5292, %v4214
        %v5294 = vadd.f32 %v5293, %v4216
        %v5295 = vadd.f32 %v5294, %v4567
        %v5296 = vadd.f32 %v5295, %v4569
        %v5297 = vadd.f32 %v5296, %v4881
        %5298 = vadd.xlane.f32.xlu0 %v5297
        %v5299 = vpop.xlane.xlu0 %5298
        %v5300 = vadd.f32 %v3867, %v3869
        %v5301 = vadd.f32 %v5300, %v4220
        %v5302 = vadd.f32 %v5301, %v4222
        %v5303 = vadd.f32 %v5302, %v4573
        %v5304 = vadd.f32 %v5303, %v4575
        %v5305 = vadd.f32 %v5304, %v4886
        %5306 = vadd.xlane.f32.xlu0 %v5305
        %v5307 = vpop.xlane.xlu0 %5306
        %v5308 = vadd.f32 %v3871, %v3873
        %v5309 = vadd.f32 %v5308, %v4224
        %v5310 = vadd.f32 %v5309, %v4226
        %v5311 = vadd.f32 %v5310, %v4577
        %v5312 = vadd.f32 %v5311, %v4579
        %v5313 = vadd.f32 %v5312, %v4889
        %5314 = vadd.xlane.f32.xlu0 %v5313
        %v5315 = vpop.xlane.xlu0 %5314
        %v5316 = vadd.f32 %v3877, %v3879
        %v5317 = vadd.f32 %v5316, %v4230
        %v5318 = vadd.f32 %v5317, %v4232
        %v5319 = vadd.f32 %v5318, %v4583
        %v5320 = vadd.f32 %v5319, %v4585
        %v5321 = vadd.f32 %v5320, %v4894
        %5322 = vadd.xlane.f32.xlu0 %v5321
        %v5323 = vpop.xlane.xlu0 %5322
        %v5324 = vadd.f32 %v3881, %v3883
        %v5325 = vadd.f32 %v5324, %v4234
        %v5326 = vadd.f32 %v5325, %v4236
        %v5327 = vadd.f32 %v5326, %v4587
        %v5328 = vadd.f32 %v5327, %v4589
        %v5329 = vadd.f32 %v5328, %v4897
        %5330 = vadd.xlane.f32.xlu0 %v5329
        %v5331 = vpop.xlane.xlu0 %5330
        %v5332 = vadd.f32 %v3887, %v3889
        %v5333 = vadd.f32 %v5332, %v4240
        %v5334 = vadd.f32 %v5333, %v4242
        %v5335 = vadd.f32 %v5334, %v4593
        %v5336 = vadd.f32 %v5335, %v4595
        %v5337 = vadd.f32 %v5336, %v4902
        %5338 = vadd.xlane.f32.xlu0 %v5337
        %v5339 = vpop.xlane.xlu0 %5338
        %v5340 = vadd.f32 %v3891, %v3893
        %v5341 = vadd.f32 %v5340, %v4244
        %v5342 = vadd.f32 %v5341, %v4246
        %v5343 = vadd.f32 %v5342, %v4597
        %v5344 = vadd.f32 %v5343, %v4599
        %v5345 = vadd.f32 %v5344, %v4905
        %5346 = vadd.xlane.f32.xlu0 %v5345
        %v5347 = vpop.xlane.xlu0 %5346
        %v5348 = vadd.f32 %v3897, %v3899
        %v5349 = vadd.f32 %v5348, %v4250
        %v5350 = vadd.f32 %v5349, %v4252
        %v5351 = vadd.f32 %v5350, %v4603
        %v5352 = vadd.f32 %v5351, %v4605
        %v5353 = vadd.f32 %v5352, %v4910
        %5354 = vadd.xlane.f32.xlu0 %v5353
        %v5355 = vpop.xlane.xlu0 %5354
        %v5356 = vadd.f32 %v3901, %v3903
        %v5357 = vadd.f32 %v5356, %v4254
        %v5358 = vadd.f32 %v5357, %v4256
        %v5359 = vadd.f32 %v5358, %v4607
        %v5360 = vadd.f32 %v5359, %v4609
        %v5361 = vadd.f32 %v5360, %v4913
        %5362 = vadd.xlane.f32.xlu0 %v5361
        %v5363 = vpop.xlane.xlu0 %5362
        %v5364 = vadd.f32 %v3907, %v3909
        %v5365 = vadd.f32 %v5364, %v4260
        %v5366 = vadd.f32 %v5365, %v4262
        %v5367 = vadd.f32 %v5366, %v4613
        %v5368 = vadd.f32 %v5367, %v4615
        %v5369 = vadd.f32 %v5368, %v4918
        %5370 = vadd.xlane.f32.xlu0 %v5369
        %v5371 = vpop.xlane.xlu0 %5370
        %v5372 = vadd.f32 %v3911, %v3913
        %v5373 = vadd.f32 %v5372, %v4264
        %v5374 = vadd.f32 %v5373, %v4266
        %v5375 = vadd.f32 %v5374, %v4617
        %v5376 = vadd.f32 %v5375, %v4619
        %v5377 = vadd.f32 %v5376, %v4921
        %5378 = vadd.xlane.f32.xlu0 %v5377
        %v5379 = vpop.xlane.xlu0 %5378
        %v5380 = vadd.f32 %v3917, %v3919
        %v5381 = vadd.f32 %v5380, %v4270
        %v5382 = vadd.f32 %v5381, %v4272
        %v5383 = vadd.f32 %v5382, %v4623
        %v5384 = vadd.f32 %v5383, %v4625
        %v5385 = vadd.f32 %v5384, %v4926
        %5386 = vadd.xlane.f32.xlu0 %v5385
        %v5387 = vpop.xlane.xlu0 %5386
        %v5388 = vadd.f32 %v3921, %v3923
        %v5389 = vadd.f32 %v5388, %v4274
        %v5390 = vadd.f32 %v5389, %v4276
        %v5391 = vadd.f32 %v5390, %v4627
        %v5392 = vadd.f32 %v5391, %v4629
        %v5393 = vadd.f32 %v5392, %v4929
        %5394 = vadd.xlane.f32.xlu0 %v5393
        %v5395 = vpop.xlane.xlu0 %5394
        %v5396 = vadd.f32 %v3927, %v3929
        %v5397 = vadd.f32 %v5396, %v4280
        %v5398 = vadd.f32 %v5397, %v4282
        %v5399 = vadd.f32 %v5398, %v4633
        %v5400 = vadd.f32 %v5399, %v4635
        %v5401 = vadd.f32 %v5400, %v4934
        %5402 = vadd.xlane.f32.xlu0 %v5401
        %v5403 = vpop.xlane.xlu0 %5402
        %v5404 = vadd.f32 %v3931, %v3933
        %v5405 = vadd.f32 %v5404, %v4284
        %v5406 = vadd.f32 %v5405, %v4286
        %v5407 = vadd.f32 %v5406, %v4637
        %v5408 = vadd.f32 %v5407, %v4639
        %v5409 = vadd.f32 %v5408, %v4937
        %5410 = vadd.xlane.f32.xlu0 %v5409
        %v5411 = vpop.xlane.xlu0 %5410
        %v5412 = vadd.f32 %v3937, %v3939
        %v5413 = vadd.f32 %v5412, %v4290
        %v5414 = vadd.f32 %v5413, %v4292
        %v5415 = vadd.f32 %v5414, %v4643
        %v5416 = vadd.f32 %v5415, %v4645
        %v5417 = vadd.f32 %v5416, %v4942
        %5418 = vadd.xlane.f32.xlu0 %v5417
        %v5419 = vpop.xlane.xlu0 %5418
        %v5420 = vadd.f32 %v3941, %v3943
        %v5421 = vadd.f32 %v5420, %v4294
        %v5422 = vadd.f32 %v5421, %v4296
        %v5423 = vadd.f32 %v5422, %v4647
        %v5424 = vadd.f32 %v5423, %v4649
        %v5425 = vadd.f32 %v5424, %v4945
        %5426 = vadd.xlane.f32.xlu0 %v5425
        %v5427 = vpop.xlane.xlu0 %5426
        %v5428 = vadd.f32 %v3947, %v3949
        %v5429 = vadd.f32 %v5428, %v4300
        %v5430 = vadd.f32 %v5429, %v4302
        %v5431 = vadd.f32 %v5430, %v4653
        %v5432 = vadd.f32 %v5431, %v4655
        %v5433 = vadd.f32 %v5432, %v4950
        %5434 = vadd.xlane.f32.xlu0 %v5433
        %v5435 = vpop.xlane.xlu0 %5434
        %v5436 = vadd.f32 %v3951, %v3953
        %v5437 = vadd.f32 %v5436, %v4304
        %v5438 = vadd.f32 %v5437, %v4306
        %v5439 = vadd.f32 %v5438, %v4657
        %v5440 = vadd.f32 %v5439, %v4659
        %v5441 = vadd.f32 %v5440, %v4953
        %5442 = vadd.xlane.f32.xlu0 %v5441
        %v5443 = vpop.xlane.xlu0 %5442
        %v5444 = vadd.f32 %v3957, %v3959
        %v5445 = vadd.f32 %v5444, %v4310
        %v5446 = vadd.f32 %v5445, %v4312
        %v5447 = vadd.f32 %v5446, %v4663
        %v5448 = vadd.f32 %v5447, %v4665
        %v5449 = vadd.f32 %v5448, %v4958
        %5450 = vadd.xlane.f32.xlu0 %v5449
        %v5451 = vpop.xlane.xlu0 %5450
        %v5452 = vadd.f32 %v3961, %v3963
        %v5453 = vadd.f32 %v5452, %v4314
        %v5454 = vadd.f32 %v5453, %v4316
        %v5455 = vadd.f32 %v5454, %v4667
        %v5456 = vadd.f32 %v5455, %v4669
        %v5457 = vadd.f32 %v5456, %v4961
        %5458 = vadd.xlane.f32.xlu0 %v5457
        %v5459 = vpop.xlane.xlu0 %5458
        %v5460 = vadd.f32 %v3967, %v3969
        %v5461 = vadd.f32 %v5460, %v4320
        %v5462 = vadd.f32 %v5461, %v4322
        %v5463 = vadd.f32 %v5462, %v4673
        %v5464 = vadd.f32 %v5463, %v4675
        %v5465 = vadd.f32 %v5464, %v4966
        %5466 = vadd.xlane.f32.xlu0 %v5465
        %v5467 = vpop.xlane.xlu0 %5466
        %v5468 = vadd.f32 %v3971, %v3973
        %v5469 = vadd.f32 %v5468, %v4324
        %v5470 = vadd.f32 %v5469, %v4326
        %v5471 = vadd.f32 %v5470, %v4677
        %v5472 = vadd.f32 %v5471, %v4679
        %v5473 = vadd.f32 %v5472, %v4969
        %5474 = vadd.xlane.f32.xlu0 %v5473
        %v5475 = vpop.xlane.xlu0 %5474
        %v5476 = vadd.f32 %v3977, %v3979
        %v5477 = vadd.f32 %v5476, %v4330
        %v5478 = vadd.f32 %v5477, %v4332
        %v5479 = vadd.f32 %v5478, %v4683
        %v5480 = vadd.f32 %v5479, %v4685
        %v5481 = vadd.f32 %v5480, %v4974
        %5482 = vadd.xlane.f32.xlu0 %v5481
        %v5483 = vpop.xlane.xlu0 %5482
        %v5484 = vadd.f32 %v3981, %v3983
        %v5485 = vadd.f32 %v5484, %v4334
        %v5486 = vadd.f32 %v5485, %v4336
        %v5487 = vadd.f32 %v5486, %v4687
        %v5488 = vadd.f32 %v5487, %v4689
        %v5489 = vadd.f32 %v5488, %v4977
        %5490 = vadd.xlane.f32.xlu0 %v5489
        %v5491 = vpop.xlane.xlu0 %5490
        %v5492 = vmul.f32 %v3667, %v3667
        %v5493 = vmul.f32 %v3669, %v3669
        %v5494 = vmul.f32 %v4020, %v4020
        %v5495 = vmul.f32 %v4022, %v4022
        %v5496 = vmul.f32 %v4373, %v4373
        %v5497 = vmul.f32 %v4375, %v4375
        %v5498 = vmul.f32 %v4726, %v4726
        %v5499 = vmul.f32 %v3671, %v3671
        %v5500 = vmul.f32 %v3673, %v3673
        %v5501 = vmul.f32 %v4024, %v4024
        %v5502 = vmul.f32 %v4026, %v4026
        %v5503 = vmul.f32 %v4377, %v4377
        %v5504 = vmul.f32 %v4379, %v4379
        %v5505 = vmul.f32 %v4729, %v4729
        %v5506 = vmul.f32 %v3677, %v3677
        %v5507 = vmul.f32 %v3679, %v3679
        %v5508 = vmul.f32 %v4030, %v4030
        %v5509 = vmul.f32 %v4032, %v4032
        %v5510 = vmul.f32 %v4383, %v4383
        %v5511 = vmul.f32 %v4385, %v4385
        %v5512 = vmul.f32 %v4734, %v4734
        %v5513 = vmul.f32 %v3681, %v3681
        %v5514 = vmul.f32 %v3683, %v3683
        %v5515 = vmul.f32 %v4034, %v4034
        %v5516 = vmul.f32 %v4036, %v4036
        %v5517 = vmul.f32 %v4387, %v4387
        %v5518 = vmul.f32 %v4389, %v4389
        %v5519 = vmul.f32 %v4737, %v4737
        %v5520 = vmul.f32 %v3687, %v3687
        %v5521 = vmul.f32 %v3689, %v3689
        %v5522 = vmul.f32 %v4040, %v4040
        %v5523 = vmul.f32 %v4042, %v4042
        %v5524 = vmul.f32 %v4393, %v4393
        %v5525 = vmul.f32 %v4395, %v4395
        %v5526 = vmul.f32 %v4742, %v4742
        %v5527 = vmul.f32 %v3691, %v3691
        %v5528 = vmul.f32 %v3693, %v3693
        %v5529 = vmul.f32 %v4044, %v4044
        %v5530 = vmul.f32 %v4046, %v4046
        %v5531 = vmul.f32 %v4397, %v4397
        %v5532 = vmul.f32 %v4399, %v4399
        %v5533 = vmul.f32 %v4745, %v4745
        %v5534 = vmul.f32 %v3697, %v3697
        %v5535 = vmul.f32 %v3699, %v3699
        %v5536 = vmul.f32 %v4050, %v4050
        %v5537 = vmul.f32 %v4052, %v4052
        %v5538 = vmul.f32 %v4403, %v4403
        %v5539 = vmul.f32 %v4405, %v4405
        %v5540 = vmul.f32 %v4750, %v4750
        %v5541 = vmul.f32 %v3701, %v3701
        %v5542 = vmul.f32 %v3703, %v3703
        %v5543 = vmul.f32 %v4054, %v4054
        %v5544 = vmul.f32 %v4056, %v4056
        %v5545 = vmul.f32 %v4407, %v4407
        %v5546 = vmul.f32 %v4409, %v4409
        %v5547 = vmul.f32 %v4753, %v4753
        %v5548 = vmul.f32 %v3707, %v3707
        %v5549 = vmul.f32 %v3709, %v3709
        %v5550 = vmul.f32 %v4060, %v4060
        %v5551 = vmul.f32 %v4062, %v4062
        %v5552 = vmul.f32 %v4413, %v4413
        %v5553 = vmul.f32 %v4415, %v4415
        %v5554 = vmul.f32 %v4758, %v4758
        %v5555 = vmul.f32 %v3711, %v3711
        %v5556 = vmul.f32 %v3713, %v3713
        %v5557 = vmul.f32 %v4064, %v4064
        %v5558 = vmul.f32 %v4066, %v4066
        %v5559 = vmul.f32 %v4417, %v4417
        %v5560 = vmul.f32 %v4419, %v4419
        %v5561 = vmul.f32 %v4761, %v4761
        %v5562 = vmul.f32 %v3717, %v3717
        %v5563 = vmul.f32 %v3719, %v3719
        %v5564 = vmul.f32 %v4070, %v4070
        %v5565 = vmul.f32 %v4072, %v4072
        %v5566 = vmul.f32 %v4423, %v4423
        %v5567 = vmul.f32 %v4425, %v4425
        %v5568 = vmul.f32 %v4766, %v4766
        %v5569 = vmul.f32 %v3721, %v3721
        %v5570 = vmul.f32 %v3723, %v3723
        %v5571 = vmul.f32 %v4074, %v4074
        %v5572 = vmul.f32 %v4076, %v4076
        %v5573 = vmul.f32 %v4427, %v4427
        %v5574 = vmul.f32 %v4429, %v4429
        %v5575 = vmul.f32 %v4769, %v4769
        %v5576 = vmul.f32 %v3727, %v3727
        %v5577 = vmul.f32 %v3729, %v3729
        %v5578 = vmul.f32 %v4080, %v4080
        %v5579 = vmul.f32 %v4082, %v4082
        %v5580 = vmul.f32 %v4433, %v4433
        %v5581 = vmul.f32 %v4435, %v4435
        %v5582 = vmul.f32 %v4774, %v4774
        %v5583 = vmul.f32 %v3731, %v3731
        %v5584 = vmul.f32 %v3733, %v3733
        %v5585 = vmul.f32 %v4084, %v4084
        %v5586 = vmul.f32 %v4086, %v4086
        %v5587 = vmul.f32 %v4437, %v4437
        %v5588 = vmul.f32 %v4439, %v4439
        %v5589 = vmul.f32 %v4777, %v4777
        %v5590 = vmul.f32 %v3737, %v3737
        %v5591 = vmul.f32 %v3739, %v3739
        %v5592 = vmul.f32 %v4090, %v4090
        %v5593 = vmul.f32 %v4092, %v4092
        %v5594 = vmul.f32 %v4443, %v4443
        %v5595 = vmul.f32 %v4445, %v4445
        %v5596 = vmul.f32 %v4782, %v4782
        %v5597 = vmul.f32 %v3741, %v3741
        %v5598 = vmul.f32 %v3743, %v3743
        %v5599 = vmul.f32 %v4094, %v4094
        %v5600 = vmul.f32 %v4096, %v4096
        %v5601 = vmul.f32 %v4447, %v4447
        %v5602 = vmul.f32 %v4449, %v4449
        %v5603 = vmul.f32 %v4785, %v4785
        %v5604 = vmul.f32 %v3747, %v3747
        %v5605 = vmul.f32 %v3749, %v3749
        %v5606 = vmul.f32 %v4100, %v4100
        %v5607 = vmul.f32 %v4102, %v4102
        %v5608 = vmul.f32 %v4453, %v4453
        %v5609 = vmul.f32 %v4455, %v4455
        %v5610 = vmul.f32 %v4790, %v4790
        %v5611 = vmul.f32 %v3751, %v3751
        %v5612 = vmul.f32 %v3753, %v3753
        %v5613 = vmul.f32 %v4104, %v4104
        %v5614 = vmul.f32 %v4106, %v4106
        %v5615 = vmul.f32 %v4457, %v4457
        %v5616 = vmul.f32 %v4459, %v4459
        %v5617 = vmul.f32 %v4793, %v4793
        %v5618 = vmul.f32 %v3757, %v3757
        %v5619 = vmul.f32 %v3759, %v3759
        %v5620 = vmul.f32 %v4110, %v4110
        %v5621 = vmul.f32 %v4112, %v4112
        %v5622 = vmul.f32 %v4463, %v4463
        %v5623 = vmul.f32 %v4465, %v4465
        %v5624 = vmul.f32 %v4798, %v4798
        %v5625 = vmul.f32 %v3761, %v3761
        %v5626 = vmul.f32 %v3763, %v3763
        %v5627 = vmul.f32 %v4114, %v4114
        %v5628 = vmul.f32 %v4116, %v4116
        %v5629 = vmul.f32 %v4467, %v4467
        %v5630 = vmul.f32 %v4469, %v4469
        %v5631 = vmul.f32 %v4801, %v4801
        %v5632 = vmul.f32 %v3767, %v3767
        %v5633 = vmul.f32 %v3769, %v3769
        %v5634 = vmul.f32 %v4120, %v4120
        %v5635 = vmul.f32 %v4122, %v4122
        %v5636 = vmul.f32 %v4473, %v4473
        %v5637 = vmul.f32 %v4475, %v4475
        %v5638 = vmul.f32 %v4806, %v4806
        %v5639 = vmul.f32 %v3771, %v3771
        %v5640 = vmul.f32 %v3773, %v3773
        %v5641 = vmul.f32 %v4124, %v4124
        %v5642 = vmul.f32 %v4126, %v4126
        %v5643 = vmul.f32 %v4477, %v4477
        %v5644 = vmul.f32 %v4479, %v4479
        %v5645 = vmul.f32 %v4809, %v4809
        %v5646 = vmul.f32 %v3777, %v3777
        %v5647 = vmul.f32 %v3779, %v3779
        %v5648 = vmul.f32 %v4130, %v4130
        %v5649 = vmul.f32 %v4132, %v4132
        %v5650 = vmul.f32 %v4483, %v4483
        %v5651 = vmul.f32 %v4485, %v4485
        %v5652 = vmul.f32 %v4814, %v4814
        %v5653 = vmul.f32 %v3781, %v3781
        %v5654 = vmul.f32 %v3783, %v3783
        %v5655 = vmul.f32 %v4134, %v4134
        %v5656 = vmul.f32 %v4136, %v4136
        %v5657 = vmul.f32 %v4487, %v4487
        %v5658 = vmul.f32 %v4489, %v4489
        %v5659 = vmul.f32 %v4817, %v4817
        %v5660 = vmul.f32 %v3787, %v3787
        %v5661 = vmul.f32 %v3789, %v3789
        %v5662 = vmul.f32 %v4140, %v4140
        %v5663 = vmul.f32 %v4142, %v4142
        %v5664 = vmul.f32 %v4493, %v4493
        %v5665 = vmul.f32 %v4495, %v4495
        %v5666 = vmul.f32 %v4822, %v4822
        %v5667 = vmul.f32 %v3791, %v3791
        %v5668 = vmul.f32 %v3793, %v3793
        %v5669 = vmul.f32 %v4144, %v4144
        %v5670 = vmul.f32 %v4146, %v4146
        %v5671 = vmul.f32 %v4497, %v4497
        %v5672 = vmul.f32 %v4499, %v4499
        %v5673 = vmul.f32 %v4825, %v4825
        %v5674 = vmul.f32 %v3797, %v3797
        %v5675 = vmul.f32 %v3799, %v3799
        %v5676 = vmul.f32 %v4150, %v4150
        %v5677 = vmul.f32 %v4152, %v4152
        %v5678 = vmul.f32 %v4503, %v4503
        %v5679 = vmul.f32 %v4505, %v4505
        %v5680 = vmul.f32 %v4830, %v4830
        %v5681 = vmul.f32 %v3801, %v3801
        %v5682 = vmul.f32 %v3803, %v3803
        %v5683 = vmul.f32 %v4154, %v4154
        %v5684 = vmul.f32 %v4156, %v4156
        %v5685 = vmul.f32 %v4507, %v4507
        %v5686 = vmul.f32 %v4509, %v4509
        %v5687 = vmul.f32 %v4833, %v4833
        %v5688 = vmul.f32 %v3807, %v3807
        %v5689 = vmul.f32 %v3809, %v3809
        %v5690 = vmul.f32 %v4160, %v4160
        %v5691 = vmul.f32 %v4162, %v4162
        %v5692 = vmul.f32 %v4513, %v4513
        %v5693 = vmul.f32 %v4515, %v4515
        %v5694 = vmul.f32 %v4838, %v4838
        %v5695 = vmul.f32 %v3811, %v3811
        %v5696 = vmul.f32 %v3813, %v3813
        %v5697 = vmul.f32 %v4164, %v4164
        %v5698 = vmul.f32 %v4166, %v4166
        %v5699 = vmul.f32 %v4517, %v4517
        %v5700 = vmul.f32 %v4519, %v4519
        %v5701 = vmul.f32 %v4841, %v4841
        %v5702 = vmul.f32 %v3817, %v3817
        %v5703 = vmul.f32 %v3819, %v3819
        %v5704 = vmul.f32 %v4170, %v4170
        %v5705 = vmul.f32 %v4172, %v4172
        %v5706 = vmul.f32 %v4523, %v4523
        %v5707 = vmul.f32 %v4525, %v4525
        %v5708 = vmul.f32 %v4846, %v4846
        %v5709 = vmul.f32 %v3821, %v3821
        %v5710 = vmul.f32 %v3823, %v3823
        %v5711 = vmul.f32 %v4174, %v4174
        %v5712 = vmul.f32 %v4176, %v4176
        %v5713 = vmul.f32 %v4527, %v4527
        %v5714 = vmul.f32 %v4529, %v4529
        %v5715 = vmul.f32 %v4849, %v4849
        %v5716 = vmul.f32 %v3827, %v3827
        %v5717 = vmul.f32 %v3829, %v3829
        %v5718 = vmul.f32 %v4180, %v4180
        %v5719 = vmul.f32 %v4182, %v4182
        %v5720 = vmul.f32 %v4533, %v4533
        %v5721 = vmul.f32 %v4535, %v4535
        %v5722 = vmul.f32 %v4854, %v4854
        %v5723 = vmul.f32 %v3831, %v3831
        %v5724 = vmul.f32 %v3833, %v3833
        %v5725 = vmul.f32 %v4184, %v4184
        %v5726 = vmul.f32 %v4186, %v4186
        %v5727 = vmul.f32 %v4537, %v4537
        %v5728 = vmul.f32 %v4539, %v4539
        %v5729 = vmul.f32 %v4857, %v4857
        %v5730 = vmul.f32 %v3837, %v3837
        %v5731 = vmul.f32 %v3839, %v3839
        %v5732 = vmul.f32 %v4190, %v4190
        %v5733 = vmul.f32 %v4192, %v4192
        %v5734 = vmul.f32 %v4543, %v4543
        %v5735 = vmul.f32 %v4545, %v4545
        %v5736 = vmul.f32 %v4862, %v4862
        %v5737 = vmul.f32 %v3841, %v3841
        %v5738 = vmul.f32 %v3843, %v3843
        %v5739 = vmul.f32 %v4194, %v4194
        %v5740 = vmul.f32 %v4196, %v4196
        %v5741 = vmul.f32 %v4547, %v4547
        %v5742 = vmul.f32 %v4549, %v4549
        %v5743 = vmul.f32 %v4865, %v4865
        %v5744 = vmul.f32 %v3847, %v3847
        %v5745 = vmul.f32 %v3849, %v3849
        %v5746 = vmul.f32 %v4200, %v4200
        %v5747 = vmul.f32 %v4202, %v4202
        %v5748 = vmul.f32 %v4553, %v4553
        %v5749 = vmul.f32 %v4555, %v4555
        %v5750 = vmul.f32 %v4870, %v4870
        %v5751 = vmul.f32 %v3851, %v3851
        %v5752 = vmul.f32 %v3853, %v3853
        %v5753 = vmul.f32 %v4204, %v4204
        %v5754 = vmul.f32 %v4206, %v4206
        %v5755 = vmul.f32 %v4557, %v4557
        %v5756 = vmul.f32 %v4559, %v4559
        %v5757 = vmul.f32 %v4873, %v4873
        %v5758 = vmul.f32 %v3857, %v3857
        %v5759 = vmul.f32 %v3859, %v3859
        %v5760 = vmul.f32 %v4210, %v4210
        %v5761 = vmul.f32 %v4212, %v4212
        %v5762 = vmul.f32 %v4563, %v4563
        %v5763 = vmul.f32 %v4565, %v4565
        %v5764 = vmul.f32 %v4878, %v4878
        %v5765 = vmul.f32 %v3861, %v3861
        %v5766 = vmul.f32 %v3863, %v3863
        %v5767 = vmul.f32 %v4214, %v4214
        %v5768 = vmul.f32 %v4216, %v4216
        %v5769 = vmul.f32 %v4567, %v4567
        %v5770 = vmul.f32 %v4569, %v4569
        %v5771 = vmul.f32 %v4881, %v4881
        %v5772 = vmul.f32 %v3867, %v3867
        %v5773 = vmul.f32 %v3869, %v3869
        %v5774 = vmul.f32 %v4220, %v4220
        %v5775 = vmul.f32 %v4222, %v4222
        %v5776 = vmul.f32 %v4573, %v4573
        %v5777 = vmul.f32 %v4575, %v4575
        %v5778 = vmul.f32 %v4886, %v4886
        %v5779 = vmul.f32 %v3871, %v3871
        %v5780 = vmul.f32 %v3873, %v3873
        %v5781 = vmul.f32 %v4224, %v4224
        %v5782 = vmul.f32 %v4226, %v4226
        %v5783 = vmul.f32 %v4577, %v4577
        %v5784 = vmul.f32 %v4579, %v4579
        %v5785 = vmul.f32 %v4889, %v4889
        %v5786 = vmul.f32 %v3877, %v3877
        %v5787 = vmul.f32 %v3879, %v3879
        %v5788 = vmul.f32 %v4230, %v4230
        %v5789 = vmul.f32 %v4232, %v4232
        %v5790 = vmul.f32 %v4583, %v4583
        %v5791 = vmul.f32 %v4585, %v4585
        %v5792 = vmul.f32 %v4894, %v4894
        %v5793 = vmul.f32 %v3881, %v3881
        %v5794 = vmul.f32 %v3883, %v3883
        %v5795 = vmul.f32 %v4234, %v4234
        %v5796 = vmul.f32 %v4236, %v4236
        %v5797 = vmul.f32 %v4587, %v4587
        %v5798 = vmul.f32 %v4589, %v4589
        %v5799 = vmul.f32 %v4897, %v4897
        %v5800 = vmul.f32 %v3887, %v3887
        %v5801 = vmul.f32 %v3889, %v3889
        %v5802 = vmul.f32 %v4240, %v4240
        %v5803 = vmul.f32 %v4242, %v4242
        %v5804 = vmul.f32 %v4593, %v4593
        %v5805 = vmul.f32 %v4595, %v4595
        %v5806 = vmul.f32 %v4902, %v4902
        %v5807 = vmul.f32 %v3891, %v3891
        %v5808 = vmul.f32 %v3893, %v3893
        %v5809 = vmul.f32 %v4244, %v4244
        %v5810 = vmul.f32 %v4246, %v4246
        %v5811 = vmul.f32 %v4597, %v4597
        %v5812 = vmul.f32 %v4599, %v4599
        %v5813 = vmul.f32 %v4905, %v4905
        %v5814 = vmul.f32 %v3897, %v3897
        %v5815 = vmul.f32 %v3899, %v3899
        %v5816 = vmul.f32 %v4250, %v4250
        %v5817 = vmul.f32 %v4252, %v4252
        %v5818 = vmul.f32 %v4603, %v4603
        %v5819 = vmul.f32 %v4605, %v4605
        %v5820 = vmul.f32 %v4910, %v4910
        %v5821 = vmul.f32 %v3901, %v3901
        %v5822 = vmul.f32 %v3903, %v3903
        %v5823 = vmul.f32 %v4254, %v4254
        %v5824 = vmul.f32 %v4256, %v4256
        %v5825 = vmul.f32 %v4607, %v4607
        %v5826 = vmul.f32 %v4609, %v4609
        %v5827 = vmul.f32 %v4913, %v4913
        %v5828 = vmul.f32 %v3907, %v3907
        %v5829 = vmul.f32 %v3909, %v3909
        %v5830 = vmul.f32 %v4260, %v4260
        %v5831 = vmul.f32 %v4262, %v4262
        %v5832 = vmul.f32 %v4613, %v4613
        %v5833 = vmul.f32 %v4615, %v4615
        %v5834 = vmul.f32 %v4918, %v4918
        %v5835 = vmul.f32 %v3911, %v3911
        %v5836 = vmul.f32 %v3913, %v3913
        %v5837 = vmul.f32 %v4264, %v4264
        %v5838 = vmul.f32 %v4266, %v4266
        %v5839 = vmul.f32 %v4617, %v4617
        %v5840 = vmul.f32 %v4619, %v4619
        %v5841 = vmul.f32 %v4921, %v4921
        %v5842 = vmul.f32 %v3917, %v3917
        %v5843 = vmul.f32 %v3919, %v3919
        %v5844 = vmul.f32 %v4270, %v4270
        %v5845 = vmul.f32 %v4272, %v4272
        %v5846 = vmul.f32 %v4623, %v4623
        %v5847 = vmul.f32 %v4625, %v4625
        %v5848 = vmul.f32 %v4926, %v4926
        %v5849 = vmul.f32 %v3921, %v3921
        %v5850 = vmul.f32 %v3923, %v3923
        %v5851 = vmul.f32 %v4274, %v4274
        %v5852 = vmul.f32 %v4276, %v4276
        %v5853 = vmul.f32 %v4627, %v4627
        %v5854 = vmul.f32 %v4629, %v4629
        %v5855 = vmul.f32 %v4929, %v4929
        %v5856 = vmul.f32 %v3927, %v3927
        %v5857 = vmul.f32 %v3929, %v3929
        %v5858 = vmul.f32 %v4280, %v4280
        %v5859 = vmul.f32 %v4282, %v4282
        %v5860 = vmul.f32 %v4633, %v4633
        %v5861 = vmul.f32 %v4635, %v4635
        %v5862 = vmul.f32 %v4934, %v4934
        %v5863 = vmul.f32 %v3931, %v3931
        %v5864 = vmul.f32 %v3933, %v3933
        %v5865 = vmul.f32 %v4284, %v4284
        %v5866 = vmul.f32 %v4286, %v4286
        %v5867 = vmul.f32 %v4637, %v4637
        %v5868 = vmul.f32 %v4639, %v4639
        %v5869 = vmul.f32 %v4937, %v4937
        %v5870 = vmul.f32 %v3937, %v3937
        %v5871 = vmul.f32 %v3939, %v3939
        %v5872 = vmul.f32 %v4290, %v4290
        %v5873 = vmul.f32 %v4292, %v4292
        %v5874 = vmul.f32 %v4643, %v4643
        %v5875 = vmul.f32 %v4645, %v4645
        %v5876 = vmul.f32 %v4942, %v4942
        %v5877 = vmul.f32 %v3941, %v3941
        %v5878 = vmul.f32 %v3943, %v3943
        %v5879 = vmul.f32 %v4294, %v4294
        %v5880 = vmul.f32 %v4296, %v4296
        %v5881 = vmul.f32 %v4647, %v4647
        %v5882 = vmul.f32 %v4649, %v4649
        %v5883 = vmul.f32 %v4945, %v4945
        %v5884 = vmul.f32 %v3947, %v3947
        %v5885 = vmul.f32 %v3949, %v3949
        %v5886 = vmul.f32 %v4300, %v4300
        %v5887 = vmul.f32 %v4302, %v4302
        %v5888 = vmul.f32 %v4653, %v4653
        %v5889 = vmul.f32 %v4655, %v4655
        %v5890 = vmul.f32 %v4950, %v4950
        %v5891 = vmul.f32 %v3951, %v3951
        %v5892 = vmul.f32 %v3953, %v3953
        %v5893 = vmul.f32 %v4304, %v4304
        %v5894 = vmul.f32 %v4306, %v4306
        %v5895 = vmul.f32 %v4657, %v4657
        %v5896 = vmul.f32 %v4659, %v4659
        %v5897 = vmul.f32 %v4953, %v4953
        %v5898 = vmul.f32 %v3957, %v3957
        %v5899 = vmul.f32 %v3959, %v3959
        %v5900 = vmul.f32 %v4310, %v4310
        %v5901 = vmul.f32 %v4312, %v4312
        %v5902 = vmul.f32 %v4663, %v4663
        %v5903 = vmul.f32 %v4665, %v4665
        %v5904 = vmul.f32 %v4958, %v4958
        %v5905 = vmul.f32 %v3961, %v3961
        %v5906 = vmul.f32 %v3963, %v3963
        %v5907 = vmul.f32 %v4314, %v4314
        %v5908 = vmul.f32 %v4316, %v4316
        %v5909 = vmul.f32 %v4667, %v4667
        %v5910 = vmul.f32 %v4669, %v4669
        %v5911 = vmul.f32 %v4961, %v4961
        %v5912 = vmul.f32 %v3967, %v3967
        %v5913 = vmul.f32 %v3969, %v3969
        %v5914 = vmul.f32 %v4320, %v4320
        %v5915 = vmul.f32 %v4322, %v4322
        %v5916 = vmul.f32 %v4673, %v4673
        %v5917 = vmul.f32 %v4675, %v4675
        %v5918 = vmul.f32 %v4966, %v4966
        %v5919 = vmul.f32 %v3971, %v3971
        %v5920 = vmul.f32 %v3973, %v3973
        %v5921 = vmul.f32 %v4324, %v4324
        %v5922 = vmul.f32 %v4326, %v4326
        %v5923 = vmul.f32 %v4677, %v4677
        %v5924 = vmul.f32 %v4679, %v4679
        %v5925 = vmul.f32 %v4969, %v4969
        %v5926 = vmul.f32 %v3977, %v3977
        %v5927 = vmul.f32 %v3979, %v3979
        %v5928 = vmul.f32 %v4330, %v4330
        %v5929 = vmul.f32 %v4332, %v4332
        %v5930 = vmul.f32 %v4683, %v4683
        %v5931 = vmul.f32 %v4685, %v4685
        %v5932 = vmul.f32 %v4974, %v4974
        %v5933 = vmul.f32 %v3981, %v3981
        %v5934 = vmul.f32 %v3983, %v3983
        %v5935 = vmul.f32 %v4334, %v4334
        %v5936 = vmul.f32 %v4336, %v4336
        %v5937 = vmul.f32 %v4687, %v4687
        %v5938 = vmul.f32 %v4689, %v4689
        %v5939 = vmul.f32 %v4977, %v4977
        %v5940 = vadd.f32 %v5492, %v5493
        %v5941 = vadd.f32 %v5940, %v5494
        %v5942 = vadd.f32 %v5941, %v5495
        %v5943 = vadd.f32 %v5942, %v5496
        %v5944 = vadd.f32 %v5943, %v5497
        %v5945 = vadd.f32 %v5944, %v5498
        %5946 = vadd.xlane.f32.xlu0 %v5945
        %v5947 = vpop.xlane.xlu0 %5946
        %v5948 = vadd.f32 %v5499, %v5500
        %v5949 = vadd.f32 %v5948, %v5501
        %v5950 = vadd.f32 %v5949, %v5502
        %v5951 = vadd.f32 %v5950, %v5503
        %v5952 = vadd.f32 %v5951, %v5504
        %v5953 = vadd.f32 %v5952, %v5505
        %5954 = vadd.xlane.f32.xlu0 %v5953
        %v5955 = vpop.xlane.xlu0 %5954
        %v5956 = vadd.f32 %v5506, %v5507
        %v5957 = vadd.f32 %v5956, %v5508
        %v5958 = vadd.f32 %v5957, %v5509
        %v5959 = vadd.f32 %v5958, %v5510
        %v5960 = vadd.f32 %v5959, %v5511
        %v5961 = vadd.f32 %v5960, %v5512
        %5962 = vadd.xlane.f32.xlu0 %v5961
        %v5963 = vpop.xlane.xlu0 %5962
        %v5964 = vadd.f32 %v5513, %v5514
        %v5965 = vadd.f32 %v5964, %v5515
        %v5966 = vadd.f32 %v5965, %v5516
        %v5967 = vadd.f32 %v5966, %v5517
        %v5968 = vadd.f32 %v5967, %v5518
        %v5969 = vadd.f32 %v5968, %v5519
        %5970 = vadd.xlane.f32.xlu0 %v5969
        %v5971 = vpop.xlane.xlu0 %5970
        %v5972 = vadd.f32 %v5520, %v5521
        %v5973 = vadd.f32 %v5972, %v5522
        %v5974 = vadd.f32 %v5973, %v5523
        %v5975 = vadd.f32 %v5974, %v5524
        %v5976 = vadd.f32 %v5975, %v5525
        %v5977 = vadd.f32 %v5976, %v5526
        %5978 = vadd.xlane.f32.xlu0 %v5977
        %v5979 = vpop.xlane.xlu0 %5978
        %v5980 = vadd.f32 %v5527, %v5528
        %v5981 = vadd.f32 %v5980, %v5529
        %v5982 = vadd.f32 %v5981, %v5530
        %v5983 = vadd.f32 %v5982, %v5531
        %v5984 = vadd.f32 %v5983, %v5532
        %v5985 = vadd.f32 %v5984, %v5533
        %5986 = vadd.xlane.f32.xlu0 %v5985
        %v5987 = vpop.xlane.xlu0 %5986
        %v5988 = vadd.f32 %v5534, %v5535
        %v5989 = vadd.f32 %v5988, %v5536
        %v5990 = vadd.f32 %v5989, %v5537
        %v5991 = vadd.f32 %v5990, %v5538
        %v5992 = vadd.f32 %v5991, %v5539
        %v5993 = vadd.f32 %v5992, %v5540
        %5994 = vadd.xlane.f32.xlu0 %v5993
        %v5995 = vpop.xlane.xlu0 %5994
        %v5996 = vadd.f32 %v5541, %v5542
        %v5997 = vadd.f32 %v5996, %v5543
        %v5998 = vadd.f32 %v5997, %v5544
        %v5999 = vadd.f32 %v5998, %v5545
        %v6000 = vadd.f32 %v5999, %v5546
        %v6001 = vadd.f32 %v6000, %v5547
        %6002 = vadd.xlane.f32.xlu0 %v6001
        %v6003 = vpop.xlane.xlu0 %6002
        %v6004 = vadd.f32 %v5548, %v5549
        %v6005 = vadd.f32 %v6004, %v5550
        %v6006 = vadd.f32 %v6005, %v5551
        %v6007 = vadd.f32 %v6006, %v5552
        %v6008 = vadd.f32 %v6007, %v5553
        %v6009 = vadd.f32 %v6008, %v5554
        %6010 = vadd.xlane.f32.xlu0 %v6009
        %v6011 = vpop.xlane.xlu0 %6010
        %v6012 = vadd.f32 %v5555, %v5556
        %v6013 = vadd.f32 %v6012, %v5557
        %v6014 = vadd.f32 %v6013, %v5558
        %v6015 = vadd.f32 %v6014, %v5559
        %v6016 = vadd.f32 %v6015, %v5560
        %v6017 = vadd.f32 %v6016, %v5561
        %6018 = vadd.xlane.f32.xlu0 %v6017
        %v6019 = vpop.xlane.xlu0 %6018
        %v6020 = vadd.f32 %v5562, %v5563
        %v6021 = vadd.f32 %v6020, %v5564
        %v6022 = vadd.f32 %v6021, %v5565
        %v6023 = vadd.f32 %v6022, %v5566
        %v6024 = vadd.f32 %v6023, %v5567
        %v6025 = vadd.f32 %v6024, %v5568
        %6026 = vadd.xlane.f32.xlu0 %v6025
        %v6027 = vpop.xlane.xlu0 %6026
        %v6028 = vadd.f32 %v5569, %v5570
        %v6029 = vadd.f32 %v6028, %v5571
        %v6030 = vadd.f32 %v6029, %v5572
        %v6031 = vadd.f32 %v6030, %v5573
        %v6032 = vadd.f32 %v6031, %v5574
        %v6033 = vadd.f32 %v6032, %v5575
        %6034 = vadd.xlane.f32.xlu0 %v6033
        %v6035 = vpop.xlane.xlu0 %6034
        %v6036 = vadd.f32 %v5576, %v5577
        %v6037 = vadd.f32 %v6036, %v5578
        %v6038 = vadd.f32 %v6037, %v5579
        %v6039 = vadd.f32 %v6038, %v5580
        %v6040 = vadd.f32 %v6039, %v5581
        %v6041 = vadd.f32 %v6040, %v5582
        %6042 = vadd.xlane.f32.xlu0 %v6041
        %v6043 = vpop.xlane.xlu0 %6042
        %v6044 = vadd.f32 %v5583, %v5584
        %v6045 = vadd.f32 %v6044, %v5585
        %v6046 = vadd.f32 %v6045, %v5586
        %v6047 = vadd.f32 %v6046, %v5587
        %v6048 = vadd.f32 %v6047, %v5588
        %v6049 = vadd.f32 %v6048, %v5589
        %6050 = vadd.xlane.f32.xlu0 %v6049
        %v6051 = vpop.xlane.xlu0 %6050
        %v6052 = vadd.f32 %v5590, %v5591
        %v6053 = vadd.f32 %v6052, %v5592
        %v6054 = vadd.f32 %v6053, %v5593
        %v6055 = vadd.f32 %v6054, %v5594
        %v6056 = vadd.f32 %v6055, %v5595
        %v6057 = vadd.f32 %v6056, %v5596
        %6058 = vadd.xlane.f32.xlu0 %v6057
        %v6059 = vpop.xlane.xlu0 %6058
        %v6060 = vadd.f32 %v5597, %v5598
        %v6061 = vadd.f32 %v6060, %v5599
        %v6062 = vadd.f32 %v6061, %v5600
        %v6063 = vadd.f32 %v6062, %v5601
        %v6064 = vadd.f32 %v6063, %v5602
        %v6065 = vadd.f32 %v6064, %v5603
        %6066 = vadd.xlane.f32.xlu0 %v6065
        %v6067 = vpop.xlane.xlu0 %6066
        %v6068 = vadd.f32 %v5604, %v5605
        %v6069 = vadd.f32 %v6068, %v5606
        %v6070 = vadd.f32 %v6069, %v5607
        %v6071 = vadd.f32 %v6070, %v5608
        %v6072 = vadd.f32 %v6071, %v5609
        %v6073 = vadd.f32 %v6072, %v5610
        %6074 = vadd.xlane.f32.xlu0 %v6073
        %v6075 = vpop.xlane.xlu0 %6074
        %v6076 = vadd.f32 %v5611, %v5612
        %v6077 = vadd.f32 %v6076, %v5613
        %v6078 = vadd.f32 %v6077, %v5614
        %v6079 = vadd.f32 %v6078, %v5615
        %v6080 = vadd.f32 %v6079, %v5616
        %v6081 = vadd.f32 %v6080, %v5617
        %6082 = vadd.xlane.f32.xlu0 %v6081
        %v6083 = vpop.xlane.xlu0 %6082
        %v6084 = vadd.f32 %v5618, %v5619
        %v6085 = vadd.f32 %v6084, %v5620
        %v6086 = vadd.f32 %v6085, %v5621
        %v6087 = vadd.f32 %v6086, %v5622
        %v6088 = vadd.f32 %v6087, %v5623
        %v6089 = vadd.f32 %v6088, %v5624
        %6090 = vadd.xlane.f32.xlu0 %v6089
        %v6091 = vpop.xlane.xlu0 %6090
        %v6092 = vadd.f32 %v5625, %v5626
        %v6093 = vadd.f32 %v6092, %v5627
        %v6094 = vadd.f32 %v6093, %v5628
        %v6095 = vadd.f32 %v6094, %v5629
        %v6096 = vadd.f32 %v6095, %v5630
        %v6097 = vadd.f32 %v6096, %v5631
        %6098 = vadd.xlane.f32.xlu0 %v6097
        %v6099 = vpop.xlane.xlu0 %6098
        %v6100 = vadd.f32 %v5632, %v5633
        %v6101 = vadd.f32 %v6100, %v5634
        %v6102 = vadd.f32 %v6101, %v5635
        %v6103 = vadd.f32 %v6102, %v5636
        %v6104 = vadd.f32 %v6103, %v5637
        %v6105 = vadd.f32 %v6104, %v5638
        %6106 = vadd.xlane.f32.xlu0 %v6105
        %v6107 = vpop.xlane.xlu0 %6106
        %v6108 = vadd.f32 %v5639, %v5640
        %v6109 = vadd.f32 %v6108, %v5641
        %v6110 = vadd.f32 %v6109, %v5642
        %v6111 = vadd.f32 %v6110, %v5643
        %v6112 = vadd.f32 %v6111, %v5644
        %v6113 = vadd.f32 %v6112, %v5645
        %6114 = vadd.xlane.f32.xlu0 %v6113
        %v6115 = vpop.xlane.xlu0 %6114
        %v6116 = vadd.f32 %v5646, %v5647
        %v6117 = vadd.f32 %v6116, %v5648
        %v6118 = vadd.f32 %v6117, %v5649
        %v6119 = vadd.f32 %v6118, %v5650
        %v6120 = vadd.f32 %v6119, %v5651
        %v6121 = vadd.f32 %v6120, %v5652
        %6122 = vadd.xlane.f32.xlu0 %v6121
        %v6123 = vpop.xlane.xlu0 %6122
        %v6124 = vadd.f32 %v5653, %v5654
        %v6125 = vadd.f32 %v6124, %v5655
        %v6126 = vadd.f32 %v6125, %v5656
        %v6127 = vadd.f32 %v6126, %v5657
        %v6128 = vadd.f32 %v6127, %v5658
        %v6129 = vadd.f32 %v6128, %v5659
        %6130 = vadd.xlane.f32.xlu0 %v6129
        %v6131 = vpop.xlane.xlu0 %6130
        %v6132 = vadd.f32 %v5660, %v5661
        %v6133 = vadd.f32 %v6132, %v5662
        %v6134 = vadd.f32 %v6133, %v5663
        %v6135 = vadd.f32 %v6134, %v5664
        %v6136 = vadd.f32 %v6135, %v5665
        %v6137 = vadd.f32 %v6136, %v5666
        %6138 = vadd.xlane.f32.xlu0 %v6137
        %v6139 = vpop.xlane.xlu0 %6138
        %v6140 = vadd.f32 %v5667, %v5668
        %v6141 = vadd.f32 %v6140, %v5669
        %v6142 = vadd.f32 %v6141, %v5670
        %v6143 = vadd.f32 %v6142, %v5671
        %v6144 = vadd.f32 %v6143, %v5672
        %v6145 = vadd.f32 %v6144, %v5673
        %6146 = vadd.xlane.f32.xlu0 %v6145
        %v6147 = vpop.xlane.xlu0 %6146
        %v6148 = vadd.f32 %v5674, %v5675
        %v6149 = vadd.f32 %v6148, %v5676
        %v6150 = vadd.f32 %v6149, %v5677
        %v6151 = vadd.f32 %v6150, %v5678
        %v6152 = vadd.f32 %v6151, %v5679
        %v6153 = vadd.f32 %v6152, %v5680
        %6154 = vadd.xlane.f32.xlu0 %v6153
        %v6155 = vpop.xlane.xlu0 %6154
        %v6156 = vadd.f32 %v5681, %v5682
        %v6157 = vadd.f32 %v6156, %v5683
        %v6158 = vadd.f32 %v6157, %v5684
        %v6159 = vadd.f32 %v6158, %v5685
        %v6160 = vadd.f32 %v6159, %v5686
        %v6161 = vadd.f32 %v6160, %v5687
        %6162 = vadd.xlane.f32.xlu0 %v6161
        %v6163 = vpop.xlane.xlu0 %6162
        %v6164 = vadd.f32 %v5688, %v5689
        %v6165 = vadd.f32 %v6164, %v5690
        %v6166 = vadd.f32 %v6165, %v5691
        %v6167 = vadd.f32 %v6166, %v5692
        %v6168 = vadd.f32 %v6167, %v5693
        %v6169 = vadd.f32 %v6168, %v5694
        %6170 = vadd.xlane.f32.xlu0 %v6169
        %v6171 = vpop.xlane.xlu0 %6170
        %v6172 = vadd.f32 %v5695, %v5696
        %v6173 = vadd.f32 %v6172, %v5697
        %v6174 = vadd.f32 %v6173, %v5698
        %v6175 = vadd.f32 %v6174, %v5699
        %v6176 = vadd.f32 %v6175, %v5700
        %v6177 = vadd.f32 %v6176, %v5701
        %6178 = vadd.xlane.f32.xlu0 %v6177
        %v6179 = vpop.xlane.xlu0 %6178
        %v6180 = vadd.f32 %v5702, %v5703
        %v6181 = vadd.f32 %v6180, %v5704
        %v6182 = vadd.f32 %v6181, %v5705
        %v6183 = vadd.f32 %v6182, %v5706
        %v6184 = vadd.f32 %v6183, %v5707
        %v6185 = vadd.f32 %v6184, %v5708
        %6186 = vadd.xlane.f32.xlu0 %v6185
        %v6187 = vpop.xlane.xlu0 %6186
        %v6188 = vadd.f32 %v5709, %v5710
        %v6189 = vadd.f32 %v6188, %v5711
        %v6190 = vadd.f32 %v6189, %v5712
        %v6191 = vadd.f32 %v6190, %v5713
        %v6192 = vadd.f32 %v6191, %v5714
        %v6193 = vadd.f32 %v6192, %v5715
        %6194 = vadd.xlane.f32.xlu0 %v6193
        %v6195 = vpop.xlane.xlu0 %6194
        %v6196 = vadd.f32 %v5716, %v5717
        %v6197 = vadd.f32 %v6196, %v5718
        %v6198 = vadd.f32 %v6197, %v5719
        %v6199 = vadd.f32 %v6198, %v5720
        %v6200 = vadd.f32 %v6199, %v5721
        %v6201 = vadd.f32 %v6200, %v5722
        %6202 = vadd.xlane.f32.xlu0 %v6201
        %v6203 = vpop.xlane.xlu0 %6202
        %v6204 = vadd.f32 %v5723, %v5724
        %v6205 = vadd.f32 %v6204, %v5725
        %v6206 = vadd.f32 %v6205, %v5726
        %v6207 = vadd.f32 %v6206, %v5727
        %v6208 = vadd.f32 %v6207, %v5728
        %v6209 = vadd.f32 %v6208, %v5729
        %6210 = vadd.xlane.f32.xlu0 %v6209
        %v6211 = vpop.xlane.xlu0 %6210
        %v6212 = vadd.f32 %v5730, %v5731
        %v6213 = vadd.f32 %v6212, %v5732
        %v6214 = vadd.f32 %v6213, %v5733
        %v6215 = vadd.f32 %v6214, %v5734
        %v6216 = vadd.f32 %v6215, %v5735
        %v6217 = vadd.f32 %v6216, %v5736
        %6218 = vadd.xlane.f32.xlu0 %v6217
        %v6219 = vpop.xlane.xlu0 %6218
        %v6220 = vadd.f32 %v5737, %v5738
        %v6221 = vadd.f32 %v6220, %v5739
        %v6222 = vadd.f32 %v6221, %v5740
        %v6223 = vadd.f32 %v6222, %v5741
        %v6224 = vadd.f32 %v6223, %v5742
        %v6225 = vadd.f32 %v6224, %v5743
        %6226 = vadd.xlane.f32.xlu0 %v6225
        %v6227 = vpop.xlane.xlu0 %6226
        %v6228 = vadd.f32 %v5744, %v5745
        %v6229 = vadd.f32 %v6228, %v5746
        %v6230 = vadd.f32 %v6229, %v5747
        %v6231 = vadd.f32 %v6230, %v5748
        %v6232 = vadd.f32 %v6231, %v5749
        %v6233 = vadd.f32 %v6232, %v5750
        %6234 = vadd.xlane.f32.xlu0 %v6233
        %v6235 = vpop.xlane.xlu0 %6234
        %v6236 = vadd.f32 %v5751, %v5752
        %v6237 = vadd.f32 %v6236, %v5753
        %v6238 = vadd.f32 %v6237, %v5754
        %v6239 = vadd.f32 %v6238, %v5755
        %v6240 = vadd.f32 %v6239, %v5756
        %v6241 = vadd.f32 %v6240, %v5757
        %6242 = vadd.xlane.f32.xlu0 %v6241
        %v6243 = vpop.xlane.xlu0 %6242
        %v6244 = vadd.f32 %v5758, %v5759
        %v6245 = vadd.f32 %v6244, %v5760
        %v6246 = vadd.f32 %v6245, %v5761
        %v6247 = vadd.f32 %v6246, %v5762
        %v6248 = vadd.f32 %v6247, %v5763
        %v6249 = vadd.f32 %v6248, %v5764
        %6250 = vadd.xlane.f32.xlu0 %v6249
        %v6251 = vpop.xlane.xlu0 %6250
        %v6252 = vadd.f32 %v5765, %v5766
        %v6253 = vadd.f32 %v6252, %v5767
        %v6254 = vadd.f32 %v6253, %v5768
        %v6255 = vadd.f32 %v6254, %v5769
        %v6256 = vadd.f32 %v6255, %v5770
        %v6257 = vadd.f32 %v6256, %v5771
        %6258 = vadd.xlane.f32.xlu0 %v6257
        %v6259 = vpop.xlane.xlu0 %6258
        %v6260 = vadd.f32 %v5772, %v5773
        %v6261 = vadd.f32 %v6260, %v5774
        %v6262 = vadd.f32 %v6261, %v5775
        %v6263 = vadd.f32 %v6262, %v5776
        %v6264 = vadd.f32 %v6263, %v5777
        %v6265 = vadd.f32 %v6264, %v5778
        %6266 = vadd.xlane.f32.xlu0 %v6265
        %v6267 = vpop.xlane.xlu0 %6266
        %v6268 = vadd.f32 %v5779, %v5780
        %v6269 = vadd.f32 %v6268, %v5781
        %v6270 = vadd.f32 %v6269, %v5782
        %v6271 = vadd.f32 %v6270, %v5783
        %v6272 = vadd.f32 %v6271, %v5784
        %v6273 = vadd.f32 %v6272, %v5785
        %6274 = vadd.xlane.f32.xlu0 %v6273
        %v6275 = vpop.xlane.xlu0 %6274
        %v6276 = vadd.f32 %v5786, %v5787
        %v6277 = vadd.f32 %v6276, %v5788
        %v6278 = vadd.f32 %v6277, %v5789
        %v6279 = vadd.f32 %v6278, %v5790
        %v6280 = vadd.f32 %v6279, %v5791
        %v6281 = vadd.f32 %v6280, %v5792
        %6282 = vadd.xlane.f32.xlu0 %v6281
        %v6283 = vpop.xlane.xlu0 %6282
        %v6284 = vadd.f32 %v5793, %v5794
        %v6285 = vadd.f32 %v6284, %v5795
        %v6286 = vadd.f32 %v6285, %v5796
        %v6287 = vadd.f32 %v6286, %v5797
        %v6288 = vadd.f32 %v6287, %v5798
        %v6289 = vadd.f32 %v6288, %v5799
        %6290 = vadd.xlane.f32.xlu0 %v6289
        %v6291 = vpop.xlane.xlu0 %6290
        %v6292 = vadd.f32 %v5800, %v5801
        %v6293 = vadd.f32 %v6292, %v5802
        %v6294 = vadd.f32 %v6293, %v5803
        %v6295 = vadd.f32 %v6294, %v5804
        %v6296 = vadd.f32 %v6295, %v5805
        %v6297 = vadd.f32 %v6296, %v5806
        %6298 = vadd.xlane.f32.xlu0 %v6297
        %v6299 = vpop.xlane.xlu0 %6298
        %v6300 = vadd.f32 %v5807, %v5808
        %v6301 = vadd.f32 %v6300, %v5809
        %v6302 = vadd.f32 %v6301, %v5810
        %v6303 = vadd.f32 %v6302, %v5811
        %v6304 = vadd.f32 %v6303, %v5812
        %v6305 = vadd.f32 %v6304, %v5813
        %6306 = vadd.xlane.f32.xlu0 %v6305
        %v6307 = vpop.xlane.xlu0 %6306
        %v6308 = vadd.f32 %v5814, %v5815
        %v6309 = vadd.f32 %v6308, %v5816
        %v6310 = vadd.f32 %v6309, %v5817
        %v6311 = vadd.f32 %v6310, %v5818
        %v6312 = vadd.f32 %v6311, %v5819
        %v6313 = vadd.f32 %v6312, %v5820
        %6314 = vadd.xlane.f32.xlu0 %v6313
        %v6315 = vpop.xlane.xlu0 %6314
        %v6316 = vadd.f32 %v5821, %v5822
        %v6317 = vadd.f32 %v6316, %v5823
        %v6318 = vadd.f32 %v6317, %v5824
        %v6319 = vadd.f32 %v6318, %v5825
        %v6320 = vadd.f32 %v6319, %v5826
        %v6321 = vadd.f32 %v6320, %v5827
        %6322 = vadd.xlane.f32.xlu0 %v6321
        %v6323 = vpop.xlane.xlu0 %6322
        %v6324 = vadd.f32 %v5828, %v5829
        %v6325 = vadd.f32 %v6324, %v5830
        %v6326 = vadd.f32 %v6325, %v5831
        %v6327 = vadd.f32 %v6326, %v5832
        %v6328 = vadd.f32 %v6327, %v5833
        %v6329 = vadd.f32 %v6328, %v5834
        %6330 = vadd.xlane.f32.xlu0 %v6329
        %v6331 = vpop.xlane.xlu0 %6330
        %v6332 = vadd.f32 %v5835, %v5836
        %v6333 = vadd.f32 %v6332, %v5837
        %v6334 = vadd.f32 %v6333, %v5838
        %v6335 = vadd.f32 %v6334, %v5839
        %v6336 = vadd.f32 %v6335, %v5840
        %v6337 = vadd.f32 %v6336, %v5841
        %6338 = vadd.xlane.f32.xlu0 %v6337
        %v6339 = vpop.xlane.xlu0 %6338
        %v6340 = vadd.f32 %v5842, %v5843
        %v6341 = vadd.f32 %v6340, %v5844
        %v6342 = vadd.f32 %v6341, %v5845
        %v6343 = vadd.f32 %v6342, %v5846
        %v6344 = vadd.f32 %v6343, %v5847
        %v6345 = vadd.f32 %v6344, %v5848
        %6346 = vadd.xlane.f32.xlu0 %v6345
        %v6347 = vpop.xlane.xlu0 %6346
        %v6348 = vadd.f32 %v5849, %v5850
        %v6349 = vadd.f32 %v6348, %v5851
        %v6350 = vadd.f32 %v6349, %v5852
        %v6351 = vadd.f32 %v6350, %v5853
        %v6352 = vadd.f32 %v6351, %v5854
        %v6353 = vadd.f32 %v6352, %v5855
        %6354 = vadd.xlane.f32.xlu0 %v6353
        %v6355 = vpop.xlane.xlu0 %6354
        %v6356 = vadd.f32 %v5856, %v5857
        %v6357 = vadd.f32 %v6356, %v5858
        %v6358 = vadd.f32 %v6357, %v5859
        %v6359 = vadd.f32 %v6358, %v5860
        %v6360 = vadd.f32 %v6359, %v5861
        %v6361 = vadd.f32 %v6360, %v5862
        %6362 = vadd.xlane.f32.xlu0 %v6361
        %v6363 = vpop.xlane.xlu0 %6362
        %v6364 = vadd.f32 %v5863, %v5864
        %v6365 = vadd.f32 %v6364, %v5865
        %v6366 = vadd.f32 %v6365, %v5866
        %v6367 = vadd.f32 %v6366, %v5867
        %v6368 = vadd.f32 %v6367, %v5868
        %v6369 = vadd.f32 %v6368, %v5869
        %6370 = vadd.xlane.f32.xlu0 %v6369
        %v6371 = vpop.xlane.xlu0 %6370
        %v6372 = vadd.f32 %v5870, %v5871
        %v6373 = vadd.f32 %v6372, %v5872
        %v6374 = vadd.f32 %v6373, %v5873
        %v6375 = vadd.f32 %v6374, %v5874
        %v6376 = vadd.f32 %v6375, %v5875
        %v6377 = vadd.f32 %v6376, %v5876
        %6378 = vadd.xlane.f32.xlu0 %v6377
        %v6379 = vpop.xlane.xlu0 %6378
        %v6380 = vadd.f32 %v5877, %v5878
        %v6381 = vadd.f32 %v6380, %v5879
        %v6382 = vadd.f32 %v6381, %v5880
        %v6383 = vadd.f32 %v6382, %v5881
        %v6384 = vadd.f32 %v6383, %v5882
        %v6385 = vadd.f32 %v6384, %v5883
        %6386 = vadd.xlane.f32.xlu0 %v6385
        %v6387 = vpop.xlane.xlu0 %6386
        %v6388 = vadd.f32 %v5884, %v5885
        %v6389 = vadd.f32 %v6388, %v5886
        %v6390 = vadd.f32 %v6389, %v5887
        %v6391 = vadd.f32 %v6390, %v5888
        %v6392 = vadd.f32 %v6391, %v5889
        %v6393 = vadd.f32 %v6392, %v5890
        %6394 = vadd.xlane.f32.xlu0 %v6393
        %v6395 = vpop.xlane.xlu0 %6394
        %v6396 = vadd.f32 %v5891, %v5892
        %v6397 = vadd.f32 %v6396, %v5893
        %v6398 = vadd.f32 %v6397, %v5894
        %v6399 = vadd.f32 %v6398, %v5895
        %v6400 = vadd.f32 %v6399, %v5896
        %v6401 = vadd.f32 %v6400, %v5897
        %6402 = vadd.xlane.f32.xlu0 %v6401
        %v6403 = vpop.xlane.xlu0 %6402
        %v6404 = vadd.f32 %v5898, %v5899
        %v6405 = vadd.f32 %v6404, %v5900
        %v6406 = vadd.f32 %v6405, %v5901
        %v6407 = vadd.f32 %v6406, %v5902
        %v6408 = vadd.f32 %v6407, %v5903
        %v6409 = vadd.f32 %v6408, %v5904
        %6410 = vadd.xlane.f32.xlu0 %v6409
        %v6411 = vpop.xlane.xlu0 %6410
        %v6412 = vadd.f32 %v5905, %v5906
        %v6413 = vadd.f32 %v6412, %v5907
        %v6414 = vadd.f32 %v6413, %v5908
        %v6415 = vadd.f32 %v6414, %v5909
        %v6416 = vadd.f32 %v6415, %v5910
        %v6417 = vadd.f32 %v6416, %v5911
        %6418 = vadd.xlane.f32.xlu0 %v6417
        %v6419 = vpop.xlane.xlu0 %6418
        %v6420 = vadd.f32 %v5912, %v5913
        %v6421 = vadd.f32 %v6420, %v5914
        %v6422 = vadd.f32 %v6421, %v5915
        %v6423 = vadd.f32 %v6422, %v5916
        %v6424 = vadd.f32 %v6423, %v5917
        %v6425 = vadd.f32 %v6424, %v5918
        %6426 = vadd.xlane.f32.xlu0 %v6425
        %v6427 = vpop.xlane.xlu0 %6426
        %v6428 = vadd.f32 %v5919, %v5920
        %v6429 = vadd.f32 %v6428, %v5921
        %v6430 = vadd.f32 %v6429, %v5922
        %v6431 = vadd.f32 %v6430, %v5923
        %v6432 = vadd.f32 %v6431, %v5924
        %v6433 = vadd.f32 %v6432, %v5925
        %6434 = vadd.xlane.f32.xlu0 %v6433
        %v6435 = vpop.xlane.xlu0 %6434
        %v6436 = vadd.f32 %v5926, %v5927
        %v6437 = vadd.f32 %v6436, %v5928
        %v6438 = vadd.f32 %v6437, %v5929
        %v6439 = vadd.f32 %v6438, %v5930
        %v6440 = vadd.f32 %v6439, %v5931
        %v6441 = vadd.f32 %v6440, %v5932
        %6442 = vadd.xlane.f32.xlu0 %v6441
        %v6443 = vpop.xlane.xlu0 %6442
        %v6444 = vadd.f32 %v5933, %v5934
        %v6445 = vadd.f32 %v6444, %v5935
        %v6446 = vadd.f32 %v6445, %v5936
        %v6447 = vadd.f32 %v6446, %v5937
        %v6448 = vadd.f32 %v6447, %v5938
        %v6449 = vadd.f32 %v6448, %v5939
        %6450 = vadd.xlane.f32.xlu0 %v6449
        %v6451 = vpop.xlane.xlu0 %6450
        %v6452 = vmul.f32 %v4987, 0.0012755102
        %v6453 = vmul.f32 %v4995, 0.0012755102
        %v6454 = vmul.f32 %v5003, 0.0012755102
        %v6455 = vmul.f32 %v5011, 0.0012755102
        %v6456 = vmul.f32 %v5019, 0.0012755102
        %v6457 = vmul.f32 %v5027, 0.0012755102
        %v6458 = vmul.f32 %v5035, 0.0012755102
        %v6459 = vmul.f32 %v5043, 0.0012755102
        %v6460 = vmul.f32 %v5051, 0.0012755102
        %v6461 = vmul.f32 %v5059, 0.0012755102
        %v6462 = vmul.f32 %v5067, 0.0012755102
        %v6463 = vmul.f32 %v5075, 0.0012755102
        %v6464 = vmul.f32 %v5083, 0.0012755102
        %v6465 = vmul.f32 %v5091, 0.0012755102
        %v6466 = vmul.f32 %v5099, 0.0012755102
        %v6467 = vmul.f32 %v5107, 0.0012755102
        %v6468 = vmul.f32 %v5115, 0.0012755102
        %v6469 = vmul.f32 %v5123, 0.0012755102
        %v6470 = vmul.f32 %v5131, 0.0012755102
        %v6471 = vmul.f32 %v5139, 0.0012755102
        %v6472 = vmul.f32 %v5147, 0.0012755102
        %v6473 = vmul.f32 %v5155, 0.0012755102
        %v6474 = vmul.f32 %v5163, 0.0012755102
        %v6475 = vmul.f32 %v5171, 0.0012755102
        %v6476 = vmul.f32 %v5179, 0.0012755102
        %v6477 = vmul.f32 %v5187, 0.0012755102
        %v6478 = vmul.f32 %v5195, 0.0012755102
        %v6479 = vmul.f32 %v5203, 0.0012755102
        %v6480 = vmul.f32 %v5211, 0.0012755102
        %v6481 = vmul.f32 %v5219, 0.0012755102
        %v6482 = vmul.f32 %v5227, 0.0012755102
        %v6483 = vmul.f32 %v5235, 0.0012755102
        %v6484 = vmul.f32 %v5243, 0.0012755102
        %v6485 = vmul.f32 %v5251, 0.0012755102
        %v6486 = vmul.f32 %v5259, 0.0012755102
        %v6487 = vmul.f32 %v5267, 0.0012755102
        %v6488 = vmul.f32 %v5275, 0.0012755102
        %v6489 = vmul.f32 %v5283, 0.0012755102
        %v6490 = vmul.f32 %v5291, 0.0012755102
        %v6491 = vmul.f32 %v5299, 0.0012755102
        %v6492 = vmul.f32 %v5307, 0.0012755102
        %v6493 = vmul.f32 %v5315, 0.0012755102
        %v6494 = vmul.f32 %v5323, 0.0012755102
        %v6495 = vmul.f32 %v5331, 0.0012755102
        %v6496 = vmul.f32 %v5339, 0.0012755102
        %v6497 = vmul.f32 %v5347, 0.0012755102
        %v6498 = vmul.f32 %v5355, 0.0012755102
        %v6499 = vmul.f32 %v5363, 0.0012755102
        %v6500 = vmul.f32 %v5371, 0.0012755102
        %v6501 = vmul.f32 %v5379, 0.0012755102
        %v6502 = vmul.f32 %v5387, 0.0012755102
        %v6503 = vmul.f32 %v5395, 0.0012755102
        %v6504 = vmul.f32 %v5403, 0.0012755102
        %v6505 = vmul.f32 %v5411, 0.0012755102
        %v6506 = vmul.f32 %v5419, 0.0012755102
        %v6507 = vmul.f32 %v5427, 0.0012755102
        %v6508 = vmul.f32 %v5435, 0.0012755102
        %v6509 = vmul.f32 %v5443, 0.0012755102
        %v6510 = vmul.f32 %v5451, 0.0012755102
        %v6511 = vmul.f32 %v5459, 0.0012755102
        %v6512 = vmul.f32 %v5467, 0.0012755102
        %v6513 = vmul.f32 %v5475, 0.0012755102
        %v6514 = vmul.f32 %v5483, 0.0012755102
        %v6515 = vmul.f32 %v5491, 0.0012755102
        %v6516 = vmul.f32 %v5947, 0.0012755102
        %v6517 = vmul.f32 %v5955, 0.0012755102
        %v6518 = vmul.f32 %v5963, 0.0012755102
        %v6519 = vmul.f32 %v5971, 0.0012755102
        %v6520 = vmul.f32 %v5979, 0.0012755102
        %v6521 = vmul.f32 %v5987, 0.0012755102
        %v6522 = vmul.f32 %v5995, 0.0012755102
        %v6523 = vmul.f32 %v6003, 0.0012755102
        %v6524 = vmul.f32 %v6011, 0.0012755102
        %v6525 = vmul.f32 %v6019, 0.0012755102
        %v6526 = vmul.f32 %v6027, 0.0012755102
        %v6527 = vmul.f32 %v6035, 0.0012755102
        %v6528 = vmul.f32 %v6043, 0.0012755102
        %v6529 = vmul.f32 %v6051, 0.0012755102
        %v6530 = vmul.f32 %v6059, 0.0012755102
        %v6531 = vmul.f32 %v6067, 0.0012755102
        %v6532 = vmul.f32 %v6075, 0.0012755102
        %v6533 = vmul.f32 %v6083, 0.0012755102
        %v6534 = vmul.f32 %v6091, 0.0012755102
        %v6535 = vmul.f32 %v6099, 0.0012755102
        %v6536 = vmul.f32 %v6107, 0.0012755102
        %v6537 = vmul.f32 %v6115, 0.0012755102
        %v6538 = vmul.f32 %v6123, 0.0012755102
        %v6539 = vmul.f32 %v6131, 0.0012755102
        %v6540 = vmul.f32 %v6139, 0.0012755102
        %v6541 = vmul.f32 %v6147, 0.0012755102
        %v6542 = vmul.f32 %v6155, 0.0012755102
        %v6543 = vmul.f32 %v6163, 0.0012755102
        %v6544 = vmul.f32 %v6171, 0.0012755102
        %v6545 = vmul.f32 %v6179, 0.0012755102
        %v6546 = vmul.f32 %v6187, 0.0012755102
        %v6547 = vmul.f32 %v6195, 0.0012755102
        %v6548 = vmul.f32 %v6203, 0.0012755102
        %v6549 = vmul.f32 %v6211, 0.0012755102
        %v6550 = vmul.f32 %v6219, 0.0012755102
        %v6551 = vmul.f32 %v6227, 0.0012755102
        %v6552 = vmul.f32 %v6235, 0.0012755102
        %v6553 = vmul.f32 %v6243, 0.0012755102
        %v6554 = vmul.f32 %v6251, 0.0012755102
        %v6555 = vmul.f32 %v6259, 0.0012755102
        %v6556 = vmul.f32 %v6267, 0.0012755102
        %v6557 = vmul.f32 %v6275, 0.0012755102
        %v6558 = vmul.f32 %v6283, 0.0012755102
        %v6559 = vmul.f32 %v6291, 0.0012755102
        %v6560 = vmul.f32 %v6299, 0.0012755102
        %v6561 = vmul.f32 %v6307, 0.0012755102
        %v6562 = vmul.f32 %v6315, 0.0012755102
        %v6563 = vmul.f32 %v6323, 0.0012755102
        %v6564 = vmul.f32 %v6331, 0.0012755102
        %v6565 = vmul.f32 %v6339, 0.0012755102
        %v6566 = vmul.f32 %v6347, 0.0012755102
        %v6567 = vmul.f32 %v6355, 0.0012755102
        %v6568 = vmul.f32 %v6363, 0.0012755102
        %v6569 = vmul.f32 %v6371, 0.0012755102
        %v6570 = vmul.f32 %v6379, 0.0012755102
        %v6571 = vmul.f32 %v6387, 0.0012755102
        %v6572 = vmul.f32 %v6395, 0.0012755102
        %v6573 = vmul.f32 %v6403, 0.0012755102
        %v6574 = vmul.f32 %v6411, 0.0012755102
        %v6575 = vmul.f32 %v6419, 0.0012755102
        %v6576 = vmul.f32 %v6427, 0.0012755102
        %v6577 = vmul.f32 %v6435, 0.0012755102
        %v6578 = vmul.f32 %v6443, 0.0012755102
        %v6579 = vmul.f32 %v6451, 0.0012755102
        %v6580 = vmul.f32 %v6452, %v6452
        %v6581 = vmul.f32 %v6453, %v6453
        %v6582 = vmul.f32 %v6454, %v6454
        %v6583 = vmul.f32 %v6455, %v6455
        %v6584 = vmul.f32 %v6456, %v6456
        %v6585 = vmul.f32 %v6457, %v6457
        %v6586 = vmul.f32 %v6458, %v6458
        %v6587 = vmul.f32 %v6459, %v6459
        %v6588 = vmul.f32 %v6460, %v6460
        %v6589 = vmul.f32 %v6461, %v6461
        %v6590 = vmul.f32 %v6462, %v6462
        %v6591 = vmul.f32 %v6463, %v6463
        %v6592 = vmul.f32 %v6464, %v6464
        %v6593 = vmul.f32 %v6465, %v6465
        %v6594 = vmul.f32 %v6466, %v6466
        %v6595 = vmul.f32 %v6467, %v6467
        %v6596 = vmul.f32 %v6468, %v6468
        %v6597 = vmul.f32 %v6469, %v6469
        %v6598 = vmul.f32 %v6470, %v6470
        %v6599 = vmul.f32 %v6471, %v6471
        %v6600 = vmul.f32 %v6472, %v6472
        %v6601 = vmul.f32 %v6473, %v6473
        %v6602 = vmul.f32 %v6474, %v6474
        %v6603 = vmul.f32 %v6475, %v6475
        %v6604 = vmul.f32 %v6476, %v6476
        %v6605 = vmul.f32 %v6477, %v6477
        %v6606 = vmul.f32 %v6478, %v6478
        %v6607 = vmul.f32 %v6479, %v6479
        %v6608 = vmul.f32 %v6480, %v6480
        %v6609 = vmul.f32 %v6481, %v6481
        %v6610 = vmul.f32 %v6482, %v6482
        %v6611 = vmul.f32 %v6483, %v6483
        %v6612 = vmul.f32 %v6484, %v6484
        %v6613 = vmul.f32 %v6485, %v6485
        %v6614 = vmul.f32 %v6486, %v6486
        %v6615 = vmul.f32 %v6487, %v6487
        %v6616 = vmul.f32 %v6488, %v6488
        %v6617 = vmul.f32 %v6489, %v6489
        %v6618 = vmul.f32 %v6490, %v6490
        %v6619 = vmul.f32 %v6491, %v6491
        %v6620 = vmul.f32 %v6492, %v6492
        %v6621 = vmul.f32 %v6493, %v6493
        %v6622 = vmul.f32 %v6494, %v6494
        %v6623 = vmul.f32 %v6495, %v6495
        %v6624 = vmul.f32 %v6496, %v6496
        %v6625 = vmul.f32 %v6497, %v6497
        %v6626 = vmul.f32 %v6498, %v6498
        %v6627 = vmul.f32 %v6499, %v6499
        %v6628 = vmul.f32 %v6500, %v6500
        %v6629 = vmul.f32 %v6501, %v6501
        %v6630 = vmul.f32 %v6502, %v6502
        %v6631 = vmul.f32 %v6503, %v6503
        %v6632 = vmul.f32 %v6504, %v6504
        %v6633 = vmul.f32 %v6505, %v6505
        %v6634 = vmul.f32 %v6506, %v6506
        %v6635 = vmul.f32 %v6507, %v6507
        %v6636 = vmul.f32 %v6508, %v6508
        %v6637 = vmul.f32 %v6509, %v6509
        %v6638 = vmul.f32 %v6510, %v6510
        %v6639 = vmul.f32 %v6511, %v6511
        %v6640 = vmul.f32 %v6512, %v6512
        %v6641 = vmul.f32 %v6513, %v6513
        %v6642 = vmul.f32 %v6514, %v6514
        %v6643 = vmul.f32 %v6515, %v6515
        %v6644 = vsub.f32 %v6516, %v6580
        %v6645 = vsub.f32 %v6517, %v6581
        %v6646 = vsub.f32 %v6518, %v6582
        %v6647 = vsub.f32 %v6519, %v6583
        %v6648 = vsub.f32 %v6520, %v6584
        %v6649 = vsub.f32 %v6521, %v6585
        %v6650 = vsub.f32 %v6522, %v6586
        %v6651 = vsub.f32 %v6523, %v6587
        %v6652 = vsub.f32 %v6524, %v6588
        %v6653 = vsub.f32 %v6525, %v6589
        %v6654 = vsub.f32 %v6526, %v6590
        %v6655 = vsub.f32 %v6527, %v6591
        %v6656 = vsub.f32 %v6528, %v6592
        %v6657 = vsub.f32 %v6529, %v6593
        %v6658 = vsub.f32 %v6530, %v6594
        %v6659 = vsub.f32 %v6531, %v6595
        %v6660 = vsub.f32 %v6532, %v6596
        %v6661 = vsub.f32 %v6533, %v6597
        %v6662 = vsub.f32 %v6534, %v6598
        %v6663 = vsub.f32 %v6535, %v6599
        %v6664 = vsub.f32 %v6536, %v6600
        %v6665 = vsub.f32 %v6537, %v6601
        %v6666 = vsub.f32 %v6538, %v6602
        %v6667 = vsub.f32 %v6539, %v6603
        %v6668 = vsub.f32 %v6540, %v6604
        %v6669 = vsub.f32 %v6541, %v6605
        %v6670 = vsub.f32 %v6542, %v6606
        %v6671 = vsub.f32 %v6543, %v6607
        %v6672 = vsub.f32 %v6544, %v6608
        %v6673 = vsub.f32 %v6545, %v6609
        %v6674 = vsub.f32 %v6546, %v6610
        %v6675 = vsub.f32 %v6547, %v6611
        %v6676 = vsub.f32 %v6548, %v6612
        %v6677 = vsub.f32 %v6549, %v6613
        %v6678 = vsub.f32 %v6550, %v6614
        %v6679 = vsub.f32 %v6551, %v6615
        %v6680 = vsub.f32 %v6552, %v6616
        %v6681 = vsub.f32 %v6553, %v6617
        %v6682 = vsub.f32 %v6554, %v6618
        %v6683 = vsub.f32 %v6555, %v6619
        %v6684 = vsub.f32 %v6556, %v6620
        %v6685 = vsub.f32 %v6557, %v6621
        %v6686 = vsub.f32 %v6558, %v6622
        %v6687 = vsub.f32 %v6559, %v6623
        %v6688 = vsub.f32 %v6560, %v6624
        %v6689 = vsub.f32 %v6561, %v6625
        %v6690 = vsub.f32 %v6562, %v6626
        %v6691 = vsub.f32 %v6563, %v6627
        %v6692 = vsub.f32 %v6564, %v6628
        %v6693 = vsub.f32 %v6565, %v6629
        %v6694 = vsub.f32 %v6566, %v6630
        %v6695 = vsub.f32 %v6567, %v6631
        %v6696 = vsub.f32 %v6568, %v6632
        %v6697 = vsub.f32 %v6569, %v6633
        %v6698 = vsub.f32 %v6570, %v6634
        %v6699 = vsub.f32 %v6571, %v6635
        %v6700 = vsub.f32 %v6572, %v6636
        %v6701 = vsub.f32 %v6573, %v6637
        %v6702 = vsub.f32 %v6574, %v6638
        %v6703 = vsub.f32 %v6575, %v6639
        %v6704 = vsub.f32 %v6576, %v6640
        %v6705 = vsub.f32 %v6577, %v6641
        %v6706 = vsub.f32 %v6578, %v6642
        %v6707 = vsub.f32 %v6579, %v6643
        %v6708 = vmax.f32 %v6644, 0.0
        %v6709 = vmax.f32 %v6645, 0.0
        %v6710 = vmax.f32 %v6646, 0.0
        %v6711 = vmax.f32 %v6647, 0.0
        %v6712 = vmax.f32 %v6648, 0.0
        %v6713 = vmax.f32 %v6649, 0.0
        %v6714 = vmax.f32 %v6650, 0.0
        %v6715 = vmax.f32 %v6651, 0.0
        %v6716 = vmax.f32 %v6652, 0.0
        %v6717 = vmax.f32 %v6653, 0.0
        %v6718 = vmax.f32 %v6654, 0.0
        %v6719 = vmax.f32 %v6655, 0.0
        %v6720 = vmax.f32 %v6656, 0.0
        %v6721 = vmax.f32 %v6657, 0.0
        %v6722 = vmax.f32 %v6658, 0.0
        %v6723 = vmax.f32 %v6659, 0.0
        %v6724 = vmax.f32 %v6660, 0.0
        %v6725 = vmax.f32 %v6661, 0.0
        %v6726 = vmax.f32 %v6662, 0.0
        %v6727 = vmax.f32 %v6663, 0.0
        %v6728 = vmax.f32 %v6664, 0.0
        %v6729 = vmax.f32 %v6665, 0.0
        %v6730 = vmax.f32 %v6666, 0.0
        %v6731 = vmax.f32 %v6667, 0.0
        %v6732 = vmax.f32 %v6668, 0.0
        %v6733 = vmax.f32 %v6669, 0.0
        %v6734 = vmax.f32 %v6670, 0.0
        %v6735 = vmax.f32 %v6671, 0.0
        %v6736 = vmax.f32 %v6672, 0.0
        %v6737 = vmax.f32 %v6673, 0.0
        %v6738 = vmax.f32 %v6674, 0.0
        %v6739 = vmax.f32 %v6675, 0.0
        %v6740 = vmax.f32 %v6676, 0.0
        %v6741 = vmax.f32 %v6677, 0.0
        %v6742 = vmax.f32 %v6678, 0.0
        %v6743 = vmax.f32 %v6679, 0.0
        %v6744 = vmax.f32 %v6680, 0.0
        %v6745 = vmax.f32 %v6681, 0.0
        %v6746 = vmax.f32 %v6682, 0.0
        %v6747 = vmax.f32 %v6683, 0.0
        %v6748 = vmax.f32 %v6684, 0.0
        %v6749 = vmax.f32 %v6685, 0.0
        %v6750 = vmax.f32 %v6686, 0.0
        %v6751 = vmax.f32 %v6687, 0.0
        %v6752 = vmax.f32 %v6688, 0.0
        %v6753 = vmax.f32 %v6689, 0.0
        %v6754 = vmax.f32 %v6690, 0.0
        %v6755 = vmax.f32 %v6691, 0.0
        %v6756 = vmax.f32 %v6692, 0.0
        %v6757 = vmax.f32 %v6693, 0.0
        %v6758 = vmax.f32 %v6694, 0.0
        %v6759 = vmax.f32 %v6695, 0.0
        %v6760 = vmax.f32 %v6696, 0.0
        %v6761 = vmax.f32 %v6697, 0.0
        %v6762 = vmax.f32 %v6698, 0.0
        %v6763 = vmax.f32 %v6699, 0.0
        %v6764 = vmax.f32 %v6700, 0.0
        %v6765 = vmax.f32 %v6701, 0.0
        %v6766 = vmax.f32 %v6702, 0.0
        %v6767 = vmax.f32 %v6703, 0.0
        %v6768 = vmax.f32 %v6704, 0.0
        %v6769 = vmax.f32 %v6705, 0.0
        %v6770 = vmax.f32 %v6706, 0.0
        %v6771 = vmax.f32 %v6707, 0.0
        %v6772 = vld [vmem:[%s323] sm:$0xff]
        %v6773 = vld [vmem:[%s323 + $0x8] sm:$0xff]
        %v6774 = vld [vmem:[%s323 + $0x10] sm:$0xff]
        %v6775 = vld [vmem:[%s323 + $0x18] sm:$0xff]
        %v6776 = vld [vmem:[%s323 + $0x20] sm:$0xff]
        %v6777 = vld [vmem:[%s323 + $0x28] sm:$0xff]
        %v6778 = vld [vmem:[%s323 + $0x30] sm:$0xff]
        %v6779 = vld [vmem:[%s323 + $0x38] sm:$0xff]
        %v6780 = vld [vmem:[%s323 + $0x40] sm:$0xff]
        %v6781 = vld [vmem:[%s323 + $0x48] sm:$0xff]
        %v6782 = vld [vmem:[%s323 + $0x50] sm:$0xff]
        %v6783 = vld [vmem:[%s323 + $0x58] sm:$0xff]
        %v6784 = vld [vmem:[%s323 + $0x60] sm:$0xff]
        %v6785 = vld [vmem:[%s323 + $0x68] sm:$0xff]
        %v6786 = vld [vmem:[%s323 + $0x70] sm:$0xff]
        %v6787 = vld [vmem:[%s323 + $0x78] sm:$0xff]
        %v6788 = vld [vmem:[%s323 + $0x80] sm:$0xff]
        %v6789 = vld [vmem:[%s323 + $0x88] sm:$0xff]
        %v6790 = vld [vmem:[%s323 + $0x90] sm:$0xff]
        %v6791 = vld [vmem:[%s323 + $0x98] sm:$0xff]
        %v6792 = vld [vmem:[%s323 + $0xa0] sm:$0xff]
        %v6793 = vld [vmem:[%s323 + $0xa8] sm:$0xff]
        %v6794 = vld [vmem:[%s323 + $0xb0] sm:$0xff]
        %v6795 = vld [vmem:[%s323 + $0xb8] sm:$0xff]
        %v6796 = vld [vmem:[%s323 + $0xc0] sm:$0xff]
        %v6797 = vld [vmem:[%s323 + $0xc8] sm:$0xff]
        %v6798 = vld [vmem:[%s323 + $0xd0] sm:$0xff]
        %v6799 = vld [vmem:[%s323 + $0xd8] sm:$0xff]
        %v6800 = vld [vmem:[%s323 + $0xe0] sm:$0xff]
        %v6801 = vld [vmem:[%s323 + $0xe8] sm:$0xff]
        %v6802 = vld [vmem:[%s323 + $0xf0] sm:$0xff]
        %v6803 = vld [vmem:[%s323 + $0xf8] sm:$0xff]
        %v6804 = vld [vmem:[%s323 + $0x100] sm:$0xff]
        %v6805 = vld [vmem:[%s323 + $0x108] sm:$0xff]
        %v6806 = vld [vmem:[%s323 + $0x110] sm:$0xff]
        %v6807 = vld [vmem:[%s323 + $0x118] sm:$0xff]
        %v6808 = vld [vmem:[%s323 + $0x120] sm:$0xff]
        %v6809 = vld [vmem:[%s323 + $0x128] sm:$0xff]
        %v6810 = vld [vmem:[%s323 + $0x130] sm:$0xff]
        %v6811 = vld [vmem:[%s323 + $0x138] sm:$0xff]
        %v6812 = vld [vmem:[%s323 + $0x140] sm:$0xff]
        %v6813 = vld [vmem:[%s323 + $0x148] sm:$0xff]
        %v6814 = vld [vmem:[%s323 + $0x150] sm:$0xff]
        %v6815 = vld [vmem:[%s323 + $0x158] sm:$0xff]
        %v6816 = vld [vmem:[%s323 + $0x160] sm:$0xff]
        %v6817 = vld [vmem:[%s323 + $0x168] sm:$0xff]
        %v6818 = vld [vmem:[%s323 + $0x170] sm:$0xff]
        %v6819 = vld [vmem:[%s323 + $0x178] sm:$0xff]
        %v6820 = vld [vmem:[%s323 + $0x180] sm:$0xff]
        %v6821 = vld [vmem:[%s323 + $0x188] sm:$0xff]
        %v6822 = vld [vmem:[%s323 + $0x190] sm:$0xff]
        %v6823 = vld [vmem:[%s323 + $0x198] sm:$0xff]
        %v6824 = vld [vmem:[%s323 + $0x1a0] sm:$0xff]
        %v6825 = vld [vmem:[%s323 + $0x1a8] sm:$0xff]
        %v6826 = vld [vmem:[%s323 + $0x1b0] sm:$0xff]
        %v6827 = vld [vmem:[%s323 + $0x1b8] sm:$0xff]
        %v6828 = vld [vmem:[%s323 + $0x1c0] sm:$0xff]
        %v6829 = vld [vmem:[%s323 + $0x1c8] sm:$0xff]
        %v6830 = vld [vmem:[%s323 + $0x1d0] sm:$0xff]
        %v6831 = vld [vmem:[%s323 + $0x1d8] sm:$0xff]
        %v6832 = vld [vmem:[%s323 + $0x1e0] sm:$0xff]
        %v6833 = vld [vmem:[%s323 + $0x1e8] sm:$0xff]
        %v6834 = vld [vmem:[%s323 + $0x1f0] sm:$0xff]
        %v6835 = vld [vmem:[%s323 + $0x1f8] sm:$0xff]
        %v6836 = vadd.f32 %v6708, 1e-05
        %v6837 = vadd.f32 %v6709, 1e-05
        %v6838 = vadd.f32 %v6710, 1e-05
        %v6839 = vadd.f32 %v6711, 1e-05
        %v6840 = vadd.f32 %v6712, 1e-05
        %v6841 = vadd.f32 %v6713, 1e-05
        %v6842 = vadd.f32 %v6714, 1e-05
        %v6843 = vadd.f32 %v6715, 1e-05
        %v6844 = vadd.f32 %v6716, 1e-05
        %v6845 = vadd.f32 %v6717, 1e-05
        %v6846 = vadd.f32 %v6718, 1e-05
        %v6847 = vadd.f32 %v6719, 1e-05
        %v6848 = vadd.f32 %v6720, 1e-05
        %v6849 = vadd.f32 %v6721, 1e-05
        %v6850 = vadd.f32 %v6722, 1e-05
        %v6851 = vadd.f32 %v6723, 1e-05
        %v6852 = vadd.f32 %v6724, 1e-05
        %v6853 = vadd.f32 %v6725, 1e-05
        %v6854 = vadd.f32 %v6726, 1e-05
        %v6855 = vadd.f32 %v6727, 1e-05
        %v6856 = vadd.f32 %v6728, 1e-05
        %v6857 = vadd.f32 %v6729, 1e-05
        %v6858 = vadd.f32 %v6730, 1e-05
        %v6859 = vadd.f32 %v6731, 1e-05
        %v6860 = vadd.f32 %v6732, 1e-05
        %v6861 = vadd.f32 %v6733, 1e-05
        %v6862 = vadd.f32 %v6734, 1e-05
        %v6863 = vadd.f32 %v6735, 1e-05
        %v6864 = vadd.f32 %v6736, 1e-05
        %v6865 = vadd.f32 %v6737, 1e-05
        %v6866 = vadd.f32 %v6738, 1e-05
        %v6867 = vadd.f32 %v6739, 1e-05
        %v6868 = vadd.f32 %v6740, 1e-05
        %v6869 = vadd.f32 %v6741, 1e-05
        %v6870 = vadd.f32 %v6742, 1e-05
        %v6871 = vadd.f32 %v6743, 1e-05
        %v6872 = vadd.f32 %v6744, 1e-05
        %v6873 = vadd.f32 %v6745, 1e-05
        %v6874 = vadd.f32 %v6746, 1e-05
        %v6875 = vadd.f32 %v6747, 1e-05
        %v6876 = vadd.f32 %v6748, 1e-05
        %v6877 = vadd.f32 %v6749, 1e-05
        %v6878 = vadd.f32 %v6750, 1e-05
        %v6879 = vadd.f32 %v6751, 1e-05
        %v6880 = vadd.f32 %v6752, 1e-05
        %v6881 = vadd.f32 %v6753, 1e-05
        %v6882 = vadd.f32 %v6754, 1e-05
        %v6883 = vadd.f32 %v6755, 1e-05
        %v6884 = vadd.f32 %v6756, 1e-05
        %v6885 = vadd.f32 %v6757, 1e-05
        %v6886 = vadd.f32 %v6758, 1e-05
        %v6887 = vadd.f32 %v6759, 1e-05
        %v6888 = vadd.f32 %v6760, 1e-05
        %v6889 = vadd.f32 %v6761, 1e-05
        %v6890 = vadd.f32 %v6762, 1e-05
        %v6891 = vadd.f32 %v6763, 1e-05
        %v6892 = vadd.f32 %v6764, 1e-05
        %v6893 = vadd.f32 %v6765, 1e-05
        %v6894 = vadd.f32 %v6766, 1e-05
        %v6895 = vadd.f32 %v6767, 1e-05
        %v6896 = vadd.f32 %v6768, 1e-05
        %v6897 = vadd.f32 %v6769, 1e-05
        %v6898 = vadd.f32 %v6770, 1e-05
        %v6899 = vadd.f32 %v6771, 1e-05
        %v6900 = vrsqrt.pop %v6836
        %v6901 = vrsqrt.pop %v6837
        %v6902 = vrsqrt.pop %v6838
        %v6903 = vrsqrt.pop %v6839
        %v6904 = vrsqrt.pop %v6840
        %v6905 = vrsqrt.pop %v6841
        %v6906 = vrsqrt.pop %v6842
        %v6907 = vrsqrt.pop %v6843
        %v6908 = vrsqrt.pop %v6844
        %v6909 = vrsqrt.pop %v6845
        %v6910 = vrsqrt.pop %v6846
        %v6911 = vrsqrt.pop %v6847
        %v6912 = vrsqrt.pop %v6848
        %v6913 = vrsqrt.pop %v6849
        %v6914 = vrsqrt.pop %v6850
        %v6915 = vrsqrt.pop %v6851
        %v6916 = vrsqrt.pop %v6852
        %v6917 = vrsqrt.pop %v6853
        %v6918 = vrsqrt.pop %v6854
        %v6919 = vrsqrt.pop %v6855
        %v6920 = vrsqrt.pop %v6856
        %v6921 = vrsqrt.pop %v6857
        %v6922 = vrsqrt.pop %v6858
        %v6923 = vrsqrt.pop %v6859
        %v6924 = vrsqrt.pop %v6860
        %v6925 = vrsqrt.pop %v6861
        %v6926 = vrsqrt.pop %v6862
        %v6927 = vrsqrt.pop %v6863
        %v6928 = vrsqrt.pop %v6864
        %v6929 = vrsqrt.pop %v6865
        %v6930 = vrsqrt.pop %v6866
        %v6931 = vrsqrt.pop %v6867
        %v6932 = vrsqrt.pop %v6868
        %v6933 = vrsqrt.pop %v6869
        %v6934 = vrsqrt.pop %v6870
        %v6935 = vrsqrt.pop %v6871
        %v6936 = vrsqrt.pop %v6872
        %v6937 = vrsqrt.pop %v6873
        %v6938 = vrsqrt.pop %v6874
        %v6939 = vrsqrt.pop %v6875
        %v6940 = vrsqrt.pop %v6876
        %v6941 = vrsqrt.pop %v6877
        %v6942 = vrsqrt.pop %v6878
        %v6943 = vrsqrt.pop %v6879
        %v6944 = vrsqrt.pop %v6880
        %v6945 = vrsqrt.pop %v6881
        %v6946 = vrsqrt.pop %v6882
        %v6947 = vrsqrt.pop %v6883
        %v6948 = vrsqrt.pop %v6884
        %v6949 = vrsqrt.pop %v6885
        %v6950 = vrsqrt.pop %v6886
        %v6951 = vrsqrt.pop %v6887
        %v6952 = vrsqrt.pop %v6888
        %v6953 = vrsqrt.pop %v6889
        %v6954 = vrsqrt.pop %v6890
        %v6955 = vrsqrt.pop %v6891
        %v6956 = vrsqrt.pop %v6892
        %v6957 = vrsqrt.pop %v6893
        %v6958 = vrsqrt.pop %v6894
        %v6959 = vrsqrt.pop %v6895
        %v6960 = vrsqrt.pop %v6896
        %v6961 = vrsqrt.pop %v6897
        %v6962 = vrsqrt.pop %v6898
        %v6963 = vrsqrt.pop %v6899
        %v6964 = vmul.f32 %v6772, %v6900
        %v6965 = vmul.f32 %v6773, %v6901
        %v6966 = vmul.f32 %v6774, %v6902
        %v6967 = vmul.f32 %v6775, %v6903
        %v6968 = vmul.f32 %v6776, %v6904
        %v6969 = vmul.f32 %v6777, %v6905
        %v6970 = vmul.f32 %v6778, %v6906
        %v6971 = vmul.f32 %v6779, %v6907
        %v6972 = vmul.f32 %v6780, %v6908
        %v6973 = vmul.f32 %v6781, %v6909
        %v6974 = vmul.f32 %v6782, %v6910
        %v6975 = vmul.f32 %v6783, %v6911
        %v6976 = vmul.f32 %v6784, %v6912
        %v6977 = vmul.f32 %v6785, %v6913
        %v6978 = vmul.f32 %v6786, %v6914
        %v6979 = vmul.f32 %v6787, %v6915
        %v6980 = vmul.f32 %v6788, %v6916
        %v6981 = vmul.f32 %v6789, %v6917
        %v6982 = vmul.f32 %v6790, %v6918
        %v6983 = vmul.f32 %v6791, %v6919
        %v6984 = vmul.f32 %v6792, %v6920
        %v6985 = vmul.f32 %v6793, %v6921
        %v6986 = vmul.f32 %v6794, %v6922
        %v6987 = vmul.f32 %v6795, %v6923
        %v6988 = vmul.f32 %v6796, %v6924
        %v6989 = vmul.f32 %v6797, %v6925
        %v6990 = vmul.f32 %v6798, %v6926
        %v6991 = vmul.f32 %v6799, %v6927
        %v6992 = vmul.f32 %v6800, %v6928
        %v6993 = vmul.f32 %v6801, %v6929
        %v6994 = vmul.f32 %v6802, %v6930
        %v6995 = vmul.f32 %v6803, %v6931
        %v6996 = vmul.f32 %v6804, %v6932
        %v6997 = vmul.f32 %v6805, %v6933
        %v6998 = vmul.f32 %v6806, %v6934
        %v6999 = vmul.f32 %v6807, %v6935
        %v7000 = vmul.f32 %v6808, %v6936
        %v7001 = vmul.f32 %v6809, %v6937
        %v7002 = vmul.f32 %v6810, %v6938
        %v7003 = vmul.f32 %v6811, %v6939
        %v7004 = vmul.f32 %v6812, %v6940
        %v7005 = vmul.f32 %v6813, %v6941
        %v7006 = vmul.f32 %v6814, %v6942
        %v7007 = vmul.f32 %v6815, %v6943
        %v7008 = vmul.f32 %v6816, %v6944
        %v7009 = vmul.f32 %v6817, %v6945
        %v7010 = vmul.f32 %v6818, %v6946
        %v7011 = vmul.f32 %v6819, %v6947
        %v7012 = vmul.f32 %v6820, %v6948
        %v7013 = vmul.f32 %v6821, %v6949
        %v7014 = vmul.f32 %v6822, %v6950
        %v7015 = vmul.f32 %v6823, %v6951
        %v7016 = vmul.f32 %v6824, %v6952
        %v7017 = vmul.f32 %v6825, %v6953
        %v7018 = vmul.f32 %v6826, %v6954
        %v7019 = vmul.f32 %v6827, %v6955
        %v7020 = vmul.f32 %v6828, %v6956
        %v7021 = vmul.f32 %v6829, %v6957
        %v7022 = vmul.f32 %v6830, %v6958
        %v7023 = vmul.f32 %v6831, %v6959
        %v7024 = vmul.f32 %v6832, %v6960
        %v7025 = vmul.f32 %v6833, %v6961
        %v7026 = vmul.f32 %v6834, %v6962
        %v7027 = vmul.f32 %v6835, %v6963
        %v7028 = vld [vmem:[%s329] sm:$0xff]
        %v7029 = vld [vmem:[%s329 + $0x8] sm:$0xff]
        %v7030 = vld [vmem:[%s329 + $0x10] sm:$0xff]
        %v7031 = vld [vmem:[%s329 + $0x18] sm:$0xff]
        %v7032 = vld [vmem:[%s329 + $0x20] sm:$0xff]
        %v7033 = vld [vmem:[%s329 + $0x28] sm:$0xff]
        %v7034 = vld [vmem:[%s329 + $0x30] sm:$0xff]
        %v7035 = vld [vmem:[%s329 + $0x38] sm:$0xff]
        %v7036 = vld [vmem:[%s329 + $0x40] sm:$0xff]
        %v7037 = vld [vmem:[%s329 + $0x48] sm:$0xff]
        %v7038 = vld [vmem:[%s329 + $0x50] sm:$0xff]
        %v7039 = vld [vmem:[%s329 + $0x58] sm:$0xff]
        %v7040 = vld [vmem:[%s329 + $0x60] sm:$0xff]
        %v7041 = vld [vmem:[%s329 + $0x68] sm:$0xff]
        %v7042 = vld [vmem:[%s329 + $0x70] sm:$0xff]
        %v7043 = vld [vmem:[%s329 + $0x78] sm:$0xff]
        %v7044 = vld [vmem:[%s329 + $0x80] sm:$0xff]
        %v7045 = vld [vmem:[%s329 + $0x88] sm:$0xff]
        %v7046 = vld [vmem:[%s329 + $0x90] sm:$0xff]
        %v7047 = vld [vmem:[%s329 + $0x98] sm:$0xff]
        %v7048 = vld [vmem:[%s329 + $0xa0] sm:$0xff]
        %v7049 = vld [vmem:[%s329 + $0xa8] sm:$0xff]
        %v7050 = vld [vmem:[%s329 + $0xb0] sm:$0xff]
        %v7051 = vld [vmem:[%s329 + $0xb8] sm:$0xff]
        %v7052 = vld [vmem:[%s329 + $0xc0] sm:$0xff]
        %v7053 = vld [vmem:[%s329 + $0xc8] sm:$0xff]
        %v7054 = vld [vmem:[%s329 + $0xd0] sm:$0xff]
        %v7055 = vld [vmem:[%s329 + $0xd8] sm:$0xff]
        %v7056 = vld [vmem:[%s329 + $0xe0] sm:$0xff]
        %v7057 = vld [vmem:[%s329 + $0xe8] sm:$0xff]
        %v7058 = vld [vmem:[%s329 + $0xf0] sm:$0xff]
        %v7059 = vld [vmem:[%s329 + $0xf8] sm:$0xff]
        %v7060 = vld [vmem:[%s329 + $0x100] sm:$0xff]
        %v7061 = vld [vmem:[%s329 + $0x108] sm:$0xff]
        %v7062 = vld [vmem:[%s329 + $0x110] sm:$0xff]
        %v7063 = vld [vmem:[%s329 + $0x118] sm:$0xff]
        %v7064 = vld [vmem:[%s329 + $0x120] sm:$0xff]
        %v7065 = vld [vmem:[%s329 + $0x128] sm:$0xff]
        %v7066 = vld [vmem:[%s329 + $0x130] sm:$0xff]
        %v7067 = vld [vmem:[%s329 + $0x138] sm:$0xff]
        %v7068 = vld [vmem:[%s329 + $0x140] sm:$0xff]
        %v7069 = vld [vmem:[%s329 + $0x148] sm:$0xff]
        %v7070 = vld [vmem:[%s329 + $0x150] sm:$0xff]
        %v7071 = vld [vmem:[%s329 + $0x158] sm:$0xff]
        %v7072 = vld [vmem:[%s329 + $0x160] sm:$0xff]
        %v7073 = vld [vmem:[%s329 + $0x168] sm:$0xff]
        %v7074 = vld [vmem:[%s329 + $0x170] sm:$0xff]
        %v7075 = vld [vmem:[%s329 + $0x178] sm:$0xff]
        %v7076 = vld [vmem:[%s329 + $0x180] sm:$0xff]
        %v7077 = vld [vmem:[%s329 + $0x188] sm:$0xff]
        %v7078 = vld [vmem:[%s329 + $0x190] sm:$0xff]
        %v7079 = vld [vmem:[%s329 + $0x198] sm:$0xff]
        %v7080 = vld [vmem:[%s329 + $0x1a0] sm:$0xff]
        %v7081 = vld [vmem:[%s329 + $0x1a8] sm:$0xff]
        %v7082 = vld [vmem:[%s329 + $0x1b0] sm:$0xff]
        %v7083 = vld [vmem:[%s329 + $0x1b8] sm:$0xff]
        %v7084 = vld [vmem:[%s329 + $0x1c0] sm:$0xff]
        %v7085 = vld [vmem:[%s329 + $0x1c8] sm:$0xff]
        %v7086 = vld [vmem:[%s329 + $0x1d0] sm:$0xff]
        %v7087 = vld [vmem:[%s329 + $0x1d8] sm:$0xff]
        %v7088 = vld [vmem:[%s329 + $0x1e0] sm:$0xff]
        %v7089 = vld [vmem:[%s329 + $0x1e8] sm:$0xff]
        %v7090 = vld [vmem:[%s329 + $0x1f0] sm:$0xff]
        %v7091 = vld [vmem:[%s329 + $0x1f8] sm:$0xff]
        %v7092 = vmul.f32 %v6452, %v6964
        %v7093 = vmul.f32 %v6453, %v6965
        %v7094 = vmul.f32 %v6454, %v6966
        %v7095 = vmul.f32 %v6455, %v6967
        %v7096 = vmul.f32 %v6456, %v6968
        %v7097 = vmul.f32 %v6457, %v6969
        %v7098 = vmul.f32 %v6458, %v6970
        %v7099 = vmul.f32 %v6459, %v6971
        %v7100 = vmul.f32 %v6460, %v6972
        %v7101 = vmul.f32 %v6461, %v6973
        %v7102 = vmul.f32 %v6462, %v6974
        %v7103 = vmul.f32 %v6463, %v6975
        %v7104 = vmul.f32 %v6464, %v6976
        %v7105 = vmul.f32 %v6465, %v6977
        %v7106 = vmul.f32 %v6466, %v6978
        %v7107 = vmul.f32 %v6467, %v6979
        %v7108 = vmul.f32 %v6468, %v6980
        %v7109 = vmul.f32 %v6469, %v6981
        %v7110 = vmul.f32 %v6470, %v6982
        %v7111 = vmul.f32 %v6471, %v6983
        %v7112 = vmul.f32 %v6472, %v6984
        %v7113 = vmul.f32 %v6473, %v6985
        %v7114 = vmul.f32 %v6474, %v6986
        %v7115 = vmul.f32 %v6475, %v6987
        %v7116 = vmul.f32 %v6476, %v6988
        %v7117 = vmul.f32 %v6477, %v6989
        %v7118 = vmul.f32 %v6478, %v6990
        %v7119 = vmul.f32 %v6479, %v6991
        %v7120 = vmul.f32 %v6480, %v6992
        %v7121 = vmul.f32 %v6481, %v6993
        %v7122 = vmul.f32 %v6482, %v6994
        %v7123 = vmul.f32 %v6483, %v6995
        %v7124 = vmul.f32 %v6484, %v6996
        %v7125 = vmul.f32 %v6485, %v6997
        %v7126 = vmul.f32 %v6486, %v6998
        %v7127 = vmul.f32 %v6487, %v6999
        %v7128 = vmul.f32 %v6488, %v7000
        %v7129 = vmul.f32 %v6489, %v7001
        %v7130 = vmul.f32 %v6490, %v7002
        %v7131 = vmul.f32 %v6491, %v7003
        %v7132 = vmul.f32 %v6492, %v7004
        %v7133 = vmul.f32 %v6493, %v7005
        %v7134 = vmul.f32 %v6494, %v7006
        %v7135 = vmul.f32 %v6495, %v7007
        %v7136 = vmul.f32 %v6496, %v7008
        %v7137 = vmul.f32 %v6497, %v7009
        %v7138 = vmul.f32 %v6498, %v7010
        %v7139 = vmul.f32 %v6499, %v7011
        %v7140 = vmul.f32 %v6500, %v7012
        %v7141 = vmul.f32 %v6501, %v7013
        %v7142 = vmul.f32 %v6502, %v7014
        %v7143 = vmul.f32 %v6503, %v7015
        %v7144 = vmul.f32 %v6504, %v7016
        %v7145 = vmul.f32 %v6505, %v7017
        %v7146 = vmul.f32 %v6506, %v7018
        %v7147 = vmul.f32 %v6507, %v7019
        %v7148 = vmul.f32 %v6508, %v7020
        %v7149 = vmul.f32 %v6509, %v7021
        %v7150 = vmul.f32 %v6510, %v7022
        %v7151 = vmul.f32 %v6511, %v7023
        %v7152 = vmul.f32 %v6512, %v7024
        %v7153 = vmul.f32 %v6513, %v7025
        %v7154 = vmul.f32 %v6514, %v7026
        %v7155 = vmul.f32 %v6515, %v7027
        %v7156 = vsub.f32 %v7028, %v7092
        %v7157 = vsub.f32 %v7029, %v7093
        %v7158 = vsub.f32 %v7030, %v7094
        %v7159 = vsub.f32 %v7031, %v7095
        %v7160 = vsub.f32 %v7032, %v7096
        %v7161 = vsub.f32 %v7033, %v7097
        %v7162 = vsub.f32 %v7034, %v7098
        %v7163 = vsub.f32 %v7035, %v7099
        %v7164 = vsub.f32 %v7036, %v7100
        %v7165 = vsub.f32 %v7037, %v7101
        %v7166 = vsub.f32 %v7038, %v7102
        %v7167 = vsub.f32 %v7039, %v7103
        %v7168 = vsub.f32 %v7040, %v7104
        %v7169 = vsub.f32 %v7041, %v7105
        %v7170 = vsub.f32 %v7042, %v7106
        %v7171 = vsub.f32 %v7043, %v7107
        %v7172 = vsub.f32 %v7044, %v7108
        %v7173 = vsub.f32 %v7045, %v7109
        %v7174 = vsub.f32 %v7046, %v7110
        %v7175 = vsub.f32 %v7047, %v7111
        %v7176 = vsub.f32 %v7048, %v7112
        %v7177 = vsub.f32 %v7049, %v7113
        %v7178 = vsub.f32 %v7050, %v7114
        %v7179 = vsub.f32 %v7051, %v7115
        %v7180 = vsub.f32 %v7052, %v7116
        %v7181 = vsub.f32 %v7053, %v7117
        %v7182 = vsub.f32 %v7054, %v7118
        %v7183 = vsub.f32 %v7055, %v7119
        %v7184 = vsub.f32 %v7056, %v7120
        %v7185 = vsub.f32 %v7057, %v7121
        %v7186 = vsub.f32 %v7058, %v7122
        %v7187 = vsub.f32 %v7059, %v7123
        %v7188 = vsub.f32 %v7060, %v7124
        %v7189 = vsub.f32 %v7061, %v7125
        %v7190 = vsub.f32 %v7062, %v7126
        %v7191 = vsub.f32 %v7063, %v7127
        %v7192 = vsub.f32 %v7064, %v7128
        %v7193 = vsub.f32 %v7065, %v7129
        %v7194 = vsub.f32 %v7066, %v7130
        %v7195 = vsub.f32 %v7067, %v7131
        %v7196 = vsub.f32 %v7068, %v7132
        %v7197 = vsub.f32 %v7069, %v7133
        %v7198 = vsub.f32 %v7070, %v7134
        %v7199 = vsub.f32 %v7071, %v7135
        %v7200 = vsub.f32 %v7072, %v7136
        %v7201 = vsub.f32 %v7073, %v7137
        %v7202 = vsub.f32 %v7074, %v7138
        %v7203 = vsub.f32 %v7075, %v7139
        %v7204 = vsub.f32 %v7076, %v7140
        %v7205 = vsub.f32 %v7077, %v7141
        %v7206 = vsub.f32 %v7078, %v7142
        %v7207 = vsub.f32 %v7079, %v7143
        %v7208 = vsub.f32 %v7080, %v7144
        %v7209 = vsub.f32 %v7081, %v7145
        %v7210 = vsub.f32 %v7082, %v7146
        %v7211 = vsub.f32 %v7083, %v7147
        %v7212 = vsub.f32 %v7084, %v7148
        %v7213 = vsub.f32 %v7085, %v7149
        %v7214 = vsub.f32 %v7086, %v7150
        %v7215 = vsub.f32 %v7087, %v7151
        %v7216 = vsub.f32 %v7088, %v7152
        %v7217 = vsub.f32 %v7089, %v7153
        %v7218 = vsub.f32 %v7090, %v7154
        %v7219 = vsub.f32 %v7091, %v7155
        %7221 = vset.pattern.permute.xlu0 0
        %7222 = vperm.xlu0 %7221, %v6964
        %v7223 = vpop.permute.xlu0 %7222
        %7226 = vset.pattern.permute.xlu0 0
        %7227 = vperm.xlu0 %7226, %v6965
        %v7228 = vpop.permute.xlu0 %7227
        %7231 = vset.pattern.permute.xlu0 0
        %7232 = vperm.xlu0 %7231, %v6966
        %v7233 = vpop.permute.xlu0 %7232
        %7236 = vset.pattern.permute.xlu0 0
        %7237 = vperm.xlu0 %7236, %v6967
        %v7238 = vpop.permute.xlu0 %7237
        %7241 = vset.pattern.permute.xlu0 0
        %7242 = vperm.xlu0 %7241, %v6968
        %v7243 = vpop.permute.xlu0 %7242
        %7246 = vset.pattern.permute.xlu0 0
        %7247 = vperm.xlu0 %7246, %v6969
        %v7248 = vpop.permute.xlu0 %7247
        %7251 = vset.pattern.permute.xlu0 0
        %7252 = vperm.xlu0 %7251, %v6970
        %v7253 = vpop.permute.xlu0 %7252
        %7256 = vset.pattern.permute.xlu0 0
        %7257 = vperm.xlu0 %7256, %v6971
        %v7258 = vpop.permute.xlu0 %7257
        %7261 = vset.pattern.permute.xlu0 0
        %7262 = vperm.xlu0 %7261, %v6972
        %v7263 = vpop.permute.xlu0 %7262
        %7266 = vset.pattern.permute.xlu0 0
        %7267 = vperm.xlu0 %7266, %v6973
        %v7268 = vpop.permute.xlu0 %7267
        %7271 = vset.pattern.permute.xlu0 0
        %7272 = vperm.xlu0 %7271, %v6974
        %v7273 = vpop.permute.xlu0 %7272
        %7276 = vset.pattern.permute.xlu0 0
        %7277 = vperm.xlu0 %7276, %v6975
        %v7278 = vpop.permute.xlu0 %7277
        %7281 = vset.pattern.permute.xlu0 0
        %7282 = vperm.xlu0 %7281, %v6976
        %v7283 = vpop.permute.xlu0 %7282
        %7286 = vset.pattern.permute.xlu0 0
        %7287 = vperm.xlu0 %7286, %v6977
        %v7288 = vpop.permute.xlu0 %7287
        %7291 = vset.pattern.permute.xlu0 0
        %7292 = vperm.xlu0 %7291, %v6978
        %v7293 = vpop.permute.xlu0 %7292
        %7296 = vset.pattern.permute.xlu0 0
        %7297 = vperm.xlu0 %7296, %v6979
        %v7298 = vpop.permute.xlu0 %7297
        %7301 = vset.pattern.permute.xlu0 0
        %7302 = vperm.xlu0 %7301, %v6980
        %v7303 = vpop.permute.xlu0 %7302
        %7306 = vset.pattern.permute.xlu0 0
        %7307 = vperm.xlu0 %7306, %v6981
        %v7308 = vpop.permute.xlu0 %7307
        %7311 = vset.pattern.permute.xlu0 0
        %7312 = vperm.xlu0 %7311, %v6982
        %v7313 = vpop.permute.xlu0 %7312
        %7316 = vset.pattern.permute.xlu0 0
        %7317 = vperm.xlu0 %7316, %v6983
        %v7318 = vpop.permute.xlu0 %7317
        %7321 = vset.pattern.permute.xlu0 0
        %7322 = vperm.xlu0 %7321, %v6984
        %v7323 = vpop.permute.xlu0 %7322
        %7326 = vset.pattern.permute.xlu0 0
        %7327 = vperm.xlu0 %7326, %v6985
        %v7328 = vpop.permute.xlu0 %7327
        %7331 = vset.pattern.permute.xlu0 0
        %7332 = vperm.xlu0 %7331, %v6986
        %v7333 = vpop.permute.xlu0 %7332
        %7336 = vset.pattern.permute.xlu0 0
        %7337 = vperm.xlu0 %7336, %v6987
        %v7338 = vpop.permute.xlu0 %7337
        %7341 = vset.pattern.permute.xlu0 0
        %7342 = vperm.xlu0 %7341, %v6988
        %v7343 = vpop.permute.xlu0 %7342
        %7346 = vset.pattern.permute.xlu0 0
        %7347 = vperm.xlu0 %7346, %v6989
        %v7348 = vpop.permute.xlu0 %7347
        %7351 = vset.pattern.permute.xlu0 0
        %7352 = vperm.xlu0 %7351, %v6990
        %v7353 = vpop.permute.xlu0 %7352
        %7356 = vset.pattern.permute.xlu0 0
        %7357 = vperm.xlu0 %7356, %v6991
        %v7358 = vpop.permute.xlu0 %7357
        %7361 = vset.pattern.permute.xlu0 0
        %7362 = vperm.xlu0 %7361, %v6992
        %v7363 = vpop.permute.xlu0 %7362
        %7366 = vset.pattern.permute.xlu0 0
        %7367 = vperm.xlu0 %7366, %v6993
        %v7368 = vpop.permute.xlu0 %7367
        %7371 = vset.pattern.permute.xlu0 0
        %7372 = vperm.xlu0 %7371, %v6994
        %v7373 = vpop.permute.xlu0 %7372
        %7376 = vset.pattern.permute.xlu0 0
        %7377 = vperm.xlu0 %7376, %v6995
        %v7378 = vpop.permute.xlu0 %7377
        %7381 = vset.pattern.permute.xlu0 0
        %7382 = vperm.xlu0 %7381, %v6996
        %v7383 = vpop.permute.xlu0 %7382
        %7386 = vset.pattern.permute.xlu0 0
        %7387 = vperm.xlu0 %7386, %v6997
        %v7388 = vpop.permute.xlu0 %7387
        %7391 = vset.pattern.permute.xlu0 0
        %7392 = vperm.xlu0 %7391, %v6998
        %v7393 = vpop.permute.xlu0 %7392
        %7396 = vset.pattern.permute.xlu0 0
        %7397 = vperm.xlu0 %7396, %v6999
        %v7398 = vpop.permute.xlu0 %7397
        %7401 = vset.pattern.permute.xlu0 0
        %7402 = vperm.xlu0 %7401, %v7000
        %v7403 = vpop.permute.xlu0 %7402
        %7406 = vset.pattern.permute.xlu0 0
        %7407 = vperm.xlu0 %7406, %v7001
        %v7408 = vpop.permute.xlu0 %7407
        %7411 = vset.pattern.permute.xlu0 0
        %7412 = vperm.xlu0 %7411, %v7002
        %v7413 = vpop.permute.xlu0 %7412
        %7416 = vset.pattern.permute.xlu0 0
        %7417 = vperm.xlu0 %7416, %v7003
        %v7418 = vpop.permute.xlu0 %7417
        %7421 = vset.pattern.permute.xlu0 0
        %7422 = vperm.xlu0 %7421, %v7004
        %v7423 = vpop.permute.xlu0 %7422
        %7426 = vset.pattern.permute.xlu0 0
        %7427 = vperm.xlu0 %7426, %v7005
        %v7428 = vpop.permute.xlu0 %7427
        %7431 = vset.pattern.permute.xlu0 0
        %7432 = vperm.xlu0 %7431, %v7006
        %v7433 = vpop.permute.xlu0 %7432
        %7436 = vset.pattern.permute.xlu0 0
        %7437 = vperm.xlu0 %7436, %v7007
        %v7438 = vpop.permute.xlu0 %7437
        %7441 = vset.pattern.permute.xlu0 0
        %7442 = vperm.xlu0 %7441, %v7008
        %v7443 = vpop.permute.xlu0 %7442
        %7446 = vset.pattern.permute.xlu0 0
        %7447 = vperm.xlu0 %7446, %v7009
        %v7448 = vpop.permute.xlu0 %7447
        %7451 = vset.pattern.permute.xlu0 0
        %7452 = vperm.xlu0 %7451, %v7010
        %v7453 = vpop.permute.xlu0 %7452
        %7456 = vset.pattern.permute.xlu0 0
        %7457 = vperm.xlu0 %7456, %v7011
        %v7458 = vpop.permute.xlu0 %7457
        %7461 = vset.pattern.permute.xlu0 0
        %7462 = vperm.xlu0 %7461, %v7012
        %v7463 = vpop.permute.xlu0 %7462
        %7466 = vset.pattern.permute.xlu0 0
        %7467 = vperm.xlu0 %7466, %v7013
        %v7468 = vpop.permute.xlu0 %7467
        %7471 = vset.pattern.permute.xlu0 0
        %7472 = vperm.xlu0 %7471, %v7014
        %v7473 = vpop.permute.xlu0 %7472
        %7476 = vset.pattern.permute.xlu0 0
        %7477 = vperm.xlu0 %7476, %v7015
        %v7478 = vpop.permute.xlu0 %7477
        %7481 = vset.pattern.permute.xlu0 0
        %7482 = vperm.xlu0 %7481, %v7016
        %v7483 = vpop.permute.xlu0 %7482
        %7486 = vset.pattern.permute.xlu0 0
        %7487 = vperm.xlu0 %7486, %v7017
        %v7488 = vpop.permute.xlu0 %7487
        %7491 = vset.pattern.permute.xlu0 0
        %7492 = vperm.xlu0 %7491, %v7018
        %v7493 = vpop.permute.xlu0 %7492
        %7496 = vset.pattern.permute.xlu0 0
        %7497 = vperm.xlu0 %7496, %v7019
        %v7498 = vpop.permute.xlu0 %7497
        %7501 = vset.pattern.permute.xlu0 0
        %7502 = vperm.xlu0 %7501, %v7020
        %v7503 = vpop.permute.xlu0 %7502
        %7506 = vset.pattern.permute.xlu0 0
        %7507 = vperm.xlu0 %7506, %v7021
        %v7508 = vpop.permute.xlu0 %7507
        %7511 = vset.pattern.permute.xlu0 0
        %7512 = vperm.xlu0 %7511, %v7022
        %v7513 = vpop.permute.xlu0 %7512
        %7516 = vset.pattern.permute.xlu0 0
        %7517 = vperm.xlu0 %7516, %v7023
        %v7518 = vpop.permute.xlu0 %7517
        %7521 = vset.pattern.permute.xlu0 0
        %7522 = vperm.xlu0 %7521, %v7024
        %v7523 = vpop.permute.xlu0 %7522
        %7526 = vset.pattern.permute.xlu0 0
        %7527 = vperm.xlu0 %7526, %v7025
        %v7528 = vpop.permute.xlu0 %7527
        %7531 = vset.pattern.permute.xlu0 0
        %7532 = vperm.xlu0 %7531, %v7026
        %v7533 = vpop.permute.xlu0 %7532
        %7536 = vset.pattern.permute.xlu0 0
        %7537 = vperm.xlu0 %7536, %v7027
        %v7538 = vpop.permute.xlu0 %7537
        %v7540 = vmul.f32 %v3667, %v7223
        %v7541 = vmul.f32 %v3669, %v7223
        %v7542 = vmul.f32 %v4020, %v7223
        %v7543 = vmul.f32 %v4022, %v7223
        %v7544 = vmul.f32 %v4373, %v7223
        %v7545 = vmul.f32 %v4375, %v7223
        %v7546 = vmul.f32 %v4726, %v7223
        %v7547 = vmul.f32 %v3671, %v7228
        %v7548 = vmul.f32 %v3673, %v7228
        %v7549 = vmul.f32 %v4024, %v7228
        %v7550 = vmul.f32 %v4026, %v7228
        %v7551 = vmul.f32 %v4377, %v7228
        %v7552 = vmul.f32 %v4379, %v7228
        %v7553 = vmul.f32 %v4729, %v7228
        %v7554 = vmul.f32 %v3677, %v7233
        %v7555 = vmul.f32 %v3679, %v7233
        %v7556 = vmul.f32 %v4030, %v7233
        %v7557 = vmul.f32 %v4032, %v7233
        %v7558 = vmul.f32 %v4383, %v7233
        %v7559 = vmul.f32 %v4385, %v7233
        %v7560 = vmul.f32 %v4734, %v7233
        %v7561 = vmul.f32 %v3681, %v7238
        %v7562 = vmul.f32 %v3683, %v7238
        %v7563 = vmul.f32 %v4034, %v7238
        %v7564 = vmul.f32 %v4036, %v7238
        %v7565 = vmul.f32 %v4387, %v7238
        %v7566 = vmul.f32 %v4389, %v7238
        %v7567 = vmul.f32 %v4737, %v7238
        %v7568 = vmul.f32 %v3687, %v7243
        %v7569 = vmul.f32 %v3689, %v7243
        %v7570 = vmul.f32 %v4040, %v7243
        %v7571 = vmul.f32 %v4042, %v7243
        %v7572 = vmul.f32 %v4393, %v7243
        %v7573 = vmul.f32 %v4395, %v7243
        %v7574 = vmul.f32 %v4742, %v7243
        %v7575 = vmul.f32 %v3691, %v7248
        %v7576 = vmul.f32 %v3693, %v7248
        %v7577 = vmul.f32 %v4044, %v7248
        %v7578 = vmul.f32 %v4046, %v7248
        %v7579 = vmul.f32 %v4397, %v7248
        %v7580 = vmul.f32 %v4399, %v7248
        %v7581 = vmul.f32 %v4745, %v7248
        %v7582 = vmul.f32 %v3697, %v7253
        %v7583 = vmul.f32 %v3699, %v7253
        %v7584 = vmul.f32 %v4050, %v7253
        %v7585 = vmul.f32 %v4052, %v7253
        %v7586 = vmul.f32 %v4403, %v7253
        %v7587 = vmul.f32 %v4405, %v7253
        %v7588 = vmul.f32 %v4750, %v7253
        %v7589 = vmul.f32 %v3701, %v7258
        %v7590 = vmul.f32 %v3703, %v7258
        %v7591 = vmul.f32 %v4054, %v7258
        %v7592 = vmul.f32 %v4056, %v7258
        %v7593 = vmul.f32 %v4407, %v7258
        %v7594 = vmul.f32 %v4409, %v7258
        %v7595 = vmul.f32 %v4753, %v7258
        %v7596 = vmul.f32 %v3707, %v7263
        %v7597 = vmul.f32 %v3709, %v7263
        %v7598 = vmul.f32 %v4060, %v7263
        %v7599 = vmul.f32 %v4062, %v7263
        %v7600 = vmul.f32 %v4413, %v7263
        %v7601 = vmul.f32 %v4415, %v7263
        %v7602 = vmul.f32 %v4758, %v7263
        %v7603 = vmul.f32 %v3711, %v7268
        %v7604 = vmul.f32 %v3713, %v7268
        %v7605 = vmul.f32 %v4064, %v7268
        %v7606 = vmul.f32 %v4066, %v7268
        %v7607 = vmul.f32 %v4417, %v7268
        %v7608 = vmul.f32 %v4419, %v7268
        %v7609 = vmul.f32 %v4761, %v7268
        %v7610 = vmul.f32 %v3717, %v7273
        %v7611 = vmul.f32 %v3719, %v7273
        %v7612 = vmul.f32 %v4070, %v7273
        %v7613 = vmul.f32 %v4072, %v7273
        %v7614 = vmul.f32 %v4423, %v7273
        %v7615 = vmul.f32 %v4425, %v7273
        %v7616 = vmul.f32 %v4766, %v7273
        %v7617 = vmul.f32 %v3721, %v7278
        %v7618 = vmul.f32 %v3723, %v7278
        %v7619 = vmul.f32 %v4074, %v7278
        %v7620 = vmul.f32 %v4076, %v7278
        %v7621 = vmul.f32 %v4427, %v7278
        %v7622 = vmul.f32 %v4429, %v7278
        %v7623 = vmul.f32 %v4769, %v7278
        %v7624 = vmul.f32 %v3727, %v7283
        %v7625 = vmul.f32 %v3729, %v7283
        %v7626 = vmul.f32 %v4080, %v7283
        %v7627 = vmul.f32 %v4082, %v7283
        %v7628 = vmul.f32 %v4433, %v7283
        %v7629 = vmul.f32 %v4435, %v7283
        %v7630 = vmul.f32 %v4774, %v7283
        %v7631 = vmul.f32 %v3731, %v7288
        %v7632 = vmul.f32 %v3733, %v7288
        %v7633 = vmul.f32 %v4084, %v7288
        %v7634 = vmul.f32 %v4086, %v7288
        %v7635 = vmul.f32 %v4437, %v7288
        %v7636 = vmul.f32 %v4439, %v7288
        %v7637 = vmul.f32 %v4777, %v7288
        %v7638 = vmul.f32 %v3737, %v7293
        %v7639 = vmul.f32 %v3739, %v7293
        %v7640 = vmul.f32 %v4090, %v7293
        %v7641 = vmul.f32 %v4092, %v7293
        %v7642 = vmul.f32 %v4443, %v7293
        %v7643 = vmul.f32 %v4445, %v7293
        %v7644 = vmul.f32 %v4782, %v7293
        %v7645 = vmul.f32 %v3741, %v7298
        %v7646 = vmul.f32 %v3743, %v7298
        %v7647 = vmul.f32 %v4094, %v7298
        %v7648 = vmul.f32 %v4096, %v7298
        %v7649 = vmul.f32 %v4447, %v7298
        %v7650 = vmul.f32 %v4449, %v7298
        %v7651 = vmul.f32 %v4785, %v7298
        %v7652 = vmul.f32 %v3747, %v7303
        %v7653 = vmul.f32 %v3749, %v7303
        %v7654 = vmul.f32 %v4100, %v7303
        %v7655 = vmul.f32 %v4102, %v7303
        %v7656 = vmul.f32 %v4453, %v7303
        %v7657 = vmul.f32 %v4455, %v7303
        %v7658 = vmul.f32 %v4790, %v7303
        %v7659 = vmul.f32 %v3751, %v7308
        %v7660 = vmul.f32 %v3753, %v7308
        %v7661 = vmul.f32 %v4104, %v7308
        %v7662 = vmul.f32 %v4106, %v7308
        %v7663 = vmul.f32 %v4457, %v7308
        %v7664 = vmul.f32 %v4459, %v7308
        %v7665 = vmul.f32 %v4793, %v7308
        %v7666 = vmul.f32 %v3757, %v7313
        %v7667 = vmul.f32 %v3759, %v7313
        %v7668 = vmul.f32 %v4110, %v7313
        %v7669 = vmul.f32 %v4112, %v7313
        %v7670 = vmul.f32 %v4463, %v7313
        %v7671 = vmul.f32 %v4465, %v7313
        %v7672 = vmul.f32 %v4798, %v7313
        %v7673 = vmul.f32 %v3761, %v7318
        %v7674 = vmul.f32 %v3763, %v7318
        %v7675 = vmul.f32 %v4114, %v7318
        %v7676 = vmul.f32 %v4116, %v7318
        %v7677 = vmul.f32 %v4467, %v7318
        %v7678 = vmul.f32 %v4469, %v7318
        %v7679 = vmul.f32 %v4801, %v7318
        %v7680 = vmul.f32 %v3767, %v7323
        %v7681 = vmul.f32 %v3769, %v7323
        %v7682 = vmul.f32 %v4120, %v7323
        %v7683 = vmul.f32 %v4122, %v7323
        %v7684 = vmul.f32 %v4473, %v7323
        %v7685 = vmul.f32 %v4475, %v7323
        %v7686 = vmul.f32 %v4806, %v7323
        %v7687 = vmul.f32 %v3771, %v7328
        %v7688 = vmul.f32 %v3773, %v7328
        %v7689 = vmul.f32 %v4124, %v7328
        %v7690 = vmul.f32 %v4126, %v7328
        %v7691 = vmul.f32 %v4477, %v7328
        %v7692 = vmul.f32 %v4479, %v7328
        %v7693 = vmul.f32 %v4809, %v7328
        %v7694 = vmul.f32 %v3777, %v7333
        %v7695 = vmul.f32 %v3779, %v7333
        %v7696 = vmul.f32 %v4130, %v7333
        %v7697 = vmul.f32 %v4132, %v7333
        %v7698 = vmul.f32 %v4483, %v7333
        %v7699 = vmul.f32 %v4485, %v7333
        %v7700 = vmul.f32 %v4814, %v7333
        %v7701 = vmul.f32 %v3781, %v7338
        %v7702 = vmul.f32 %v3783, %v7338
        %v7703 = vmul.f32 %v4134, %v7338
        %v7704 = vmul.f32 %v4136, %v7338
        %v7705 = vmul.f32 %v4487, %v7338
        %v7706 = vmul.f32 %v4489, %v7338
        %v7707 = vmul.f32 %v4817, %v7338
        %v7708 = vmul.f32 %v3787, %v7343
        %v7709 = vmul.f32 %v3789, %v7343
        %v7710 = vmul.f32 %v4140, %v7343
        %v7711 = vmul.f32 %v4142, %v7343
        %v7712 = vmul.f32 %v4493, %v7343
        %v7713 = vmul.f32 %v4495, %v7343
        %v7714 = vmul.f32 %v4822, %v7343
        %v7715 = vmul.f32 %v3791, %v7348
        %v7716 = vmul.f32 %v3793, %v7348
        %v7717 = vmul.f32 %v4144, %v7348
        %v7718 = vmul.f32 %v4146, %v7348
        %v7719 = vmul.f32 %v4497, %v7348
        %v7720 = vmul.f32 %v4499, %v7348
        %v7721 = vmul.f32 %v4825, %v7348
        %v7722 = vmul.f32 %v3797, %v7353
        %v7723 = vmul.f32 %v3799, %v7353
        %v7724 = vmul.f32 %v4150, %v7353
        %v7725 = vmul.f32 %v4152, %v7353
        %v7726 = vmul.f32 %v4503, %v7353
        %v7727 = vmul.f32 %v4505, %v7353
        %v7728 = vmul.f32 %v4830, %v7353
        %v7729 = vmul.f32 %v3801, %v7358
        %v7730 = vmul.f32 %v3803, %v7358
        %v7731 = vmul.f32 %v4154, %v7358
        %v7732 = vmul.f32 %v4156, %v7358
        %v7733 = vmul.f32 %v4507, %v7358
        %v7734 = vmul.f32 %v4509, %v7358
        %v7735 = vmul.f32 %v4833, %v7358
        %v7736 = vmul.f32 %v3807, %v7363
        %v7737 = vmul.f32 %v3809, %v7363
        %v7738 = vmul.f32 %v4160, %v7363
        %v7739 = vmul.f32 %v4162, %v7363
        %v7740 = vmul.f32 %v4513, %v7363
        %v7741 = vmul.f32 %v4515, %v7363
        %v7742 = vmul.f32 %v4838, %v7363
        %v7743 = vmul.f32 %v3811, %v7368
        %v7744 = vmul.f32 %v3813, %v7368
        %v7745 = vmul.f32 %v4164, %v7368
        %v7746 = vmul.f32 %v4166, %v7368
        %v7747 = vmul.f32 %v4517, %v7368
        %v7748 = vmul.f32 %v4519, %v7368
        %v7749 = vmul.f32 %v4841, %v7368
        %v7750 = vmul.f32 %v3817, %v7373
        %v7751 = vmul.f32 %v3819, %v7373
        %v7752 = vmul.f32 %v4170, %v7373
        %v7753 = vmul.f32 %v4172, %v7373
        %v7754 = vmul.f32 %v4523, %v7373
        %v7755 = vmul.f32 %v4525, %v7373
        %v7756 = vmul.f32 %v4846, %v7373
        %v7757 = vmul.f32 %v3821, %v7378
        %v7758 = vmul.f32 %v3823, %v7378
        %v7759 = vmul.f32 %v4174, %v7378
        %v7760 = vmul.f32 %v4176, %v7378
        %v7761 = vmul.f32 %v4527, %v7378
        %v7762 = vmul.f32 %v4529, %v7378
        %v7763 = vmul.f32 %v4849, %v7378
        %v7764 = vmul.f32 %v3827, %v7383
        %v7765 = vmul.f32 %v3829, %v7383
        %v7766 = vmul.f32 %v4180, %v7383
        %v7767 = vmul.f32 %v4182, %v7383
        %v7768 = vmul.f32 %v4533, %v7383
        %v7769 = vmul.f32 %v4535, %v7383
        %v7770 = vmul.f32 %v4854, %v7383
        %v7771 = vmul.f32 %v3831, %v7388
        %v7772 = vmul.f32 %v3833, %v7388
        %v7773 = vmul.f32 %v4184, %v7388
        %v7774 = vmul.f32 %v4186, %v7388
        %v7775 = vmul.f32 %v4537, %v7388
        %v7776 = vmul.f32 %v4539, %v7388
        %v7777 = vmul.f32 %v4857, %v7388
        %v7778 = vmul.f32 %v3837, %v7393
        %v7779 = vmul.f32 %v3839, %v7393
        %v7780 = vmul.f32 %v4190, %v7393
        %v7781 = vmul.f32 %v4192, %v7393
        %v7782 = vmul.f32 %v4543, %v7393
        %v7783 = vmul.f32 %v4545, %v7393
        %v7784 = vmul.f32 %v4862, %v7393
        %v7785 = vmul.f32 %v3841, %v7398
        %v7786 = vmul.f32 %v3843, %v7398
        %v7787 = vmul.f32 %v4194, %v7398
        %v7788 = vmul.f32 %v4196, %v7398
        %v7789 = vmul.f32 %v4547, %v7398
        %v7790 = vmul.f32 %v4549, %v7398
        %v7791 = vmul.f32 %v4865, %v7398
        %v7792 = vmul.f32 %v3847, %v7403
        %v7793 = vmul.f32 %v3849, %v7403
        %v7794 = vmul.f32 %v4200, %v7403
        %v7795 = vmul.f32 %v4202, %v7403
        %v7796 = vmul.f32 %v4553, %v7403
        %v7797 = vmul.f32 %v4555, %v7403
        %v7798 = vmul.f32 %v4870, %v7403
        %v7799 = vmul.f32 %v3851, %v7408
        %v7800 = vmul.f32 %v3853, %v7408
        %v7801 = vmul.f32 %v4204, %v7408
        %v7802 = vmul.f32 %v4206, %v7408
        %v7803 = vmul.f32 %v4557, %v7408
        %v7804 = vmul.f32 %v4559, %v7408
        %v7805 = vmul.f32 %v4873, %v7408
        %v7806 = vmul.f32 %v3857, %v7413
        %v7807 = vmul.f32 %v3859, %v7413
        %v7808 = vmul.f32 %v4210, %v7413
        %v7809 = vmul.f32 %v4212, %v7413
        %v7810 = vmul.f32 %v4563, %v7413
        %v7811 = vmul.f32 %v4565, %v7413
        %v7812 = vmul.f32 %v4878, %v7413
        %v7813 = vmul.f32 %v3861, %v7418
        %v7814 = vmul.f32 %v3863, %v7418
        %v7815 = vmul.f32 %v4214, %v7418
        %v7816 = vmul.f32 %v4216, %v7418
        %v7817 = vmul.f32 %v4567, %v7418
        %v7818 = vmul.f32 %v4569, %v7418
        %v7819 = vmul.f32 %v4881, %v7418
        %v7820 = vmul.f32 %v3867, %v7423
        %v7821 = vmul.f32 %v3869, %v7423
        %v7822 = vmul.f32 %v4220, %v7423
        %v7823 = vmul.f32 %v4222, %v7423
        %v7824 = vmul.f32 %v4573, %v7423
        %v7825 = vmul.f32 %v4575, %v7423
        %v7826 = vmul.f32 %v4886, %v7423
        %v7827 = vmul.f32 %v3871, %v7428
        %v7828 = vmul.f32 %v3873, %v7428
        %v7829 = vmul.f32 %v4224, %v7428
        %v7830 = vmul.f32 %v4226, %v7428
        %v7831 = vmul.f32 %v4577, %v7428
        %v7832 = vmul.f32 %v4579, %v7428
        %v7833 = vmul.f32 %v4889, %v7428
        %v7834 = vmul.f32 %v3877, %v7433
        %v7835 = vmul.f32 %v3879, %v7433
        %v7836 = vmul.f32 %v4230, %v7433
        %v7837 = vmul.f32 %v4232, %v7433
        %v7838 = vmul.f32 %v4583, %v7433
        %v7839 = vmul.f32 %v4585, %v7433
        %v7840 = vmul.f32 %v4894, %v7433
        %v7841 = vmul.f32 %v3881, %v7438
        %v7842 = vmul.f32 %v3883, %v7438
        %v7843 = vmul.f32 %v4234, %v7438
        %v7844 = vmul.f32 %v4236, %v7438
        %v7845 = vmul.f32 %v4587, %v7438
        %v7846 = vmul.f32 %v4589, %v7438
        %v7847 = vmul.f32 %v4897, %v7438
        %v7848 = vmul.f32 %v3887, %v7443
        %v7849 = vmul.f32 %v3889, %v7443
        %v7850 = vmul.f32 %v4240, %v7443
        %v7851 = vmul.f32 %v4242, %v7443
        %v7852 = vmul.f32 %v4593, %v7443
        %v7853 = vmul.f32 %v4595, %v7443
        %v7854 = vmul.f32 %v4902, %v7443
        %v7855 = vmul.f32 %v3891, %v7448
        %v7856 = vmul.f32 %v3893, %v7448
        %v7857 = vmul.f32 %v4244, %v7448
        %v7858 = vmul.f32 %v4246, %v7448
        %v7859 = vmul.f32 %v4597, %v7448
        %v7860 = vmul.f32 %v4599, %v7448
        %v7861 = vmul.f32 %v4905, %v7448
        %v7862 = vmul.f32 %v3897, %v7453
        %v7863 = vmul.f32 %v3899, %v7453
        %v7864 = vmul.f32 %v4250, %v7453
        %v7865 = vmul.f32 %v4252, %v7453
        %v7866 = vmul.f32 %v4603, %v7453
        %v7867 = vmul.f32 %v4605, %v7453
        %v7868 = vmul.f32 %v4910, %v7453
        %v7869 = vmul.f32 %v3901, %v7458
        %v7870 = vmul.f32 %v3903, %v7458
        %v7871 = vmul.f32 %v4254, %v7458
        %v7872 = vmul.f32 %v4256, %v7458
        %v7873 = vmul.f32 %v4607, %v7458
        %v7874 = vmul.f32 %v4609, %v7458
        %v7875 = vmul.f32 %v4913, %v7458
        %v7876 = vmul.f32 %v3907, %v7463
        %v7877 = vmul.f32 %v3909, %v7463
        %v7878 = vmul.f32 %v4260, %v7463
        %v7879 = vmul.f32 %v4262, %v7463
        %v7880 = vmul.f32 %v4613, %v7463
        %v7881 = vmul.f32 %v4615, %v7463
        %v7882 = vmul.f32 %v4918, %v7463
        %v7883 = vmul.f32 %v3911, %v7468
        %v7884 = vmul.f32 %v3913, %v7468
        %v7885 = vmul.f32 %v4264, %v7468
        %v7886 = vmul.f32 %v4266, %v7468
        %v7887 = vmul.f32 %v4617, %v7468
        %v7888 = vmul.f32 %v4619, %v7468
        %v7889 = vmul.f32 %v4921, %v7468
        %v7890 = vmul.f32 %v3917, %v7473
        %v7891 = vmul.f32 %v3919, %v7473
        %v7892 = vmul.f32 %v4270, %v7473
        %v7893 = vmul.f32 %v4272, %v7473
        %v7894 = vmul.f32 %v4623, %v7473
        %v7895 = vmul.f32 %v4625, %v7473
        %v7896 = vmul.f32 %v4926, %v7473
        %v7897 = vmul.f32 %v3921, %v7478
        %v7898 = vmul.f32 %v3923, %v7478
        %v7899 = vmul.f32 %v4274, %v7478
        %v7900 = vmul.f32 %v4276, %v7478
        %v7901 = vmul.f32 %v4627, %v7478
        %v7902 = vmul.f32 %v4629, %v7478
        %v7903 = vmul.f32 %v4929, %v7478
        %v7904 = vmul.f32 %v3927, %v7483
        %v7905 = vmul.f32 %v3929, %v7483
        %v7906 = vmul.f32 %v4280, %v7483
        %v7907 = vmul.f32 %v4282, %v7483
        %v7908 = vmul.f32 %v4633, %v7483
        %v7909 = vmul.f32 %v4635, %v7483
        %v7910 = vmul.f32 %v4934, %v7483
        %v7911 = vmul.f32 %v3931, %v7488
        %v7912 = vmul.f32 %v3933, %v7488
        %v7913 = vmul.f32 %v4284, %v7488
        %v7914 = vmul.f32 %v4286, %v7488
        %v7915 = vmul.f32 %v4637, %v7488
        %v7916 = vmul.f32 %v4639, %v7488
        %v7917 = vmul.f32 %v4937, %v7488
        %v7918 = vmul.f32 %v3937, %v7493
        %v7919 = vmul.f32 %v3939, %v7493
        %v7920 = vmul.f32 %v4290, %v7493
        %v7921 = vmul.f32 %v4292, %v7493
        %v7922 = vmul.f32 %v4643, %v7493
        %v7923 = vmul.f32 %v4645, %v7493
        %v7924 = vmul.f32 %v4942, %v7493
        %v7925 = vmul.f32 %v3941, %v7498
        %v7926 = vmul.f32 %v3943, %v7498
        %v7927 = vmul.f32 %v4294, %v7498
        %v7928 = vmul.f32 %v4296, %v7498
        %v7929 = vmul.f32 %v4647, %v7498
        %v7930 = vmul.f32 %v4649, %v7498
        %v7931 = vmul.f32 %v4945, %v7498
        %v7932 = vmul.f32 %v3947, %v7503
        %v7933 = vmul.f32 %v3949, %v7503
        %v7934 = vmul.f32 %v4300, %v7503
        %v7935 = vmul.f32 %v4302, %v7503
        %v7936 = vmul.f32 %v4653, %v7503
        %v7937 = vmul.f32 %v4655, %v7503
        %v7938 = vmul.f32 %v4950, %v7503
        %v7939 = vmul.f32 %v3951, %v7508
        %v7940 = vmul.f32 %v3953, %v7508
        %v7941 = vmul.f32 %v4304, %v7508
        %v7942 = vmul.f32 %v4306, %v7508
        %v7943 = vmul.f32 %v4657, %v7508
        %v7944 = vmul.f32 %v4659, %v7508
        %v7945 = vmul.f32 %v4953, %v7508
        %v7946 = vmul.f32 %v3957, %v7513
        %v7947 = vmul.f32 %v3959, %v7513
        %v7948 = vmul.f32 %v4310, %v7513
        %v7949 = vmul.f32 %v4312, %v7513
        %v7950 = vmul.f32 %v4663, %v7513
        %v7951 = vmul.f32 %v4665, %v7513
        %v7952 = vmul.f32 %v4958, %v7513
        %v7953 = vmul.f32 %v3961, %v7518
        %v7954 = vmul.f32 %v3963, %v7518
        %v7955 = vmul.f32 %v4314, %v7518
        %v7956 = vmul.f32 %v4316, %v7518
        %v7957 = vmul.f32 %v4667, %v7518
        %v7958 = vmul.f32 %v4669, %v7518
        %v7959 = vmul.f32 %v4961, %v7518
        %v7960 = vmul.f32 %v3967, %v7523
        %v7961 = vmul.f32 %v3969, %v7523
        %v7962 = vmul.f32 %v4320, %v7523
        %v7963 = vmul.f32 %v4322, %v7523
        %v7964 = vmul.f32 %v4673, %v7523
        %v7965 = vmul.f32 %v4675, %v7523
        %v7966 = vmul.f32 %v4966, %v7523
        %v7967 = vmul.f32 %v3971, %v7528
        %v7968 = vmul.f32 %v3973, %v7528
        %v7969 = vmul.f32 %v4324, %v7528
        %v7970 = vmul.f32 %v4326, %v7528
        %v7971 = vmul.f32 %v4677, %v7528
        %v7972 = vmul.f32 %v4679, %v7528
        %v7973 = vmul.f32 %v4969, %v7528
        %v7974 = vmul.f32 %v3977, %v7533
        %v7975 = vmul.f32 %v3979, %v7533
        %v7976 = vmul.f32 %v4330, %v7533
        %v7977 = vmul.f32 %v4332, %v7533
        %v7978 = vmul.f32 %v4683, %v7533
        %v7979 = vmul.f32 %v4685, %v7533
        %v7980 = vmul.f32 %v4974, %v7533
        %v7981 = vmul.f32 %v3981, %v7538
        %v7982 = vmul.f32 %v3983, %v7538
        %v7983 = vmul.f32 %v4334, %v7538
        %v7984 = vmul.f32 %v4336, %v7538
        %v7985 = vmul.f32 %v4687, %v7538
        %v7986 = vmul.f32 %v4689, %v7538
        %v7987 = vmul.f32 %v4977, %v7538
        %7989 = vset.pattern.permute.xlu0 0
        %7990 = vperm.xlu0 %7989, %v7156
        %v7991 = vpop.permute.xlu0 %7990
        %7994 = vset.pattern.permute.xlu0 0
        %7995 = vperm.xlu0 %7994, %v7157
        %v7996 = vpop.permute.xlu0 %7995
        %7999 = vset.pattern.permute.xlu0 0
        %8000 = vperm.xlu0 %7999, %v7158
        %v8001 = vpop.permute.xlu0 %8000
        %8004 = vset.pattern.permute.xlu0 0
        %8005 = vperm.xlu0 %8004, %v7159
        %v8006 = vpop.permute.xlu0 %8005
        %8009 = vset.pattern.permute.xlu0 0
        %8010 = vperm.xlu0 %8009, %v7160
        %v8011 = vpop.permute.xlu0 %8010
        %8014 = vset.pattern.permute.xlu0 0
        %8015 = vperm.xlu0 %8014, %v7161
        %v8016 = vpop.permute.xlu0 %8015
        %8019 = vset.pattern.permute.xlu0 0
        %8020 = vperm.xlu0 %8019, %v7162
        %v8021 = vpop.permute.xlu0 %8020
        %8024 = vset.pattern.permute.xlu0 0
        %8025 = vperm.xlu0 %8024, %v7163
        %v8026 = vpop.permute.xlu0 %8025
        %8029 = vset.pattern.permute.xlu0 0
        %8030 = vperm.xlu0 %8029, %v7164
        %v8031 = vpop.permute.xlu0 %8030
        %8034 = vset.pattern.permute.xlu0 0
        %8035 = vperm.xlu0 %8034, %v7165
        %v8036 = vpop.permute.xlu0 %8035
        %8039 = vset.pattern.permute.xlu0 0
        %8040 = vperm.xlu0 %8039, %v7166
        %v8041 = vpop.permute.xlu0 %8040
        %8044 = vset.pattern.permute.xlu0 0
        %8045 = vperm.xlu0 %8044, %v7167
        %v8046 = vpop.permute.xlu0 %8045
        %8049 = vset.pattern.permute.xlu0 0
        %8050 = vperm.xlu0 %8049, %v7168
        %v8051 = vpop.permute.xlu0 %8050
        %8054 = vset.pattern.permute.xlu0 0
        %8055 = vperm.xlu0 %8054, %v7169
        %v8056 = vpop.permute.xlu0 %8055
        %8059 = vset.pattern.permute.xlu0 0
        %8060 = vperm.xlu0 %8059, %v7170
        %v8061 = vpop.permute.xlu0 %8060
        %8064 = vset.pattern.permute.xlu0 0
        %8065 = vperm.xlu0 %8064, %v7171
        %v8066 = vpop.permute.xlu0 %8065
        %8069 = vset.pattern.permute.xlu0 0
        %8070 = vperm.xlu0 %8069, %v7172
        %v8071 = vpop.permute.xlu0 %8070
        %8074 = vset.pattern.permute.xlu0 0
        %8075 = vperm.xlu0 %8074, %v7173
        %v8076 = vpop.permute.xlu0 %8075
        %8079 = vset.pattern.permute.xlu0 0
        %8080 = vperm.xlu0 %8079, %v7174
        %v8081 = vpop.permute.xlu0 %8080
        %8084 = vset.pattern.permute.xlu0 0
        %8085 = vperm.xlu0 %8084, %v7175
        %v8086 = vpop.permute.xlu0 %8085
        %8089 = vset.pattern.permute.xlu0 0
        %8090 = vperm.xlu0 %8089, %v7176
        %v8091 = vpop.permute.xlu0 %8090
        %8094 = vset.pattern.permute.xlu0 0
        %8095 = vperm.xlu0 %8094, %v7177
        %v8096 = vpop.permute.xlu0 %8095
        %8099 = vset.pattern.permute.xlu0 0
        %8100 = vperm.xlu0 %8099, %v7178
        %v8101 = vpop.permute.xlu0 %8100
        %8104 = vset.pattern.permute.xlu0 0
        %8105 = vperm.xlu0 %8104, %v7179
        %v8106 = vpop.permute.xlu0 %8105
        %8109 = vset.pattern.permute.xlu0 0
        %8110 = vperm.xlu0 %8109, %v7180
        %v8111 = vpop.permute.xlu0 %8110
        %8114 = vset.pattern.permute.xlu0 0
        %8115 = vperm.xlu0 %8114, %v7181
        %v8116 = vpop.permute.xlu0 %8115
        %8119 = vset.pattern.permute.xlu0 0
        %8120 = vperm.xlu0 %8119, %v7182
        %v8121 = vpop.permute.xlu0 %8120
        %8124 = vset.pattern.permute.xlu0 0
        %8125 = vperm.xlu0 %8124, %v7183
        %v8126 = vpop.permute.xlu0 %8125
        %8129 = vset.pattern.permute.xlu0 0
        %8130 = vperm.xlu0 %8129, %v7184
        %v8131 = vpop.permute.xlu0 %8130
        %8134 = vset.pattern.permute.xlu0 0
        %8135 = vperm.xlu0 %8134, %v7185
        %v8136 = vpop.permute.xlu0 %8135
        %8139 = vset.pattern.permute.xlu0 0
        %8140 = vperm.xlu0 %8139, %v7186
        %v8141 = vpop.permute.xlu0 %8140
        %8144 = vset.pattern.permute.xlu0 0
        %8145 = vperm.xlu0 %8144, %v7187
        %v8146 = vpop.permute.xlu0 %8145
        %8149 = vset.pattern.permute.xlu0 0
        %8150 = vperm.xlu0 %8149, %v7188
        %v8151 = vpop.permute.xlu0 %8150
        %8154 = vset.pattern.permute.xlu0 0
        %8155 = vperm.xlu0 %8154, %v7189
        %v8156 = vpop.permute.xlu0 %8155
        %8159 = vset.pattern.permute.xlu0 0
        %8160 = vperm.xlu0 %8159, %v7190
        %v8161 = vpop.permute.xlu0 %8160
        %8164 = vset.pattern.permute.xlu0 0
        %8165 = vperm.xlu0 %8164, %v7191
        %v8166 = vpop.permute.xlu0 %8165
        %8169 = vset.pattern.permute.xlu0 0
        %8170 = vperm.xlu0 %8169, %v7192
        %v8171 = vpop.permute.xlu0 %8170
        %8174 = vset.pattern.permute.xlu0 0
        %8175 = vperm.xlu0 %8174, %v7193
        %v8176 = vpop.permute.xlu0 %8175
        %8179 = vset.pattern.permute.xlu0 0
        %8180 = vperm.xlu0 %8179, %v7194
        %v8181 = vpop.permute.xlu0 %8180
        %8184 = vset.pattern.permute.xlu0 0
        %8185 = vperm.xlu0 %8184, %v7195
        %v8186 = vpop.permute.xlu0 %8185
        %8189 = vset.pattern.permute.xlu0 0
        %8190 = vperm.xlu0 %8189, %v7196
        %v8191 = vpop.permute.xlu0 %8190
        %8194 = vset.pattern.permute.xlu0 0
        %8195 = vperm.xlu0 %8194, %v7197
        %v8196 = vpop.permute.xlu0 %8195
        %8199 = vset.pattern.permute.xlu0 0
        %8200 = vperm.xlu0 %8199, %v7198
        %v8201 = vpop.permute.xlu0 %8200
        %8204 = vset.pattern.permute.xlu0 0
        %8205 = vperm.xlu0 %8204, %v7199
        %v8206 = vpop.permute.xlu0 %8205
        %8209 = vset.pattern.permute.xlu0 0
        %8210 = vperm.xlu0 %8209, %v7200
        %v8211 = vpop.permute.xlu0 %8210
        %8214 = vset.pattern.permute.xlu0 0
        %8215 = vperm.xlu0 %8214, %v7201
        %v8216 = vpop.permute.xlu0 %8215
        %8219 = vset.pattern.permute.xlu0 0
        %8220 = vperm.xlu0 %8219, %v7202
        %v8221 = vpop.permute.xlu0 %8220
        %8224 = vset.pattern.permute.xlu0 0
        %8225 = vperm.xlu0 %8224, %v7203
        %v8226 = vpop.permute.xlu0 %8225
        %8229 = vset.pattern.permute.xlu0 0
        %8230 = vperm.xlu0 %8229, %v7204
        %v8231 = vpop.permute.xlu0 %8230
        %8234 = vset.pattern.permute.xlu0 0
        %8235 = vperm.xlu0 %8234, %v7205
        %v8236 = vpop.permute.xlu0 %8235
        %8239 = vset.pattern.permute.xlu0 0
        %8240 = vperm.xlu0 %8239, %v7206
        %v8241 = vpop.permute.xlu0 %8240
        %8244 = vset.pattern.permute.xlu0 0
        %8245 = vperm.xlu0 %8244, %v7207
        %v8246 = vpop.permute.xlu0 %8245
        %8249 = vset.pattern.permute.xlu0 0
        %8250 = vperm.xlu0 %8249, %v7208
        %v8251 = vpop.permute.xlu0 %8250
        %8254 = vset.pattern.permute.xlu0 0
        %8255 = vperm.xlu0 %8254, %v7209
        %v8256 = vpop.permute.xlu0 %8255
        %8259 = vset.pattern.permute.xlu0 0
        %8260 = vperm.xlu0 %8259, %v7210
        %v8261 = vpop.permute.xlu0 %8260
        %8264 = vset.pattern.permute.xlu0 0
        %8265 = vperm.xlu0 %8264, %v7211
        %v8266 = vpop.permute.xlu0 %8265
        %8269 = vset.pattern.permute.xlu0 0
        %8270 = vperm.xlu0 %8269, %v7212
        %v8271 = vpop.permute.xlu0 %8270
        %8274 = vset.pattern.permute.xlu0 0
        %8275 = vperm.xlu0 %8274, %v7213
        %v8276 = vpop.permute.xlu0 %8275
        %8279 = vset.pattern.permute.xlu0 0
        %8280 = vperm.xlu0 %8279, %v7214
        %v8281 = vpop.permute.xlu0 %8280
        %8284 = vset.pattern.permute.xlu0 0
        %8285 = vperm.xlu0 %8284, %v7215
        %v8286 = vpop.permute.xlu0 %8285
        %8289 = vset.pattern.permute.xlu0 0
        %8290 = vperm.xlu0 %8289, %v7216
        %v8291 = vpop.permute.xlu0 %8290
        %8294 = vset.pattern.permute.xlu0 0
        %8295 = vperm.xlu0 %8294, %v7217
        %v8296 = vpop.permute.xlu0 %8295
        %8299 = vset.pattern.permute.xlu0 0
        %8300 = vperm.xlu0 %8299, %v7218
        %v8301 = vpop.permute.xlu0 %8300
        %8304 = vset.pattern.permute.xlu0 0
        %8305 = vperm.xlu0 %8304, %v7219
        %v8306 = vpop.permute.xlu0 %8305
        %v8308 = vadd.f32 %v7540, %v7991
        %v8309 = vadd.f32 %v7541, %v7991
        %v8310 = vadd.f32 %v7542, %v7991
        %v8311 = vadd.f32 %v7543, %v7991
        %v8312 = vadd.f32 %v7544, %v7991
        %v8313 = vadd.f32 %v7545, %v7991
        %v8314 = vadd.f32 %v7546, %v7991
        %v8315 = vadd.f32 %v7547, %v7996
        %v8316 = vadd.f32 %v7548, %v7996
        %v8317 = vadd.f32 %v7549, %v7996
        %v8318 = vadd.f32 %v7550, %v7996
        %v8319 = vadd.f32 %v7551, %v7996
        %v8320 = vadd.f32 %v7552, %v7996
        %v8321 = vadd.f32 %v7553, %v7996
        %v8322 = vadd.f32 %v7554, %v8001
        %v8323 = vadd.f32 %v7555, %v8001
        %v8324 = vadd.f32 %v7556, %v8001
        %v8325 = vadd.f32 %v7557, %v8001
        %v8326 = vadd.f32 %v7558, %v8001
        %v8327 = vadd.f32 %v7559, %v8001
        %v8328 = vadd.f32 %v7560, %v8001
        %v8329 = vadd.f32 %v7561, %v8006
        %v8330 = vadd.f32 %v7562, %v8006
        %v8331 = vadd.f32 %v7563, %v8006
        %v8332 = vadd.f32 %v7564, %v8006
        %v8333 = vadd.f32 %v7565, %v8006
        %v8334 = vadd.f32 %v7566, %v8006
        %v8335 = vadd.f32 %v7567, %v8006
        %v8336 = vadd.f32 %v7568, %v8011
        %v8337 = vadd.f32 %v7569, %v8011
        %v8338 = vadd.f32 %v7570, %v8011
        %v8339 = vadd.f32 %v7571, %v8011
        %v8340 = vadd.f32 %v7572, %v8011
        %v8341 = vadd.f32 %v7573, %v8011
        %v8342 = vadd.f32 %v7574, %v8011
        %v8343 = vadd.f32 %v7575, %v8016
        %v8344 = vadd.f32 %v7576, %v8016
        %v8345 = vadd.f32 %v7577, %v8016
        %v8346 = vadd.f32 %v7578, %v8016
        %v8347 = vadd.f32 %v7579, %v8016
        %v8348 = vadd.f32 %v7580, %v8016
        %v8349 = vadd.f32 %v7581, %v8016
        %v8350 = vadd.f32 %v7582, %v8021
        %v8351 = vadd.f32 %v7583, %v8021
        %v8352 = vadd.f32 %v7584, %v8021
        %v8353 = vadd.f32 %v7585, %v8021
        %v8354 = vadd.f32 %v7586, %v8021
        %v8355 = vadd.f32 %v7587, %v8021
        %v8356 = vadd.f32 %v7588, %v8021
        %v8357 = vadd.f32 %v7589, %v8026
        %v8358 = vadd.f32 %v7590, %v8026
        %v8359 = vadd.f32 %v7591, %v8026
        %v8360 = vadd.f32 %v7592, %v8026
        %v8361 = vadd.f32 %v7593, %v8026
        %v8362 = vadd.f32 %v7594, %v8026
        %v8363 = vadd.f32 %v7595, %v8026
        %v8364 = vadd.f32 %v7596, %v8031
        %v8365 = vadd.f32 %v7597, %v8031
        %v8366 = vadd.f32 %v7598, %v8031
        %v8367 = vadd.f32 %v7599, %v8031
        %v8368 = vadd.f32 %v7600, %v8031
        %v8369 = vadd.f32 %v7601, %v8031
        %v8370 = vadd.f32 %v7602, %v8031
        %v8371 = vadd.f32 %v7603, %v8036
        %v8372 = vadd.f32 %v7604, %v8036
        %v8373 = vadd.f32 %v7605, %v8036
        %v8374 = vadd.f32 %v7606, %v8036
        %v8375 = vadd.f32 %v7607, %v8036
        %v8376 = vadd.f32 %v7608, %v8036
        %v8377 = vadd.f32 %v7609, %v8036
        %v8378 = vadd.f32 %v7610, %v8041
        %v8379 = vadd.f32 %v7611, %v8041
        %v8380 = vadd.f32 %v7612, %v8041
        %v8381 = vadd.f32 %v7613, %v8041
        %v8382 = vadd.f32 %v7614, %v8041
        %v8383 = vadd.f32 %v7615, %v8041
        %v8384 = vadd.f32 %v7616, %v8041
        %v8385 = vadd.f32 %v7617, %v8046
        %v8386 = vadd.f32 %v7618, %v8046
        %v8387 = vadd.f32 %v7619, %v8046
        %v8388 = vadd.f32 %v7620, %v8046
        %v8389 = vadd.f32 %v7621, %v8046
        %v8390 = vadd.f32 %v7622, %v8046
        %v8391 = vadd.f32 %v7623, %v8046
        %v8392 = vadd.f32 %v7624, %v8051
        %v8393 = vadd.f32 %v7625, %v8051
        %v8394 = vadd.f32 %v7626, %v8051
        %v8395 = vadd.f32 %v7627, %v8051
        %v8396 = vadd.f32 %v7628, %v8051
        %v8397 = vadd.f32 %v7629, %v8051
        %v8398 = vadd.f32 %v7630, %v8051
        %v8399 = vadd.f32 %v7631, %v8056
        %v8400 = vadd.f32 %v7632, %v8056
        %v8401 = vadd.f32 %v7633, %v8056
        %v8402 = vadd.f32 %v7634, %v8056
        %v8403 = vadd.f32 %v7635, %v8056
        %v8404 = vadd.f32 %v7636, %v8056
        %v8405 = vadd.f32 %v7637, %v8056
        %v8406 = vadd.f32 %v7638, %v8061
        %v8407 = vadd.f32 %v7639, %v8061
        %v8408 = vadd.f32 %v7640, %v8061
        %v8409 = vadd.f32 %v7641, %v8061
        %v8410 = vadd.f32 %v7642, %v8061
        %v8411 = vadd.f32 %v7643, %v8061
        %v8412 = vadd.f32 %v7644, %v8061
        %v8413 = vadd.f32 %v7645, %v8066
        %v8414 = vadd.f32 %v7646, %v8066
        %v8415 = vadd.f32 %v7647, %v8066
        %v8416 = vadd.f32 %v7648, %v8066
        %v8417 = vadd.f32 %v7649, %v8066
        %v8418 = vadd.f32 %v7650, %v8066
        %v8419 = vadd.f32 %v7651, %v8066
        %v8420 = vadd.f32 %v7652, %v8071
        %v8421 = vadd.f32 %v7653, %v8071
        %v8422 = vadd.f32 %v7654, %v8071
        %v8423 = vadd.f32 %v7655, %v8071
        %v8424 = vadd.f32 %v7656, %v8071
        %v8425 = vadd.f32 %v7657, %v8071
        %v8426 = vadd.f32 %v7658, %v8071
        %v8427 = vadd.f32 %v7659, %v8076
        %v8428 = vadd.f32 %v7660, %v8076
        %v8429 = vadd.f32 %v7661, %v8076
        %v8430 = vadd.f32 %v7662, %v8076
        %v8431 = vadd.f32 %v7663, %v8076
        %v8432 = vadd.f32 %v7664, %v8076
        %v8433 = vadd.f32 %v7665, %v8076
        %v8434 = vadd.f32 %v7666, %v8081
        %v8435 = vadd.f32 %v7667, %v8081
        %v8436 = vadd.f32 %v7668, %v8081
        %v8437 = vadd.f32 %v7669, %v8081
        %v8438 = vadd.f32 %v7670, %v8081
        %v8439 = vadd.f32 %v7671, %v8081
        %v8440 = vadd.f32 %v7672, %v8081
        %v8441 = vadd.f32 %v7673, %v8086
        %v8442 = vadd.f32 %v7674, %v8086
        %v8443 = vadd.f32 %v7675, %v8086
        %v8444 = vadd.f32 %v7676, %v8086
        %v8445 = vadd.f32 %v7677, %v8086
        %v8446 = vadd.f32 %v7678, %v8086
        %v8447 = vadd.f32 %v7679, %v8086
        %v8448 = vadd.f32 %v7680, %v8091
        %v8449 = vadd.f32 %v7681, %v8091
        %v8450 = vadd.f32 %v7682, %v8091
        %v8451 = vadd.f32 %v7683, %v8091
        %v8452 = vadd.f32 %v7684, %v8091
        %v8453 = vadd.f32 %v7685, %v8091
        %v8454 = vadd.f32 %v7686, %v8091
        %v8455 = vadd.f32 %v7687, %v8096
        %v8456 = vadd.f32 %v7688, %v8096
        %v8457 = vadd.f32 %v7689, %v8096
        %v8458 = vadd.f32 %v7690, %v8096
        %v8459 = vadd.f32 %v7691, %v8096
        %v8460 = vadd.f32 %v7692, %v8096
        %v8461 = vadd.f32 %v7693, %v8096
        %v8462 = vadd.f32 %v7694, %v8101
        %v8463 = vadd.f32 %v7695, %v8101
        %v8464 = vadd.f32 %v7696, %v8101
        %v8465 = vadd.f32 %v7697, %v8101
        %v8466 = vadd.f32 %v7698, %v8101
        %v8467 = vadd.f32 %v7699, %v8101
        %v8468 = vadd.f32 %v7700, %v8101
        %v8469 = vadd.f32 %v7701, %v8106
        %v8470 = vadd.f32 %v7702, %v8106
        %v8471 = vadd.f32 %v7703, %v8106
        %v8472 = vadd.f32 %v7704, %v8106
        %v8473 = vadd.f32 %v7705, %v8106
        %v8474 = vadd.f32 %v7706, %v8106
        %v8475 = vadd.f32 %v7707, %v8106
        %v8476 = vadd.f32 %v7708, %v8111
        %v8477 = vadd.f32 %v7709, %v8111
        %v8478 = vadd.f32 %v7710, %v8111
        %v8479 = vadd.f32 %v7711, %v8111
        %v8480 = vadd.f32 %v7712, %v8111
        %v8481 = vadd.f32 %v7713, %v8111
        %v8482 = vadd.f32 %v7714, %v8111
        %v8483 = vadd.f32 %v7715, %v8116
        %v8484 = vadd.f32 %v7716, %v8116
        %v8485 = vadd.f32 %v7717, %v8116
        %v8486 = vadd.f32 %v7718, %v8116
        %v8487 = vadd.f32 %v7719, %v8116
        %v8488 = vadd.f32 %v7720, %v8116
        %v8489 = vadd.f32 %v7721, %v8116
        %v8490 = vadd.f32 %v7722, %v8121
        %v8491 = vadd.f32 %v7723, %v8121
        %v8492 = vadd.f32 %v7724, %v8121
        %v8493 = vadd.f32 %v7725, %v8121
        %v8494 = vadd.f32 %v7726, %v8121
        %v8495 = vadd.f32 %v7727, %v8121
        %v8496 = vadd.f32 %v7728, %v8121
        %v8497 = vadd.f32 %v7729, %v8126
        %v8498 = vadd.f32 %v7730, %v8126
        %v8499 = vadd.f32 %v7731, %v8126
        %v8500 = vadd.f32 %v7732, %v8126
        %v8501 = vadd.f32 %v7733, %v8126
        %v8502 = vadd.f32 %v7734, %v8126
        %v8503 = vadd.f32 %v7735, %v8126
        %v8504 = vadd.f32 %v7736, %v8131
        %v8505 = vadd.f32 %v7737, %v8131
        %v8506 = vadd.f32 %v7738, %v8131
        %v8507 = vadd.f32 %v7739, %v8131
        %v8508 = vadd.f32 %v7740, %v8131
        %v8509 = vadd.f32 %v7741, %v8131
        %v8510 = vadd.f32 %v7742, %v8131
        %v8511 = vadd.f32 %v7743, %v8136
        %v8512 = vadd.f32 %v7744, %v8136
        %v8513 = vadd.f32 %v7745, %v8136
        %v8514 = vadd.f32 %v7746, %v8136
        %v8515 = vadd.f32 %v7747, %v8136
        %v8516 = vadd.f32 %v7748, %v8136
        %v8517 = vadd.f32 %v7749, %v8136
        %v8518 = vadd.f32 %v7750, %v8141
        %v8519 = vadd.f32 %v7751, %v8141
        %v8520 = vadd.f32 %v7752, %v8141
        %v8521 = vadd.f32 %v7753, %v8141
        %v8522 = vadd.f32 %v7754, %v8141
        %v8523 = vadd.f32 %v7755, %v8141
        %v8524 = vadd.f32 %v7756, %v8141
        %v8525 = vadd.f32 %v7757, %v8146
        %v8526 = vadd.f32 %v7758, %v8146
        %v8527 = vadd.f32 %v7759, %v8146
        %v8528 = vadd.f32 %v7760, %v8146
        %v8529 = vadd.f32 %v7761, %v8146
        %v8530 = vadd.f32 %v7762, %v8146
        %v8531 = vadd.f32 %v7763, %v8146
        %v8532 = vadd.f32 %v7764, %v8151
        %v8533 = vadd.f32 %v7765, %v8151
        %v8534 = vadd.f32 %v7766, %v8151
        %v8535 = vadd.f32 %v7767, %v8151
        %v8536 = vadd.f32 %v7768, %v8151
        %v8537 = vadd.f32 %v7769, %v8151
        %v8538 = vadd.f32 %v7770, %v8151
        %v8539 = vadd.f32 %v7771, %v8156
        %v8540 = vadd.f32 %v7772, %v8156
        %v8541 = vadd.f32 %v7773, %v8156
        %v8542 = vadd.f32 %v7774, %v8156
        %v8543 = vadd.f32 %v7775, %v8156
        %v8544 = vadd.f32 %v7776, %v8156
        %v8545 = vadd.f32 %v7777, %v8156
        %v8546 = vadd.f32 %v7778, %v8161
        %v8547 = vadd.f32 %v7779, %v8161
        %v8548 = vadd.f32 %v7780, %v8161
        %v8549 = vadd.f32 %v7781, %v8161
        %v8550 = vadd.f32 %v7782, %v8161
        %v8551 = vadd.f32 %v7783, %v8161
        %v8552 = vadd.f32 %v7784, %v8161
        %v8553 = vadd.f32 %v7785, %v8166
        %v8554 = vadd.f32 %v7786, %v8166
        %v8555 = vadd.f32 %v7787, %v8166
        %v8556 = vadd.f32 %v7788, %v8166
        %v8557 = vadd.f32 %v7789, %v8166
        %v8558 = vadd.f32 %v7790, %v8166
        %v8559 = vadd.f32 %v7791, %v8166
        %v8560 = vadd.f32 %v7792, %v8171
        %v8561 = vadd.f32 %v7793, %v8171
        %v8562 = vadd.f32 %v7794, %v8171
        %v8563 = vadd.f32 %v7795, %v8171
        %v8564 = vadd.f32 %v7796, %v8171
        %v8565 = vadd.f32 %v7797, %v8171
        %v8566 = vadd.f32 %v7798, %v8171
        %v8567 = vadd.f32 %v7799, %v8176
        %v8568 = vadd.f32 %v7800, %v8176
        %v8569 = vadd.f32 %v7801, %v8176
        %v8570 = vadd.f32 %v7802, %v8176
        %v8571 = vadd.f32 %v7803, %v8176
        %v8572 = vadd.f32 %v7804, %v8176
        %v8573 = vadd.f32 %v7805, %v8176
        %v8574 = vadd.f32 %v7806, %v8181
        %v8575 = vadd.f32 %v7807, %v8181
        %v8576 = vadd.f32 %v7808, %v8181
        %v8577 = vadd.f32 %v7809, %v8181
        %v8578 = vadd.f32 %v7810, %v8181
        %v8579 = vadd.f32 %v7811, %v8181
        %v8580 = vadd.f32 %v7812, %v8181
        %v8581 = vadd.f32 %v7813, %v8186
        %v8582 = vadd.f32 %v7814, %v8186
        %v8583 = vadd.f32 %v7815, %v8186
        %v8584 = vadd.f32 %v7816, %v8186
        %v8585 = vadd.f32 %v7817, %v8186
        %v8586 = vadd.f32 %v7818, %v8186
        %v8587 = vadd.f32 %v7819, %v8186
        %v8588 = vadd.f32 %v7820, %v8191
        %v8589 = vadd.f32 %v7821, %v8191
        %v8590 = vadd.f32 %v7822, %v8191
        %v8591 = vadd.f32 %v7823, %v8191
        %v8592 = vadd.f32 %v7824, %v8191
        %v8593 = vadd.f32 %v7825, %v8191
        %v8594 = vadd.f32 %v7826, %v8191
        %v8595 = vadd.f32 %v7827, %v8196
        %v8596 = vadd.f32 %v7828, %v8196
        %v8597 = vadd.f32 %v7829, %v8196
        %v8598 = vadd.f32 %v7830, %v8196
        %v8599 = vadd.f32 %v7831, %v8196
        %v8600 = vadd.f32 %v7832, %v8196
        %v8601 = vadd.f32 %v7833, %v8196
        %v8602 = vadd.f32 %v7834, %v8201
        %v8603 = vadd.f32 %v7835, %v8201
        %v8604 = vadd.f32 %v7836, %v8201
        %v8605 = vadd.f32 %v7837, %v8201
        %v8606 = vadd.f32 %v7838, %v8201
        %v8607 = vadd.f32 %v7839, %v8201
        %v8608 = vadd.f32 %v7840, %v8201
        %v8609 = vadd.f32 %v7841, %v8206
        %v8610 = vadd.f32 %v7842, %v8206
        %v8611 = vadd.f32 %v7843, %v8206
        %v8612 = vadd.f32 %v7844, %v8206
        %v8613 = vadd.f32 %v7845, %v8206
        %v8614 = vadd.f32 %v7846, %v8206
        %v8615 = vadd.f32 %v7847, %v8206
        %v8616 = vadd.f32 %v7848, %v8211
        %v8617 = vadd.f32 %v7849, %v8211
        %v8618 = vadd.f32 %v7850, %v8211
        %v8619 = vadd.f32 %v7851, %v8211
        %v8620 = vadd.f32 %v7852, %v8211
        %v8621 = vadd.f32 %v7853, %v8211
        %v8622 = vadd.f32 %v7854, %v8211
        %v8623 = vadd.f32 %v7855, %v8216
        %v8624 = vadd.f32 %v7856, %v8216
        %v8625 = vadd.f32 %v7857, %v8216
        %v8626 = vadd.f32 %v7858, %v8216
        %v8627 = vadd.f32 %v7859, %v8216
        %v8628 = vadd.f32 %v7860, %v8216
        %v8629 = vadd.f32 %v7861, %v8216
        %v8630 = vadd.f32 %v7862, %v8221
        %v8631 = vadd.f32 %v7863, %v8221
        %v8632 = vadd.f32 %v7864, %v8221
        %v8633 = vadd.f32 %v7865, %v8221
        %v8634 = vadd.f32 %v7866, %v8221
        %v8635 = vadd.f32 %v7867, %v8221
        %v8636 = vadd.f32 %v7868, %v8221
        %v8637 = vadd.f32 %v7869, %v8226
        %v8638 = vadd.f32 %v7870, %v8226
        %v8639 = vadd.f32 %v7871, %v8226
        %v8640 = vadd.f32 %v7872, %v8226
        %v8641 = vadd.f32 %v7873, %v8226
        %v8642 = vadd.f32 %v7874, %v8226
        %v8643 = vadd.f32 %v7875, %v8226
        %v8644 = vadd.f32 %v7876, %v8231
        %v8645 = vadd.f32 %v7877, %v8231
        %v8646 = vadd.f32 %v7878, %v8231
        %v8647 = vadd.f32 %v7879, %v8231
        %v8648 = vadd.f32 %v7880, %v8231
        %v8649 = vadd.f32 %v7881, %v8231
        %v8650 = vadd.f32 %v7882, %v8231
        %v8651 = vadd.f32 %v7883, %v8236
        %v8652 = vadd.f32 %v7884, %v8236
        %v8653 = vadd.f32 %v7885, %v8236
        %v8654 = vadd.f32 %v7886, %v8236
        %v8655 = vadd.f32 %v7887, %v8236
        %v8656 = vadd.f32 %v7888, %v8236
        %v8657 = vadd.f32 %v7889, %v8236
        %v8658 = vadd.f32 %v7890, %v8241
        %v8659 = vadd.f32 %v7891, %v8241
        %v8660 = vadd.f32 %v7892, %v8241
        %v8661 = vadd.f32 %v7893, %v8241
        %v8662 = vadd.f32 %v7894, %v8241
        %v8663 = vadd.f32 %v7895, %v8241
        %v8664 = vadd.f32 %v7896, %v8241
        %v8665 = vadd.f32 %v7897, %v8246
        %v8666 = vadd.f32 %v7898, %v8246
        %v8667 = vadd.f32 %v7899, %v8246
        %v8668 = vadd.f32 %v7900, %v8246
        %v8669 = vadd.f32 %v7901, %v8246
        %v8670 = vadd.f32 %v7902, %v8246
        %v8671 = vadd.f32 %v7903, %v8246
        %v8672 = vadd.f32 %v7904, %v8251
        %v8673 = vadd.f32 %v7905, %v8251
        %v8674 = vadd.f32 %v7906, %v8251
        %v8675 = vadd.f32 %v7907, %v8251
        %v8676 = vadd.f32 %v7908, %v8251
        %v8677 = vadd.f32 %v7909, %v8251
        %v8678 = vadd.f32 %v7910, %v8251
        %v8679 = vadd.f32 %v7911, %v8256
        %v8680 = vadd.f32 %v7912, %v8256
        %v8681 = vadd.f32 %v7913, %v8256
        %v8682 = vadd.f32 %v7914, %v8256
        %v8683 = vadd.f32 %v7915, %v8256
        %v8684 = vadd.f32 %v7916, %v8256
        %v8685 = vadd.f32 %v7917, %v8256
        %v8686 = vadd.f32 %v7918, %v8261
        %v8687 = vadd.f32 %v7919, %v8261
        %v8688 = vadd.f32 %v7920, %v8261
        %v8689 = vadd.f32 %v7921, %v8261
        %v8690 = vadd.f32 %v7922, %v8261
        %v8691 = vadd.f32 %v7923, %v8261
        %v8692 = vadd.f32 %v7924, %v8261
        %v8693 = vadd.f32 %v7925, %v8266
        %v8694 = vadd.f32 %v7926, %v8266
        %v8695 = vadd.f32 %v7927, %v8266
        %v8696 = vadd.f32 %v7928, %v8266
        %v8697 = vadd.f32 %v7929, %v8266
        %v8698 = vadd.f32 %v7930, %v8266
        %v8699 = vadd.f32 %v7931, %v8266
        %v8700 = vadd.f32 %v7932, %v8271
        %v8701 = vadd.f32 %v7933, %v8271
        %v8702 = vadd.f32 %v7934, %v8271
        %v8703 = vadd.f32 %v7935, %v8271
        %v8704 = vadd.f32 %v7936, %v8271
        %v8705 = vadd.f32 %v7937, %v8271
        %v8706 = vadd.f32 %v7938, %v8271
        %v8707 = vadd.f32 %v7939, %v8276
        %v8708 = vadd.f32 %v7940, %v8276
        %v8709 = vadd.f32 %v7941, %v8276
        %v8710 = vadd.f32 %v7942, %v8276
        %v8711 = vadd.f32 %v7943, %v8276
        %v8712 = vadd.f32 %v7944, %v8276
        %v8713 = vadd.f32 %v7945, %v8276
        %v8714 = vadd.f32 %v7946, %v8281
        %v8715 = vadd.f32 %v7947, %v8281
        %v8716 = vadd.f32 %v7948, %v8281
        %v8717 = vadd.f32 %v7949, %v8281
        %v8718 = vadd.f32 %v7950, %v8281
        %v8719 = vadd.f32 %v7951, %v8281
        %v8720 = vadd.f32 %v7952, %v8281
        %v8721 = vadd.f32 %v7953, %v8286
        %v8722 = vadd.f32 %v7954, %v8286
        %v8723 = vadd.f32 %v7955, %v8286
        %v8724 = vadd.f32 %v7956, %v8286
        %v8725 = vadd.f32 %v7957, %v8286
        %v8726 = vadd.f32 %v7958, %v8286
        %v8727 = vadd.f32 %v7959, %v8286
        %v8728 = vadd.f32 %v7960, %v8291
        %v8729 = vadd.f32 %v7961, %v8291
        %v8730 = vadd.f32 %v7962, %v8291
        %v8731 = vadd.f32 %v7963, %v8291
        %v8732 = vadd.f32 %v7964, %v8291
        %v8733 = vadd.f32 %v7965, %v8291
        %v8734 = vadd.f32 %v7966, %v8291
        %v8735 = vadd.f32 %v7967, %v8296
        %v8736 = vadd.f32 %v7968, %v8296
        %v8737 = vadd.f32 %v7969, %v8296
        %v8738 = vadd.f32 %v7970, %v8296
        %v8739 = vadd.f32 %v7971, %v8296
        %v8740 = vadd.f32 %v7972, %v8296
        %v8741 = vadd.f32 %v7973, %v8296
        %v8742 = vadd.f32 %v7974, %v8301
        %v8743 = vadd.f32 %v7975, %v8301
        %v8744 = vadd.f32 %v7976, %v8301
        %v8745 = vadd.f32 %v7977, %v8301
        %v8746 = vadd.f32 %v7978, %v8301
        %v8747 = vadd.f32 %v7979, %v8301
        %v8748 = vadd.f32 %v7980, %v8301
        %v8749 = vadd.f32 %v7981, %v8306
        %v8750 = vadd.f32 %v7982, %v8306
        %v8751 = vadd.f32 %v7983, %v8306
        %v8752 = vadd.f32 %v7984, %v8306
        %v8753 = vadd.f32 %v7985, %v8306
        %v8754 = vadd.f32 %v7986, %v8306
        %v8755 = vadd.f32 %v7987, %v8306
        %8756 = vst [vmem:[%s317] sm:$0xff] %v8308
        %8757 = vst [vmem:[%s317 + $0x8] sm:$0xff] %v8309
        %8758 = vst [vmem:[%s317 + $0x10] sm:$0xff] %v8310
        %8759 = vst [vmem:[%s317 + $0x18] sm:$0xff] %v8311
        %8760 = vst [vmem:[%s317 + $0x20] sm:$0xff] %v8312
        %8761 = vst [vmem:[%s317 + $0x28] sm:$0xff] %v8313
        %8762 = vst [vmem:[%s317 + $0x30] sm:$0xff] %v8314
        %8763 = vst [vmem:[%s317 + $0x38] sm:$0xff] %v8315
        %8764 = vst [vmem:[%s317 + $0x40] sm:$0xff] %v8316
        %8765 = vst [vmem:[%s317 + $0x48] sm:$0xff] %v8317
        %8766 = vst [vmem:[%s317 + $0x50] sm:$0xff] %v8318
        %8767 = vst [vmem:[%s317 + $0x58] sm:$0xff] %v8319
        %8768 = vst [vmem:[%s317 + $0x60] sm:$0xff] %v8320
        %8769 = vst [vmem:[%s317 + $0x68] sm:$0xff] %v8321
        %8770 = vst [vmem:[%s317 + $0x70] sm:$0xff] %v8322
        %8771 = vst [vmem:[%s317 + $0x78] sm:$0xff] %v8323
        %8772 = vst [vmem:[%s317 + $0x80] sm:$0xff] %v8324
        %8773 = vst [vmem:[%s317 + $0x88] sm:$0xff] %v8325
        %8774 = vst [vmem:[%s317 + $0x90] sm:$0xff] %v8326
        %8775 = vst [vmem:[%s317 + $0x98] sm:$0xff] %v8327
        %8776 = vst [vmem:[%s317 + $0xa0] sm:$0xff] %v8328
        %8777 = vst [vmem:[%s317 + $0xa8] sm:$0xff] %v8329
        %8778 = vst [vmem:[%s317 + $0xb0] sm:$0xff] %v8330
        %8779 = vst [vmem:[%s317 + $0xb8] sm:$0xff] %v8331
        %8780 = vst [vmem:[%s317 + $0xc0] sm:$0xff] %v8332
        %8781 = vst [vmem:[%s317 + $0xc8] sm:$0xff] %v8333
        %8782 = vst [vmem:[%s317 + $0xd0] sm:$0xff] %v8334
        %8783 = vst [vmem:[%s317 + $0xd8] sm:$0xff] %v8335
        %8784 = vst [vmem:[%s317 + $0xe0] sm:$0xff] %v8336
        %8785 = vst [vmem:[%s317 + $0xe8] sm:$0xff] %v8337
        %8786 = vst [vmem:[%s317 + $0xf0] sm:$0xff] %v8338
        %8787 = vst [vmem:[%s317 + $0xf8] sm:$0xff] %v8339
        %8788 = vst [vmem:[%s317 + $0x100] sm:$0xff] %v8340
        %8789 = vst [vmem:[%s317 + $0x108] sm:$0xff] %v8341
        %8790 = vst [vmem:[%s317 + $0x110] sm:$0xff] %v8342
        %8791 = vst [vmem:[%s317 + $0x118] sm:$0xff] %v8343
        %8792 = vst [vmem:[%s317 + $0x120] sm:$0xff] %v8344
        %8793 = vst [vmem:[%s317 + $0x128] sm:$0xff] %v8345
        %8794 = vst [vmem:[%s317 + $0x130] sm:$0xff] %v8346
        %8795 = vst [vmem:[%s317 + $0x138] sm:$0xff] %v8347
        %8796 = vst [vmem:[%s317 + $0x140] sm:$0xff] %v8348
        %8797 = vst [vmem:[%s317 + $0x148] sm:$0xff] %v8349
        %8798 = vst [vmem:[%s317 + $0x150] sm:$0xff] %v8350
        %8799 = vst [vmem:[%s317 + $0x158] sm:$0xff] %v8351
        %8800 = vst [vmem:[%s317 + $0x160] sm:$0xff] %v8352
        %8801 = vst [vmem:[%s317 + $0x168] sm:$0xff] %v8353
        %8802 = vst [vmem:[%s317 + $0x170] sm:$0xff] %v8354
        %8803 = vst [vmem:[%s317 + $0x178] sm:$0xff] %v8355
        %8804 = vst [vmem:[%s317 + $0x180] sm:$0xff] %v8356
        %8805 = vst [vmem:[%s317 + $0x188] sm:$0xff] %v8357
        %8806 = vst [vmem:[%s317 + $0x190] sm:$0xff] %v8358
        %8807 = vst [vmem:[%s317 + $0x198] sm:$0xff] %v8359
        %8808 = vst [vmem:[%s317 + $0x1a0] sm:$0xff] %v8360
        %8809 = vst [vmem:[%s317 + $0x1a8] sm:$0xff] %v8361
        %8810 = vst [vmem:[%s317 + $0x1b0] sm:$0xff] %v8362
        %8811 = vst [vmem:[%s317 + $0x1b8] sm:$0xff] %v8363
        %8812 = vst [vmem:[%s317 + $0x1c0] sm:$0xff] %v8364
        %8813 = vst [vmem:[%s317 + $0x1c8] sm:$0xff] %v8365
        %8814 = vst [vmem:[%s317 + $0x1d0] sm:$0xff] %v8366
        %8815 = vst [vmem:[%s317 + $0x1d8] sm:$0xff] %v8367
        %8816 = vst [vmem:[%s317 + $0x1e0] sm:$0xff] %v8368
        %8817 = vst [vmem:[%s317 + $0x1e8] sm:$0xff] %v8369
        %8818 = vst [vmem:[%s317 + $0x1f0] sm:$0xff] %v8370
        %8819 = vst [vmem:[%s317 + $0x1f8] sm:$0xff] %v8371
        %8820 = vst [vmem:[%s317 + $0x200] sm:$0xff] %v8372
        %8821 = vst [vmem:[%s317 + $0x208] sm:$0xff] %v8373
        %8822 = vst [vmem:[%s317 + $0x210] sm:$0xff] %v8374
        %8823 = vst [vmem:[%s317 + $0x218] sm:$0xff] %v8375
        %8824 = vst [vmem:[%s317 + $0x220] sm:$0xff] %v8376
        %8825 = vst [vmem:[%s317 + $0x228] sm:$0xff] %v8377
        %8826 = vst [vmem:[%s317 + $0x230] sm:$0xff] %v8378
        %8827 = vst [vmem:[%s317 + $0x238] sm:$0xff] %v8379
        %8828 = vst [vmem:[%s317 + $0x240] sm:$0xff] %v8380
        %8829 = vst [vmem:[%s317 + $0x248] sm:$0xff] %v8381
        %8830 = vst [vmem:[%s317 + $0x250] sm:$0xff] %v8382
        %8831 = vst [vmem:[%s317 + $0x258] sm:$0xff] %v8383
        %8832 = vst [vmem:[%s317 + $0x260] sm:$0xff] %v8384
        %8833 = vst [vmem:[%s317 + $0x268] sm:$0xff] %v8385
        %8834 = vst [vmem:[%s317 + $0x270] sm:$0xff] %v8386
        %8835 = vst [vmem:[%s317 + $0x278] sm:$0xff] %v8387
        %8836 = vst [vmem:[%s317 + $0x280] sm:$0xff] %v8388
        %8837 = vst [vmem:[%s317 + $0x288] sm:$0xff] %v8389
        %8838 = vst [vmem:[%s317 + $0x290] sm:$0xff] %v8390
        %8839 = vst [vmem:[%s317 + $0x298] sm:$0xff] %v8391
        %8840 = vst [vmem:[%s317 + $0x2a0] sm:$0xff] %v8392
        %8841 = vst [vmem:[%s317 + $0x2a8] sm:$0xff] %v8393
        %8842 = vst [vmem:[%s317 + $0x2b0] sm:$0xff] %v8394
        %8843 = vst [vmem:[%s317 + $0x2b8] sm:$0xff] %v8395
        %8844 = vst [vmem:[%s317 + $0x2c0] sm:$0xff] %v8396
        %8845 = vst [vmem:[%s317 + $0x2c8] sm:$0xff] %v8397
        %8846 = vst [vmem:[%s317 + $0x2d0] sm:$0xff] %v8398
        %8847 = vst [vmem:[%s317 + $0x2d8] sm:$0xff] %v8399
        %8848 = vst [vmem:[%s317 + $0x2e0] sm:$0xff] %v8400
        %8849 = vst [vmem:[%s317 + $0x2e8] sm:$0xff] %v8401
        %8850 = vst [vmem:[%s317 + $0x2f0] sm:$0xff] %v8402
        %8851 = vst [vmem:[%s317 + $0x2f8] sm:$0xff] %v8403
        %8852 = vst [vmem:[%s317 + $0x300] sm:$0xff] %v8404
        %8853 = vst [vmem:[%s317 + $0x308] sm:$0xff] %v8405
        %8854 = vst [vmem:[%s317 + $0x310] sm:$0xff] %v8406
        %8855 = vst [vmem:[%s317 + $0x318] sm:$0xff] %v8407
        %8856 = vst [vmem:[%s317 + $0x320] sm:$0xff] %v8408
        %8857 = vst [vmem:[%s317 + $0x328] sm:$0xff] %v8409
        %8858 = vst [vmem:[%s317 + $0x330] sm:$0xff] %v8410
        %8859 = vst [vmem:[%s317 + $0x338] sm:$0xff] %v8411
        %8860 = vst [vmem:[%s317 + $0x340] sm:$0xff] %v8412
        %8861 = vst [vmem:[%s317 + $0x348] sm:$0xff] %v8413
        %8862 = vst [vmem:[%s317 + $0x350] sm:$0xff] %v8414
        %8863 = vst [vmem:[%s317 + $0x358] sm:$0xff] %v8415
        %8864 = vst [vmem:[%s317 + $0x360] sm:$0xff] %v8416
        %8865 = vst [vmem:[%s317 + $0x368] sm:$0xff] %v8417
        %8866 = vst [vmem:[%s317 + $0x370] sm:$0xff] %v8418
        %8867 = vst [vmem:[%s317 + $0x378] sm:$0xff] %v8419
        %8868 = vst [vmem:[%s317 + $0x380] sm:$0xff] %v8420
        %8869 = vst [vmem:[%s317 + $0x388] sm:$0xff] %v8421
        %8870 = vst [vmem:[%s317 + $0x390] sm:$0xff] %v8422
        %8871 = vst [vmem:[%s317 + $0x398] sm:$0xff] %v8423
        %8872 = vst [vmem:[%s317 + $0x3a0] sm:$0xff] %v8424
        %8873 = vst [vmem:[%s317 + $0x3a8] sm:$0xff] %v8425
        %8874 = vst [vmem:[%s317 + $0x3b0] sm:$0xff] %v8426
        %8875 = vst [vmem:[%s317 + $0x3b8] sm:$0xff] %v8427
        %8876 = vst [vmem:[%s317 + $0x3c0] sm:$0xff] %v8428
        %8877 = vst [vmem:[%s317 + $0x3c8] sm:$0xff] %v8429
        %8878 = vst [vmem:[%s317 + $0x3d0] sm:$0xff] %v8430
        %8879 = vst [vmem:[%s317 + $0x3d8] sm:$0xff] %v8431
        %8880 = vst [vmem:[%s317 + $0x3e0] sm:$0xff] %v8432
        %8881 = vst [vmem:[%s317 + $0x3e8] sm:$0xff] %v8433
        %8882 = vst [vmem:[%s317 + $0x3f0] sm:$0xff] %v8434
        %8883 = vst [vmem:[%s317 + $0x3f8] sm:$0xff] %v8435
        %8884 = vst [vmem:[%s317 + $0x400] sm:$0xff] %v8436
        %8885 = vst [vmem:[%s317 + $0x408] sm:$0xff] %v8437
        %8886 = vst [vmem:[%s317 + $0x410] sm:$0xff] %v8438
        %8887 = vst [vmem:[%s317 + $0x418] sm:$0xff] %v8439
        %8888 = vst [vmem:[%s317 + $0x420] sm:$0xff] %v8440
        %8889 = vst [vmem:[%s317 + $0x428] sm:$0xff] %v8441
        %8890 = vst [vmem:[%s317 + $0x430] sm:$0xff] %v8442
        %8891 = vst [vmem:[%s317 + $0x438] sm:$0xff] %v8443
        %8892 = vst [vmem:[%s317 + $0x440] sm:$0xff] %v8444
        %8893 = vst [vmem:[%s317 + $0x448] sm:$0xff] %v8445
        %8894 = vst [vmem:[%s317 + $0x450] sm:$0xff] %v8446
        %8895 = vst [vmem:[%s317 + $0x458] sm:$0xff] %v8447
        %8896 = vst [vmem:[%s317 + $0x460] sm:$0xff] %v8448
        %8897 = vst [vmem:[%s317 + $0x468] sm:$0xff] %v8449
        %8898 = vst [vmem:[%s317 + $0x470] sm:$0xff] %v8450
        %8899 = vst [vmem:[%s317 + $0x478] sm:$0xff] %v8451
        %8900 = vst [vmem:[%s317 + $0x480] sm:$0xff] %v8452
        %8901 = vst [vmem:[%s317 + $0x488] sm:$0xff] %v8453
        %8902 = vst [vmem:[%s317 + $0x490] sm:$0xff] %v8454
        %8903 = vst [vmem:[%s317 + $0x498] sm:$0xff] %v8455
        %8904 = vst [vmem:[%s317 + $0x4a0] sm:$0xff] %v8456
        %8905 = vst [vmem:[%s317 + $0x4a8] sm:$0xff] %v8457
        %8906 = vst [vmem:[%s317 + $0x4b0] sm:$0xff] %v8458
        %8907 = vst [vmem:[%s317 + $0x4b8] sm:$0xff] %v8459
        %8908 = vst [vmem:[%s317 + $0x4c0] sm:$0xff] %v8460
        %8909 = vst [vmem:[%s317 + $0x4c8] sm:$0xff] %v8461
        %8910 = vst [vmem:[%s317 + $0x4d0] sm:$0xff] %v8462
        %8911 = vst [vmem:[%s317 + $0x4d8] sm:$0xff] %v8463
        %8912 = vst [vmem:[%s317 + $0x4e0] sm:$0xff] %v8464
        %8913 = vst [vmem:[%s317 + $0x4e8] sm:$0xff] %v8465
        %8914 = vst [vmem:[%s317 + $0x4f0] sm:$0xff] %v8466
        %8915 = vst [vmem:[%s317 + $0x4f8] sm:$0xff] %v8467
        %8916 = vst [vmem:[%s317 + $0x500] sm:$0xff] %v8468
        %8917 = vst [vmem:[%s317 + $0x508] sm:$0xff] %v8469
        %8918 = vst [vmem:[%s317 + $0x510] sm:$0xff] %v8470
        %8919 = vst [vmem:[%s317 + $0x518] sm:$0xff] %v8471
        %8920 = vst [vmem:[%s317 + $0x520] sm:$0xff] %v8472
        %8921 = vst [vmem:[%s317 + $0x528] sm:$0xff] %v8473
        %8922 = vst [vmem:[%s317 + $0x530] sm:$0xff] %v8474
        %8923 = vst [vmem:[%s317 + $0x538] sm:$0xff] %v8475
        %8924 = vst [vmem:[%s317 + $0x540] sm:$0xff] %v8476
        %8925 = vst [vmem:[%s317 + $0x548] sm:$0xff] %v8477
        %8926 = vst [vmem:[%s317 + $0x550] sm:$0xff] %v8478
        %8927 = vst [vmem:[%s317 + $0x558] sm:$0xff] %v8479
        %8928 = vst [vmem:[%s317 + $0x560] sm:$0xff] %v8480
        %8929 = vst [vmem:[%s317 + $0x568] sm:$0xff] %v8481
        %8930 = vst [vmem:[%s317 + $0x570] sm:$0xff] %v8482
        %8931 = vst [vmem:[%s317 + $0x578] sm:$0xff] %v8483
        %8932 = vst [vmem:[%s317 + $0x580] sm:$0xff] %v8484
        %8933 = vst [vmem:[%s317 + $0x588] sm:$0xff] %v8485
        %8934 = vst [vmem:[%s317 + $0x590] sm:$0xff] %v8486
        %8935 = vst [vmem:[%s317 + $0x598] sm:$0xff] %v8487
        %8936 = vst [vmem:[%s317 + $0x5a0] sm:$0xff] %v8488
        %8937 = vst [vmem:[%s317 + $0x5a8] sm:$0xff] %v8489
        %8938 = vst [vmem:[%s317 + $0x5b0] sm:$0xff] %v8490
        %8939 = vst [vmem:[%s317 + $0x5b8] sm:$0xff] %v8491
        %8940 = vst [vmem:[%s317 + $0x5c0] sm:$0xff] %v8492
        %8941 = vst [vmem:[%s317 + $0x5c8] sm:$0xff] %v8493
        %8942 = vst [vmem:[%s317 + $0x5d0] sm:$0xff] %v8494
        %8943 = vst [vmem:[%s317 + $0x5d8] sm:$0xff] %v8495
        %8944 = vst [vmem:[%s317 + $0x5e0] sm:$0xff] %v8496
        %8945 = vst [vmem:[%s317 + $0x5e8] sm:$0xff] %v8497
        %8946 = vst [vmem:[%s317 + $0x5f0] sm:$0xff] %v8498
        %8947 = vst [vmem:[%s317 + $0x5f8] sm:$0xff] %v8499
        %8948 = vst [vmem:[%s317 + $0x600] sm:$0xff] %v8500
        %8949 = vst [vmem:[%s317 + $0x608] sm:$0xff] %v8501
        %8950 = vst [vmem:[%s317 + $0x610] sm:$0xff] %v8502
        %8951 = vst [vmem:[%s317 + $0x618] sm:$0xff] %v8503
        %8952 = vst [vmem:[%s317 + $0x620] sm:$0xff] %v8504
        %8953 = vst [vmem:[%s317 + $0x628] sm:$0xff] %v8505
        %8954 = vst [vmem:[%s317 + $0x630] sm:$0xff] %v8506
        %8955 = vst [vmem:[%s317 + $0x638] sm:$0xff] %v8507
        %8956 = vst [vmem:[%s317 + $0x640] sm:$0xff] %v8508
        %8957 = vst [vmem:[%s317 + $0x648] sm:$0xff] %v8509
        %8958 = vst [vmem:[%s317 + $0x650] sm:$0xff] %v8510
        %8959 = vst [vmem:[%s317 + $0x658] sm:$0xff] %v8511
        %8960 = vst [vmem:[%s317 + $0x660] sm:$0xff] %v8512
        %8961 = vst [vmem:[%s317 + $0x668] sm:$0xff] %v8513
        %8962 = vst [vmem:[%s317 + $0x670] sm:$0xff] %v8514
        %8963 = vst [vmem:[%s317 + $0x678] sm:$0xff] %v8515
        %8964 = vst [vmem:[%s317 + $0x680] sm:$0xff] %v8516
        %8965 = vst [vmem:[%s317 + $0x688] sm:$0xff] %v8517
        %8966 = vst [vmem:[%s317 + $0x690] sm:$0xff] %v8518
        %8967 = vst [vmem:[%s317 + $0x698] sm:$0xff] %v8519
        %8968 = vst [vmem:[%s317 + $0x6a0] sm:$0xff] %v8520
        %8969 = vst [vmem:[%s317 + $0x6a8] sm:$0xff] %v8521
        %8970 = vst [vmem:[%s317 + $0x6b0] sm:$0xff] %v8522
        %8971 = vst [vmem:[%s317 + $0x6b8] sm:$0xff] %v8523
        %8972 = vst [vmem:[%s317 + $0x6c0] sm:$0xff] %v8524
        %8973 = vst [vmem:[%s317 + $0x6c8] sm:$0xff] %v8525
        %8974 = vst [vmem:[%s317 + $0x6d0] sm:$0xff] %v8526
        %8975 = vst [vmem:[%s317 + $0x6d8] sm:$0xff] %v8527
        %8976 = vst [vmem:[%s317 + $0x6e0] sm:$0xff] %v8528
        %8977 = vst [vmem:[%s317 + $0x6e8] sm:$0xff] %v8529
        %8978 = vst [vmem:[%s317 + $0x6f0] sm:$0xff] %v8530
        %8979 = vst [vmem:[%s317 + $0x6f8] sm:$0xff] %v8531
        %8980 = vst [vmem:[%s317 + $0x700] sm:$0xff] %v8532
        %8981 = vst [vmem:[%s317 + $0x708] sm:$0xff] %v8533
        %8982 = vst [vmem:[%s317 + $0x710] sm:$0xff] %v8534
        %8983 = vst [vmem:[%s317 + $0x718] sm:$0xff] %v8535
        %8984 = vst [vmem:[%s317 + $0x720] sm:$0xff] %v8536
        %8985 = vst [vmem:[%s317 + $0x728] sm:$0xff] %v8537
        %8986 = vst [vmem:[%s317 + $0x730] sm:$0xff] %v8538
        %8987 = vst [vmem:[%s317 + $0x738] sm:$0xff] %v8539
        %8988 = vst [vmem:[%s317 + $0x740] sm:$0xff] %v8540
        %8989 = vst [vmem:[%s317 + $0x748] sm:$0xff] %v8541
        %8990 = vst [vmem:[%s317 + $0x750] sm:$0xff] %v8542
        %8991 = vst [vmem:[%s317 + $0x758] sm:$0xff] %v8543
        %8992 = vst [vmem:[%s317 + $0x760] sm:$0xff] %v8544
        %8993 = vst [vmem:[%s317 + $0x768] sm:$0xff] %v8545
        %8994 = vst [vmem:[%s317 + $0x770] sm:$0xff] %v8546
        %8995 = vst [vmem:[%s317 + $0x778] sm:$0xff] %v8547
        %8996 = vst [vmem:[%s317 + $0x780] sm:$0xff] %v8548
        %8997 = vst [vmem:[%s317 + $0x788] sm:$0xff] %v8549
        %8998 = vst [vmem:[%s317 + $0x790] sm:$0xff] %v8550
        %8999 = vst [vmem:[%s317 + $0x798] sm:$0xff] %v8551
        %9000 = vst [vmem:[%s317 + $0x7a0] sm:$0xff] %v8552
        %9001 = vst [vmem:[%s317 + $0x7a8] sm:$0xff] %v8553
        %9002 = vst [vmem:[%s317 + $0x7b0] sm:$0xff] %v8554
        %9003 = vst [vmem:[%s317 + $0x7b8] sm:$0xff] %v8555
        %9004 = vst [vmem:[%s317 + $0x7c0] sm:$0xff] %v8556
        %9005 = vst [vmem:[%s317 + $0x7c8] sm:$0xff] %v8557
        %9006 = vst [vmem:[%s317 + $0x7d0] sm:$0xff] %v8558
        %9007 = vst [vmem:[%s317 + $0x7d8] sm:$0xff] %v8559
        %9008 = vst [vmem:[%s317 + $0x7e0] sm:$0xff] %v8560
        %9009 = vst [vmem:[%s317 + $0x7e8] sm:$0xff] %v8561
        %9010 = vst [vmem:[%s317 + $0x7f0] sm:$0xff] %v8562
        %9011 = vst [vmem:[%s317 + $0x7f8] sm:$0xff] %v8563
        %9012 = vst [vmem:[%s317 + $0x800] sm:$0xff] %v8564
        %9013 = vst [vmem:[%s317 + $0x808] sm:$0xff] %v8565
        %9014 = vst [vmem:[%s317 + $0x810] sm:$0xff] %v8566
        %9015 = vst [vmem:[%s317 + $0x818] sm:$0xff] %v8567
        %9016 = vst [vmem:[%s317 + $0x820] sm:$0xff] %v8568
        %9017 = vst [vmem:[%s317 + $0x828] sm:$0xff] %v8569
        %9018 = vst [vmem:[%s317 + $0x830] sm:$0xff] %v8570
        %9019 = vst [vmem:[%s317 + $0x838] sm:$0xff] %v8571
        %9020 = vst [vmem:[%s317 + $0x840] sm:$0xff] %v8572
        %9021 = vst [vmem:[%s317 + $0x848] sm:$0xff] %v8573
        %9022 = vst [vmem:[%s317 + $0x850] sm:$0xff] %v8574
        %9023 = vst [vmem:[%s317 + $0x858] sm:$0xff] %v8575
        %9024 = vst [vmem:[%s317 + $0x860] sm:$0xff] %v8576
        %9025 = vst [vmem:[%s317 + $0x868] sm:$0xff] %v8577
        %9026 = vst [vmem:[%s317 + $0x870] sm:$0xff] %v8578
        %9027 = vst [vmem:[%s317 + $0x878] sm:$0xff] %v8579
        %9028 = vst [vmem:[%s317 + $0x880] sm:$0xff] %v8580
        %9029 = vst [vmem:[%s317 + $0x888] sm:$0xff] %v8581
        %9030 = vst [vmem:[%s317 + $0x890] sm:$0xff] %v8582
        %9031 = vst [vmem:[%s317 + $0x898] sm:$0xff] %v8583
        %9032 = vst [vmem:[%s317 + $0x8a0] sm:$0xff] %v8584
        %9033 = vst [vmem:[%s317 + $0x8a8] sm:$0xff] %v8585
        %9034 = vst [vmem:[%s317 + $0x8b0] sm:$0xff] %v8586
        %9035 = vst [vmem:[%s317 + $0x8b8] sm:$0xff] %v8587
        %9036 = vst [vmem:[%s317 + $0x8c0] sm:$0xff] %v8588
        %9037 = vst [vmem:[%s317 + $0x8c8] sm:$0xff] %v8589
        %9038 = vst [vmem:[%s317 + $0x8d0] sm:$0xff] %v8590
        %9039 = vst [vmem:[%s317 + $0x8d8] sm:$0xff] %v8591
        %9040 = vst [vmem:[%s317 + $0x8e0] sm:$0xff] %v8592
        %9041 = vst [vmem:[%s317 + $0x8e8] sm:$0xff] %v8593
        %9042 = vst [vmem:[%s317 + $0x8f0] sm:$0xff] %v8594
        %9043 = vst [vmem:[%s317 + $0x8f8] sm:$0xff] %v8595
        %9044 = vst [vmem:[%s317 + $0x900] sm:$0xff] %v8596
        %9045 = vst [vmem:[%s317 + $0x908] sm:$0xff] %v8597
        %9046 = vst [vmem:[%s317 + $0x910] sm:$0xff] %v8598
        %9047 = vst [vmem:[%s317 + $0x918] sm:$0xff] %v8599
        %9048 = vst [vmem:[%s317 + $0x920] sm:$0xff] %v8600
        %9049 = vst [vmem:[%s317 + $0x928] sm:$0xff] %v8601
        %9050 = vst [vmem:[%s317 + $0x930] sm:$0xff] %v8602
        %9051 = vst [vmem:[%s317 + $0x938] sm:$0xff] %v8603
        %9052 = vst [vmem:[%s317 + $0x940] sm:$0xff] %v8604
        %9053 = vst [vmem:[%s317 + $0x948] sm:$0xff] %v8605
        %9054 = vst [vmem:[%s317 + $0x950] sm:$0xff] %v8606
        %9055 = vst [vmem:[%s317 + $0x958] sm:$0xff] %v8607
        %9056 = vst [vmem:[%s317 + $0x960] sm:$0xff] %v8608
        %9057 = vst [vmem:[%s317 + $0x968] sm:$0xff] %v8609
        %9058 = vst [vmem:[%s317 + $0x970] sm:$0xff] %v8610
        %9059 = vst [vmem:[%s317 + $0x978] sm:$0xff] %v8611
        %9060 = vst [vmem:[%s317 + $0x980] sm:$0xff] %v8612
        %9061 = vst [vmem:[%s317 + $0x988] sm:$0xff] %v8613
        %9062 = vst [vmem:[%s317 + $0x990] sm:$0xff] %v8614
        %9063 = vst [vmem:[%s317 + $0x998] sm:$0xff] %v8615
        %9064 = vst [vmem:[%s317 + $0x9a0] sm:$0xff] %v8616
        %9065 = vst [vmem:[%s317 + $0x9a8] sm:$0xff] %v8617
        %9066 = vst [vmem:[%s317 + $0x9b0] sm:$0xff] %v8618
        %9067 = vst [vmem:[%s317 + $0x9b8] sm:$0xff] %v8619
        %9068 = vst [vmem:[%s317 + $0x9c0] sm:$0xff] %v8620
        %9069 = vst [vmem:[%s317 + $0x9c8] sm:$0xff] %v8621
        %9070 = vst [vmem:[%s317 + $0x9d0] sm:$0xff] %v8622
        %9071 = vst [vmem:[%s317 + $0x9d8] sm:$0xff] %v8623
        %9072 = vst [vmem:[%s317 + $0x9e0] sm:$0xff] %v8624
        %9073 = vst [vmem:[%s317 + $0x9e8] sm:$0xff] %v8625
        %9074 = vst [vmem:[%s317 + $0x9f0] sm:$0xff] %v8626
        %9075 = vst [vmem:[%s317 + $0x9f8] sm:$0xff] %v8627
        %9076 = vst [vmem:[%s317 + $0xa00] sm:$0xff] %v8628
        %9077 = vst [vmem:[%s317 + $0xa08] sm:$0xff] %v8629
        %9078 = vst [vmem:[%s317 + $0xa10] sm:$0xff] %v8630
        %9079 = vst [vmem:[%s317 + $0xa18] sm:$0xff] %v8631
        %9080 = vst [vmem:[%s317 + $0xa20] sm:$0xff] %v8632
        %9081 = vst [vmem:[%s317 + $0xa28] sm:$0xff] %v8633
        %9082 = vst [vmem:[%s317 + $0xa30] sm:$0xff] %v8634
        %9083 = vst [vmem:[%s317 + $0xa38] sm:$0xff] %v8635
        %9084 = vst [vmem:[%s317 + $0xa40] sm:$0xff] %v8636
        %9085 = vst [vmem:[%s317 + $0xa48] sm:$0xff] %v8637
        %9086 = vst [vmem:[%s317 + $0xa50] sm:$0xff] %v8638
        %9087 = vst [vmem:[%s317 + $0xa58] sm:$0xff] %v8639
        %9088 = vst [vmem:[%s317 + $0xa60] sm:$0xff] %v8640
        %9089 = vst [vmem:[%s317 + $0xa68] sm:$0xff] %v8641
        %9090 = vst [vmem:[%s317 + $0xa70] sm:$0xff] %v8642
        %9091 = vst [vmem:[%s317 + $0xa78] sm:$0xff] %v8643
        %9092 = vst [vmem:[%s317 + $0xa80] sm:$0xff] %v8644
        %9093 = vst [vmem:[%s317 + $0xa88] sm:$0xff] %v8645
        %9094 = vst [vmem:[%s317 + $0xa90] sm:$0xff] %v8646
        %9095 = vst [vmem:[%s317 + $0xa98] sm:$0xff] %v8647
        %9096 = vst [vmem:[%s317 + $0xaa0] sm:$0xff] %v8648
        %9097 = vst [vmem:[%s317 + $0xaa8] sm:$0xff] %v8649
        %9098 = vst [vmem:[%s317 + $0xab0] sm:$0xff] %v8650
        %9099 = vst [vmem:[%s317 + $0xab8] sm:$0xff] %v8651
        %9100 = vst [vmem:[%s317 + $0xac0] sm:$0xff] %v8652
        %9101 = vst [vmem:[%s317 + $0xac8] sm:$0xff] %v8653
        %9102 = vst [vmem:[%s317 + $0xad0] sm:$0xff] %v8654
        %9103 = vst [vmem:[%s317 + $0xad8] sm:$0xff] %v8655
        %9104 = vst [vmem:[%s317 + $0xae0] sm:$0xff] %v8656
        %9105 = vst [vmem:[%s317 + $0xae8] sm:$0xff] %v8657
        %9106 = vst [vmem:[%s317 + $0xaf0] sm:$0xff] %v8658
        %9107 = vst [vmem:[%s317 + $0xaf8] sm:$0xff] %v8659
        %9108 = vst [vmem:[%s317 + $0xb00] sm:$0xff] %v8660
        %9109 = vst [vmem:[%s317 + $0xb08] sm:$0xff] %v8661
        %9110 = vst [vmem:[%s317 + $0xb10] sm:$0xff] %v8662
        %9111 = vst [vmem:[%s317 + $0xb18] sm:$0xff] %v8663
        %9112 = vst [vmem:[%s317 + $0xb20] sm:$0xff] %v8664
        %9113 = vst [vmem:[%s317 + $0xb28] sm:$0xff] %v8665
        %9114 = vst [vmem:[%s317 + $0xb30] sm:$0xff] %v8666
        %9115 = vst [vmem:[%s317 + $0xb38] sm:$0xff] %v8667
        %9116 = vst [vmem:[%s317 + $0xb40] sm:$0xff] %v8668
        %9117 = vst [vmem:[%s317 + $0xb48] sm:$0xff] %v8669
        %9118 = vst [vmem:[%s317 + $0xb50] sm:$0xff] %v8670
        %9119 = vst [vmem:[%s317 + $0xb58] sm:$0xff] %v8671
        %9120 = vst [vmem:[%s317 + $0xb60] sm:$0xff] %v8672
        %9121 = vst [vmem:[%s317 + $0xb68] sm:$0xff] %v8673
        %9122 = vst [vmem:[%s317 + $0xb70] sm:$0xff] %v8674
        %9123 = vst [vmem:[%s317 + $0xb78] sm:$0xff] %v8675
        %9124 = vst [vmem:[%s317 + $0xb80] sm:$0xff] %v8676
        %9125 = vst [vmem:[%s317 + $0xb88] sm:$0xff] %v8677
        %9126 = vst [vmem:[%s317 + $0xb90] sm:$0xff] %v8678
        %9127 = vst [vmem:[%s317 + $0xb98] sm:$0xff] %v8679
        %9128 = vst [vmem:[%s317 + $0xba0] sm:$0xff] %v8680
        %9129 = vst [vmem:[%s317 + $0xba8] sm:$0xff] %v8681
        %9130 = vst [vmem:[%s317 + $0xbb0] sm:$0xff] %v8682
        %9131 = vst [vmem:[%s317 + $0xbb8] sm:$0xff] %v8683
        %9132 = vst [vmem:[%s317 + $0xbc0] sm:$0xff] %v8684
        %9133 = vst [vmem:[%s317 + $0xbc8] sm:$0xff] %v8685
        %9134 = vst [vmem:[%s317 + $0xbd0] sm:$0xff] %v8686
        %9135 = vst [vmem:[%s317 + $0xbd8] sm:$0xff] %v8687
        %9136 = vst [vmem:[%s317 + $0xbe0] sm:$0xff] %v8688
        %9137 = vst [vmem:[%s317 + $0xbe8] sm:$0xff] %v8689
        %9138 = vst [vmem:[%s317 + $0xbf0] sm:$0xff] %v8690
        %9139 = vst [vmem:[%s317 + $0xbf8] sm:$0xff] %v8691
        %9140 = vst [vmem:[%s317 + $0xc00] sm:$0xff] %v8692
        %9141 = vst [vmem:[%s317 + $0xc08] sm:$0xff] %v8693
        %9142 = vst [vmem:[%s317 + $0xc10] sm:$0xff] %v8694
        %9143 = vst [vmem:[%s317 + $0xc18] sm:$0xff] %v8695
        %9144 = vst [vmem:[%s317 + $0xc20] sm:$0xff] %v8696
        %9145 = vst [vmem:[%s317 + $0xc28] sm:$0xff] %v8697
        %9146 = vst [vmem:[%s317 + $0xc30] sm:$0xff] %v8698
        %9147 = vst [vmem:[%s317 + $0xc38] sm:$0xff] %v8699
        %9148 = vst [vmem:[%s317 + $0xc40] sm:$0xff] %v8700
        %9149 = vst [vmem:[%s317 + $0xc48] sm:$0xff] %v8701
        %9150 = vst [vmem:[%s317 + $0xc50] sm:$0xff] %v8702
        %9151 = vst [vmem:[%s317 + $0xc58] sm:$0xff] %v8703
        %9152 = vst [vmem:[%s317 + $0xc60] sm:$0xff] %v8704
        %9153 = vst [vmem:[%s317 + $0xc68] sm:$0xff] %v8705
        %9154 = vst [vmem:[%s317 + $0xc70] sm:$0xff] %v8706
        %9155 = vst [vmem:[%s317 + $0xc78] sm:$0xff] %v8707
        %9156 = vst [vmem:[%s317 + $0xc80] sm:$0xff] %v8708
        %9157 = vst [vmem:[%s317 + $0xc88] sm:$0xff] %v8709
        %9158 = vst [vmem:[%s317 + $0xc90] sm:$0xff] %v8710
        %9159 = vst [vmem:[%s317 + $0xc98] sm:$0xff] %v8711
        %9160 = vst [vmem:[%s317 + $0xca0] sm:$0xff] %v8712
        %9161 = vst [vmem:[%s317 + $0xca8] sm:$0xff] %v8713
        %9162 = vst [vmem:[%s317 + $0xcb0] sm:$0xff] %v8714
        %9163 = vst [vmem:[%s317 + $0xcb8] sm:$0xff] %v8715
        %9164 = vst [vmem:[%s317 + $0xcc0] sm:$0xff] %v8716
        %9165 = vst [vmem:[%s317 + $0xcc8] sm:$0xff] %v8717
        %9166 = vst [vmem:[%s317 + $0xcd0] sm:$0xff] %v8718
        %9167 = vst [vmem:[%s317 + $0xcd8] sm:$0xff] %v8719
        %9168 = vst [vmem:[%s317 + $0xce0] sm:$0xff] %v8720
        %9169 = vst [vmem:[%s317 + $0xce8] sm:$0xff] %v8721
        %9170 = vst [vmem:[%s317 + $0xcf0] sm:$0xff] %v8722
        %9171 = vst [vmem:[%s317 + $0xcf8] sm:$0xff] %v8723
        %9172 = vst [vmem:[%s317 + $0xd00] sm:$0xff] %v8724
        %9173 = vst [vmem:[%s317 + $0xd08] sm:$0xff] %v8725
        %9174 = vst [vmem:[%s317 + $0xd10] sm:$0xff] %v8726
        %9175 = vst [vmem:[%s317 + $0xd18] sm:$0xff] %v8727
        %9176 = vst [vmem:[%s317 + $0xd20] sm:$0xff] %v8728
        %9177 = vst [vmem:[%s317 + $0xd28] sm:$0xff] %v8729
        %9178 = vst [vmem:[%s317 + $0xd30] sm:$0xff] %v8730
        %9179 = vst [vmem:[%s317 + $0xd38] sm:$0xff] %v8731
        %9180 = vst [vmem:[%s317 + $0xd40] sm:$0xff] %v8732
        %9181 = vst [vmem:[%s317 + $0xd48] sm:$0xff] %v8733
        %9182 = vst [vmem:[%s317 + $0xd50] sm:$0xff] %v8734
        %9183 = vst [vmem:[%s317 + $0xd58] sm:$0xff] %v8735
        %9184 = vst [vmem:[%s317 + $0xd60] sm:$0xff] %v8736
        %9185 = vst [vmem:[%s317 + $0xd68] sm:$0xff] %v8737
        %9186 = vst [vmem:[%s317 + $0xd70] sm:$0xff] %v8738
        %9187 = vst [vmem:[%s317 + $0xd78] sm:$0xff] %v8739
        %9188 = vst [vmem:[%s317 + $0xd80] sm:$0xff] %v8740
        %9189 = vst [vmem:[%s317 + $0xd88] sm:$0xff] %v8741
        %9190 = vst [vmem:[%s317 + $0xd90] sm:$0xff] %v8742
        %9191 = vst [vmem:[%s317 + $0xd98] sm:$0xff] %v8743
        %9192 = vst [vmem:[%s317 + $0xda0] sm:$0xff] %v8744
        %9193 = vst [vmem:[%s317 + $0xda8] sm:$0xff] %v8745
        %9194 = vst [vmem:[%s317 + $0xdb0] sm:$0xff] %v8746
        %9195 = vst [vmem:[%s317 + $0xdb8] sm:$0xff] %v8747
        %9196 = vst [vmem:[%s317 + $0xdc0] sm:$0xff] %v8748
        %9197 = vst [vmem:[%s317 + $0xdc8] sm:$0xff] %v8749
        %9198 = vst [vmem:[%s317 + $0xdd0] sm:$0xff] %v8750
        %9199 = vst [vmem:[%s317 + $0xdd8] sm:$0xff] %v8751
        %9200 = vst [vmem:[%s317 + $0xde0] sm:$0xff] %v8752
        %9201 = vst [vmem:[%s317 + $0xde8] sm:$0xff] %v8753
        %9202 = vst [vmem:[%s317 + $0xdf0] sm:$0xff] %v8754
        %9203 = vst [vmem:[%s317 + $0xdf8] sm:$0xff] %v8755
        %s9204 = sand.u32 %s173, 1
        %s9205 = scalar_lea.sflag [#allocation5], %s9204
        %s9206 = sand.u32 %s173, 1
        %s9207 = smul.addr %s9206, 3584
        %s9208 = scalar_lea.vmem [#allocation8], %s9207
        // Predicated region
        $region57: #{tpu_custom_call.1} parent=43 // pred_check
          %p9209 = pneg %p183
        $region58: #{tpu_custom_call.1} parent=43 // pred_check_branch
          %9211 = sbr.rel (%p9209) target = $region60
        $region59: #{tpu_custom_call.1} parent=43 // pred_region
          %s9212 = smul.u32 64, %s24
          %s9214 = ssub.s32 57344, 57344
          %9215 = vsyncadd %s9205, %s9214
          %s9216 = smul.addr %s9212, 7
          %s9217 = smul.addr %s9216, 128
          %s9218 = scalar_lea.hbm %s6, %s9217
          %s9219 = sshll.u32 %s9208, 4
          %s9220 = int_to_ptr.vmem [resolvable:$true] %s9219
          %9225 = dma.vmem_to_hbm [thread:$0]  %s9220, 57344, %s9218, %s9205, 896, 896, 56
        $region60: #{tpu_custom_call.1} parent=43 // pred_fallthru
          _
      $region44: #{tpu_custom_call.1} parent=5 // pred_fallthru
        _
      %p9226 = scmp.le.s32.totalorder 2, %s19
      // Predicated region
      $region61: #{tpu_custom_call.1} parent=5 // pred_check
        %p9227 = pneg %p9226
      $region62: #{tpu_custom_call.1} parent=5 // pred_check_branch
        %9229 = sbr.rel (%p9227) target = $region64
      $region63: #{tpu_custom_call.1} parent=5 // pred_region
        %s9230 = ssub.s32 %s19, 2
        // Predicated region
        $region65: #{tpu_custom_call.1} parent=63 // pred_check
          %p9231 = pneg %p189
        $region66: #{tpu_custom_call.1} parent=63 // pred_check_branch
          %9233 = sbr.rel (%p9231) target = $region68
        $region67: #{tpu_custom_call.1} parent=63 // pred_region
          %s9234 = sand.u32 %s174, 1
          %s9235 = scalar_lea.sflag [#allocation5], %s9234
          %s9236 = sand.u32 %s174, 1
          %s9237 = smul.addr %s9236, 3584
          %s9238 = scalar_lea.vmem [#allocation8], %s9237
          %9239 = dma.done %s9235, 57344
        $region68: #{tpu_custom_call.1} parent=63 // pred_fallthru
          _
      $region64: #{tpu_custom_call.1} parent=5 // pred_fallthru
        _
    $region6: #{tpu_custom_call.1} parent=1 // loop_footer
      %s23 = sadd.s32 1, %s19
    $region7: #{tpu_custom_call.1} parent=1 // loop_footer_branch
      %18 = sbr.rel target = $region3
    $region8: #{tpu_custom_call.1} parent=1 // loop_exit
      _
    %9240 = vsyncpa [#allocation4], 1
    %s9241 = scalar_lea.sflag [#allocation4], 1
    %9242 = vsyncpa %s9241, 1
    %9243 = vsyncpa [#allocation7], 1
    %s9244 = scalar_lea.sflag [#allocation7], 1
    %9245 = vsyncpa %s9244, 1
    %9246 = vsyncpa [#allocation5], 1
    %s9247 = scalar_lea.sflag [#allocation5], 1
    %9248 = vsyncpa %s9247, 1

</llo_original>
